<compile_context>
chip_gen: v7x
topology: tpu7x:2x2x1
jax: 0.10.0
libtpu: 0.0.40
codegen_flags: <defaults>
</compile_context>

<pallas_src>
import jax
import jax.numpy as jnp
from jax.experimental import pallas as pl
from jax.experimental.pallas import tpu as pltpu

# ---- module hyperparameters (mirror the PyTorch __init__ defaults) ----------
NUM_LAYERS = 3
HIDDEN_DIM = 64
GEO_FEAT_DIM = 15
NUM_LAYERS_COLOR = 4
HIDDEN_DIM_COLOR = 64
INPUT_CH = 3
INPUT_CH_VIEWS = 3


def nerf_ngp_kernel(pts_ref, views_ref,
                    s0_ref, s1_ref, s2s_ref, s2g_ref,         # sigma net, (out, in) bf16
                    c0v_ref, c0g_ref, c1_ref, c2_ref, c3_ref,  # color net, (out, in) bf16
                    out_ref):
    """Feature-major tile: all activations are (features, TB); TB rides the lanes."""

    def mm(w_ref, a):
        # bf16 x bf16 MXU matmul, f32 accumulation.
        return jnp.dot(w_ref[...], a.astype(jnp.bfloat16),
                       preferred_element_type=jnp.float32)

    pts = pts_ref[...]        # (3, TB) bf16
    views = views_ref[...]    # (3, TB) bf16

    # ---- sigma net: Linear(3,64) -> relu -> Linear(64,64) -> relu -> Linear(64,16)
    h = jnp.maximum(mm(s0_ref, pts), 0.0)             # (64, TB) f32
    h = jnp.maximum(mm(s1_ref, h), 0.0)               # (64, TB) f32
    sigma = mm(s2s_ref, h)                            # (1,  TB) f32
    geo = mm(s2g_ref, h)                              # (15, TB) f32

    # ---- color net: cat(views, geo) -> 3x (Linear+relu) -> Linear(64,3)
    # The concat is replaced by split weights: dot + dot + add (no lane shuffles).
    hc = jnp.maximum(mm(c0v_ref, views) + mm(c0g_ref, geo), 0.0)   # (64, TB)
    hc = jnp.maximum(mm(c1_ref, hc), 0.0)                          # (64, TB)
    hc = jnp.maximum(mm(c2_ref, hc), 0.0)                          # (64, TB)
    color = mm(c3_ref, hc)                                         # (3,  TB)

    # Output block is (4, TB): rows = [color(3), sigma(1)] (cheap sublane-axis concat).
    out_ref[...] = jnp.concatenate([color, sigma], axis=0)


def prepare_weights(weights):
    """Convert (in, out) f32 weights into the kernel's pre-split, pre-transposed
    (out, in) bf16 form."""
    bf = lambda w: w.astype(jnp.bfloat16)
    s2_t = weights["s2"].T                      # (16, 64)
    c0_t = weights["c0"].T                      # (64, 18)
    return dict(
        s0=bf(weights["s0"].T),                 # (64, 3)
        s1=bf(weights["s1"].T),                 # (64, 64)
        s2_sigma=bf(s2_t[0:1, :]),              # (1, 64)
        s2_geo=bf(s2_t[1:, :]),                 # (15, 64)
        c0_views=bf(c0_t[:, :INPUT_CH_VIEWS]),  # (64, 3)
        c0_geo=bf(c0_t[:, INPUT_CH_VIEWS:]),    # (64, 15)
        c1=bf(weights["c1"].T),                 # (64, 64)
        c2=bf(weights["c2"].T),                 # (64, 64)
        c3=bf(weights["c3"].T),                 # (3, 64)
    )


def nerf_ngp_forward(x, weights, *, tile_b=2048):
    """x: (N, 6) f32 = [pts(3), views(3)].  weights: dict of (in, out) f32 matrices
    (PyTorch W.T).  Returns (N, 4) f32 = [color(3), sigma(1)]."""
    N, F = x.shape
    assert F == INPUT_CH + INPUT_CH_VIEWS
    assert tile_b % 128 == 0
    # TODO(synk): if tile_b is pushed far beyond 8192, re-derive the fit against
    # v7x's 64 MiB VMEM (32 MiB default scoped limit).

    # Pad the batch to a tile multiple and go feature-major (batch on lanes).
    n_pad = pl.cdiv(N, tile_b) * tile_b
    if n_pad != N:
        x = jnp.pad(x, ((0, n_pad - N), (0, 0)))
    xt = x.T.astype(jnp.bfloat16)               # (6, n_pad) bf16 dot inputs
    pts_t = xt[:INPUT_CH]                       # (3, n_pad)
    views_t = xt[INPUT_CH:]                     # (3, n_pad)

    kw = prepare_weights(weights)
    w_list = [kw["s0"], kw["s1"], kw["s2_sigma"], kw["s2_geo"],
              kw["c0_views"], kw["c0_geo"], kw["c1"], kw["c2"], kw["c3"]]

    def full_spec(w):
        # Whole (tiny) weight resident in VMEM for every grid step.
        return pl.BlockSpec(w.shape, lambda i: (0, 0))

    grid = (n_pad // tile_b,)

    flops_per_row = 2 * (INPUT_CH * HIDDEN_DIM
                         + HIDDEN_DIM * HIDDEN_DIM
                         + HIDDEN_DIM * (1 + GEO_FEAT_DIM)
                         + (INPUT_CH_VIEWS + GEO_FEAT_DIM) * HIDDEN_DIM_COLOR
                         + 2 * HIDDEN_DIM_COLOR * HIDDEN_DIM_COLOR
                         + HIDDEN_DIM_COLOR * 3)
    weight_bytes = sum(int(w.size) * w.dtype.itemsize for w in w_list)
    cost = pl.CostEstimate(
        flops=flops_per_row * n_pad,
        transcendentals=0,
        bytes_accessed=n_pad * (F * 2 + 4 * 4) + weight_bytes)

    out_t = pl.pallas_call(
        nerf_ngp_kernel,
        out_shape=jax.ShapeDtypeStruct((4, n_pad), jnp.float32),
        grid_spec=pltpu.PrefetchScalarGridSpec(
            num_scalar_prefetch=0,
            grid=grid,
            in_specs=[pl.BlockSpec((INPUT_CH, tile_b), lambda i: (0, i)),
                      pl.BlockSpec((INPUT_CH_VIEWS, tile_b), lambda i: (0, i))]
                     + [full_spec(w) for w in w_list],
            out_specs=pl.BlockSpec((4, tile_b), lambda i: (0, i)),
        ),
        compiler_params=pltpu.CompilerParams(
            dimension_semantics=("parallel",)),
        cost_estimate=cost,
    )(pts_t, views_t, *w_list)

    return out_t.T[:N]                          # (N, 4) f32


def init_weights(key):
    """Deterministic init.  PyTorch Linear weight is (out, in); we store the
    transpose (in, out).  All layers are bias-free, matching the module."""
    dims_sigma = []
    for l in range(NUM_LAYERS):
        in_dim = INPUT_CH if l == 0 else HIDDEN_DIM
        out_dim = (1 + GEO_FEAT_DIM) if l == NUM_LAYERS - 1 else HIDDEN_DIM
        dims_sigma.append((in_dim, out_dim))
    dims_color = []
    for l in range(NUM_LAYERS_COLOR):
        in_dim = (INPUT_CH_VIEWS + GEO_FEAT_DIM) if l == 0 else HIDDEN_DIM
        out_dim = 3 if l == NUM_LAYERS_COLOR - 1 else HIDDEN_DIM_COLOR
        dims_color.append((in_dim, out_dim))

    weights = {}
    names = ["s0", "s1", "s2", "c0", "c1", "c2", "c3"]
    all_dims = dims_sigma + dims_color
    keys = jax.random.split(key, len(all_dims))
    for name, (din, dout), k in zip(names, all_dims, keys):
        bound = 1.0 / jnp.sqrt(jnp.float32(din))  # kaiming-uniform-ish, like nn.Linear
        weights[name] = jax.random.uniform(
            k, (din, dout), jnp.float32, minval=-bound, maxval=bound)
    return weights


def reference_forward_f32(x, weights):
    """Pure-f32 JAX reference matching the PyTorch forward (module semantics)."""
    pts, views = x[:, :INPUT_CH], x[:, INPUT_CH:]
    h = pts
    for name in ["s0", "s1", "s2"]:
        h = h @ weights[name]
        if name != "s2":
            h = jnp.maximum(h, 0.0)
    sigma, geo = h[:, 0:1], h[:, 1:]
    h = jnp.concatenate([views, geo], axis=-1)
    for name in ["c0", "c1", "c2", "c3"]:
        h = h @ weights[name]
        if name != "c3":
            h = jnp.maximum(h, 0.0)
    return jnp.concatenate([h, sigma], axis=-1)


def reference_forward_bf16(x, weights):
    """Same graph, with dot inputs rounded to bf16 (f32 accumulation) to match the
    kernel's MXU numerics."""
    def dot(a, w):
        return jnp.dot(a.astype(jnp.bfloat16), w.astype(jnp.bfloat16),
                       preferred_element_type=jnp.float32)
    pts, views = x[:, :INPUT_CH], x[:, INPUT_CH:]
    h = jnp.maximum(dot(pts, weights["s0"]), 0.0)
    h = jnp.maximum(dot(h, weights["s1"]), 0.0)
    h = dot(h, weights["s2"])
    sigma, geo = h[:, 0:1], h[:, 1:]
    hc = jnp.concatenate([views, geo], axis=-1)
    hc = jnp.maximum(dot(hc, weights["c0"]), 0.0)
    hc = jnp.maximum(dot(hc, weights["c1"]), 0.0)
    hc = jnp.maximum(dot(hc, weights["c2"]), 0.0)
    color = dot(hc, weights["c3"])
    return jnp.concatenate([color, sigma], axis=-1)


if __name__ == "__main__":
    key = jax.random.PRNGKey(0)
    kx, kw = jax.random.split(key)

    N = 4096  # batch of sampled points; 2 tiles of 2048 -> both v7x TCs get work
    x = jax.random.normal(kx, (N, INPUT_CH + INPUT_CH_VIEWS), jnp.float32)
    weights = init_weights(kw)

    out = nerf_ngp_forward(x, weights, tile_b=2048)
    out = jax.block_until_ready(out)
    assert out.shape == (N, 4)

    ref_bf16 = reference_forward_bf16(x, weights)
    ref_f32 = reference_forward_f32(x, weights)
    assert jnp.allclose(out, ref_bf16, atol=1e-2, rtol=1e-2), \
        "mismatch vs bf16-matched reference"
    assert jnp.allclose(out, ref_f32, atol=1e-1, rtol=1e-1), \
        "mismatch vs f32 module reference"

    print("KERNEL_OK")
</pallas_src>

<mosaic_0001>
module attributes {stable_mosaic.version = 11 : i64} {
  func.func @nerf_ngp_kernel(%arg0: i32, %arg1: memref<3x2048xbf16, #tpu.memory_space<vmem>>, %arg2: memref<3x2048xbf16, #tpu.memory_space<vmem>>, %arg3: memref<64x3xbf16, #tpu.memory_space<vmem>>, %arg4: memref<64x64xbf16, #tpu.memory_space<vmem>>, %arg5: memref<1x64xbf16, #tpu.memory_space<vmem>>, %arg6: memref<15x64xbf16, #tpu.memory_space<vmem>>, %arg7: memref<64x3xbf16, #tpu.memory_space<vmem>>, %arg8: memref<64x15xbf16, #tpu.memory_space<vmem>>, %arg9: memref<64x64xbf16, #tpu.memory_space<vmem>>, %arg10: memref<64x64xbf16, #tpu.memory_space<vmem>>, %arg11: memref<3x64xbf16, #tpu.memory_space<vmem>>, %arg12: memref<4x2048xf32, #tpu.memory_space<vmem>>) attributes {dimension_semantics = [#tpu.dimension_semantics<parallel>], iteration_bounds = array<i64: 2>, scalar_prefetch = 0 : i64, scratch_operands = 0 : i64, tpu.core_type = #tpu.core_type<tc>, window_params = [{transform_indices = @transform_0, window_bounds = array<i64: 3, 2048>}, {transform_indices = @transform_1, window_bounds = array<i64: 3, 2048>}, {pipeline_mode = #tpu.pipeline_mode<synchronous>, transform_indices = @transform_2, window_bounds = array<i64: 64, 3>}, {pipeline_mode = #tpu.pipeline_mode<synchronous>, transform_indices = @transform_3, window_bounds = array<i64: 64, 64>}, {pipeline_mode = #tpu.pipeline_mode<synchronous>, transform_indices = @transform_4, window_bounds = array<i64: 1, 64>}, {pipeline_mode = #tpu.pipeline_mode<synchronous>, transform_indices = @transform_5, window_bounds = array<i64: 15, 64>}, {pipeline_mode = #tpu.pipeline_mode<synchronous>, transform_indices = @transform_6, window_bounds = array<i64: 64, 3>}, {pipeline_mode = #tpu.pipeline_mode<synchronous>, transform_indices = @transform_7, window_bounds = array<i64: 64, 15>}, {pipeline_mode = #tpu.pipeline_mode<synchronous>, transform_indices = @transform_8, window_bounds = array<i64: 64, 64>}, {pipeline_mode = #tpu.pipeline_mode<synchronous>, transform_indices = @transform_9, window_bounds = array<i64: 64, 64>}, {pipeline_mode = #tpu.pipeline_mode<synchronous>, transform_indices = @transform_10, window_bounds = array<i64: 3, 64>}, {transform_indices = @transform_11, window_bounds = array<i64: 4, 2048>}]} {
    %c0 = arith.constant 0 : index
    %c0_0 = arith.constant 0 : index
    %0 = vector.load %arg1[%c0, %c0_0] : memref<3x2048xbf16, #tpu.memory_space<vmem>>, vector<3x2048xbf16>
    %c0_1 = arith.constant 0 : index
    %c0_2 = arith.constant 0 : index
    %1 = vector.load %arg2[%c0_1, %c0_2] : memref<3x2048xbf16, #tpu.memory_space<vmem>>, vector<3x2048xbf16>
    %c0_3 = arith.constant 0 : index
    %c0_4 = arith.constant 0 : index
    %2 = vector.load %arg3[%c0_3, %c0_4] : memref<64x3xbf16, #tpu.memory_space<vmem>>, vector<64x3xbf16>
    %cst = arith.constant dense<0.000000e+00> : vector<64x2048xf32>
    %3 = tpu.matmul %2, %0, %cst {dimension_numbers = #tpu.dot_dimension_numbers<[1], [0], [0], [1], [0, 0, 1, 1], [], []>} : vector<64x3xbf16>, vector<3x2048xbf16>, vector<64x2048xf32> -> vector<64x2048xf32>
    %cst_5 = arith.constant 0.000000e+00 : f32
    %4 = vector.broadcast %cst_5 : f32 to vector<64x2048xf32>
    %5 = arith.maximumf %3, %4 : vector<64x2048xf32>
    %c0_6 = arith.constant 0 : index
    %c0_7 = arith.constant 0 : index
    %6 = vector.load %arg4[%c0_6, %c0_7] : memref<64x64xbf16, #tpu.memory_space<vmem>>, vector<64x64xbf16>
    %7 = arith.truncf %5 : vector<64x2048xf32> to vector<64x2048xbf16>
    %cst_8 = arith.constant dense<0.000000e+00> : vector<64x2048xf32>
    %8 = tpu.matmul %6, %7, %cst_8 {dimension_numbers = #tpu.dot_dimension_numbers<[1], [0], [0], [1], [0, 0, 1, 1], [], []>} : vector<64x64xbf16>, vector<64x2048xbf16>, vector<64x2048xf32> -> vector<64x2048xf32>
    %cst_9 = arith.constant 0.000000e+00 : f32
    %9 = vector.broadcast %cst_9 : f32 to vector<64x2048xf32>
    %10 = arith.maximumf %8, %9 : vector<64x2048xf32>
    %c0_10 = arith.constant 0 : index
    %c0_11 = arith.constant 0 : index
    %11 = vector.load %arg5[%c0_10, %c0_11] : memref<1x64xbf16, #tpu.memory_space<vmem>>, vector<1x64xbf16>
    %12 = arith.truncf %10 : vector<64x2048xf32> to vector<64x2048xbf16>
    %cst_12 = arith.constant dense<0.000000e+00> : vector<1x2048xf32>
    %13 = tpu.matmul %11, %12, %cst_12 {dimension_numbers = #tpu.dot_dimension_numbers<[1], [0], [0], [1], [0, 0, 1, 1], [], []>} : vector<1x64xbf16>, vector<64x2048xbf16>, vector<1x2048xf32> -> vector<1x2048xf32>
    %c0_13 = arith.constant 0 : index
    %c0_14 = arith.constant 0 : index
    %14 = vector.load %arg6[%c0_13, %c0_14] : memref<15x64xbf16, #tpu.memory_space<vmem>>, vector<15x64xbf16>
    %15 = arith.truncf %10 : vector<64x2048xf32> to vector<64x2048xbf16>
    %cst_15 = arith.constant dense<0.000000e+00> : vector<15x2048xf32>
    %16 = tpu.matmul %14, %15, %cst_15 {dimension_numbers = #tpu.dot_dimension_numbers<[1], [0], [0], [1], [0, 0, 1, 1], [], []>} : vector<15x64xbf16>, vector<64x2048xbf16>, vector<15x2048xf32> -> vector<15x2048xf32>
    %c0_16 = arith.constant 0 : index
    %c0_17 = arith.constant 0 : index
    %17 = vector.load %arg7[%c0_16, %c0_17] : memref<64x3xbf16, #tpu.memory_space<vmem>>, vector<64x3xbf16>
    %cst_18 = arith.constant dense<0.000000e+00> : vector<64x2048xf32>
    %18 = tpu.matmul %17, %1, %cst_18 {dimension_numbers = #tpu.dot_dimension_numbers<[1], [0], [0], [1], [0, 0, 1, 1], [], []>} : vector<64x3xbf16>, vector<3x2048xbf16>, vector<64x2048xf32> -> vector<64x2048xf32>
    %c0_19 = arith.constant 0 : index
    %c0_20 = arith.constant 0 : index
    %19 = vector.load %arg8[%c0_19, %c0_20] : memref<64x15xbf16, #tpu.memory_space<vmem>>, vector<64x15xbf16>
    %20 = arith.truncf %16 : vector<15x2048xf32> to vector<15x2048xbf16>
    %cst_21 = arith.constant dense<0.000000e+00> : vector<64x2048xf32>
    %21 = tpu.matmul %19, %20, %cst_21 {dimension_numbers = #tpu.dot_dimension_numbers<[1], [0], [0], [1], [0, 0, 1, 1], [], []>} : vector<64x15xbf16>, vector<15x2048xbf16>, vector<64x2048xf32> -> vector<64x2048xf32>
    %22 = arith.addf %18, %21 : vector<64x2048xf32>
    %cst_22 = arith.constant 0.000000e+00 : f32
    %23 = vector.broadcast %cst_22 : f32 to vector<64x2048xf32>
    %24 = arith.maximumf %22, %23 : vector<64x2048xf32>
    %c0_23 = arith.constant 0 : index
    %c0_24 = arith.constant 0 : index
    %25 = vector.load %arg9[%c0_23, %c0_24] : memref<64x64xbf16, #tpu.memory_space<vmem>>, vector<64x64xbf16>
    %26 = arith.truncf %24 : vector<64x2048xf32> to vector<64x2048xbf16>
    %cst_25 = arith.constant dense<0.000000e+00> : vector<64x2048xf32>
    %27 = tpu.matmul %25, %26, %cst_25 {dimension_numbers = #tpu.dot_dimension_numbers<[1], [0], [0], [1], [0, 0, 1, 1], [], []>} : vector<64x64xbf16>, vector<64x2048xbf16>, vector<64x2048xf32> -> vector<64x2048xf32>
    %cst_26 = arith.constant 0.000000e+00 : f32
    %28 = vector.broadcast %cst_26 : f32 to vector<64x2048xf32>
    %29 = arith.maximumf %27, %28 : vector<64x2048xf32>
    %c0_27 = arith.constant 0 : index
    %c0_28 = arith.constant 0 : index
    %30 = vector.load %arg10[%c0_27, %c0_28] : memref<64x64xbf16, #tpu.memory_space<vmem>>, vector<64x64xbf16>
    %31 = arith.truncf %29 : vector<64x2048xf32> to vector<64x2048xbf16>
    %cst_29 = arith.constant dense<0.000000e+00> : vector<64x2048xf32>
    %32 = tpu.matmul %30, %31, %cst_29 {dimension_numbers = #tpu.dot_dimension_numbers<[1], [0], [0], [1], [0, 0, 1, 1], [], []>} : vector<64x64xbf16>, vector<64x2048xbf16>, vector<64x2048xf32> -> vector<64x2048xf32>
    %cst_30 = arith.constant 0.000000e+00 : f32
    %33 = vector.broadcast %cst_30 : f32 to vector<64x2048xf32>
    %34 = arith.maximumf %32, %33 : vector<64x2048xf32>
    %c0_31 = arith.constant 0 : index
    %c0_32 = arith.constant 0 : index
    %35 = vector.load %arg11[%c0_31, %c0_32] : memref<3x64xbf16, #tpu.memory_space<vmem>>, vector<3x64xbf16>
    %36 = arith.truncf %34 : vector<64x2048xf32> to vector<64x2048xbf16>
    %cst_33 = arith.constant dense<0.000000e+00> : vector<3x2048xf32>
    %37 = tpu.matmul %35, %36, %cst_33 {dimension_numbers = #tpu.dot_dimension_numbers<[1], [0], [0], [1], [0, 0, 1, 1], [], []>} : vector<3x64xbf16>, vector<64x2048xbf16>, vector<3x2048xf32> -> vector<3x2048xf32>
    %38 = tpu.concatenate %37, %13 in 0 : vector<3x2048xf32>, vector<1x2048xf32> -> vector<4x2048xf32>
    %c0_34 = arith.constant 0 : index
    %c0_35 = arith.constant 0 : index
    %39 = vector.load %arg12[%c0_34, %c0_35] : memref<4x2048xf32, #tpu.memory_space<vmem>>, vector<4x2048xf32>
    tpu.vector_store %arg12[%c0_34, %c0_35], %38 {strides = array<i32>} : memref<4x2048xf32, #tpu.memory_space<vmem>>, vector<4x2048xf32>,
    return
  }
  func.func @transform_0(%arg0: i32) -> (i32, i32) {
    %c0_i32 = arith.constant 0 : i32
    %c0_i32_0 = arith.constant 0 : i32
    return %c0_i32, %arg0 : i32, i32
  }
  func.func @transform_1(%arg0: i32) -> (i32, i32) {
    %c0_i32 = arith.constant 0 : i32
    %c0_i32_0 = arith.constant 0 : i32
    return %c0_i32, %arg0 : i32, i32
  }
  func.func @transform_2(%arg0: i32) -> (i32, i32) {
    %c0_i32 = arith.constant 0 : i32
    %c0_i32_0 = arith.constant 0 : i32
    %c0_i32_1 = arith.constant 0 : i32
    return %c0_i32, %c0_i32_0 : i32, i32
  }
  func.func @transform_3(%arg0: i32) -> (i32, i32) {
    %c0_i32 = arith.constant 0 : i32
    %c0_i32_0 = arith.constant 0 : i32
    %c0_i32_1 = arith.constant 0 : i32
    return %c0_i32, %c0_i32_0 : i32, i32
  }
  func.func @transform_4(%arg0: i32) -> (i32, i32) {
    %c0_i32 = arith.constant 0 : i32
    %c0_i32_0 = arith.constant 0 : i32
    %c0_i32_1 = arith.constant 0 : i32
    return %c0_i32, %c0_i32_0 : i32, i32
  }
  func.func @transform_5(%arg0: i32) -> (i32, i32) {
    %c0_i32 = arith.constant 0 : i32
    %c0_i32_0 = arith.constant 0 : i32
    %c0_i32_1 = arith.constant 0 : i32
    return %c0_i32, %c0_i32_0 : i32, i32
  }
  func.func @transform_6(%arg0: i32) -> (i32, i32) {
    %c0_i32 = arith.constant 0 : i32
    %c0_i32_0 = arith.constant 0 : i32
    %c0_i32_1 = arith.constant 0 : i32
    return %c0_i32, %c0_i32_0 : i32, i32
  }
  func.func @transform_7(%arg0: i32) -> (i32, i32) {
    %c0_i32 = arith.constant 0 : i32
    %c0_i32_0 = arith.constant 0 : i32
    %c0_i32_1 = arith.constant 0 : i32
    return %c0_i32, %c0_i32_0 : i32, i32
  }
  func.func @transform_8(%arg0: i32) -> (i32, i32) {
    %c0_i32 = arith.constant 0 : i32
    %c0_i32_0 = arith.constant 0 : i32
    %c0_i32_1 = arith.constant 0 : i32
    return %c0_i32, %c0_i32_0 : i32, i32
  }
  func.func @transform_9(%arg0: i32) -> (i32, i32) {
    %c0_i32 = arith.constant 0 : i32
    %c0_i32_0 = arith.constant 0 : i32
    %c0_i32_1 = arith.constant 0 : i32
    return %c0_i32, %c0_i32_0 : i32, i32
  }
  func.func @transform_10(%arg0: i32) -> (i32, i32) {
    %c0_i32 = arith.constant 0 : i32
    %c0_i32_0 = arith.constant 0 : i32
    %c0_i32_1 = arith.constant 0 : i32
    return %c0_i32, %c0_i32_0 : i32, i32
  }
  func.func @transform_11(%arg0: i32) -> (i32, i32) {
    %c0_i32 = arith.constant 0 : i32
    %c0_i32_0 = arith.constant 0 : i32
    return %c0_i32, %arg0 : i32, i32
  }
}

</mosaic_0001>

<llo_original>
// kernel: tpu_custom_call.1
$region0: #{tpu_custom_call.1}
  #allocation0 [shape = 'u32[]', space=smem, size = 0x4, offset = 0x4, fixed_abs, tag = 'smem constant byte address 0x4 - core index']
  #allocation1 [shape = 'u32[144,128]{1,0:T(1,128)}', space=vmem, size = 0x12000, scoped, tag = 'internal scratch']
  %s0 = inlined_call_operand.vmem [shape: bf16[3,4096], index: 0, kind: input, shape index: {}]
  %s1 = inlined_call_operand.hbm [shape: bf16[3,4096], index: 1, kind: input, shape index: {}]
  %s2 = inlined_call_operand.vmem [shape: bf16[64,3], index: 2, kind: input, shape index: {}]
  %s3 = inlined_call_operand.vmem [shape: bf16[64,64], index: 3, kind: input, shape index: {}]
  %s4 = inlined_call_operand.hbm [shape: bf16[1,64], index: 4, kind: input, shape index: {}]
  %s5 = inlined_call_operand.hbm [shape: bf16[15,64], index: 5, kind: input, shape index: {}]
  %s6 = inlined_call_operand.vmem [shape: bf16[64,3], index: 6, kind: input, shape index: {}]
  %s7 = inlined_call_operand.vmem [shape: bf16[64,15], index: 7, kind: input, shape index: {}]
  %s8 = inlined_call_operand.hbm [shape: bf16[64,64], index: 8, kind: input, shape index: {}]
  %s9 = inlined_call_operand.vmem [shape: bf16[64,64], index: 9, kind: input, shape index: {}]
  %s10 = inlined_call_operand.vmem [shape: bf16[3,64], index: 10, kind: input, shape index: {}]
  %s11 = inlined_call_operand.hbm [shape: f32[4,4096], index: 11, kind: output, shape index: {}]
  %s12 = sld [smem:[#allocation0]]
  $region93: #{tpu_custom_call.1} parent=0
    _
  %s14 = ssub.s32 1, %s12
  %s15 = scalar_select 0, %s14, %s12
  $region1: #{tpu_custom_call.1} parent=0
    #allocation2 [shape = 'u8[32768]{0}', space=vmem, size = 0x8000, scoped, tag = 'input window, operand 1']
    #allocation3 [shape = 's32[2]{0}', space=sflag, size = 0x8, scoped, tag = 'scoped memory for tpu_custom_call.1']
    #allocation4 [shape = 's32[2]{0}', space=sflag, size = 0x8, scoped, tag = 'scoped memory for tpu_custom_call.1']
    #allocation5 [shape = 'u8[512]{0}', space=vmem, size = 0x400, scoped, tag = 'input window, operand 4, single buffered']
    #allocation6 [shape = 's32[1]{0}', space=sflag, size = 0x4, scoped, tag = 'scoped memory for tpu_custom_call.1']
    #allocation7 [shape = 'u8[4096]{0}', space=vmem, size = 0x1000, scoped, tag = 'input window, operand 5, single buffered']
    #allocation8 [shape = 'u8[16384]{0}', space=vmem, size = 0x4000, scoped, tag = 'input window, operand 8, single buffered']
    #allocation9 [shape = 's32[1]{0}', space=sflag, size = 0x4, scoped, tag = 'scoped memory for tpu_custom_call.1']
    #allocation10 [shape = 'u8[65536]{0}', space=vmem, size = 0x10000, scoped, tag = 'output window, operand 0']
    %16 = vsyncpa [#allocation3], 0
    %s17 = scalar_lea.sflag [#allocation3], 1
    %18 = vsyncpa %s17, 0
    %19 = vsyncpa [#allocation6], 0
    %20 = vsyncpa [#allocation9], 0
    %21 = vsyncpa [#allocation4], 0
    %s22 = scalar_lea.sflag [#allocation4], 1
    %23 = vsyncpa %s22, 0
    loop: start=0, step=1, limit=4
    $region2: #{tpu_custom_call.1} parent=1 // loop_pre_header
      _
    $region3: #{tpu_custom_call.1} parent=1 // loop_header
      %s25 = sphi 0, %s29
      %p26 = scmp.ge.s32.totalorder %s25, 4
      %s35 = sphi 0, %s37
      %s38 = sphi 0, %s35
      %s39 = sphi 0, %s38
      %s55 = sphi 0, %s39
      %s61 = sphi 0, %s63
      %s64 = sphi 0, %s61
      %s65 = sphi 0, %s64
      %s81 = sphi 0, %s65
      %s85 = sphi 0, %s85
      %s87 = sphi 0, %s85
      %s88 = sphi 0, %s87
      %s102 = sphi 0, %s88
      %s106 = sphi 0, %s106
      %s108 = sphi 0, %s106
      %s109 = sphi 0, %s108
      %s123 = sphi 0, %s109
      %s127 = sphi 0, %s127
      %s129 = sphi 0, %s127
      %s130 = sphi 0, %s129
      %s144 = sphi 0, %s130
      %s148 = sphi 0, %s148
      %s150 = sphi 0, %s148
      %s151 = sphi 0, %s150
      %s165 = sphi 0, %s151
      %s169 = sphi 0, %s169
      %s171 = sphi 0, %s169
      %s172 = sphi 0, %s171
      %s186 = sphi 0, %s172
      %s190 = sphi 0, %s190
      %s192 = sphi 0, %s190
      %s193 = sphi 0, %s192
      %s207 = sphi 0, %s193
      %s211 = sphi 0, %s211
      %s213 = sphi 0, %s211
      %s214 = sphi 0, %s213
      %s228 = sphi 0, %s214
      %s232 = sphi 0, %s232
      %s234 = sphi 0, %s232
      %s235 = sphi 0, %s234
      %s249 = sphi 0, %s235
      %s253 = sphi 0, %s253
      %s255 = sphi 0, %s253
      %s256 = sphi 0, %s255
      %s270 = sphi 0, %s256
      %s276 = sphi 0, %s278
      %s279 = sphi 0, %s276
      %s280 = sphi 0, %s279
      %s296 = sphi 0, %s280
    $region4: #{tpu_custom_call.1} parent=1 // loop_header_branch
      %28 = sbr.rel (%p26) target = $region8
    $region5: #{tpu_custom_call.1} parent=1 // loop_body
      %s30 = ssub.s32 %s25, 1
      %s31 = ssub.s32 %s25, 2
      %s32 = sadd.s32 %s25, 1
      %s33 = ssub.s32 %s25, %s32
      %p34 = scmp.eq.s32.totalorder %s33, 0
      %s36 = sadd.s32 %s35, 1
      %s37 = scalar_select %p34, %s35, %s36
      %p40 = pneg %p34
      %p41 = scmp.eq.s32.totalorder %s25, 1
      %p42 = por %p40, %p41
      %p43 = scmp.ne.s32.totalorder %s35, %s38
      %p44 = scmp.eq.s32.totalorder %s25, 0
      %p45 = por %p43, %p44
      %p46 = scmp.ne.s32.totalorder %s35, %s38
      %p47 = scmp.eq.s32.totalorder %s30, 1
      %p48 = por %p46, %p47
      %p49 = scmp.ne.s32.totalorder %s38, %s39
      %p50 = scmp.eq.s32.totalorder %s30, 0
      %p51 = por %p49, %p50
      %p52 = scmp.ne.s32.totalorder %s38, %s39
      %p53 = scmp.eq.s32.totalorder %s31, 1
      %p54 = por %p52, %p53
      %p56 = scmp.ne.s32.totalorder %s39, %s55
      %p57 = scmp.eq.s32.totalorder %s31, 0
      %p58 = por %p56, %p57
      %s59 = ssub.s32 %s25, %s32
      %p60 = scmp.eq.s32.totalorder %s59, 0
      %s62 = sadd.s32 %s61, 1
      %s63 = scalar_select %p60, %s61, %s62
      %p66 = pneg %p60
      %p67 = scmp.eq.s32.totalorder %s25, 1
      %p68 = por %p66, %p67
      %p69 = scmp.ne.s32.totalorder %s61, %s64
      %p70 = scmp.eq.s32.totalorder %s25, 0
      %p71 = por %p69, %p70
      %p72 = scmp.ne.s32.totalorder %s61, %s64
      %p73 = scmp.eq.s32.totalorder %s30, 1
      %p74 = por %p72, %p73
      %p75 = scmp.ne.s32.totalorder %s64, %s65
      %p76 = scmp.eq.s32.totalorder %s30, 0
      %p77 = por %p75, %p76
      %p78 = scmp.ne.s32.totalorder %s64, %s65
      %p79 = scmp.eq.s32.totalorder %s31, 1
      %p80 = por %p78, %p79
      %p82 = scmp.ne.s32.totalorder %s65, %s81
      %p83 = scmp.eq.s32.totalorder %s31, 0
      %p84 = por %p82, %p83
      %s86 = sadd.s32 %s85, 1
      %p89 = scmp.eq.s32.totalorder %s25, 1
      %p90 = scmp.ne.s32.totalorder %s85, %s87
      %p91 = scmp.eq.s32.totalorder %s25, 0
      %p92 = por %p90, %p91
      %p93 = scmp.ne.s32.totalorder %s85, %s87
      %p94 = scmp.eq.s32.totalorder %s30, 1
      %p95 = por %p93, %p94
      %p96 = scmp.ne.s32.totalorder %s87, %s88
      %p97 = scmp.eq.s32.totalorder %s30, 0
      %p98 = por %p96, %p97
      %p99 = scmp.ne.s32.totalorder %s87, %s88
      %p100 = scmp.eq.s32.totalorder %s31, 1
      %p101 = por %p99, %p100
      %p103 = scmp.ne.s32.totalorder %s88, %s102
      %p104 = scmp.eq.s32.totalorder %s31, 0
      %p105 = por %p103, %p104
      %s107 = sadd.s32 %s106, 1
      %p110 = scmp.eq.s32.totalorder %s25, 1
      %p111 = scmp.ne.s32.totalorder %s106, %s108
      %p112 = scmp.eq.s32.totalorder %s25, 0
      %p113 = por %p111, %p112
      %p114 = scmp.ne.s32.totalorder %s106, %s108
      %p115 = scmp.eq.s32.totalorder %s30, 1
      %p116 = por %p114, %p115
      %p117 = scmp.ne.s32.totalorder %s108, %s109
      %p118 = scmp.eq.s32.totalorder %s30, 0
      %p119 = por %p117, %p118
      %p120 = scmp.ne.s32.totalorder %s108, %s109
      %p121 = scmp.eq.s32.totalorder %s31, 1
      %p122 = por %p120, %p121
      %p124 = scmp.ne.s32.totalorder %s109, %s123
      %p125 = scmp.eq.s32.totalorder %s31, 0
      %p126 = por %p124, %p125
      %s128 = sadd.s32 %s127, 1
      %p131 = scmp.eq.s32.totalorder %s25, 1
      %p132 = scmp.ne.s32.totalorder %s127, %s129
      %p133 = scmp.eq.s32.totalorder %s25, 0
      %p134 = por %p132, %p133
      %p135 = scmp.ne.s32.totalorder %s127, %s129
      %p136 = scmp.eq.s32.totalorder %s30, 1
      %p137 = por %p135, %p136
      %p138 = scmp.ne.s32.totalorder %s129, %s130
      %p139 = scmp.eq.s32.totalorder %s30, 0
      %p140 = por %p138, %p139
      %p141 = scmp.ne.s32.totalorder %s129, %s130
      %p142 = scmp.eq.s32.totalorder %s31, 1
      %p143 = por %p141, %p142
      %p145 = scmp.ne.s32.totalorder %s130, %s144
      %p146 = scmp.eq.s32.totalorder %s31, 0
      %p147 = por %p145, %p146
      %s149 = sadd.s32 %s148, 1
      %p152 = scmp.eq.s32.totalorder %s25, 1
      %p153 = scmp.ne.s32.totalorder %s148, %s150
      %p154 = scmp.eq.s32.totalorder %s25, 0
      %p155 = por %p153, %p154
      %p156 = scmp.ne.s32.totalorder %s148, %s150
      %p157 = scmp.eq.s32.totalorder %s30, 1
      %p158 = por %p156, %p157
      %p159 = scmp.ne.s32.totalorder %s150, %s151
      %p160 = scmp.eq.s32.totalorder %s30, 0
      %p161 = por %p159, %p160
      %p162 = scmp.ne.s32.totalorder %s150, %s151
      %p163 = scmp.eq.s32.totalorder %s31, 1
      %p164 = por %p162, %p163
      %p166 = scmp.ne.s32.totalorder %s151, %s165
      %p167 = scmp.eq.s32.totalorder %s31, 0
      %p168 = por %p166, %p167
      %s170 = sadd.s32 %s169, 1
      %p173 = scmp.eq.s32.totalorder %s25, 1
      %p174 = scmp.ne.s32.totalorder %s169, %s171
      %p175 = scmp.eq.s32.totalorder %s25, 0
      %p176 = por %p174, %p175
      %p177 = scmp.ne.s32.totalorder %s169, %s171
      %p178 = scmp.eq.s32.totalorder %s30, 1
      %p179 = por %p177, %p178
      %p180 = scmp.ne.s32.totalorder %s171, %s172
      %p181 = scmp.eq.s32.totalorder %s30, 0
      %p182 = por %p180, %p181
      %p183 = scmp.ne.s32.totalorder %s171, %s172
      %p184 = scmp.eq.s32.totalorder %s31, 1
      %p185 = por %p183, %p184
      %p187 = scmp.ne.s32.totalorder %s172, %s186
      %p188 = scmp.eq.s32.totalorder %s31, 0
      %p189 = por %p187, %p188
      %s191 = sadd.s32 %s190, 1
      %p194 = scmp.eq.s32.totalorder %s25, 1
      %p195 = scmp.ne.s32.totalorder %s190, %s192
      %p196 = scmp.eq.s32.totalorder %s25, 0
      %p197 = por %p195, %p196
      %p198 = scmp.ne.s32.totalorder %s190, %s192
      %p199 = scmp.eq.s32.totalorder %s30, 1
      %p200 = por %p198, %p199
      %p201 = scmp.ne.s32.totalorder %s192, %s193
      %p202 = scmp.eq.s32.totalorder %s30, 0
      %p203 = por %p201, %p202
      %p204 = scmp.ne.s32.totalorder %s192, %s193
      %p205 = scmp.eq.s32.totalorder %s31, 1
      %p206 = por %p204, %p205
      %p208 = scmp.ne.s32.totalorder %s193, %s207
      %p209 = scmp.eq.s32.totalorder %s31, 0
      %p210 = por %p208, %p209
      %s212 = sadd.s32 %s211, 1
      %p215 = scmp.eq.s32.totalorder %s25, 1
      %p216 = scmp.ne.s32.totalorder %s211, %s213
      %p217 = scmp.eq.s32.totalorder %s25, 0
      %p218 = por %p216, %p217
      %p219 = scmp.ne.s32.totalorder %s211, %s213
      %p220 = scmp.eq.s32.totalorder %s30, 1
      %p221 = por %p219, %p220
      %p222 = scmp.ne.s32.totalorder %s213, %s214
      %p223 = scmp.eq.s32.totalorder %s30, 0
      %p224 = por %p222, %p223
      %p225 = scmp.ne.s32.totalorder %s213, %s214
      %p226 = scmp.eq.s32.totalorder %s31, 1
      %p227 = por %p225, %p226
      %p229 = scmp.ne.s32.totalorder %s214, %s228
      %p230 = scmp.eq.s32.totalorder %s31, 0
      %p231 = por %p229, %p230
      %s233 = sadd.s32 %s232, 1
      %p236 = scmp.eq.s32.totalorder %s25, 1
      %p237 = scmp.ne.s32.totalorder %s232, %s234
      %p238 = scmp.eq.s32.totalorder %s25, 0
      %p239 = por %p237, %p238
      %p240 = scmp.ne.s32.totalorder %s232, %s234
      %p241 = scmp.eq.s32.totalorder %s30, 1
      %p242 = por %p240, %p241
      %p243 = scmp.ne.s32.totalorder %s234, %s235
      %p244 = scmp.eq.s32.totalorder %s30, 0
      %p245 = por %p243, %p244
      %p246 = scmp.ne.s32.totalorder %s234, %s235
      %p247 = scmp.eq.s32.totalorder %s31, 1
      %p248 = por %p246, %p247
      %p250 = scmp.ne.s32.totalorder %s235, %s249
      %p251 = scmp.eq.s32.totalorder %s31, 0
      %p252 = por %p250, %p251
      %s254 = sadd.s32 %s253, 1
      %p257 = scmp.eq.s32.totalorder %s25, 1
      %p258 = scmp.ne.s32.totalorder %s253, %s255
      %p259 = scmp.eq.s32.totalorder %s25, 0
      %p260 = por %p258, %p259
      %p261 = scmp.ne.s32.totalorder %s253, %s255
      %p262 = scmp.eq.s32.totalorder %s30, 1
      %p263 = por %p261, %p262
      %p264 = scmp.ne.s32.totalorder %s255, %s256
      %p265 = scmp.eq.s32.totalorder %s30, 0
      %p266 = por %p264, %p265
      %p267 = scmp.ne.s32.totalorder %s255, %s256
      %p268 = scmp.eq.s32.totalorder %s31, 1
      %p269 = por %p267, %p268
      %p271 = scmp.ne.s32.totalorder %s256, %s270
      %p272 = scmp.eq.s32.totalorder %s31, 0
      %p273 = por %p271, %p272
      %s274 = ssub.s32 %s25, %s32
      %p275 = scmp.eq.s32.totalorder %s274, 0
      %s277 = sadd.s32 %s276, 1
      %s278 = scalar_select %p275, %s276, %s277
      %p281 = pneg %p275
      %p282 = scmp.eq.s32.totalorder %s25, 1
      %p283 = por %p281, %p282
      %p284 = scmp.ne.s32.totalorder %s276, %s279
      %p285 = scmp.eq.s32.totalorder %s25, 0
      %p286 = por %p284, %p285
      %p287 = scmp.ne.s32.totalorder %s276, %s279
      %p288 = scmp.eq.s32.totalorder %s30, 1
      %p289 = por %p287, %p288
      %p290 = scmp.ne.s32.totalorder %s279, %s280
      %p291 = scmp.eq.s32.totalorder %s30, 0
      %p292 = por %p290, %p291
      %p293 = scmp.ne.s32.totalorder %s279, %s280
      %p294 = scmp.eq.s32.totalorder %s31, 1
      %p295 = por %p293, %p294
      %p297 = scmp.ne.s32.totalorder %s280, %s296
      %p298 = scmp.eq.s32.totalorder %s31, 0
      %p299 = por %p297, %p298
      %p300 = scmp.le.s32.totalorder 1, %s25
      %p301 = scmp.lt.s32.totalorder %s25, 3
      %p302 = pnand %p300, %p301
      %p303 = pneg %p302
      // Predicated region
      $region9: #{tpu_custom_call.1} parent=5 // pred_check
        _
      $region10: #{tpu_custom_call.1} parent=5 // pred_check_branch
        %305 = sbr.rel (%p302) target = $region12
      $region11: #{tpu_custom_call.1} parent=5 // pred_region
        %s306 = ssub.s32 %s25, 1
        // Predicated region
        $region13: #{tpu_custom_call.1} parent=11 // pred_check
          %p307 = pneg %p98
        $region14: #{tpu_custom_call.1} parent=11 // pred_check_branch
          %309 = sbr.rel (%p307) target = $region16
        $region15: #{tpu_custom_call.1} parent=11 // pred_region
          _
        $region16: #{tpu_custom_call.1} parent=11 // pred_fallthru
          _
        // Predicated region
        $region17: #{tpu_custom_call.1} parent=11 // pred_check
          %p310 = pneg %p119
        $region18: #{tpu_custom_call.1} parent=11 // pred_check_branch
          %312 = sbr.rel (%p310) target = $region20
        $region19: #{tpu_custom_call.1} parent=11 // pred_region
          _
        $region20: #{tpu_custom_call.1} parent=11 // pred_fallthru
          _
        // Predicated region
        $region21: #{tpu_custom_call.1} parent=11 // pred_check
          %p313 = pneg %p140
        $region22: #{tpu_custom_call.1} parent=11 // pred_check_branch
          %315 = sbr.rel (%p313) target = $region24
        $region23: #{tpu_custom_call.1} parent=11 // pred_region
          %s317 = ssub.s32 16, 16
          %318 = vsyncadd [#allocation6], %s317
          %s320 = sshll.u32 [#allocation5], 4
          %s321 = int_to_ptr.vmem [resolvable:$true] %s320
          %323 = dma.hbm_to_vmem [thread:$0]  %s4, 16, %s321, [#allocation6]
        $region24: #{tpu_custom_call.1} parent=11 // pred_fallthru
          _
        // Predicated region
        $region25: #{tpu_custom_call.1} parent=11 // pred_check
          %p324 = pneg %p161
        $region26: #{tpu_custom_call.1} parent=11 // pred_check_branch
          %326 = sbr.rel (%p324) target = $region28
        $region27: #{tpu_custom_call.1} parent=11 // pred_region
          %s328 = ssub.s32 128, 128
          %329 = vsyncadd [#allocation6], %s328
          %s330 = sshll.u32 [#allocation7], 4
          %s331 = int_to_ptr.vmem [resolvable:$true] %s330
          %336 = dma.hbm_to_vmem [thread:$0]  %s5, 128, %s331, [#allocation6], 64, 64, 4
        $region28: #{tpu_custom_call.1} parent=11 // pred_fallthru
          _
        // Predicated region
        $region29: #{tpu_custom_call.1} parent=11 // pred_check
          %p337 = pneg %p182
        $region30: #{tpu_custom_call.1} parent=11 // pred_check_branch
          %339 = sbr.rel (%p337) target = $region32
        $region31: #{tpu_custom_call.1} parent=11 // pred_region
          _
        $region32: #{tpu_custom_call.1} parent=11 // pred_fallthru
          _
        // Predicated region
        $region33: #{tpu_custom_call.1} parent=11 // pred_check
          %p340 = pneg %p203
        $region34: #{tpu_custom_call.1} parent=11 // pred_check_branch
          %342 = sbr.rel (%p340) target = $region36
        $region35: #{tpu_custom_call.1} parent=11 // pred_region
          _
        $region36: #{tpu_custom_call.1} parent=11 // pred_fallthru
          _
        // Predicated region
        $region37: #{tpu_custom_call.1} parent=11 // pred_check
          %p343 = pneg %p224
        $region38: #{tpu_custom_call.1} parent=11 // pred_check_branch
          %345 = sbr.rel (%p343) target = $region40
        $region39: #{tpu_custom_call.1} parent=11 // pred_region
          %s347 = ssub.s32 512, 512
          %348 = vsyncadd [#allocation9], %s347
          %s349 = sshll.u32 [#allocation8], 4
          %s350 = int_to_ptr.vmem [resolvable:$true] %s349
          %355 = dma.hbm_to_vmem [thread:$0]  %s8, 512, %s350, [#allocation9], 64, 64, 4
        $region40: #{tpu_custom_call.1} parent=11 // pred_fallthru
          _
        // Predicated region
        $region41: #{tpu_custom_call.1} parent=11 // pred_check
          %p356 = pneg %p245
        $region42: #{tpu_custom_call.1} parent=11 // pred_check_branch
          %358 = sbr.rel (%p356) target = $region44
        $region43: #{tpu_custom_call.1} parent=11 // pred_region
          _
        $region44: #{tpu_custom_call.1} parent=11 // pred_fallthru
          _
        // Predicated region
        $region45: #{tpu_custom_call.1} parent=11 // pred_check
          %p359 = pneg %p266
        $region46: #{tpu_custom_call.1} parent=11 // pred_check_branch
          %361 = sbr.rel (%p359) target = $region48
        $region47: #{tpu_custom_call.1} parent=11 // pred_region
          _
        $region48: #{tpu_custom_call.1} parent=11 // pred_fallthru
          _
      $region12: #{tpu_custom_call.1} parent=5 // pred_fallthru
        _
      %p362 = scmp.lt.s32.totalorder %s25, 2
      // Predicated region
      $region49: #{tpu_custom_call.1} parent=5 // pred_check
        %p363 = pneg %p362
      $region50: #{tpu_custom_call.1} parent=5 // pred_check_branch
        %365 = sbr.rel (%p363) target = $region52
      $region51: #{tpu_custom_call.1} parent=5 // pred_region
        // Predicated region
        $region53: #{tpu_custom_call.1} parent=51 // pred_check
          %p366 = pneg %p45
        $region54: #{tpu_custom_call.1} parent=51 // pred_check_branch
          %368 = sbr.rel (%p366) target = $region56
        $region55: #{tpu_custom_call.1} parent=51 // pred_region
          %s369 = smul.u32 16, %s25
          %p370 = scmp.lt.s32.totalorder %s369, 31
          %s371 = scalar_select %p370, %s369, 31
          %s372 = smul.addr %s371, 2
          %s373 = scalar_lea.vmem %s0, %s372
          %s374 = smul.u32 16, %s25
        $region56: #{tpu_custom_call.1} parent=51 // pred_fallthru
          _
        // Predicated region
        $region57: #{tpu_custom_call.1} parent=51 // pred_check
          %p375 = pneg %p71
        $region58: #{tpu_custom_call.1} parent=51 // pred_check_branch
          %377 = sbr.rel (%p375) target = $region60
        $region59: #{tpu_custom_call.1} parent=51 // pred_region
          %s378 = sand.u32 %s61, 1
          %s379 = scalar_lea.sflag [#allocation3], %s378
          %s380 = sand.u32 %s61, 1
          %s381 = smul.addr %s380, 32
          %s382 = scalar_lea.vmem [#allocation2], %s381
          %s383 = smul.u32 16, %s25
          %s385 = ssub.s32 512, 512
          %386 = vsyncadd %s379, %s385
          %s387 = smul.addr %s383, 32
          %s388 = scalar_lea.hbm %s1, %s387
          %s390 = sshll.u32 %s382, 4
          %s391 = int_to_ptr.vmem [resolvable:$true] %s390
          %393 = dma.hbm_to_vmem [thread:$0]  %s388, 512, %s391, %s379
        $region60: #{tpu_custom_call.1} parent=51 // pred_fallthru
          _
      $region52: #{tpu_custom_call.1} parent=5 // pred_fallthru
        _
      %p394 = scmp.le.s32.totalorder 1, %s25
      %p395 = scmp.lt.s32.totalorder %s25, 3
      %p396 = pnand %p394, %p395
      %p397 = pneg %p396
      // Predicated region
      $region61: #{tpu_custom_call.1} parent=5 // pred_check
        _
      $region62: #{tpu_custom_call.1} parent=5 // pred_check_branch
        %399 = sbr.rel (%p396) target = $region64
      $region63: #{tpu_custom_call.1} parent=5 // pred_region
        %s400 = ssub.s32 %s25, 1
        %s401 = sand.u32 %s64, 1
        %s402 = scalar_lea.sflag [#allocation3], %s401
        %s403 = sand.u32 %s64, 1
        %s404 = smul.addr %s403, 32
        %s405 = scalar_lea.vmem [#allocation2], %s404
        // Predicated region
        $region65: #{tpu_custom_call.1} parent=63 // pred_check
          %p406 = pneg %p77
        $region66: #{tpu_custom_call.1} parent=63 // pred_check_branch
          %408 = sbr.rel (%p406) target = $region68
        $region67: #{tpu_custom_call.1} parent=63 // pred_region
          %409 = dma.done %s402, 512
        $region68: #{tpu_custom_call.1} parent=63 // pred_fallthru
          _
        // Predicated region
        $region69: #{tpu_custom_call.1} parent=63 // pred_check
          %p410 = pneg %p140
        $region70: #{tpu_custom_call.1} parent=63 // pred_check_branch
          %412 = sbr.rel (%p410) target = $region72
        $region71: #{tpu_custom_call.1} parent=63 // pred_region
          %413 = dma.done [#allocation6], 16
        $region72: #{tpu_custom_call.1} parent=63 // pred_fallthru
          _
        // Predicated region
        $region73: #{tpu_custom_call.1} parent=63 // pred_check
          %p414 = pneg %p161
        $region74: #{tpu_custom_call.1} parent=63 // pred_check_branch
          %416 = sbr.rel (%p414) target = $region76
        $region75: #{tpu_custom_call.1} parent=63 // pred_region
          %417 = dma.done [#allocation6], 128
        $region76: #{tpu_custom_call.1} parent=63 // pred_fallthru
          _
        // Predicated region
        $region77: #{tpu_custom_call.1} parent=63 // pred_check
          %p418 = pneg %p224
        $region78: #{tpu_custom_call.1} parent=63 // pred_check_branch
          %420 = sbr.rel (%p418) target = $region80
        $region79: #{tpu_custom_call.1} parent=63 // pred_region
          %421 = dma.done [#allocation9], 512
        $region80: #{tpu_custom_call.1} parent=63 // pred_fallthru
          _
        %s422 = smul.u32 16, %s30
        %p423 = scmp.lt.s32.totalorder %s422, 31
        %s424 = scalar_select %p423, %s422, 31
        %s425 = smul.addr %s424, 2
        %s426 = scalar_lea.vmem %s0, %s425
        %p427 = pneg %p51
        %p428 = pneg %p48
        %s429 = sand.u32 %s64, 1
        %s430 = scalar_lea.sflag [#allocation3], %s429
        %s431 = sand.u32 %s64, 1
        %s432 = smul.addr %s431, 32
        %s433 = scalar_lea.vmem [#allocation2], %s432
        %p434 = pneg %p77
        %p435 = pneg %p74
        %p436 = pneg %p98
        %p437 = pneg %p95
        %p438 = pneg %p119
        %p439 = pneg %p116
        %p440 = pneg %p140
        %p441 = pneg %p137
        %p442 = pneg %p161
        %p443 = pneg %p158
        %p444 = pneg %p182
        %p445 = pneg %p179
        %p446 = pneg %p203
        %p447 = pneg %p200
        %p448 = pneg %p224
        %p449 = pneg %p221
        %p450 = pneg %p245
        %p451 = pneg %p242
        %p452 = pneg %p266
        %p453 = pneg %p263
        %p454 = pneg %p292
        %p455 = pneg %p289
        %s456 = sand.u32 %s279, 1
        %s457 = scalar_lea.sflag [#allocation4], %s456
        %s458 = sand.u32 %s279, 1
        %s459 = smul.addr %s458, 64
        %s460 = scalar_lea.vmem [#allocation10], %s459
        %s461 = smul.u32 16, %s30
        %p462 = scmp.lt.s32.totalorder %s461, 31
        %s463 = scalar_select %p462, %s461, 31
        %s464 = smul.addr %s463, 2
        %s465 = scalar_lea.vmem %s0, %s464
        %s466 = smul.u32 16, %s30
        %s467 = smul.u32 16, %s30
        %s468 = smul.u32 16, %s30
        %v470 = vld [vmem:[%s465] sm:$0xff]
        %v471 = vld [vmem:[%s465 + $0x8] sm:$0xff]
        %v472 = vld [vmem:[%s465 + $0x10] sm:$0xff]
        %v473 = vld [vmem:[%s465 + $0x18] sm:$0xff]
        %v474 = vld [vmem:[%s405] sm:$0xff]
        %v475 = vld [vmem:[%s405 + $0x8] sm:$0xff]
        %v476 = vld [vmem:[%s405 + $0x10] sm:$0xff]
        %v477 = vld [vmem:[%s405 + $0x18] sm:$0xff]
        %v478 = vld [vmem:[%s2] sm:$0xf]
        %v479 = vld [vmem:[%s2 + $0x4] sm:$0xf]
        %v480 = vld [vmem:[%s2 + $0x8] sm:$0xf]
        %v481 = vld [vmem:[%s2 + $0xc] sm:$0xf]
        %v482 = vld [vmem:[%s2 + $0x10] sm:$0xf]
        %v483 = vld [vmem:[%s2 + $0x14] sm:$0xf]
        %v484 = vld [vmem:[%s2 + $0x18] sm:$0xf]
        %v485 = vld [vmem:[%s2 + $0x1c] sm:$0xf]
        %v494 = vunpack.c.l.b16 %v478
        %v495 = vunpack.c.l.b16 %v479
        %v496 = vunpack.c.l.b16 %v480
        %v497 = vunpack.c.l.b16 %v481
        %v498 = vunpack.c.l.b16 %v482
        %v499 = vunpack.c.l.b16 %v483
        %v500 = vunpack.c.l.b16 %v484
        %v501 = vunpack.c.l.b16 %v485
        %v502 = vpack.c.b16 %v495, %v494
        %v503 = vpack.c.b16 %v497, %v496
        %v504 = vpack.c.b16 %v499, %v498
        %v505 = vpack.c.b16 %v501, %v500
        %v510 = vcombine.high %v470, %v470
        %v512 = vunpack.c.l.s4 1983009808
        %v513 = vunpack.c.0.s8 %v512
        %v514 = vlaneseq
        %v515 = vshrl.u32 %v514, 7
        %v516 = vsub.s32 %v513, %v515
        %v517 = vrot.slane %v470, %v516
        %v519 = vunpack.c.l.s4 1983009808
        %v520 = vunpack.c.0.s8 %v519
        %v521 = vlaneseq
        %v522 = vshrl.u32 %v521, 7
        %v523 = vsub.s32 %v520, %v522
        %v524 = vrot.slane %v510, %v523
        %v525 = vcombine.high %v517, %v517
        %v526 = vcombine.high %v524, %v524
        %v527 = vcombine.high %v471, %v471
        %v529 = vunpack.c.l.s4 1983009808
        %v530 = vunpack.c.0.s8 %v529
        %v531 = vlaneseq
        %v532 = vshrl.u32 %v531, 7
        %v533 = vsub.s32 %v530, %v532
        %v534 = vrot.slane %v471, %v533
        %v536 = vunpack.c.l.s4 1983009808
        %v537 = vunpack.c.0.s8 %v536
        %v538 = vlaneseq
        %v539 = vshrl.u32 %v538, 7
        %v540 = vsub.s32 %v537, %v539
        %v541 = vrot.slane %v527, %v540
        %v542 = vcombine.high %v534, %v534
        %v543 = vcombine.high %v541, %v541
        %v544 = vcombine.high %v472, %v472
        %v546 = vunpack.c.l.s4 1983009808
        %v547 = vunpack.c.0.s8 %v546
        %v548 = vlaneseq
        %v549 = vshrl.u32 %v548, 7
        %v550 = vsub.s32 %v547, %v549
        %v551 = vrot.slane %v472, %v550
        %v553 = vunpack.c.l.s4 1983009808
        %v554 = vunpack.c.0.s8 %v553
        %v555 = vlaneseq
        %v556 = vshrl.u32 %v555, 7
        %v557 = vsub.s32 %v554, %v556
        %v558 = vrot.slane %v544, %v557
        %v559 = vcombine.high %v551, %v551
        %v560 = vcombine.high %v558, %v558
        %v561 = vcombine.high %v473, %v473
        %v563 = vunpack.c.l.s4 1983009808
        %v564 = vunpack.c.0.s8 %v563
        %v565 = vlaneseq
        %v566 = vshrl.u32 %v565, 7
        %v567 = vsub.s32 %v564, %v566
        %v568 = vrot.slane %v473, %v567
        %v570 = vunpack.c.l.s4 1983009808
        %v571 = vunpack.c.0.s8 %v570
        %v572 = vlaneseq
        %v573 = vshrl.u32 %v572, 7
        %v574 = vsub.s32 %v571, %v573
        %v575 = vrot.slane %v561, %v574
        %v576 = vcombine.high %v568, %v568
        %v577 = vcombine.high %v575, %v575
        %vm578 = vcmask 23552
        %v580 = vsel %vm578, %v502, 0
        %v583 = vsel %vm578, %v503, 0
        %v586 = vsel %vm578, %v504, 0
        %v589 = vsel %vm578, %v505, 0
        %vm591 = vcmask 1040384
        %vm592 = vcmask 1041408
        %v593 = vsel %vm591, 4294967295, 65535
        %v594 = vsel %vm592, %v593, 0
        %v596 = vand.u32 %v517, %v594
        %v599 = vand.u32 %v525, %v594
        %v602 = vand.u32 %v524, %v594
        %v605 = vand.u32 %v526, %v594
        %v608 = vand.u32 %v534, %v594
        %v611 = vand.u32 %v542, %v594
        %v614 = vand.u32 %v541, %v594
        %v617 = vand.u32 %v543, %v594
        %v620 = vand.u32 %v551, %v594
        %v623 = vand.u32 %v559, %v594
        %v626 = vand.u32 %v558, %v594
        %v629 = vand.u32 %v560, %v594
        %v632 = vand.u32 %v568, %v594
        %v635 = vand.u32 %v576, %v594
        %v638 = vand.u32 %v575, %v594
        %v641 = vand.u32 %v577, %v594
        %643 = vmatprep.subr.bf16.mxu0 %v599
        %644 = vmatpush1.bf16.msra.mxu0 %v596
        %645 = vmatprep.subr.bf16.mxu0 0
        %646 = vmatpush1.bf16.msra.mxu0 0
        %647 = vmatprep.subr.bf16.mxu0 0
        %648 = vmatpush1.bf16.msra.mxu0 0
        %649 = vmatprep.subr.bf16.mxu0 0
        %650 = vmatpush1.bf16.msra.mxu0 0
        %651 = vmatprep.subr.bf16.mxu0 0
        %652 = vmatpush1.bf16.msra.mxu0 0
        %653 = vmatprep.subr.bf16.mxu0 0
        %654 = vmatpush1.bf16.msra.mxu0 0
        %655 = vmatprep.subr.bf16.mxu0 0
        %656 = vmatpush1.bf16.msra.mxu0 0
        %657 = vmatprep.subr.bf16.mxu0 0
        %658 = vmatpush1.bf16.msra.mxu0 0
        %659 = vmatprep.subr.bf16.mxu0 0
        %660 = vmatpush1.bf16.msra.mxu0 0
        %661 = vmatprep.subr.bf16.mxu0 0
        %662 = vmatpush1.bf16.msra.mxu0 0
        %663 = vmatprep.subr.bf16.mxu0 0
        %664 = vmatpush1.bf16.msra.mxu0 0
        %665 = vmatprep.subr.bf16.mxu0 0
        %666 = vmatpush1.bf16.msra.mxu0 0
        %667 = vmatprep.subr.bf16.mxu0 0
        %668 = vmatpush1.bf16.msra.mxu0 0
        %669 = vmatprep.subr.bf16.mxu0 0
        %670 = vmatpush1.bf16.msra.mxu0 0
        %671 = vmatprep.subr.bf16.mxu0 0
        %672 = vmatpush1.bf16.msra.mxu0 0
        %673 = vmatprep.subr.bf16.mxu0 0
        %674 = vmatpush1.bf16.msra.mxu0 0
        %675 = vmatprep.mubr.bf16.mxu0 0
        %676 = vmatmul.mubr.bf16.gmra.mrb[0].mxu0 %v580
        %v677 = vpop.f32.mrb[0].mxu0
        %v678 = vadd.f32 0.0, %v677
        %v679 = vpop.f32.mrb[0].mxu0
        %v680 = vadd.f32 0.0, %v679
        %v681 = vpop.f32.mrb[0].mxu0
        %v682 = vadd.f32 0.0, %v681
        %v683 = vpop.f32.mrb[0].mxu0
        %v684 = vadd.f32 0.0, %v683
        %685 = vmatprep.mubr.bf16.mxu0 0
        %686 = vmatmul.mubr.bf16.gmra.mrb[0].mxu0 %v583
        %v687 = vpop.f32.mrb[0].mxu0
        %v688 = vadd.f32 0.0, %v687
        %v689 = vpop.f32.mrb[0].mxu0
        %v690 = vadd.f32 0.0, %v689
        %v691 = vpop.f32.mrb[0].mxu0
        %v692 = vadd.f32 0.0, %v691
        %v693 = vpop.f32.mrb[0].mxu0
        %v694 = vadd.f32 0.0, %v693
        %695 = vmatprep.mubr.bf16.mxu0 0
        %696 = vmatmul.mubr.bf16.gmra.mrb[0].mxu0 %v586
        %v697 = vpop.f32.mrb[0].mxu0
        %v698 = vadd.f32 0.0, %v697
        %v699 = vpop.f32.mrb[0].mxu0
        %v700 = vadd.f32 0.0, %v699
        %v701 = vpop.f32.mrb[0].mxu0
        %v702 = vadd.f32 0.0, %v701
        %v703 = vpop.f32.mrb[0].mxu0
        %v704 = vadd.f32 0.0, %v703
        %705 = vmatprep.mubr.bf16.mxu0 0
        %706 = vmatmul.mubr.bf16.gmra.mrb[0].mxu0 %v589
        %v707 = vpop.f32.mrb[0].mxu0
        %v708 = vadd.f32 0.0, %v707
        %v709 = vpop.f32.mrb[0].mxu0
        %v710 = vadd.f32 0.0, %v709
        %v711 = vpop.f32.mrb[0].mxu0
        %v712 = vadd.f32 0.0, %v711
        %v713 = vpop.f32.mrb[0].mxu0
        %v714 = vadd.f32 0.0, %v713
        %715 = vdwg.mxu0
        %716 = vmatprep.subr.bf16.mxu0 %v605
        %717 = vmatpush1.bf16.msra.mxu0 %v602
        %718 = vmatprep.subr.bf16.mxu0 0
        %719 = vmatpush1.bf16.msra.mxu0 0
        %720 = vmatprep.subr.bf16.mxu0 0
        %721 = vmatpush1.bf16.msra.mxu0 0
        %722 = vmatprep.subr.bf16.mxu0 0
        %723 = vmatpush1.bf16.msra.mxu0 0
        %724 = vmatprep.subr.bf16.mxu0 0
        %725 = vmatpush1.bf16.msra.mxu0 0
        %726 = vmatprep.subr.bf16.mxu0 0
        %727 = vmatpush1.bf16.msra.mxu0 0
        %728 = vmatprep.subr.bf16.mxu0 0
        %729 = vmatpush1.bf16.msra.mxu0 0
        %730 = vmatprep.subr.bf16.mxu0 0
        %731 = vmatpush1.bf16.msra.mxu0 0
        %732 = vmatprep.subr.bf16.mxu0 0
        %733 = vmatpush1.bf16.msra.mxu0 0
        %734 = vmatprep.subr.bf16.mxu0 0
        %735 = vmatpush1.bf16.msra.mxu0 0
        %736 = vmatprep.subr.bf16.mxu0 0
        %737 = vmatpush1.bf16.msra.mxu0 0
        %738 = vmatprep.subr.bf16.mxu0 0
        %739 = vmatpush1.bf16.msra.mxu0 0
        %740 = vmatprep.subr.bf16.mxu0 0
        %741 = vmatpush1.bf16.msra.mxu0 0
        %742 = vmatprep.subr.bf16.mxu0 0
        %743 = vmatpush1.bf16.msra.mxu0 0
        %744 = vmatprep.subr.bf16.mxu0 0
        %745 = vmatpush1.bf16.msra.mxu0 0
        %746 = vmatprep.subr.bf16.mxu0 0
        %747 = vmatpush1.bf16.msra.mxu0 0
        %748 = vmatprep.mubr.bf16.mxu0 0
        %749 = vmatmul.mubr.bf16.gmra.mrb[0].mxu0 %v580
        %v750 = vpop.f32.mrb[0].mxu0
        %v751 = vadd.f32 0.0, %v750
        %v752 = vpop.f32.mrb[0].mxu0
        %v753 = vadd.f32 0.0, %v752
        %v754 = vpop.f32.mrb[0].mxu0
        %v755 = vadd.f32 0.0, %v754
        %v756 = vpop.f32.mrb[0].mxu0
        %v757 = vadd.f32 0.0, %v756
        %758 = vmatprep.mubr.bf16.mxu0 0
        %759 = vmatmul.mubr.bf16.gmra.mrb[0].mxu0 %v583
        %v760 = vpop.f32.mrb[0].mxu0
        %v761 = vadd.f32 0.0, %v760
        %v762 = vpop.f32.mrb[0].mxu0
        %v763 = vadd.f32 0.0, %v762
        %v764 = vpop.f32.mrb[0].mxu0
        %v765 = vadd.f32 0.0, %v764
        %v766 = vpop.f32.mrb[0].mxu0
        %v767 = vadd.f32 0.0, %v766
        %768 = vmatprep.mubr.bf16.mxu0 0
        %769 = vmatmul.mubr.bf16.gmra.mrb[0].mxu0 %v586
        %v770 = vpop.f32.mrb[0].mxu0
        %v771 = vadd.f32 0.0, %v770
        %v772 = vpop.f32.mrb[0].mxu0
        %v773 = vadd.f32 0.0, %v772
        %v774 = vpop.f32.mrb[0].mxu0
        %v775 = vadd.f32 0.0, %v774
        %v776 = vpop.f32.mrb[0].mxu0
        %v777 = vadd.f32 0.0, %v776
        %778 = vmatprep.mubr.bf16.mxu0 0
        %779 = vmatmul.mubr.bf16.gmra.mrb[0].mxu0 %v589
        %v780 = vpop.f32.mrb[0].mxu0
        %v781 = vadd.f32 0.0, %v780
        %v782 = vpop.f32.mrb[0].mxu0
        %v783 = vadd.f32 0.0, %v782
        %v784 = vpop.f32.mrb[0].mxu0
        %v785 = vadd.f32 0.0, %v784
        %v786 = vpop.f32.mrb[0].mxu0
        %v787 = vadd.f32 0.0, %v786
        %788 = vdwg.mxu0
        %789 = vmatprep.subr.bf16.mxu0 %v611
        %790 = vmatpush1.bf16.msra.mxu0 %v608
        %791 = vmatprep.subr.bf16.mxu0 0
        %792 = vmatpush1.bf16.msra.mxu0 0
        %793 = vmatprep.subr.bf16.mxu0 0
        %794 = vmatpush1.bf16.msra.mxu0 0
        %795 = vmatprep.subr.bf16.mxu0 0
        %796 = vmatpush1.bf16.msra.mxu0 0
        %797 = vmatprep.subr.bf16.mxu0 0
        %798 = vmatpush1.bf16.msra.mxu0 0
        %799 = vmatprep.subr.bf16.mxu0 0
        %800 = vmatpush1.bf16.msra.mxu0 0
        %801 = vmatprep.subr.bf16.mxu0 0
        %802 = vmatpush1.bf16.msra.mxu0 0
        %803 = vmatprep.subr.bf16.mxu0 0
        %804 = vmatpush1.bf16.msra.mxu0 0
        %805 = vmatprep.subr.bf16.mxu0 0
        %806 = vmatpush1.bf16.msra.mxu0 0
        %807 = vmatprep.subr.bf16.mxu0 0
        %808 = vmatpush1.bf16.msra.mxu0 0
        %809 = vmatprep.subr.bf16.mxu0 0
        %810 = vmatpush1.bf16.msra.mxu0 0
        %811 = vmatprep.subr.bf16.mxu0 0
        %812 = vmatpush1.bf16.msra.mxu0 0
        %813 = vmatprep.subr.bf16.mxu0 0
        %814 = vmatpush1.bf16.msra.mxu0 0
        %815 = vmatprep.subr.bf16.mxu0 0
        %816 = vmatpush1.bf16.msra.mxu0 0
        %817 = vmatprep.subr.bf16.mxu0 0
        %818 = vmatpush1.bf16.msra.mxu0 0
        %819 = vmatprep.subr.bf16.mxu0 0
        %820 = vmatpush1.bf16.msra.mxu0 0
        %821 = vmatprep.mubr.bf16.mxu0 0
        %822 = vmatmul.mubr.bf16.gmra.mrb[0].mxu0 %v580
        %v823 = vpop.f32.mrb[0].mxu0
        %v824 = vadd.f32 0.0, %v823
        %v825 = vpop.f32.mrb[0].mxu0
        %v826 = vadd.f32 0.0, %v825
        %v827 = vpop.f32.mrb[0].mxu0
        %v828 = vadd.f32 0.0, %v827
        %v829 = vpop.f32.mrb[0].mxu0
        %v830 = vadd.f32 0.0, %v829
        %831 = vmatprep.mubr.bf16.mxu0 0
        %832 = vmatmul.mubr.bf16.gmra.mrb[0].mxu0 %v583
        %v833 = vpop.f32.mrb[0].mxu0
        %v834 = vadd.f32 0.0, %v833
        %v835 = vpop.f32.mrb[0].mxu0
        %v836 = vadd.f32 0.0, %v835
        %v837 = vpop.f32.mrb[0].mxu0
        %v838 = vadd.f32 0.0, %v837
        %v839 = vpop.f32.mrb[0].mxu0
        %v840 = vadd.f32 0.0, %v839
        %841 = vmatprep.mubr.bf16.mxu0 0
        %842 = vmatmul.mubr.bf16.gmra.mrb[0].mxu0 %v586
        %v843 = vpop.f32.mrb[0].mxu0
        %v844 = vadd.f32 0.0, %v843
        %v845 = vpop.f32.mrb[0].mxu0
        %v846 = vadd.f32 0.0, %v845
        %v847 = vpop.f32.mrb[0].mxu0
        %v848 = vadd.f32 0.0, %v847
        %v849 = vpop.f32.mrb[0].mxu0
        %v850 = vadd.f32 0.0, %v849
        %851 = vmatprep.mubr.bf16.mxu0 0
        %852 = vmatmul.mubr.bf16.gmra.mrb[0].mxu0 %v589
        %v853 = vpop.f32.mrb[0].mxu0
        %v854 = vadd.f32 0.0, %v853
        %v855 = vpop.f32.mrb[0].mxu0
        %v856 = vadd.f32 0.0, %v855
        %v857 = vpop.f32.mrb[0].mxu0
        %v858 = vadd.f32 0.0, %v857
        %v859 = vpop.f32.mrb[0].mxu0
        %v860 = vadd.f32 0.0, %v859
        %861 = vdwg.mxu0
        %862 = vmatprep.subr.bf16.mxu0 %v617
        %863 = vmatpush1.bf16.msra.mxu0 %v614
        %864 = vmatprep.subr.bf16.mxu0 0
        %865 = vmatpush1.bf16.msra.mxu0 0
        %866 = vmatprep.subr.bf16.mxu0 0
        %867 = vmatpush1.bf16.msra.mxu0 0
        %868 = vmatprep.subr.bf16.mxu0 0
        %869 = vmatpush1.bf16.msra.mxu0 0
        %870 = vmatprep.subr.bf16.mxu0 0
        %871 = vmatpush1.bf16.msra.mxu0 0
        %872 = vmatprep.subr.bf16.mxu0 0
        %873 = vmatpush1.bf16.msra.mxu0 0
        %874 = vmatprep.subr.bf16.mxu0 0
        %875 = vmatpush1.bf16.msra.mxu0 0
        %876 = vmatprep.subr.bf16.mxu0 0
        %877 = vmatpush1.bf16.msra.mxu0 0
        %878 = vmatprep.subr.bf16.mxu0 0
        %879 = vmatpush1.bf16.msra.mxu0 0
        %880 = vmatprep.subr.bf16.mxu0 0
        %881 = vmatpush1.bf16.msra.mxu0 0
        %882 = vmatprep.subr.bf16.mxu0 0
        %883 = vmatpush1.bf16.msra.mxu0 0
        %884 = vmatprep.subr.bf16.mxu0 0
        %885 = vmatpush1.bf16.msra.mxu0 0
        %886 = vmatprep.subr.bf16.mxu0 0
        %887 = vmatpush1.bf16.msra.mxu0 0
        %888 = vmatprep.subr.bf16.mxu0 0
        %889 = vmatpush1.bf16.msra.mxu0 0
        %890 = vmatprep.subr.bf16.mxu0 0
        %891 = vmatpush1.bf16.msra.mxu0 0
        %892 = vmatprep.subr.bf16.mxu0 0
        %893 = vmatpush1.bf16.msra.mxu0 0
        %894 = vmatprep.mubr.bf16.mxu0 0
        %895 = vmatmul.mubr.bf16.gmra.mrb[0].mxu0 %v580
        %v896 = vpop.f32.mrb[0].mxu0
        %v897 = vadd.f32 0.0, %v896
        %v898 = vpop.f32.mrb[0].mxu0
        %v899 = vadd.f32 0.0, %v898
        %v900 = vpop.f32.mrb[0].mxu0
        %v901 = vadd.f32 0.0, %v900
        %v902 = vpop.f32.mrb[0].mxu0
        %v903 = vadd.f32 0.0, %v902
        %904 = vmatprep.mubr.bf16.mxu0 0
        %905 = vmatmul.mubr.bf16.gmra.mrb[0].mxu0 %v583
        %v906 = vpop.f32.mrb[0].mxu0
        %v907 = vadd.f32 0.0, %v906
        %v908 = vpop.f32.mrb[0].mxu0
        %v909 = vadd.f32 0.0, %v908
        %v910 = vpop.f32.mrb[0].mxu0
        %v911 = vadd.f32 0.0, %v910
        %v912 = vpop.f32.mrb[0].mxu0
        %v913 = vadd.f32 0.0, %v912
        %914 = vmatprep.mubr.bf16.mxu0 0
        %915 = vmatmul.mubr.bf16.gmra.mrb[0].mxu0 %v586
        %v916 = vpop.f32.mrb[0].mxu0
        %v917 = vadd.f32 0.0, %v916
        %v918 = vpop.f32.mrb[0].mxu0
        %v919 = vadd.f32 0.0, %v918
        %v920 = vpop.f32.mrb[0].mxu0
        %v921 = vadd.f32 0.0, %v920
        %v922 = vpop.f32.mrb[0].mxu0
        %v923 = vadd.f32 0.0, %v922
        %924 = vmatprep.mubr.bf16.mxu0 0
        %925 = vmatmul.mubr.bf16.gmra.mrb[0].mxu0 %v589
        %v926 = vpop.f32.mrb[0].mxu0
        %v927 = vadd.f32 0.0, %v926
        %v928 = vpop.f32.mrb[0].mxu0
        %v929 = vadd.f32 0.0, %v928
        %v930 = vpop.f32.mrb[0].mxu0
        %v931 = vadd.f32 0.0, %v930
        %v932 = vpop.f32.mrb[0].mxu0
        %v933 = vadd.f32 0.0, %v932
        %934 = vdwg.mxu0
        %935 = vmatprep.subr.bf16.mxu0 %v623
        %936 = vmatpush1.bf16.msra.mxu0 %v620
        %937 = vmatprep.subr.bf16.mxu0 0
        %938 = vmatpush1.bf16.msra.mxu0 0
        %939 = vmatprep.subr.bf16.mxu0 0
        %940 = vmatpush1.bf16.msra.mxu0 0
        %941 = vmatprep.subr.bf16.mxu0 0
        %942 = vmatpush1.bf16.msra.mxu0 0
        %943 = vmatprep.subr.bf16.mxu0 0
        %944 = vmatpush1.bf16.msra.mxu0 0
        %945 = vmatprep.subr.bf16.mxu0 0
        %946 = vmatpush1.bf16.msra.mxu0 0
        %947 = vmatprep.subr.bf16.mxu0 0
        %948 = vmatpush1.bf16.msra.mxu0 0
        %949 = vmatprep.subr.bf16.mxu0 0
        %950 = vmatpush1.bf16.msra.mxu0 0
        %951 = vmatprep.subr.bf16.mxu0 0
        %952 = vmatpush1.bf16.msra.mxu0 0
        %953 = vmatprep.subr.bf16.mxu0 0
        %954 = vmatpush1.bf16.msra.mxu0 0
        %955 = vmatprep.subr.bf16.mxu0 0
        %956 = vmatpush1.bf16.msra.mxu0 0
        %957 = vmatprep.subr.bf16.mxu0 0
        %958 = vmatpush1.bf16.msra.mxu0 0
        %959 = vmatprep.subr.bf16.mxu0 0
        %960 = vmatpush1.bf16.msra.mxu0 0
        %961 = vmatprep.subr.bf16.mxu0 0
        %962 = vmatpush1.bf16.msra.mxu0 0
        %963 = vmatprep.subr.bf16.mxu0 0
        %964 = vmatpush1.bf16.msra.mxu0 0
        %965 = vmatprep.subr.bf16.mxu0 0
        %966 = vmatpush1.bf16.msra.mxu0 0
        %967 = vmatprep.mubr.bf16.mxu0 0
        %968 = vmatmul.mubr.bf16.gmra.mrb[0].mxu0 %v580
        %v969 = vpop.f32.mrb[0].mxu0
        %v970 = vadd.f32 0.0, %v969
        %v971 = vpop.f32.mrb[0].mxu0
        %v972 = vadd.f32 0.0, %v971
        %v973 = vpop.f32.mrb[0].mxu0
        %v974 = vadd.f32 0.0, %v973
        %v975 = vpop.f32.mrb[0].mxu0
        %v976 = vadd.f32 0.0, %v975
        %977 = vmatprep.mubr.bf16.mxu0 0
        %978 = vmatmul.mubr.bf16.gmra.mrb[0].mxu0 %v583
        %v979 = vpop.f32.mrb[0].mxu0
        %v980 = vadd.f32 0.0, %v979
        %v981 = vpop.f32.mrb[0].mxu0
        %v982 = vadd.f32 0.0, %v981
        %v983 = vpop.f32.mrb[0].mxu0
        %v984 = vadd.f32 0.0, %v983
        %v985 = vpop.f32.mrb[0].mxu0
        %v986 = vadd.f32 0.0, %v985
        %987 = vmatprep.mubr.bf16.mxu0 0
        %988 = vmatmul.mubr.bf16.gmra.mrb[0].mxu0 %v586
        %v989 = vpop.f32.mrb[0].mxu0
        %v990 = vadd.f32 0.0, %v989
        %v991 = vpop.f32.mrb[0].mxu0
        %v992 = vadd.f32 0.0, %v991
        %v993 = vpop.f32.mrb[0].mxu0
        %v994 = vadd.f32 0.0, %v993
        %v995 = vpop.f32.mrb[0].mxu0
        %v996 = vadd.f32 0.0, %v995
        %997 = vmatprep.mubr.bf16.mxu0 0
        %998 = vmatmul.mubr.bf16.gmra.mrb[0].mxu0 %v589
        %v999 = vpop.f32.mrb[0].mxu0
        %v1000 = vadd.f32 0.0, %v999
        %v1001 = vpop.f32.mrb[0].mxu0
        %v1002 = vadd.f32 0.0, %v1001
        %v1003 = vpop.f32.mrb[0].mxu0
        %v1004 = vadd.f32 0.0, %v1003
        %v1005 = vpop.f32.mrb[0].mxu0
        %v1006 = vadd.f32 0.0, %v1005
        %1007 = vdwg.mxu0
        %1008 = vmatprep.subr.bf16.mxu0 %v629
        %1009 = vmatpush1.bf16.msra.mxu0 %v626
        %1010 = vmatprep.subr.bf16.mxu0 0
        %1011 = vmatpush1.bf16.msra.mxu0 0
        %1012 = vmatprep.subr.bf16.mxu0 0
        %1013 = vmatpush1.bf16.msra.mxu0 0
        %1014 = vmatprep.subr.bf16.mxu0 0
        %1015 = vmatpush1.bf16.msra.mxu0 0
        %1016 = vmatprep.subr.bf16.mxu0 0
        %1017 = vmatpush1.bf16.msra.mxu0 0
        %1018 = vmatprep.subr.bf16.mxu0 0
        %1019 = vmatpush1.bf16.msra.mxu0 0
        %1020 = vmatprep.subr.bf16.mxu0 0
        %1021 = vmatpush1.bf16.msra.mxu0 0
        %1022 = vmatprep.subr.bf16.mxu0 0
        %1023 = vmatpush1.bf16.msra.mxu0 0
        %1024 = vmatprep.subr.bf16.mxu0 0
        %1025 = vmatpush1.bf16.msra.mxu0 0
        %1026 = vmatprep.subr.bf16.mxu0 0
        %1027 = vmatpush1.bf16.msra.mxu0 0
        %1028 = vmatprep.subr.bf16.mxu0 0
        %1029 = vmatpush1.bf16.msra.mxu0 0
        %1030 = vmatprep.subr.bf16.mxu0 0
        %1031 = vmatpush1.bf16.msra.mxu0 0
        %1032 = vmatprep.subr.bf16.mxu0 0
        %1033 = vmatpush1.bf16.msra.mxu0 0
        %1034 = vmatprep.subr.bf16.mxu0 0
        %1035 = vmatpush1.bf16.msra.mxu0 0
        %1036 = vmatprep.subr.bf16.mxu0 0
        %1037 = vmatpush1.bf16.msra.mxu0 0
        %1038 = vmatprep.subr.bf16.mxu0 0
        %1039 = vmatpush1.bf16.msra.mxu0 0
        %1040 = vmatprep.mubr.bf16.mxu0 0
        %1041 = vmatmul.mubr.bf16.gmra.mrb[0].mxu0 %v580
        %v1042 = vpop.f32.mrb[0].mxu0
        %v1043 = vadd.f32 0.0, %v1042
        %v1044 = vpop.f32.mrb[0].mxu0
        %v1045 = vadd.f32 0.0, %v1044
        %v1046 = vpop.f32.mrb[0].mxu0
        %v1047 = vadd.f32 0.0, %v1046
        %v1048 = vpop.f32.mrb[0].mxu0
        %v1049 = vadd.f32 0.0, %v1048
        %1050 = vmatprep.mubr.bf16.mxu0 0
        %1051 = vmatmul.mubr.bf16.gmra.mrb[0].mxu0 %v583
        %v1052 = vpop.f32.mrb[0].mxu0
        %v1053 = vadd.f32 0.0, %v1052
        %v1054 = vpop.f32.mrb[0].mxu0
        %v1055 = vadd.f32 0.0, %v1054
        %v1056 = vpop.f32.mrb[0].mxu0
        %v1057 = vadd.f32 0.0, %v1056
        %v1058 = vpop.f32.mrb[0].mxu0
        %v1059 = vadd.f32 0.0, %v1058
        %1060 = vmatprep.mubr.bf16.mxu0 0
        %1061 = vmatmul.mubr.bf16.gmra.mrb[0].mxu0 %v586
        %v1062 = vpop.f32.mrb[0].mxu0
        %v1063 = vadd.f32 0.0, %v1062
        %v1064 = vpop.f32.mrb[0].mxu0
        %v1065 = vadd.f32 0.0, %v1064
        %v1066 = vpop.f32.mrb[0].mxu0
        %v1067 = vadd.f32 0.0, %v1066
        %v1068 = vpop.f32.mrb[0].mxu0
        %v1069 = vadd.f32 0.0, %v1068
        %1070 = vmatprep.mubr.bf16.mxu0 0
        %1071 = vmatmul.mubr.bf16.gmra.mrb[0].mxu0 %v589
        %v1072 = vpop.f32.mrb[0].mxu0
        %v1073 = vadd.f32 0.0, %v1072
        %v1074 = vpop.f32.mrb[0].mxu0
        %v1075 = vadd.f32 0.0, %v1074
        %v1076 = vpop.f32.mrb[0].mxu0
        %v1077 = vadd.f32 0.0, %v1076
        %v1078 = vpop.f32.mrb[0].mxu0
        %v1079 = vadd.f32 0.0, %v1078
        %1080 = vdwg.mxu0
        %1081 = vmatprep.subr.bf16.mxu0 %v635
        %1082 = vmatpush1.bf16.msra.mxu0 %v632
        %1083 = vmatprep.subr.bf16.mxu0 0
        %1084 = vmatpush1.bf16.msra.mxu0 0
        %1085 = vmatprep.subr.bf16.mxu0 0
        %1086 = vmatpush1.bf16.msra.mxu0 0
        %1087 = vmatprep.subr.bf16.mxu0 0
        %1088 = vmatpush1.bf16.msra.mxu0 0
        %1089 = vmatprep.subr.bf16.mxu0 0
        %1090 = vmatpush1.bf16.msra.mxu0 0
        %1091 = vmatprep.subr.bf16.mxu0 0
        %1092 = vmatpush1.bf16.msra.mxu0 0
        %1093 = vmatprep.subr.bf16.mxu0 0
        %1094 = vmatpush1.bf16.msra.mxu0 0
        %1095 = vmatprep.subr.bf16.mxu0 0
        %1096 = vmatpush1.bf16.msra.mxu0 0
        %1097 = vmatprep.subr.bf16.mxu0 0
        %1098 = vmatpush1.bf16.msra.mxu0 0
        %1099 = vmatprep.subr.bf16.mxu0 0
        %1100 = vmatpush1.bf16.msra.mxu0 0
        %1101 = vmatprep.subr.bf16.mxu0 0
        %1102 = vmatpush1.bf16.msra.mxu0 0
        %1103 = vmatprep.subr.bf16.mxu0 0
        %1104 = vmatpush1.bf16.msra.mxu0 0
        %1105 = vmatprep.subr.bf16.mxu0 0
        %1106 = vmatpush1.bf16.msra.mxu0 0
        %1107 = vmatprep.subr.bf16.mxu0 0
        %1108 = vmatpush1.bf16.msra.mxu0 0
        %1109 = vmatprep.subr.bf16.mxu0 0
        %1110 = vmatpush1.bf16.msra.mxu0 0
        %1111 = vmatprep.subr.bf16.mxu0 0
        %1112 = vmatpush1.bf16.msra.mxu0 0
        %1113 = vmatprep.mubr.bf16.mxu0 0
        %1114 = vmatmul.mubr.bf16.gmra.mrb[0].mxu0 %v580
        %v1115 = vpop.f32.mrb[0].mxu0
        %v1116 = vadd.f32 0.0, %v1115
        %v1117 = vpop.f32.mrb[0].mxu0
        %v1118 = vadd.f32 0.0, %v1117
        %v1119 = vpop.f32.mrb[0].mxu0
        %v1120 = vadd.f32 0.0, %v1119
        %v1121 = vpop.f32.mrb[0].mxu0
        %v1122 = vadd.f32 0.0, %v1121
        %1123 = vmatprep.mubr.bf16.mxu0 0
        %1124 = vmatmul.mubr.bf16.gmra.mrb[0].mxu0 %v583
        %v1125 = vpop.f32.mrb[0].mxu0
        %v1126 = vadd.f32 0.0, %v1125
        %v1127 = vpop.f32.mrb[0].mxu0
        %v1128 = vadd.f32 0.0, %v1127
        %v1129 = vpop.f32.mrb[0].mxu0
        %v1130 = vadd.f32 0.0, %v1129
        %v1131 = vpop.f32.mrb[0].mxu0
        %v1132 = vadd.f32 0.0, %v1131
        %1133 = vmatprep.mubr.bf16.mxu0 0
        %1134 = vmatmul.mubr.bf16.gmra.mrb[0].mxu0 %v586
        %v1135 = vpop.f32.mrb[0].mxu0
        %v1136 = vadd.f32 0.0, %v1135
        %v1137 = vpop.f32.mrb[0].mxu0
        %v1138 = vadd.f32 0.0, %v1137
        %v1139 = vpop.f32.mrb[0].mxu0
        %v1140 = vadd.f32 0.0, %v1139
        %v1141 = vpop.f32.mrb[0].mxu0
        %v1142 = vadd.f32 0.0, %v1141
        %1143 = vmatprep.mubr.bf16.mxu0 0
        %1144 = vmatmul.mubr.bf16.gmra.mrb[0].mxu0 %v589
        %v1145 = vpop.f32.mrb[0].mxu0
        %v1146 = vadd.f32 0.0, %v1145
        %v1147 = vpop.f32.mrb[0].mxu0
        %v1148 = vadd.f32 0.0, %v1147
        %v1149 = vpop.f32.mrb[0].mxu0
        %v1150 = vadd.f32 0.0, %v1149
        %v1151 = vpop.f32.mrb[0].mxu0
        %v1152 = vadd.f32 0.0, %v1151
        %1153 = vdwg.mxu0
        %1154 = vmatprep.subr.bf16.mxu0 %v641
        %1155 = vmatpush1.bf16.msra.mxu0 %v638
        %1156 = vmatprep.subr.bf16.mxu0 0
        %1157 = vmatpush1.bf16.msra.mxu0 0
        %1158 = vmatprep.subr.bf16.mxu0 0
        %1159 = vmatpush1.bf16.msra.mxu0 0
        %1160 = vmatprep.subr.bf16.mxu0 0
        %1161 = vmatpush1.bf16.msra.mxu0 0
        %1162 = vmatprep.subr.bf16.mxu0 0
        %1163 = vmatpush1.bf16.msra.mxu0 0
        %1164 = vmatprep.subr.bf16.mxu0 0
        %1165 = vmatpush1.bf16.msra.mxu0 0
        %1166 = vmatprep.subr.bf16.mxu0 0
        %1167 = vmatpush1.bf16.msra.mxu0 0
        %1168 = vmatprep.subr.bf16.mxu0 0
        %1169 = vmatpush1.bf16.msra.mxu0 0
        %1170 = vmatprep.subr.bf16.mxu0 0
        %1171 = vmatpush1.bf16.msra.mxu0 0
        %1172 = vmatprep.subr.bf16.mxu0 0
        %1173 = vmatpush1.bf16.msra.mxu0 0
        %1174 = vmatprep.subr.bf16.mxu0 0
        %1175 = vmatpush1.bf16.msra.mxu0 0
        %1176 = vmatprep.subr.bf16.mxu0 0
        %1177 = vmatpush1.bf16.msra.mxu0 0
        %1178 = vmatprep.subr.bf16.mxu0 0
        %1179 = vmatpush1.bf16.msra.mxu0 0
        %1180 = vmatprep.subr.bf16.mxu0 0
        %1181 = vmatpush1.bf16.msra.mxu0 0
        %1182 = vmatprep.subr.bf16.mxu0 0
        %1183 = vmatpush1.bf16.msra.mxu0 0
        %1184 = vmatprep.subr.bf16.mxu0 0
        %1185 = vmatpush1.bf16.msra.mxu0 0
        %1186 = vmatprep.mubr.bf16.mxu0 0
        %1187 = vmatmul.mubr.bf16.gmra.mrb[0].mxu0 %v580
        %v1188 = vpop.f32.mrb[0].mxu0
        %v1189 = vadd.f32 0.0, %v1188
        %v1190 = vpop.f32.mrb[0].mxu0
        %v1191 = vadd.f32 0.0, %v1190
        %v1192 = vpop.f32.mrb[0].mxu0
        %v1193 = vadd.f32 0.0, %v1192
        %v1194 = vpop.f32.mrb[0].mxu0
        %v1195 = vadd.f32 0.0, %v1194
        %1196 = vmatprep.mubr.bf16.mxu0 0
        %1197 = vmatmul.mubr.bf16.gmra.mrb[0].mxu0 %v583
        %v1198 = vpop.f32.mrb[0].mxu0
        %v1199 = vadd.f32 0.0, %v1198
        %v1200 = vpop.f32.mrb[0].mxu0
        %v1201 = vadd.f32 0.0, %v1200
        %v1202 = vpop.f32.mrb[0].mxu0
        %v1203 = vadd.f32 0.0, %v1202
        %v1204 = vpop.f32.mrb[0].mxu0
        %v1205 = vadd.f32 0.0, %v1204
        %1206 = vmatprep.mubr.bf16.mxu0 0
        %1207 = vmatmul.mubr.bf16.gmra.mrb[0].mxu0 %v586
        %v1208 = vpop.f32.mrb[0].mxu0
        %v1209 = vadd.f32 0.0, %v1208
        %v1210 = vpop.f32.mrb[0].mxu0
        %v1211 = vadd.f32 0.0, %v1210
        %v1212 = vpop.f32.mrb[0].mxu0
        %v1213 = vadd.f32 0.0, %v1212
        %v1214 = vpop.f32.mrb[0].mxu0
        %v1215 = vadd.f32 0.0, %v1214
        %1216 = vmatprep.mubr.bf16.mxu0 0
        %1217 = vmatmul.mubr.bf16.gmra.mrb[0].mxu0 %v589
        %v1218 = vpop.f32.mrb[0].mxu0
        %v1219 = vadd.f32 0.0, %v1218
        %v1220 = vpop.f32.mrb[0].mxu0
        %v1221 = vadd.f32 0.0, %v1220
        %v1222 = vpop.f32.mrb[0].mxu0
        %v1223 = vadd.f32 0.0, %v1222
        %v1224 = vpop.f32.mrb[0].mxu0
        %v1225 = vadd.f32 0.0, %v1224
        %1226 = vdwg.mxu0
        %v1227 = vmax.f32 %v678, 0.0
        %v1228 = vmax.f32 %v680, 0.0
        %v1229 = vmax.f32 %v751, 0.0
        %v1230 = vmax.f32 %v753, 0.0
        %v1231 = vmax.f32 %v824, 0.0
        %v1232 = vmax.f32 %v826, 0.0
        %v1233 = vmax.f32 %v897, 0.0
        %v1234 = vmax.f32 %v899, 0.0
        %v1235 = vmax.f32 %v970, 0.0
        %v1236 = vmax.f32 %v972, 0.0
        %v1237 = vmax.f32 %v1043, 0.0
        %v1238 = vmax.f32 %v1045, 0.0
        %v1239 = vmax.f32 %v1116, 0.0
        %v1240 = vmax.f32 %v1118, 0.0
        %v1241 = vmax.f32 %v1189, 0.0
        %v1242 = vmax.f32 %v1191, 0.0
        %v1243 = vmax.f32 %v682, 0.0
        %v1244 = vmax.f32 %v684, 0.0
        %v1245 = vmax.f32 %v755, 0.0
        %v1246 = vmax.f32 %v757, 0.0
        %v1247 = vmax.f32 %v828, 0.0
        %v1248 = vmax.f32 %v830, 0.0
        %v1249 = vmax.f32 %v901, 0.0
        %v1250 = vmax.f32 %v903, 0.0
        %v1251 = vmax.f32 %v974, 0.0
        %v1252 = vmax.f32 %v976, 0.0
        %v1253 = vmax.f32 %v1047, 0.0
        %v1254 = vmax.f32 %v1049, 0.0
        %v1255 = vmax.f32 %v1120, 0.0
        %v1256 = vmax.f32 %v1122, 0.0
        %v1257 = vmax.f32 %v1193, 0.0
        %v1258 = vmax.f32 %v1195, 0.0
        %v1259 = vmax.f32 %v688, 0.0
        %v1260 = vmax.f32 %v690, 0.0
        %v1261 = vmax.f32 %v761, 0.0
        %v1262 = vmax.f32 %v763, 0.0
        %v1263 = vmax.f32 %v834, 0.0
        %v1264 = vmax.f32 %v836, 0.0
        %v1265 = vmax.f32 %v907, 0.0
        %v1266 = vmax.f32 %v909, 0.0
        %v1267 = vmax.f32 %v980, 0.0
        %v1268 = vmax.f32 %v982, 0.0
        %v1269 = vmax.f32 %v1053, 0.0
        %v1270 = vmax.f32 %v1055, 0.0
        %v1271 = vmax.f32 %v1126, 0.0
        %v1272 = vmax.f32 %v1128, 0.0
        %v1273 = vmax.f32 %v1199, 0.0
        %v1274 = vmax.f32 %v1201, 0.0
        %v1275 = vmax.f32 %v692, 0.0
        %v1276 = vmax.f32 %v694, 0.0
        %v1277 = vmax.f32 %v765, 0.0
        %v1278 = vmax.f32 %v767, 0.0
        %v1279 = vmax.f32 %v838, 0.0
        %v1280 = vmax.f32 %v840, 0.0
        %v1281 = vmax.f32 %v911, 0.0
        %v1282 = vmax.f32 %v913, 0.0
        %v1283 = vmax.f32 %v984, 0.0
        %v1284 = vmax.f32 %v986, 0.0
        %v1285 = vmax.f32 %v1057, 0.0
        %v1286 = vmax.f32 %v1059, 0.0
        %v1287 = vmax.f32 %v1130, 0.0
        %v1288 = vmax.f32 %v1132, 0.0
        %v1289 = vmax.f32 %v1203, 0.0
        %v1290 = vmax.f32 %v1205, 0.0
        %v1291 = vmax.f32 %v698, 0.0
        %v1292 = vmax.f32 %v700, 0.0
        %v1293 = vmax.f32 %v771, 0.0
        %v1294 = vmax.f32 %v773, 0.0
        %v1295 = vmax.f32 %v844, 0.0
        %v1296 = vmax.f32 %v846, 0.0
        %v1297 = vmax.f32 %v917, 0.0
        %v1298 = vmax.f32 %v919, 0.0
        %v1299 = vmax.f32 %v990, 0.0
        %v1300 = vmax.f32 %v992, 0.0
        %v1301 = vmax.f32 %v1063, 0.0
        %v1302 = vmax.f32 %v1065, 0.0
        %v1303 = vmax.f32 %v1136, 0.0
        %v1304 = vmax.f32 %v1138, 0.0
        %v1305 = vmax.f32 %v1209, 0.0
        %v1306 = vmax.f32 %v1211, 0.0
        %v1307 = vmax.f32 %v702, 0.0
        %v1308 = vmax.f32 %v704, 0.0
        %v1309 = vmax.f32 %v775, 0.0
        %v1310 = vmax.f32 %v777, 0.0
        %v1311 = vmax.f32 %v848, 0.0
        %v1312 = vmax.f32 %v850, 0.0
        %v1313 = vmax.f32 %v921, 0.0
        %v1314 = vmax.f32 %v923, 0.0
        %v1315 = vmax.f32 %v994, 0.0
        %v1316 = vmax.f32 %v996, 0.0
        %v1317 = vmax.f32 %v1067, 0.0
        %v1318 = vmax.f32 %v1069, 0.0
        %v1319 = vmax.f32 %v1140, 0.0
        %v1320 = vmax.f32 %v1142, 0.0
        %v1321 = vmax.f32 %v1213, 0.0
        %v1322 = vmax.f32 %v1215, 0.0
        %v1323 = vmax.f32 %v708, 0.0
        %v1324 = vmax.f32 %v710, 0.0
        %v1325 = vmax.f32 %v781, 0.0
        %v1326 = vmax.f32 %v783, 0.0
        %v1327 = vmax.f32 %v854, 0.0
        %v1328 = vmax.f32 %v856, 0.0
        %v1329 = vmax.f32 %v927, 0.0
        %v1330 = vmax.f32 %v929, 0.0
        %v1331 = vmax.f32 %v1000, 0.0
        %v1332 = vmax.f32 %v1002, 0.0
        %v1333 = vmax.f32 %v1073, 0.0
        %v1334 = vmax.f32 %v1075, 0.0
        %v1335 = vmax.f32 %v1146, 0.0
        %v1336 = vmax.f32 %v1148, 0.0
        %v1337 = vmax.f32 %v1219, 0.0
        %v1338 = vmax.f32 %v1221, 0.0
        %v1339 = vmax.f32 %v712, 0.0
        %v1340 = vmax.f32 %v714, 0.0
        %v1341 = vmax.f32 %v785, 0.0
        %v1342 = vmax.f32 %v787, 0.0
        %v1343 = vmax.f32 %v858, 0.0
        %v1344 = vmax.f32 %v860, 0.0
        %v1345 = vmax.f32 %v931, 0.0
        %v1346 = vmax.f32 %v933, 0.0
        %v1347 = vmax.f32 %v1004, 0.0
        %v1348 = vmax.f32 %v1006, 0.0
        %v1349 = vmax.f32 %v1077, 0.0
        %v1350 = vmax.f32 %v1079, 0.0
        %v1351 = vmax.f32 %v1150, 0.0
        %v1352 = vmax.f32 %v1152, 0.0
        %v1353 = vmax.f32 %v1223, 0.0
        %v1354 = vmax.f32 %v1225, 0.0
        %v1355 = vld [vmem:[%s3] sm:$0xf]
        %v1356 = vld [vmem:[%s3 + $0x4] sm:$0xf]
        %v1357 = vld [vmem:[%s3 + $0x8] sm:$0xf]
        %v1358 = vld [vmem:[%s3 + $0xc] sm:$0xf]
        %v1359 = vld [vmem:[%s3 + $0x10] sm:$0xf]
        %v1360 = vld [vmem:[%s3 + $0x14] sm:$0xf]
        %v1361 = vld [vmem:[%s3 + $0x18] sm:$0xf]
        %v1362 = vld [vmem:[%s3 + $0x1c] sm:$0xf]
        %v1363 = vpack.c.bf16 %v1243, %v1227
        %v1364 = vpack.c.bf16 %v1244, %v1228
        %v1365 = vpack.c.bf16 %v1245, %v1229
        %v1366 = vpack.c.bf16 %v1246, %v1230
        %v1367 = vpack.c.bf16 %v1247, %v1231
        %v1368 = vpack.c.bf16 %v1248, %v1232
        %v1369 = vpack.c.bf16 %v1249, %v1233
        %v1370 = vpack.c.bf16 %v1250, %v1234
        %v1371 = vpack.c.bf16 %v1251, %v1235
        %v1372 = vpack.c.bf16 %v1252, %v1236
        %v1373 = vpack.c.bf16 %v1253, %v1237
        %v1374 = vpack.c.bf16 %v1254, %v1238
        %v1375 = vpack.c.bf16 %v1255, %v1239
        %v1376 = vpack.c.bf16 %v1256, %v1240
        %v1377 = vpack.c.bf16 %v1257, %v1241
        %v1378 = vpack.c.bf16 %v1258, %v1242
        %v1379 = vpack.c.bf16 %v1275, %v1259
        %v1380 = vpack.c.bf16 %v1276, %v1260
        %v1381 = vpack.c.bf16 %v1277, %v1261
        %v1382 = vpack.c.bf16 %v1278, %v1262
        %v1383 = vpack.c.bf16 %v1279, %v1263
        %v1384 = vpack.c.bf16 %v1280, %v1264
        %v1385 = vpack.c.bf16 %v1281, %v1265
        %v1386 = vpack.c.bf16 %v1282, %v1266
        %v1387 = vpack.c.bf16 %v1283, %v1267
        %v1388 = vpack.c.bf16 %v1284, %v1268
        %v1389 = vpack.c.bf16 %v1285, %v1269
        %v1390 = vpack.c.bf16 %v1286, %v1270
        %v1391 = vpack.c.bf16 %v1287, %v1271
        %v1392 = vpack.c.bf16 %v1288, %v1272
        %v1393 = vpack.c.bf16 %v1289, %v1273
        %v1394 = vpack.c.bf16 %v1290, %v1274
        %v1395 = vpack.c.bf16 %v1307, %v1291
        %v1396 = vpack.c.bf16 %v1308, %v1292
        %v1397 = vpack.c.bf16 %v1309, %v1293
        %v1398 = vpack.c.bf16 %v1310, %v1294
        %v1399 = vpack.c.bf16 %v1311, %v1295
        %v1400 = vpack.c.bf16 %v1312, %v1296
        %v1401 = vpack.c.bf16 %v1313, %v1297
        %v1402 = vpack.c.bf16 %v1314, %v1298
        %v1403 = vpack.c.bf16 %v1315, %v1299
        %v1404 = vpack.c.bf16 %v1316, %v1300
        %v1405 = vpack.c.bf16 %v1317, %v1301
        %v1406 = vpack.c.bf16 %v1318, %v1302
        %v1407 = vpack.c.bf16 %v1319, %v1303
        %v1408 = vpack.c.bf16 %v1320, %v1304
        %v1409 = vpack.c.bf16 %v1321, %v1305
        %v1410 = vpack.c.bf16 %v1322, %v1306
        %v1411 = vpack.c.bf16 %v1339, %v1323
        %v1412 = vpack.c.bf16 %v1340, %v1324
        %v1413 = vpack.c.bf16 %v1341, %v1325
        %v1414 = vpack.c.bf16 %v1342, %v1326
        %v1415 = vpack.c.bf16 %v1343, %v1327
        %v1416 = vpack.c.bf16 %v1344, %v1328
        %v1417 = vpack.c.bf16 %v1345, %v1329
        %v1418 = vpack.c.bf16 %v1346, %v1330
        %v1419 = vpack.c.bf16 %v1347, %v1331
        %v1420 = vpack.c.bf16 %v1348, %v1332
        %v1421 = vpack.c.bf16 %v1349, %v1333
        %v1422 = vpack.c.bf16 %v1350, %v1334
        %v1423 = vpack.c.bf16 %v1351, %v1335
        %v1424 = vpack.c.bf16 %v1352, %v1336
        %v1425 = vpack.c.bf16 %v1353, %v1337
        %v1426 = vpack.c.bf16 %v1354, %v1338
        %v1435 = vunpack.c.l.b16 %v1355
        %v1436 = vunpack.c.l.b16 %v1356
        %v1437 = vunpack.c.l.b16 %v1357
        %v1438 = vunpack.c.l.b16 %v1358
        %v1439 = vunpack.c.l.b16 %v1359
        %v1440 = vunpack.c.l.b16 %v1360
        %v1441 = vunpack.c.l.b16 %v1361
        %v1442 = vunpack.c.l.b16 %v1362
        %v1443 = vpack.c.b16 %v1436, %v1435
        %v1444 = vpack.c.b16 %v1438, %v1437
        %v1445 = vpack.c.b16 %v1440, %v1439
        %v1446 = vpack.c.b16 %v1442, %v1441
        %vm1447 = vcmask 523264
        %v1449 = vsel %vm1447, %v1443, 0
        %v1452 = vsel %vm1447, %v1444, 0
        %v1455 = vsel %vm1447, %v1445, 0
        %v1458 = vsel %vm1447, %v1446, 0
        %1460 = vmatprep.subr.bf16.mxu0 %v1364
        %1461 = vmatpush1.bf16.msra.mxu0 %v1363
        %1462 = vmatprep.subr.bf16.mxu0 %v1380
        %1463 = vmatpush1.bf16.msra.mxu0 %v1379
        %1464 = vmatprep.subr.bf16.mxu0 %v1396
        %1465 = vmatpush1.bf16.msra.mxu0 %v1395
        %1466 = vmatprep.subr.bf16.mxu0 %v1412
        %1467 = vmatpush1.bf16.msra.mxu0 %v1411
        %1468 = vmatprep.subr.bf16.mxu0 0
        %1469 = vmatpush1.bf16.msra.mxu0 0
        %1470 = vmatprep.subr.bf16.mxu0 0
        %1471 = vmatpush1.bf16.msra.mxu0 0
        %1472 = vmatprep.subr.bf16.mxu0 0
        %1473 = vmatpush1.bf16.msra.mxu0 0
        %1474 = vmatprep.subr.bf16.mxu0 0
        %1475 = vmatpush1.bf16.msra.mxu0 0
        %1476 = vmatprep.subr.bf16.mxu0 0
        %1477 = vmatpush1.bf16.msra.mxu0 0
        %1478 = vmatprep.subr.bf16.mxu0 0
        %1479 = vmatpush1.bf16.msra.mxu0 0
        %1480 = vmatprep.subr.bf16.mxu0 0
        %1481 = vmatpush1.bf16.msra.mxu0 0
        %1482 = vmatprep.subr.bf16.mxu0 0
        %1483 = vmatpush1.bf16.msra.mxu0 0
        %1484 = vmatprep.subr.bf16.mxu0 0
        %1485 = vmatpush1.bf16.msra.mxu0 0
        %1486 = vmatprep.subr.bf16.mxu0 0
        %1487 = vmatpush1.bf16.msra.mxu0 0
        %1488 = vmatprep.subr.bf16.mxu0 0
        %1489 = vmatpush1.bf16.msra.mxu0 0
        %1490 = vmatprep.subr.bf16.mxu0 0
        %1491 = vmatpush1.bf16.msra.mxu0 0
        %1492 = vmatprep.mubr.bf16.mxu0 0
        %1493 = vmatmul.mubr.bf16.gmra.mrb[0].mxu0 %v1449
        %v1494 = vpop.f32.mrb[0].mxu0
        %v1495 = vadd.f32 0.0, %v1494
        %v1496 = vpop.f32.mrb[0].mxu0
        %v1497 = vadd.f32 0.0, %v1496
        %v1498 = vpop.f32.mrb[0].mxu0
        %v1499 = vadd.f32 0.0, %v1498
        %v1500 = vpop.f32.mrb[0].mxu0
        %v1501 = vadd.f32 0.0, %v1500
        %1502 = vmatprep.mubr.bf16.mxu0 0
        %1503 = vmatmul.mubr.bf16.gmra.mrb[0].mxu0 %v1452
        %v1504 = vpop.f32.mrb[0].mxu0
        %v1505 = vadd.f32 0.0, %v1504
        %v1506 = vpop.f32.mrb[0].mxu0
        %v1507 = vadd.f32 0.0, %v1506
        %v1508 = vpop.f32.mrb[0].mxu0
        %v1509 = vadd.f32 0.0, %v1508
        %v1510 = vpop.f32.mrb[0].mxu0
        %v1511 = vadd.f32 0.0, %v1510
        %1512 = vmatprep.mubr.bf16.mxu0 0
        %1513 = vmatmul.mubr.bf16.gmra.mrb[0].mxu0 %v1455
        %v1514 = vpop.f32.mrb[0].mxu0
        %v1515 = vadd.f32 0.0, %v1514
        %v1516 = vpop.f32.mrb[0].mxu0
        %v1517 = vadd.f32 0.0, %v1516
        %v1518 = vpop.f32.mrb[0].mxu0
        %v1519 = vadd.f32 0.0, %v1518
        %v1520 = vpop.f32.mrb[0].mxu0
        %v1521 = vadd.f32 0.0, %v1520
        %1522 = vmatprep.mubr.bf16.mxu0 0
        %1523 = vmatmul.mubr.bf16.gmra.mrb[0].mxu0 %v1458
        %v1524 = vpop.f32.mrb[0].mxu0
        %v1525 = vadd.f32 0.0, %v1524
        %v1526 = vpop.f32.mrb[0].mxu0
        %v1527 = vadd.f32 0.0, %v1526
        %v1528 = vpop.f32.mrb[0].mxu0
        %v1529 = vadd.f32 0.0, %v1528
        %v1530 = vpop.f32.mrb[0].mxu0
        %v1531 = vadd.f32 0.0, %v1530
        %1532 = vdwg.mxu0
        %1533 = vmatprep.subr.bf16.mxu0 %v1366
        %1534 = vmatpush1.bf16.msra.mxu0 %v1365
        %1535 = vmatprep.subr.bf16.mxu0 %v1382
        %1536 = vmatpush1.bf16.msra.mxu0 %v1381
        %1537 = vmatprep.subr.bf16.mxu0 %v1398
        %1538 = vmatpush1.bf16.msra.mxu0 %v1397
        %1539 = vmatprep.subr.bf16.mxu0 %v1414
        %1540 = vmatpush1.bf16.msra.mxu0 %v1413
        %1541 = vmatprep.subr.bf16.mxu0 0
        %1542 = vmatpush1.bf16.msra.mxu0 0
        %1543 = vmatprep.subr.bf16.mxu0 0
        %1544 = vmatpush1.bf16.msra.mxu0 0
        %1545 = vmatprep.subr.bf16.mxu0 0
        %1546 = vmatpush1.bf16.msra.mxu0 0
        %1547 = vmatprep.subr.bf16.mxu0 0
        %1548 = vmatpush1.bf16.msra.mxu0 0
        %1549 = vmatprep.subr.bf16.mxu0 0
        %1550 = vmatpush1.bf16.msra.mxu0 0
        %1551 = vmatprep.subr.bf16.mxu0 0
        %1552 = vmatpush1.bf16.msra.mxu0 0
        %1553 = vmatprep.subr.bf16.mxu0 0
        %1554 = vmatpush1.bf16.msra.mxu0 0
        %1555 = vmatprep.subr.bf16.mxu0 0
        %1556 = vmatpush1.bf16.msra.mxu0 0
        %1557 = vmatprep.subr.bf16.mxu0 0
        %1558 = vmatpush1.bf16.msra.mxu0 0
        %1559 = vmatprep.subr.bf16.mxu0 0
        %1560 = vmatpush1.bf16.msra.mxu0 0
        %1561 = vmatprep.subr.bf16.mxu0 0
        %1562 = vmatpush1.bf16.msra.mxu0 0
        %1563 = vmatprep.subr.bf16.mxu0 0
        %1564 = vmatpush1.bf16.msra.mxu0 0
        %1565 = vmatprep.mubr.bf16.mxu0 0
        %1566 = vmatmul.mubr.bf16.gmra.mrb[0].mxu0 %v1449
        %v1567 = vpop.f32.mrb[0].mxu0
        %v1568 = vadd.f32 0.0, %v1567
        %v1569 = vpop.f32.mrb[0].mxu0
        %v1570 = vadd.f32 0.0, %v1569
        %v1571 = vpop.f32.mrb[0].mxu0
        %v1572 = vadd.f32 0.0, %v1571
        %v1573 = vpop.f32.mrb[0].mxu0
        %v1574 = vadd.f32 0.0, %v1573
        %1575 = vmatprep.mubr.bf16.mxu0 0
        %1576 = vmatmul.mubr.bf16.gmra.mrb[0].mxu0 %v1452
        %v1577 = vpop.f32.mrb[0].mxu0
        %v1578 = vadd.f32 0.0, %v1577
        %v1579 = vpop.f32.mrb[0].mxu0
        %v1580 = vadd.f32 0.0, %v1579
        %v1581 = vpop.f32.mrb[0].mxu0
        %v1582 = vadd.f32 0.0, %v1581
        %v1583 = vpop.f32.mrb[0].mxu0
        %v1584 = vadd.f32 0.0, %v1583
        %1585 = vmatprep.mubr.bf16.mxu0 0
        %1586 = vmatmul.mubr.bf16.gmra.mrb[0].mxu0 %v1455
        %v1587 = vpop.f32.mrb[0].mxu0
        %v1588 = vadd.f32 0.0, %v1587
        %v1589 = vpop.f32.mrb[0].mxu0
        %v1590 = vadd.f32 0.0, %v1589
        %v1591 = vpop.f32.mrb[0].mxu0
        %v1592 = vadd.f32 0.0, %v1591
        %v1593 = vpop.f32.mrb[0].mxu0
        %v1594 = vadd.f32 0.0, %v1593
        %1595 = vmatprep.mubr.bf16.mxu0 0
        %1596 = vmatmul.mubr.bf16.gmra.mrb[0].mxu0 %v1458
        %v1597 = vpop.f32.mrb[0].mxu0
        %v1598 = vadd.f32 0.0, %v1597
        %v1599 = vpop.f32.mrb[0].mxu0
        %v1600 = vadd.f32 0.0, %v1599
        %v1601 = vpop.f32.mrb[0].mxu0
        %v1602 = vadd.f32 0.0, %v1601
        %v1603 = vpop.f32.mrb[0].mxu0
        %v1604 = vadd.f32 0.0, %v1603
        %1605 = vdwg.mxu0
        %1606 = vmatprep.subr.bf16.mxu0 %v1368
        %1607 = vmatpush1.bf16.msra.mxu0 %v1367
        %1608 = vmatprep.subr.bf16.mxu0 %v1384
        %1609 = vmatpush1.bf16.msra.mxu0 %v1383
        %1610 = vmatprep.subr.bf16.mxu0 %v1400
        %1611 = vmatpush1.bf16.msra.mxu0 %v1399
        %1612 = vmatprep.subr.bf16.mxu0 %v1416
        %1613 = vmatpush1.bf16.msra.mxu0 %v1415
        %1614 = vmatprep.subr.bf16.mxu0 0
        %1615 = vmatpush1.bf16.msra.mxu0 0
        %1616 = vmatprep.subr.bf16.mxu0 0
        %1617 = vmatpush1.bf16.msra.mxu0 0
        %1618 = vmatprep.subr.bf16.mxu0 0
        %1619 = vmatpush1.bf16.msra.mxu0 0
        %1620 = vmatprep.subr.bf16.mxu0 0
        %1621 = vmatpush1.bf16.msra.mxu0 0
        %1622 = vmatprep.subr.bf16.mxu0 0
        %1623 = vmatpush1.bf16.msra.mxu0 0
        %1624 = vmatprep.subr.bf16.mxu0 0
        %1625 = vmatpush1.bf16.msra.mxu0 0
        %1626 = vmatprep.subr.bf16.mxu0 0
        %1627 = vmatpush1.bf16.msra.mxu0 0
        %1628 = vmatprep.subr.bf16.mxu0 0
        %1629 = vmatpush1.bf16.msra.mxu0 0
        %1630 = vmatprep.subr.bf16.mxu0 0
        %1631 = vmatpush1.bf16.msra.mxu0 0
        %1632 = vmatprep.subr.bf16.mxu0 0
        %1633 = vmatpush1.bf16.msra.mxu0 0
        %1634 = vmatprep.subr.bf16.mxu0 0
        %1635 = vmatpush1.bf16.msra.mxu0 0
        %1636 = vmatprep.subr.bf16.mxu0 0
        %1637 = vmatpush1.bf16.msra.mxu0 0
        %1638 = vmatprep.mubr.bf16.mxu0 0
        %1639 = vmatmul.mubr.bf16.gmra.mrb[0].mxu0 %v1449
        %v1640 = vpop.f32.mrb[0].mxu0
        %v1641 = vadd.f32 0.0, %v1640
        %v1642 = vpop.f32.mrb[0].mxu0
        %v1643 = vadd.f32 0.0, %v1642
        %v1644 = vpop.f32.mrb[0].mxu0
        %v1645 = vadd.f32 0.0, %v1644
        %v1646 = vpop.f32.mrb[0].mxu0
        %v1647 = vadd.f32 0.0, %v1646
        %1648 = vmatprep.mubr.bf16.mxu0 0
        %1649 = vmatmul.mubr.bf16.gmra.mrb[0].mxu0 %v1452
        %v1650 = vpop.f32.mrb[0].mxu0
        %v1651 = vadd.f32 0.0, %v1650
        %v1652 = vpop.f32.mrb[0].mxu0
        %v1653 = vadd.f32 0.0, %v1652
        %v1654 = vpop.f32.mrb[0].mxu0
        %v1655 = vadd.f32 0.0, %v1654
        %v1656 = vpop.f32.mrb[0].mxu0
        %v1657 = vadd.f32 0.0, %v1656
        %1658 = vmatprep.mubr.bf16.mxu0 0
        %1659 = vmatmul.mubr.bf16.gmra.mrb[0].mxu0 %v1455
        %v1660 = vpop.f32.mrb[0].mxu0
        %v1661 = vadd.f32 0.0, %v1660
        %v1662 = vpop.f32.mrb[0].mxu0
        %v1663 = vadd.f32 0.0, %v1662
        %v1664 = vpop.f32.mrb[0].mxu0
        %v1665 = vadd.f32 0.0, %v1664
        %v1666 = vpop.f32.mrb[0].mxu0
        %v1667 = vadd.f32 0.0, %v1666
        %1668 = vmatprep.mubr.bf16.mxu0 0
        %1669 = vmatmul.mubr.bf16.gmra.mrb[0].mxu0 %v1458
        %v1670 = vpop.f32.mrb[0].mxu0
        %v1671 = vadd.f32 0.0, %v1670
        %v1672 = vpop.f32.mrb[0].mxu0
        %v1673 = vadd.f32 0.0, %v1672
        %v1674 = vpop.f32.mrb[0].mxu0
        %v1675 = vadd.f32 0.0, %v1674
        %v1676 = vpop.f32.mrb[0].mxu0
        %v1677 = vadd.f32 0.0, %v1676
        %1678 = vdwg.mxu0
        %1679 = vmatprep.subr.bf16.mxu0 %v1370
        %1680 = vmatpush1.bf16.msra.mxu0 %v1369
        %1681 = vmatprep.subr.bf16.mxu0 %v1386
        %1682 = vmatpush1.bf16.msra.mxu0 %v1385
        %1683 = vmatprep.subr.bf16.mxu0 %v1402
        %1684 = vmatpush1.bf16.msra.mxu0 %v1401
        %1685 = vmatprep.subr.bf16.mxu0 %v1418
        %1686 = vmatpush1.bf16.msra.mxu0 %v1417
        %1687 = vmatprep.subr.bf16.mxu0 0
        %1688 = vmatpush1.bf16.msra.mxu0 0
        %1689 = vmatprep.subr.bf16.mxu0 0
        %1690 = vmatpush1.bf16.msra.mxu0 0
        %1691 = vmatprep.subr.bf16.mxu0 0
        %1692 = vmatpush1.bf16.msra.mxu0 0
        %1693 = vmatprep.subr.bf16.mxu0 0
        %1694 = vmatpush1.bf16.msra.mxu0 0
        %1695 = vmatprep.subr.bf16.mxu0 0
        %1696 = vmatpush1.bf16.msra.mxu0 0
        %1697 = vmatprep.subr.bf16.mxu0 0
        %1698 = vmatpush1.bf16.msra.mxu0 0
        %1699 = vmatprep.subr.bf16.mxu0 0
        %1700 = vmatpush1.bf16.msra.mxu0 0
        %1701 = vmatprep.subr.bf16.mxu0 0
        %1702 = vmatpush1.bf16.msra.mxu0 0
        %1703 = vmatprep.subr.bf16.mxu0 0
        %1704 = vmatpush1.bf16.msra.mxu0 0
        %1705 = vmatprep.subr.bf16.mxu0 0
        %1706 = vmatpush1.bf16.msra.mxu0 0
        %1707 = vmatprep.subr.bf16.mxu0 0
        %1708 = vmatpush1.bf16.msra.mxu0 0
        %1709 = vmatprep.subr.bf16.mxu0 0
        %1710 = vmatpush1.bf16.msra.mxu0 0
        %1711 = vmatprep.mubr.bf16.mxu0 0
        %1712 = vmatmul.mubr.bf16.gmra.mrb[0].mxu0 %v1449
        %v1713 = vpop.f32.mrb[0].mxu0
        %v1714 = vadd.f32 0.0, %v1713
        %v1715 = vpop.f32.mrb[0].mxu0
        %v1716 = vadd.f32 0.0, %v1715
        %v1717 = vpop.f32.mrb[0].mxu0
        %v1718 = vadd.f32 0.0, %v1717
        %v1719 = vpop.f32.mrb[0].mxu0
        %v1720 = vadd.f32 0.0, %v1719
        %1721 = vmatprep.mubr.bf16.mxu0 0
        %1722 = vmatmul.mubr.bf16.gmra.mrb[0].mxu0 %v1452
        %v1723 = vpop.f32.mrb[0].mxu0
        %v1724 = vadd.f32 0.0, %v1723
        %v1725 = vpop.f32.mrb[0].mxu0
        %v1726 = vadd.f32 0.0, %v1725
        %v1727 = vpop.f32.mrb[0].mxu0
        %v1728 = vadd.f32 0.0, %v1727
        %v1729 = vpop.f32.mrb[0].mxu0
        %v1730 = vadd.f32 0.0, %v1729
        %1731 = vmatprep.mubr.bf16.mxu0 0
        %1732 = vmatmul.mubr.bf16.gmra.mrb[0].mxu0 %v1455
        %v1733 = vpop.f32.mrb[0].mxu0
        %v1734 = vadd.f32 0.0, %v1733
        %v1735 = vpop.f32.mrb[0].mxu0
        %v1736 = vadd.f32 0.0, %v1735
        %v1737 = vpop.f32.mrb[0].mxu0
        %v1738 = vadd.f32 0.0, %v1737
        %v1739 = vpop.f32.mrb[0].mxu0
        %v1740 = vadd.f32 0.0, %v1739
        %1741 = vmatprep.mubr.bf16.mxu0 0
        %1742 = vmatmul.mubr.bf16.gmra.mrb[0].mxu0 %v1458
        %v1743 = vpop.f32.mrb[0].mxu0
        %v1744 = vadd.f32 0.0, %v1743
        %v1745 = vpop.f32.mrb[0].mxu0
        %v1746 = vadd.f32 0.0, %v1745
        %v1747 = vpop.f32.mrb[0].mxu0
        %v1748 = vadd.f32 0.0, %v1747
        %v1749 = vpop.f32.mrb[0].mxu0
        %v1750 = vadd.f32 0.0, %v1749
        %1751 = vdwg.mxu0
        %1752 = vmatprep.subr.bf16.mxu0 %v1372
        %1753 = vmatpush1.bf16.msra.mxu0 %v1371
        %1754 = vmatprep.subr.bf16.mxu0 %v1388
        %1755 = vmatpush1.bf16.msra.mxu0 %v1387
        %1756 = vmatprep.subr.bf16.mxu0 %v1404
        %1757 = vmatpush1.bf16.msra.mxu0 %v1403
        %1758 = vmatprep.subr.bf16.mxu0 %v1420
        %1759 = vmatpush1.bf16.msra.mxu0 %v1419
        %1760 = vmatprep.subr.bf16.mxu0 0
        %1761 = vmatpush1.bf16.msra.mxu0 0
        %1762 = vmatprep.subr.bf16.mxu0 0
        %1763 = vmatpush1.bf16.msra.mxu0 0
        %1764 = vmatprep.subr.bf16.mxu0 0
        %1765 = vmatpush1.bf16.msra.mxu0 0
        %1766 = vmatprep.subr.bf16.mxu0 0
        %1767 = vmatpush1.bf16.msra.mxu0 0
        %1768 = vmatprep.subr.bf16.mxu0 0
        %1769 = vmatpush1.bf16.msra.mxu0 0
        %1770 = vmatprep.subr.bf16.mxu0 0
        %1771 = vmatpush1.bf16.msra.mxu0 0
        %1772 = vmatprep.subr.bf16.mxu0 0
        %1773 = vmatpush1.bf16.msra.mxu0 0
        %1774 = vmatprep.subr.bf16.mxu0 0
        %1775 = vmatpush1.bf16.msra.mxu0 0
        %1776 = vmatprep.subr.bf16.mxu0 0
        %1777 = vmatpush1.bf16.msra.mxu0 0
        %1778 = vmatprep.subr.bf16.mxu0 0
        %1779 = vmatpush1.bf16.msra.mxu0 0
        %1780 = vmatprep.subr.bf16.mxu0 0
        %1781 = vmatpush1.bf16.msra.mxu0 0
        %1782 = vmatprep.subr.bf16.mxu0 0
        %1783 = vmatpush1.bf16.msra.mxu0 0
        %1784 = vmatprep.mubr.bf16.mxu0 0
        %1785 = vmatmul.mubr.bf16.gmra.mrb[0].mxu0 %v1449
        %v1786 = vpop.f32.mrb[0].mxu0
        %v1787 = vadd.f32 0.0, %v1786
        %v1788 = vpop.f32.mrb[0].mxu0
        %v1789 = vadd.f32 0.0, %v1788
        %v1790 = vpop.f32.mrb[0].mxu0
        %v1791 = vadd.f32 0.0, %v1790
        %v1792 = vpop.f32.mrb[0].mxu0
        %v1793 = vadd.f32 0.0, %v1792
        %1794 = vmatprep.mubr.bf16.mxu0 0
        %1795 = vmatmul.mubr.bf16.gmra.mrb[0].mxu0 %v1452
        %v1796 = vpop.f32.mrb[0].mxu0
        %v1797 = vadd.f32 0.0, %v1796
        %v1798 = vpop.f32.mrb[0].mxu0
        %v1799 = vadd.f32 0.0, %v1798
        %v1800 = vpop.f32.mrb[0].mxu0
        %v1801 = vadd.f32 0.0, %v1800
        %v1802 = vpop.f32.mrb[0].mxu0
        %v1803 = vadd.f32 0.0, %v1802
        %1804 = vmatprep.mubr.bf16.mxu0 0
        %1805 = vmatmul.mubr.bf16.gmra.mrb[0].mxu0 %v1455
        %v1806 = vpop.f32.mrb[0].mxu0
        %v1807 = vadd.f32 0.0, %v1806
        %v1808 = vpop.f32.mrb[0].mxu0
        %v1809 = vadd.f32 0.0, %v1808
        %v1810 = vpop.f32.mrb[0].mxu0
        %v1811 = vadd.f32 0.0, %v1810
        %v1812 = vpop.f32.mrb[0].mxu0
        %v1813 = vadd.f32 0.0, %v1812
        %1814 = vmatprep.mubr.bf16.mxu0 0
        %1815 = vmatmul.mubr.bf16.gmra.mrb[0].mxu0 %v1458
        %v1816 = vpop.f32.mrb[0].mxu0
        %v1817 = vadd.f32 0.0, %v1816
        %v1818 = vpop.f32.mrb[0].mxu0
        %v1819 = vadd.f32 0.0, %v1818
        %v1820 = vpop.f32.mrb[0].mxu0
        %v1821 = vadd.f32 0.0, %v1820
        %v1822 = vpop.f32.mrb[0].mxu0
        %v1823 = vadd.f32 0.0, %v1822
        %1824 = vdwg.mxu0
        %1825 = vmatprep.subr.bf16.mxu0 %v1374
        %1826 = vmatpush1.bf16.msra.mxu0 %v1373
        %1827 = vmatprep.subr.bf16.mxu0 %v1390
        %1828 = vmatpush1.bf16.msra.mxu0 %v1389
        %1829 = vmatprep.subr.bf16.mxu0 %v1406
        %1830 = vmatpush1.bf16.msra.mxu0 %v1405
        %1831 = vmatprep.subr.bf16.mxu0 %v1422
        %1832 = vmatpush1.bf16.msra.mxu0 %v1421
        %1833 = vmatprep.subr.bf16.mxu0 0
        %1834 = vmatpush1.bf16.msra.mxu0 0
        %1835 = vmatprep.subr.bf16.mxu0 0
        %1836 = vmatpush1.bf16.msra.mxu0 0
        %1837 = vmatprep.subr.bf16.mxu0 0
        %1838 = vmatpush1.bf16.msra.mxu0 0
        %1839 = vmatprep.subr.bf16.mxu0 0
        %1840 = vmatpush1.bf16.msra.mxu0 0
        %1841 = vmatprep.subr.bf16.mxu0 0
        %1842 = vmatpush1.bf16.msra.mxu0 0
        %1843 = vmatprep.subr.bf16.mxu0 0
        %1844 = vmatpush1.bf16.msra.mxu0 0
        %1845 = vmatprep.subr.bf16.mxu0 0
        %1846 = vmatpush1.bf16.msra.mxu0 0
        %1847 = vmatprep.subr.bf16.mxu0 0
        %1848 = vmatpush1.bf16.msra.mxu0 0
        %1849 = vmatprep.subr.bf16.mxu0 0
        %1850 = vmatpush1.bf16.msra.mxu0 0
        %1851 = vmatprep.subr.bf16.mxu0 0
        %1852 = vmatpush1.bf16.msra.mxu0 0
        %1853 = vmatprep.subr.bf16.mxu0 0
        %1854 = vmatpush1.bf16.msra.mxu0 0
        %1855 = vmatprep.subr.bf16.mxu0 0
        %1856 = vmatpush1.bf16.msra.mxu0 0
        %1857 = vmatprep.mubr.bf16.mxu0 0
        %1858 = vmatmul.mubr.bf16.gmra.mrb[0].mxu0 %v1449
        %v1859 = vpop.f32.mrb[0].mxu0
        %v1860 = vadd.f32 0.0, %v1859
        %v1861 = vpop.f32.mrb[0].mxu0
        %v1862 = vadd.f32 0.0, %v1861
        %v1863 = vpop.f32.mrb[0].mxu0
        %v1864 = vadd.f32 0.0, %v1863
        %v1865 = vpop.f32.mrb[0].mxu0
        %v1866 = vadd.f32 0.0, %v1865
        %1867 = vmatprep.mubr.bf16.mxu0 0
        %1868 = vmatmul.mubr.bf16.gmra.mrb[0].mxu0 %v1452
        %v1869 = vpop.f32.mrb[0].mxu0
        %v1870 = vadd.f32 0.0, %v1869
        %v1871 = vpop.f32.mrb[0].mxu0
        %v1872 = vadd.f32 0.0, %v1871
        %v1873 = vpop.f32.mrb[0].mxu0
        %v1874 = vadd.f32 0.0, %v1873
        %v1875 = vpop.f32.mrb[0].mxu0
        %v1876 = vadd.f32 0.0, %v1875
        %1877 = vmatprep.mubr.bf16.mxu0 0
        %1878 = vmatmul.mubr.bf16.gmra.mrb[0].mxu0 %v1455
        %v1879 = vpop.f32.mrb[0].mxu0
        %v1880 = vadd.f32 0.0, %v1879
        %v1881 = vpop.f32.mrb[0].mxu0
        %v1882 = vadd.f32 0.0, %v1881
        %v1883 = vpop.f32.mrb[0].mxu0
        %v1884 = vadd.f32 0.0, %v1883
        %v1885 = vpop.f32.mrb[0].mxu0
        %v1886 = vadd.f32 0.0, %v1885
        %1887 = vmatprep.mubr.bf16.mxu0 0
        %1888 = vmatmul.mubr.bf16.gmra.mrb[0].mxu0 %v1458
        %v1889 = vpop.f32.mrb[0].mxu0
        %v1890 = vadd.f32 0.0, %v1889
        %v1891 = vpop.f32.mrb[0].mxu0
        %v1892 = vadd.f32 0.0, %v1891
        %v1893 = vpop.f32.mrb[0].mxu0
        %v1894 = vadd.f32 0.0, %v1893
        %v1895 = vpop.f32.mrb[0].mxu0
        %v1896 = vadd.f32 0.0, %v1895
        %1897 = vdwg.mxu0
        %1898 = vmatprep.subr.bf16.mxu0 %v1376
        %1899 = vmatpush1.bf16.msra.mxu0 %v1375
        %1900 = vmatprep.subr.bf16.mxu0 %v1392
        %1901 = vmatpush1.bf16.msra.mxu0 %v1391
        %1902 = vmatprep.subr.bf16.mxu0 %v1408
        %1903 = vmatpush1.bf16.msra.mxu0 %v1407
        %1904 = vmatprep.subr.bf16.mxu0 %v1424
        %1905 = vmatpush1.bf16.msra.mxu0 %v1423
        %1906 = vmatprep.subr.bf16.mxu0 0
        %1907 = vmatpush1.bf16.msra.mxu0 0
        %1908 = vmatprep.subr.bf16.mxu0 0
        %1909 = vmatpush1.bf16.msra.mxu0 0
        %1910 = vmatprep.subr.bf16.mxu0 0
        %1911 = vmatpush1.bf16.msra.mxu0 0
        %1912 = vmatprep.subr.bf16.mxu0 0
        %1913 = vmatpush1.bf16.msra.mxu0 0
        %1914 = vmatprep.subr.bf16.mxu0 0
        %1915 = vmatpush1.bf16.msra.mxu0 0
        %1916 = vmatprep.subr.bf16.mxu0 0
        %1917 = vmatpush1.bf16.msra.mxu0 0
        %1918 = vmatprep.subr.bf16.mxu0 0
        %1919 = vmatpush1.bf16.msra.mxu0 0
        %1920 = vmatprep.subr.bf16.mxu0 0
        %1921 = vmatpush1.bf16.msra.mxu0 0
        %1922 = vmatprep.subr.bf16.mxu0 0
        %1923 = vmatpush1.bf16.msra.mxu0 0
        %1924 = vmatprep.subr.bf16.mxu0 0
        %1925 = vmatpush1.bf16.msra.mxu0 0
        %1926 = vmatprep.subr.bf16.mxu0 0
        %1927 = vmatpush1.bf16.msra.mxu0 0
        %1928 = vmatprep.subr.bf16.mxu0 0
        %1929 = vmatpush1.bf16.msra.mxu0 0
        %1930 = vmatprep.mubr.bf16.mxu0 0
        %1931 = vmatmul.mubr.bf16.gmra.mrb[0].mxu0 %v1449
        %v1932 = vpop.f32.mrb[0].mxu0
        %v1933 = vadd.f32 0.0, %v1932
        %v1934 = vpop.f32.mrb[0].mxu0
        %v1935 = vadd.f32 0.0, %v1934
        %v1936 = vpop.f32.mrb[0].mxu0
        %v1937 = vadd.f32 0.0, %v1936
        %v1938 = vpop.f32.mrb[0].mxu0
        %v1939 = vadd.f32 0.0, %v1938
        %1940 = vmatprep.mubr.bf16.mxu0 0
        %1941 = vmatmul.mubr.bf16.gmra.mrb[0].mxu0 %v1452
        %v1942 = vpop.f32.mrb[0].mxu0
        %v1943 = vadd.f32 0.0, %v1942
        %v1944 = vpop.f32.mrb[0].mxu0
        %v1945 = vadd.f32 0.0, %v1944
        %v1946 = vpop.f32.mrb[0].mxu0
        %v1947 = vadd.f32 0.0, %v1946
        %v1948 = vpop.f32.mrb[0].mxu0
        %v1949 = vadd.f32 0.0, %v1948
        %1950 = vmatprep.mubr.bf16.mxu0 0
        %1951 = vmatmul.mubr.bf16.gmra.mrb[0].mxu0 %v1455
        %v1952 = vpop.f32.mrb[0].mxu0
        %v1953 = vadd.f32 0.0, %v1952
        %v1954 = vpop.f32.mrb[0].mxu0
        %v1955 = vadd.f32 0.0, %v1954
        %v1956 = vpop.f32.mrb[0].mxu0
        %v1957 = vadd.f32 0.0, %v1956
        %v1958 = vpop.f32.mrb[0].mxu0
        %v1959 = vadd.f32 0.0, %v1958
        %1960 = vmatprep.mubr.bf16.mxu0 0
        %1961 = vmatmul.mubr.bf16.gmra.mrb[0].mxu0 %v1458
        %v1962 = vpop.f32.mrb[0].mxu0
        %v1963 = vadd.f32 0.0, %v1962
        %v1964 = vpop.f32.mrb[0].mxu0
        %v1965 = vadd.f32 0.0, %v1964
        %v1966 = vpop.f32.mrb[0].mxu0
        %v1967 = vadd.f32 0.0, %v1966
        %v1968 = vpop.f32.mrb[0].mxu0
        %v1969 = vadd.f32 0.0, %v1968
        %1970 = vdwg.mxu0
        %1971 = vmatprep.subr.bf16.mxu0 %v1378
        %1972 = vmatpush1.bf16.msra.mxu0 %v1377
        %1973 = vmatprep.subr.bf16.mxu0 %v1394
        %1974 = vmatpush1.bf16.msra.mxu0 %v1393
        %1975 = vmatprep.subr.bf16.mxu0 %v1410
        %1976 = vmatpush1.bf16.msra.mxu0 %v1409
        %1977 = vmatprep.subr.bf16.mxu0 %v1426
        %1978 = vmatpush1.bf16.msra.mxu0 %v1425
        %1979 = vmatprep.subr.bf16.mxu0 0
        %1980 = vmatpush1.bf16.msra.mxu0 0
        %1981 = vmatprep.subr.bf16.mxu0 0
        %1982 = vmatpush1.bf16.msra.mxu0 0
        %1983 = vmatprep.subr.bf16.mxu0 0
        %1984 = vmatpush1.bf16.msra.mxu0 0
        %1985 = vmatprep.subr.bf16.mxu0 0
        %1986 = vmatpush1.bf16.msra.mxu0 0
        %1987 = vmatprep.subr.bf16.mxu0 0
        %1988 = vmatpush1.bf16.msra.mxu0 0
        %1989 = vmatprep.subr.bf16.mxu0 0
        %1990 = vmatpush1.bf16.msra.mxu0 0
        %1991 = vmatprep.subr.bf16.mxu0 0
        %1992 = vmatpush1.bf16.msra.mxu0 0
        %1993 = vmatprep.subr.bf16.mxu0 0
        %1994 = vmatpush1.bf16.msra.mxu0 0
        %1995 = vmatprep.subr.bf16.mxu0 0
        %1996 = vmatpush1.bf16.msra.mxu0 0
        %1997 = vmatprep.subr.bf16.mxu0 0
        %1998 = vmatpush1.bf16.msra.mxu0 0
        %1999 = vmatprep.subr.bf16.mxu0 0
        %2000 = vmatpush1.bf16.msra.mxu0 0
        %2001 = vmatprep.subr.bf16.mxu0 0
        %2002 = vmatpush1.bf16.msra.mxu0 0
        %2003 = vmatprep.mubr.bf16.mxu0 0
        %2004 = vmatmul.mubr.bf16.gmra.mrb[0].mxu0 %v1449
        %v2005 = vpop.f32.mrb[0].mxu0
        %v2006 = vadd.f32 0.0, %v2005
        %v2007 = vpop.f32.mrb[0].mxu0
        %v2008 = vadd.f32 0.0, %v2007
        %v2009 = vpop.f32.mrb[0].mxu0
        %v2010 = vadd.f32 0.0, %v2009
        %v2011 = vpop.f32.mrb[0].mxu0
        %v2012 = vadd.f32 0.0, %v2011
        %2013 = vmatprep.mubr.bf16.mxu0 0
        %2014 = vmatmul.mubr.bf16.gmra.mrb[0].mxu0 %v1452
        %v2015 = vpop.f32.mrb[0].mxu0
        %v2016 = vadd.f32 0.0, %v2015
        %v2017 = vpop.f32.mrb[0].mxu0
        %v2018 = vadd.f32 0.0, %v2017
        %v2019 = vpop.f32.mrb[0].mxu0
        %v2020 = vadd.f32 0.0, %v2019
        %v2021 = vpop.f32.mrb[0].mxu0
        %v2022 = vadd.f32 0.0, %v2021
        %2023 = vmatprep.mubr.bf16.mxu0 0
        %2024 = vmatmul.mubr.bf16.gmra.mrb[0].mxu0 %v1455
        %v2025 = vpop.f32.mrb[0].mxu0
        %v2026 = vadd.f32 0.0, %v2025
        %v2027 = vpop.f32.mrb[0].mxu0
        %v2028 = vadd.f32 0.0, %v2027
        %v2029 = vpop.f32.mrb[0].mxu0
        %v2030 = vadd.f32 0.0, %v2029
        %v2031 = vpop.f32.mrb[0].mxu0
        %v2032 = vadd.f32 0.0, %v2031
        %2033 = vmatprep.mubr.bf16.mxu0 0
        %2034 = vmatmul.mubr.bf16.gmra.mrb[0].mxu0 %v1458
        %v2035 = vpop.f32.mrb[0].mxu0
        %v2036 = vadd.f32 0.0, %v2035
        %v2037 = vpop.f32.mrb[0].mxu0
        %v2038 = vadd.f32 0.0, %v2037
        %v2039 = vpop.f32.mrb[0].mxu0
        %v2040 = vadd.f32 0.0, %v2039
        %v2041 = vpop.f32.mrb[0].mxu0
        %v2042 = vadd.f32 0.0, %v2041
        %2043 = vdwg.mxu0
        %v2044 = vmax.f32 %v1495, 0.0
        %v2045 = vmax.f32 %v1497, 0.0
        %v2046 = vmax.f32 %v1568, 0.0
        %v2047 = vmax.f32 %v1570, 0.0
        %v2048 = vmax.f32 %v1641, 0.0
        %v2049 = vmax.f32 %v1643, 0.0
        %v2050 = vmax.f32 %v1714, 0.0
        %v2051 = vmax.f32 %v1716, 0.0
        %v2052 = vmax.f32 %v1787, 0.0
        %v2053 = vmax.f32 %v1789, 0.0
        %v2054 = vmax.f32 %v1860, 0.0
        %v2055 = vmax.f32 %v1862, 0.0
        %v2056 = vmax.f32 %v1933, 0.0
        %v2057 = vmax.f32 %v1935, 0.0
        %v2058 = vmax.f32 %v2006, 0.0
        %v2059 = vmax.f32 %v2008, 0.0
        %v2060 = vmax.f32 %v1499, 0.0
        %v2061 = vmax.f32 %v1501, 0.0
        %v2062 = vmax.f32 %v1572, 0.0
        %v2063 = vmax.f32 %v1574, 0.0
        %v2064 = vmax.f32 %v1645, 0.0
        %v2065 = vmax.f32 %v1647, 0.0
        %v2066 = vmax.f32 %v1718, 0.0
        %v2067 = vmax.f32 %v1720, 0.0
        %v2068 = vmax.f32 %v1791, 0.0
        %v2069 = vmax.f32 %v1793, 0.0
        %v2070 = vmax.f32 %v1864, 0.0
        %v2071 = vmax.f32 %v1866, 0.0
        %v2072 = vmax.f32 %v1937, 0.0
        %v2073 = vmax.f32 %v1939, 0.0
        %v2074 = vmax.f32 %v2010, 0.0
        %v2075 = vmax.f32 %v2012, 0.0
        %v2076 = vmax.f32 %v1505, 0.0
        %v2077 = vmax.f32 %v1507, 0.0
        %v2078 = vmax.f32 %v1578, 0.0
        %v2079 = vmax.f32 %v1580, 0.0
        %v2080 = vmax.f32 %v1651, 0.0
        %v2081 = vmax.f32 %v1653, 0.0
        %v2082 = vmax.f32 %v1724, 0.0
        %v2083 = vmax.f32 %v1726, 0.0
        %v2084 = vmax.f32 %v1797, 0.0
        %v2085 = vmax.f32 %v1799, 0.0
        %v2086 = vmax.f32 %v1870, 0.0
        %v2087 = vmax.f32 %v1872, 0.0
        %v2088 = vmax.f32 %v1943, 0.0
        %v2089 = vmax.f32 %v1945, 0.0
        %v2090 = vmax.f32 %v2016, 0.0
        %v2091 = vmax.f32 %v2018, 0.0
        %v2092 = vmax.f32 %v1509, 0.0
        %v2093 = vmax.f32 %v1511, 0.0
        %v2094 = vmax.f32 %v1582, 0.0
        %v2095 = vmax.f32 %v1584, 0.0
        %v2096 = vmax.f32 %v1655, 0.0
        %v2097 = vmax.f32 %v1657, 0.0
        %v2098 = vmax.f32 %v1728, 0.0
        %v2099 = vmax.f32 %v1730, 0.0
        %v2100 = vmax.f32 %v1801, 0.0
        %v2101 = vmax.f32 %v1803, 0.0
        %v2102 = vmax.f32 %v1874, 0.0
        %v2103 = vmax.f32 %v1876, 0.0
        %v2104 = vmax.f32 %v1947, 0.0
        %v2105 = vmax.f32 %v1949, 0.0
        %v2106 = vmax.f32 %v2020, 0.0
        %v2107 = vmax.f32 %v2022, 0.0
        %v2108 = vmax.f32 %v1515, 0.0
        %v2109 = vmax.f32 %v1517, 0.0
        %v2110 = vmax.f32 %v1588, 0.0
        %v2111 = vmax.f32 %v1590, 0.0
        %v2112 = vmax.f32 %v1661, 0.0
        %v2113 = vmax.f32 %v1663, 0.0
        %v2114 = vmax.f32 %v1734, 0.0
        %v2115 = vmax.f32 %v1736, 0.0
        %v2116 = vmax.f32 %v1807, 0.0
        %v2117 = vmax.f32 %v1809, 0.0
        %v2118 = vmax.f32 %v1880, 0.0
        %v2119 = vmax.f32 %v1882, 0.0
        %v2120 = vmax.f32 %v1953, 0.0
        %v2121 = vmax.f32 %v1955, 0.0
        %v2122 = vmax.f32 %v2026, 0.0
        %v2123 = vmax.f32 %v2028, 0.0
        %v2124 = vmax.f32 %v1519, 0.0
        %v2125 = vmax.f32 %v1521, 0.0
        %v2126 = vmax.f32 %v1592, 0.0
        %v2127 = vmax.f32 %v1594, 0.0
        %v2128 = vmax.f32 %v1665, 0.0
        %v2129 = vmax.f32 %v1667, 0.0
        %v2130 = vmax.f32 %v1738, 0.0
        %v2131 = vmax.f32 %v1740, 0.0
        %v2132 = vmax.f32 %v1811, 0.0
        %v2133 = vmax.f32 %v1813, 0.0
        %v2134 = vmax.f32 %v1884, 0.0
        %v2135 = vmax.f32 %v1886, 0.0
        %v2136 = vmax.f32 %v1957, 0.0
        %v2137 = vmax.f32 %v1959, 0.0
        %v2138 = vmax.f32 %v2030, 0.0
        %v2139 = vmax.f32 %v2032, 0.0
        %v2140 = vmax.f32 %v1525, 0.0
        %v2141 = vmax.f32 %v1527, 0.0
        %v2142 = vmax.f32 %v1598, 0.0
        %v2143 = vmax.f32 %v1600, 0.0
        %v2144 = vmax.f32 %v1671, 0.0
        %v2145 = vmax.f32 %v1673, 0.0
        %v2146 = vmax.f32 %v1744, 0.0
        %v2147 = vmax.f32 %v1746, 0.0
        %v2148 = vmax.f32 %v1817, 0.0
        %v2149 = vmax.f32 %v1819, 0.0
        %v2150 = vmax.f32 %v1890, 0.0
        %v2151 = vmax.f32 %v1892, 0.0
        %v2152 = vmax.f32 %v1963, 0.0
        %v2153 = vmax.f32 %v1965, 0.0
        %v2154 = vmax.f32 %v2036, 0.0
        %v2155 = vmax.f32 %v2038, 0.0
        %v2156 = vmax.f32 %v1529, 0.0
        %v2157 = vmax.f32 %v1531, 0.0
        %v2158 = vmax.f32 %v1602, 0.0
        %v2159 = vmax.f32 %v1604, 0.0
        %v2160 = vmax.f32 %v1675, 0.0
        %v2161 = vmax.f32 %v1677, 0.0
        %v2162 = vmax.f32 %v1748, 0.0
        %v2163 = vmax.f32 %v1750, 0.0
        %v2164 = vmax.f32 %v1821, 0.0
        %v2165 = vmax.f32 %v1823, 0.0
        %v2166 = vmax.f32 %v1894, 0.0
        %v2167 = vmax.f32 %v1896, 0.0
        %v2168 = vmax.f32 %v1967, 0.0
        %v2169 = vmax.f32 %v1969, 0.0
        %v2170 = vmax.f32 %v2040, 0.0
        %v2171 = vmax.f32 %v2042, 0.0
        %v2172 = vld [vmem:[#allocation5] sm:$0x1]
        %v2173 = vpack.c.bf16 %v2060, %v2044
        %v2174 = vpack.c.bf16 %v2061, %v2045
        %v2175 = vpack.c.bf16 %v2062, %v2046
        %v2176 = vpack.c.bf16 %v2063, %v2047
        %v2177 = vpack.c.bf16 %v2064, %v2048
        %v2178 = vpack.c.bf16 %v2065, %v2049
        %v2179 = vpack.c.bf16 %v2066, %v2050
        %v2180 = vpack.c.bf16 %v2067, %v2051
        %v2181 = vpack.c.bf16 %v2068, %v2052
        %v2182 = vpack.c.bf16 %v2069, %v2053
        %v2183 = vpack.c.bf16 %v2070, %v2054
        %v2184 = vpack.c.bf16 %v2071, %v2055
        %v2185 = vpack.c.bf16 %v2072, %v2056
        %v2186 = vpack.c.bf16 %v2073, %v2057
        %v2187 = vpack.c.bf16 %v2074, %v2058
        %v2188 = vpack.c.bf16 %v2075, %v2059
        %v2189 = vpack.c.bf16 %v2092, %v2076
        %v2190 = vpack.c.bf16 %v2093, %v2077
        %v2191 = vpack.c.bf16 %v2094, %v2078
        %v2192 = vpack.c.bf16 %v2095, %v2079
        %v2193 = vpack.c.bf16 %v2096, %v2080
        %v2194 = vpack.c.bf16 %v2097, %v2081
        %v2195 = vpack.c.bf16 %v2098, %v2082
        %v2196 = vpack.c.bf16 %v2099, %v2083
        %v2197 = vpack.c.bf16 %v2100, %v2084
        %v2198 = vpack.c.bf16 %v2101, %v2085
        %v2199 = vpack.c.bf16 %v2102, %v2086
        %v2200 = vpack.c.bf16 %v2103, %v2087
        %v2201 = vpack.c.bf16 %v2104, %v2088
        %v2202 = vpack.c.bf16 %v2105, %v2089
        %v2203 = vpack.c.bf16 %v2106, %v2090
        %v2204 = vpack.c.bf16 %v2107, %v2091
        %v2205 = vpack.c.bf16 %v2124, %v2108
        %v2206 = vpack.c.bf16 %v2125, %v2109
        %v2207 = vpack.c.bf16 %v2126, %v2110
        %v2208 = vpack.c.bf16 %v2127, %v2111
        %v2209 = vpack.c.bf16 %v2128, %v2112
        %v2210 = vpack.c.bf16 %v2129, %v2113
        %v2211 = vpack.c.bf16 %v2130, %v2114
        %v2212 = vpack.c.bf16 %v2131, %v2115
        %v2213 = vpack.c.bf16 %v2132, %v2116
        %v2214 = vpack.c.bf16 %v2133, %v2117
        %v2215 = vpack.c.bf16 %v2134, %v2118
        %v2216 = vpack.c.bf16 %v2135, %v2119
        %v2217 = vpack.c.bf16 %v2136, %v2120
        %v2218 = vpack.c.bf16 %v2137, %v2121
        %v2219 = vpack.c.bf16 %v2138, %v2122
        %v2220 = vpack.c.bf16 %v2139, %v2123
        %v2221 = vpack.c.bf16 %v2156, %v2140
        %v2222 = vpack.c.bf16 %v2157, %v2141
        %v2223 = vpack.c.bf16 %v2158, %v2142
        %v2224 = vpack.c.bf16 %v2159, %v2143
        %v2225 = vpack.c.bf16 %v2160, %v2144
        %v2226 = vpack.c.bf16 %v2161, %v2145
        %v2227 = vpack.c.bf16 %v2162, %v2146
        %v2228 = vpack.c.bf16 %v2163, %v2147
        %v2229 = vpack.c.bf16 %v2164, %v2148
        %v2230 = vpack.c.bf16 %v2165, %v2149
        %v2231 = vpack.c.bf16 %v2166, %v2150
        %v2232 = vpack.c.bf16 %v2167, %v2151
        %v2233 = vpack.c.bf16 %v2168, %v2152
        %v2234 = vpack.c.bf16 %v2169, %v2153
        %v2235 = vpack.c.bf16 %v2170, %v2154
        %v2236 = vpack.c.bf16 %v2171, %v2155
        %v2238 = vsel %vm1447, %v2172, 0
        %2240 = vmatprep.subr.bf16.mxu0 %v2174
        %2241 = vmatpush1.bf16.msra.mxu0 %v2173
        %2242 = vmatprep.subr.bf16.mxu0 %v2190
        %2243 = vmatpush1.bf16.msra.mxu0 %v2189
        %2244 = vmatprep.subr.bf16.mxu0 %v2206
        %2245 = vmatpush1.bf16.msra.mxu0 %v2205
        %2246 = vmatprep.subr.bf16.mxu0 %v2222
        %2247 = vmatpush1.bf16.msra.mxu0 %v2221
        %2248 = vmatprep.subr.bf16.mxu0 0
        %2249 = vmatpush1.bf16.msra.mxu0 0
        %2250 = vmatprep.subr.bf16.mxu0 0
        %2251 = vmatpush1.bf16.msra.mxu0 0
        %2252 = vmatprep.subr.bf16.mxu0 0
        %2253 = vmatpush1.bf16.msra.mxu0 0
        %2254 = vmatprep.subr.bf16.mxu0 0
        %2255 = vmatpush1.bf16.msra.mxu0 0
        %2256 = vmatprep.subr.bf16.mxu0 0
        %2257 = vmatpush1.bf16.msra.mxu0 0
        %2258 = vmatprep.subr.bf16.mxu0 0
        %2259 = vmatpush1.bf16.msra.mxu0 0
        %2260 = vmatprep.subr.bf16.mxu0 0
        %2261 = vmatpush1.bf16.msra.mxu0 0
        %2262 = vmatprep.subr.bf16.mxu0 0
        %2263 = vmatpush1.bf16.msra.mxu0 0
        %2264 = vmatprep.subr.bf16.mxu0 0
        %2265 = vmatpush1.bf16.msra.mxu0 0
        %2266 = vmatprep.subr.bf16.mxu0 0
        %2267 = vmatpush1.bf16.msra.mxu0 0
        %2268 = vmatprep.subr.bf16.mxu0 0
        %2269 = vmatpush1.bf16.msra.mxu0 0
        %2270 = vmatprep.subr.bf16.mxu0 0
        %2271 = vmatpush1.bf16.msra.mxu0 0
        %2272 = vmatprep.mubr.bf16.mxu0 0
        %2273 = vmatmul.mubr.bf16.gmra.mrb[0].mxu0 %v2238
        %v2274 = vpop.f32.mrb[0].mxu0
        %v2275 = vadd.f32 0.0, %v2274
        %v2276 = vpop.f32.mrb[0].mxu0
        %v2277 = vadd.f32 0.0, %v2276
        %v2278 = vpop.f32.mrb[0].mxu0
        %v2279 = vpop.f32.mrb[0].mxu0
        %2280 = vdwg.mxu0
        %2281 = vmatprep.subr.bf16.mxu0 %v2176
        %2282 = vmatpush1.bf16.msra.mxu0 %v2175
        %2283 = vmatprep.subr.bf16.mxu0 %v2192
        %2284 = vmatpush1.bf16.msra.mxu0 %v2191
        %2285 = vmatprep.subr.bf16.mxu0 %v2208
        %2286 = vmatpush1.bf16.msra.mxu0 %v2207
        %2287 = vmatprep.subr.bf16.mxu0 %v2224
        %2288 = vmatpush1.bf16.msra.mxu0 %v2223
        %2289 = vmatprep.subr.bf16.mxu0 0
        %2290 = vmatpush1.bf16.msra.mxu0 0
        %2291 = vmatprep.subr.bf16.mxu0 0
        %2292 = vmatpush1.bf16.msra.mxu0 0
        %2293 = vmatprep.subr.bf16.mxu0 0
        %2294 = vmatpush1.bf16.msra.mxu0 0
        %2295 = vmatprep.subr.bf16.mxu0 0
        %2296 = vmatpush1.bf16.msra.mxu0 0
        %2297 = vmatprep.subr.bf16.mxu0 0
        %2298 = vmatpush1.bf16.msra.mxu0 0
        %2299 = vmatprep.subr.bf16.mxu0 0
        %2300 = vmatpush1.bf16.msra.mxu0 0
        %2301 = vmatprep.subr.bf16.mxu0 0
        %2302 = vmatpush1.bf16.msra.mxu0 0
        %2303 = vmatprep.subr.bf16.mxu0 0
        %2304 = vmatpush1.bf16.msra.mxu0 0
        %2305 = vmatprep.subr.bf16.mxu0 0
        %2306 = vmatpush1.bf16.msra.mxu0 0
        %2307 = vmatprep.subr.bf16.mxu0 0
        %2308 = vmatpush1.bf16.msra.mxu0 0
        %2309 = vmatprep.subr.bf16.mxu0 0
        %2310 = vmatpush1.bf16.msra.mxu0 0
        %2311 = vmatprep.subr.bf16.mxu0 0
        %2312 = vmatpush1.bf16.msra.mxu0 0
        %2313 = vmatprep.mubr.bf16.mxu0 0
        %2314 = vmatmul.mubr.bf16.gmra.mrb[0].mxu0 %v2238
        %v2315 = vpop.f32.mrb[0].mxu0
        %v2316 = vadd.f32 0.0, %v2315
        %v2317 = vpop.f32.mrb[0].mxu0
        %v2318 = vadd.f32 0.0, %v2317
        %v2319 = vpop.f32.mrb[0].mxu0
        %v2320 = vpop.f32.mrb[0].mxu0
        %2321 = vdwg.mxu0
        %2322 = vmatprep.subr.bf16.mxu0 %v2178
        %2323 = vmatpush1.bf16.msra.mxu0 %v2177
        %2324 = vmatprep.subr.bf16.mxu0 %v2194
        %2325 = vmatpush1.bf16.msra.mxu0 %v2193
        %2326 = vmatprep.subr.bf16.mxu0 %v2210
        %2327 = vmatpush1.bf16.msra.mxu0 %v2209
        %2328 = vmatprep.subr.bf16.mxu0 %v2226
        %2329 = vmatpush1.bf16.msra.mxu0 %v2225
        %2330 = vmatprep.subr.bf16.mxu0 0
        %2331 = vmatpush1.bf16.msra.mxu0 0
        %2332 = vmatprep.subr.bf16.mxu0 0
        %2333 = vmatpush1.bf16.msra.mxu0 0
        %2334 = vmatprep.subr.bf16.mxu0 0
        %2335 = vmatpush1.bf16.msra.mxu0 0
        %2336 = vmatprep.subr.bf16.mxu0 0
        %2337 = vmatpush1.bf16.msra.mxu0 0
        %2338 = vmatprep.subr.bf16.mxu0 0
        %2339 = vmatpush1.bf16.msra.mxu0 0
        %2340 = vmatprep.subr.bf16.mxu0 0
        %2341 = vmatpush1.bf16.msra.mxu0 0
        %2342 = vmatprep.subr.bf16.mxu0 0
        %2343 = vmatpush1.bf16.msra.mxu0 0
        %2344 = vmatprep.subr.bf16.mxu0 0
        %2345 = vmatpush1.bf16.msra.mxu0 0
        %2346 = vmatprep.subr.bf16.mxu0 0
        %2347 = vmatpush1.bf16.msra.mxu0 0
        %2348 = vmatprep.subr.bf16.mxu0 0
        %2349 = vmatpush1.bf16.msra.mxu0 0
        %2350 = vmatprep.subr.bf16.mxu0 0
        %2351 = vmatpush1.bf16.msra.mxu0 0
        %2352 = vmatprep.subr.bf16.mxu0 0
        %2353 = vmatpush1.bf16.msra.mxu0 0
        %2354 = vmatprep.mubr.bf16.mxu0 0
        %2355 = vmatmul.mubr.bf16.gmra.mrb[0].mxu0 %v2238
        %v2356 = vpop.f32.mrb[0].mxu0
        %v2357 = vadd.f32 0.0, %v2356
        %v2358 = vpop.f32.mrb[0].mxu0
        %v2359 = vadd.f32 0.0, %v2358
        %v2360 = vpop.f32.mrb[0].mxu0
        %v2361 = vpop.f32.mrb[0].mxu0
        %2362 = vdwg.mxu0
        %2363 = vmatprep.subr.bf16.mxu0 %v2180
        %2364 = vmatpush1.bf16.msra.mxu0 %v2179
        %2365 = vmatprep.subr.bf16.mxu0 %v2196
        %2366 = vmatpush1.bf16.msra.mxu0 %v2195
        %2367 = vmatprep.subr.bf16.mxu0 %v2212
        %2368 = vmatpush1.bf16.msra.mxu0 %v2211
        %2369 = vmatprep.subr.bf16.mxu0 %v2228
        %2370 = vmatpush1.bf16.msra.mxu0 %v2227
        %2371 = vmatprep.subr.bf16.mxu0 0
        %2372 = vmatpush1.bf16.msra.mxu0 0
        %2373 = vmatprep.subr.bf16.mxu0 0
        %2374 = vmatpush1.bf16.msra.mxu0 0
        %2375 = vmatprep.subr.bf16.mxu0 0
        %2376 = vmatpush1.bf16.msra.mxu0 0
        %2377 = vmatprep.subr.bf16.mxu0 0
        %2378 = vmatpush1.bf16.msra.mxu0 0
        %2379 = vmatprep.subr.bf16.mxu0 0
        %2380 = vmatpush1.bf16.msra.mxu0 0
        %2381 = vmatprep.subr.bf16.mxu0 0
        %2382 = vmatpush1.bf16.msra.mxu0 0
        %2383 = vmatprep.subr.bf16.mxu0 0
        %2384 = vmatpush1.bf16.msra.mxu0 0
        %2385 = vmatprep.subr.bf16.mxu0 0
        %2386 = vmatpush1.bf16.msra.mxu0 0
        %2387 = vmatprep.subr.bf16.mxu0 0
        %2388 = vmatpush1.bf16.msra.mxu0 0
        %2389 = vmatprep.subr.bf16.mxu0 0
        %2390 = vmatpush1.bf16.msra.mxu0 0
        %2391 = vmatprep.subr.bf16.mxu0 0
        %2392 = vmatpush1.bf16.msra.mxu0 0
        %2393 = vmatprep.subr.bf16.mxu0 0
        %2394 = vmatpush1.bf16.msra.mxu0 0
        %2395 = vmatprep.mubr.bf16.mxu0 0
        %2396 = vmatmul.mubr.bf16.gmra.mrb[0].mxu0 %v2238
        %v2397 = vpop.f32.mrb[0].mxu0
        %v2398 = vadd.f32 0.0, %v2397
        %v2399 = vpop.f32.mrb[0].mxu0
        %v2400 = vadd.f32 0.0, %v2399
        %v2401 = vpop.f32.mrb[0].mxu0
        %v2402 = vpop.f32.mrb[0].mxu0
        %2403 = vdwg.mxu0
        %2404 = vmatprep.subr.bf16.mxu0 %v2182
        %2405 = vmatpush1.bf16.msra.mxu0 %v2181
        %2406 = vmatprep.subr.bf16.mxu0 %v2198
        %2407 = vmatpush1.bf16.msra.mxu0 %v2197
        %2408 = vmatprep.subr.bf16.mxu0 %v2214
        %2409 = vmatpush1.bf16.msra.mxu0 %v2213
        %2410 = vmatprep.subr.bf16.mxu0 %v2230
        %2411 = vmatpush1.bf16.msra.mxu0 %v2229
        %2412 = vmatprep.subr.bf16.mxu0 0
        %2413 = vmatpush1.bf16.msra.mxu0 0
        %2414 = vmatprep.subr.bf16.mxu0 0
        %2415 = vmatpush1.bf16.msra.mxu0 0
        %2416 = vmatprep.subr.bf16.mxu0 0
        %2417 = vmatpush1.bf16.msra.mxu0 0
        %2418 = vmatprep.subr.bf16.mxu0 0
        %2419 = vmatpush1.bf16.msra.mxu0 0
        %2420 = vmatprep.subr.bf16.mxu0 0
        %2421 = vmatpush1.bf16.msra.mxu0 0
        %2422 = vmatprep.subr.bf16.mxu0 0
        %2423 = vmatpush1.bf16.msra.mxu0 0
        %2424 = vmatprep.subr.bf16.mxu0 0
        %2425 = vmatpush1.bf16.msra.mxu0 0
        %2426 = vmatprep.subr.bf16.mxu0 0
        %2427 = vmatpush1.bf16.msra.mxu0 0
        %2428 = vmatprep.subr.bf16.mxu0 0
        %2429 = vmatpush1.bf16.msra.mxu0 0
        %2430 = vmatprep.subr.bf16.mxu0 0
        %2431 = vmatpush1.bf16.msra.mxu0 0
        %2432 = vmatprep.subr.bf16.mxu0 0
        %2433 = vmatpush1.bf16.msra.mxu0 0
        %2434 = vmatprep.subr.bf16.mxu0 0
        %2435 = vmatpush1.bf16.msra.mxu0 0
        %2436 = vmatprep.mubr.bf16.mxu0 0
        %2437 = vmatmul.mubr.bf16.gmra.mrb[0].mxu0 %v2238
        %v2438 = vpop.f32.mrb[0].mxu0
        %v2439 = vadd.f32 0.0, %v2438
        %v2440 = vpop.f32.mrb[0].mxu0
        %v2441 = vadd.f32 0.0, %v2440
        %v2442 = vpop.f32.mrb[0].mxu0
        %v2443 = vpop.f32.mrb[0].mxu0
        %2444 = vdwg.mxu0
        %2445 = vmatprep.subr.bf16.mxu0 %v2184
        %2446 = vmatpush1.bf16.msra.mxu0 %v2183
        %2447 = vmatprep.subr.bf16.mxu0 %v2200
        %2448 = vmatpush1.bf16.msra.mxu0 %v2199
        %2449 = vmatprep.subr.bf16.mxu0 %v2216
        %2450 = vmatpush1.bf16.msra.mxu0 %v2215
        %2451 = vmatprep.subr.bf16.mxu0 %v2232
        %2452 = vmatpush1.bf16.msra.mxu0 %v2231
        %2453 = vmatprep.subr.bf16.mxu0 0
        %2454 = vmatpush1.bf16.msra.mxu0 0
        %2455 = vmatprep.subr.bf16.mxu0 0
        %2456 = vmatpush1.bf16.msra.mxu0 0
        %2457 = vmatprep.subr.bf16.mxu0 0
        %2458 = vmatpush1.bf16.msra.mxu0 0
        %2459 = vmatprep.subr.bf16.mxu0 0
        %2460 = vmatpush1.bf16.msra.mxu0 0
        %2461 = vmatprep.subr.bf16.mxu0 0
        %2462 = vmatpush1.bf16.msra.mxu0 0
        %2463 = vmatprep.subr.bf16.mxu0 0
        %2464 = vmatpush1.bf16.msra.mxu0 0
        %2465 = vmatprep.subr.bf16.mxu0 0
        %2466 = vmatpush1.bf16.msra.mxu0 0
        %2467 = vmatprep.subr.bf16.mxu0 0
        %2468 = vmatpush1.bf16.msra.mxu0 0
        %2469 = vmatprep.subr.bf16.mxu0 0
        %2470 = vmatpush1.bf16.msra.mxu0 0
        %2471 = vmatprep.subr.bf16.mxu0 0
        %2472 = vmatpush1.bf16.msra.mxu0 0
        %2473 = vmatprep.subr.bf16.mxu0 0
        %2474 = vmatpush1.bf16.msra.mxu0 0
        %2475 = vmatprep.subr.bf16.mxu0 0
        %2476 = vmatpush1.bf16.msra.mxu0 0
        %2477 = vmatprep.mubr.bf16.mxu0 0
        %2478 = vmatmul.mubr.bf16.gmra.mrb[0].mxu0 %v2238
        %v2479 = vpop.f32.mrb[0].mxu0
        %v2480 = vadd.f32 0.0, %v2479
        %v2481 = vpop.f32.mrb[0].mxu0
        %v2482 = vadd.f32 0.0, %v2481
        %v2483 = vpop.f32.mrb[0].mxu0
        %v2484 = vpop.f32.mrb[0].mxu0
        %2485 = vdwg.mxu0
        %2486 = vmatprep.subr.bf16.mxu0 %v2186
        %2487 = vmatpush1.bf16.msra.mxu0 %v2185
        %2488 = vmatprep.subr.bf16.mxu0 %v2202
        %2489 = vmatpush1.bf16.msra.mxu0 %v2201
        %2490 = vmatprep.subr.bf16.mxu0 %v2218
        %2491 = vmatpush1.bf16.msra.mxu0 %v2217
        %2492 = vmatprep.subr.bf16.mxu0 %v2234
        %2493 = vmatpush1.bf16.msra.mxu0 %v2233
        %2494 = vmatprep.subr.bf16.mxu0 0
        %2495 = vmatpush1.bf16.msra.mxu0 0
        %2496 = vmatprep.subr.bf16.mxu0 0
        %2497 = vmatpush1.bf16.msra.mxu0 0
        %2498 = vmatprep.subr.bf16.mxu0 0
        %2499 = vmatpush1.bf16.msra.mxu0 0
        %2500 = vmatprep.subr.bf16.mxu0 0
        %2501 = vmatpush1.bf16.msra.mxu0 0
        %2502 = vmatprep.subr.bf16.mxu0 0
        %2503 = vmatpush1.bf16.msra.mxu0 0
        %2504 = vmatprep.subr.bf16.mxu0 0
        %2505 = vmatpush1.bf16.msra.mxu0 0
        %2506 = vmatprep.subr.bf16.mxu0 0
        %2507 = vmatpush1.bf16.msra.mxu0 0
        %2508 = vmatprep.subr.bf16.mxu0 0
        %2509 = vmatpush1.bf16.msra.mxu0 0
        %2510 = vmatprep.subr.bf16.mxu0 0
        %2511 = vmatpush1.bf16.msra.mxu0 0
        %2512 = vmatprep.subr.bf16.mxu0 0
        %2513 = vmatpush1.bf16.msra.mxu0 0
        %2514 = vmatprep.subr.bf16.mxu0 0
        %2515 = vmatpush1.bf16.msra.mxu0 0
        %2516 = vmatprep.subr.bf16.mxu0 0
        %2517 = vmatpush1.bf16.msra.mxu0 0
        %2518 = vmatprep.mubr.bf16.mxu0 0
        %2519 = vmatmul.mubr.bf16.gmra.mrb[0].mxu0 %v2238
        %v2520 = vpop.f32.mrb[0].mxu0
        %v2521 = vadd.f32 0.0, %v2520
        %v2522 = vpop.f32.mrb[0].mxu0
        %v2523 = vadd.f32 0.0, %v2522
        %v2524 = vpop.f32.mrb[0].mxu0
        %v2525 = vpop.f32.mrb[0].mxu0
        %2526 = vdwg.mxu0
        %2527 = vmatprep.subr.bf16.mxu0 %v2188
        %2528 = vmatpush1.bf16.msra.mxu0 %v2187
        %2529 = vmatprep.subr.bf16.mxu0 %v2204
        %2530 = vmatpush1.bf16.msra.mxu0 %v2203
        %2531 = vmatprep.subr.bf16.mxu0 %v2220
        %2532 = vmatpush1.bf16.msra.mxu0 %v2219
        %2533 = vmatprep.subr.bf16.mxu0 %v2236
        %2534 = vmatpush1.bf16.msra.mxu0 %v2235
        %2535 = vmatprep.subr.bf16.mxu0 0
        %2536 = vmatpush1.bf16.msra.mxu0 0
        %2537 = vmatprep.subr.bf16.mxu0 0
        %2538 = vmatpush1.bf16.msra.mxu0 0
        %2539 = vmatprep.subr.bf16.mxu0 0
        %2540 = vmatpush1.bf16.msra.mxu0 0
        %2541 = vmatprep.subr.bf16.mxu0 0
        %2542 = vmatpush1.bf16.msra.mxu0 0
        %2543 = vmatprep.subr.bf16.mxu0 0
        %2544 = vmatpush1.bf16.msra.mxu0 0
        %2545 = vmatprep.subr.bf16.mxu0 0
        %2546 = vmatpush1.bf16.msra.mxu0 0
        %2547 = vmatprep.subr.bf16.mxu0 0
        %2548 = vmatpush1.bf16.msra.mxu0 0
        %2549 = vmatprep.subr.bf16.mxu0 0
        %2550 = vmatpush1.bf16.msra.mxu0 0
        %2551 = vmatprep.subr.bf16.mxu0 0
        %2552 = vmatpush1.bf16.msra.mxu0 0
        %2553 = vmatprep.subr.bf16.mxu0 0
        %2554 = vmatpush1.bf16.msra.mxu0 0
        %2555 = vmatprep.subr.bf16.mxu0 0
        %2556 = vmatpush1.bf16.msra.mxu0 0
        %2557 = vmatprep.subr.bf16.mxu0 0
        %2558 = vmatpush1.bf16.msra.mxu0 0
        %2559 = vmatprep.mubr.bf16.mxu0 0
        %2560 = vmatmul.mubr.bf16.gmra.mrb[0].mxu0 %v2238
        %v2561 = vpop.f32.mrb[0].mxu0
        %v2562 = vadd.f32 0.0, %v2561
        %v2563 = vpop.f32.mrb[0].mxu0
        %v2564 = vadd.f32 0.0, %v2563
        %v2565 = vpop.f32.mrb[0].mxu0
        %v2566 = vpop.f32.mrb[0].mxu0
        %2567 = vdwg.mxu0
        %v2568 = vld [vmem:[#allocation7] sm:$0xf]
        %v2569 = vld [vmem:[#allocation7 + $0x4] sm:$0xf]
        %v2572 = vunpack.c.l.b16 %v2568
        %v2573 = vunpack.c.l.b16 %v2569
        %v2574 = vpack.c.b16 %v2573, %v2572
        %v2576 = vsel %vm1447, %v2574, 0
        %2578 = vmatprep.subr.bf16.mxu0 %v2174
        %2579 = vmatpush1.bf16.msra.mxu0 %v2173
        %2580 = vmatprep.subr.bf16.mxu0 %v2190
        %2581 = vmatpush1.bf16.msra.mxu0 %v2189
        %2582 = vmatprep.subr.bf16.mxu0 %v2206
        %2583 = vmatpush1.bf16.msra.mxu0 %v2205
        %2584 = vmatprep.subr.bf16.mxu0 %v2222
        %2585 = vmatpush1.bf16.msra.mxu0 %v2221
        %2586 = vmatprep.subr.bf16.mxu0 0
        %2587 = vmatpush1.bf16.msra.mxu0 0
        %2588 = vmatprep.subr.bf16.mxu0 0
        %2589 = vmatpush1.bf16.msra.mxu0 0
        %2590 = vmatprep.subr.bf16.mxu0 0
        %2591 = vmatpush1.bf16.msra.mxu0 0
        %2592 = vmatprep.subr.bf16.mxu0 0
        %2593 = vmatpush1.bf16.msra.mxu0 0
        %2594 = vmatprep.subr.bf16.mxu0 0
        %2595 = vmatpush1.bf16.msra.mxu0 0
        %2596 = vmatprep.subr.bf16.mxu0 0
        %2597 = vmatpush1.bf16.msra.mxu0 0
        %2598 = vmatprep.subr.bf16.mxu0 0
        %2599 = vmatpush1.bf16.msra.mxu0 0
        %2600 = vmatprep.subr.bf16.mxu0 0
        %2601 = vmatpush1.bf16.msra.mxu0 0
        %2602 = vmatprep.subr.bf16.mxu0 0
        %2603 = vmatpush1.bf16.msra.mxu0 0
        %2604 = vmatprep.subr.bf16.mxu0 0
        %2605 = vmatpush1.bf16.msra.mxu0 0
        %2606 = vmatprep.subr.bf16.mxu0 0
        %2607 = vmatpush1.bf16.msra.mxu0 0
        %2608 = vmatprep.subr.bf16.mxu0 0
        %2609 = vmatpush1.bf16.msra.mxu0 0
        %2610 = vmatprep.mubr.bf16.mxu0 0
        %2611 = vmatmul.mubr.bf16.gmra.mrb[0].mxu0 %v2576
        %v2612 = vpop.f32.mrb[0].mxu0
        %v2613 = vadd.f32 0.0, %v2612
        %v2614 = vpop.f32.mrb[0].mxu0
        %v2615 = vadd.f32 0.0, %v2614
        %v2616 = vpop.f32.mrb[0].mxu0
        %v2617 = vadd.f32 0.0, %v2616
        %v2618 = vpop.f32.mrb[0].mxu0
        %v2619 = vadd.f32 0.0, %v2618
        %2620 = vdwg.mxu0
        %2621 = vmatprep.subr.bf16.mxu0 %v2176
        %2622 = vmatpush1.bf16.msra.mxu0 %v2175
        %2623 = vmatprep.subr.bf16.mxu0 %v2192
        %2624 = vmatpush1.bf16.msra.mxu0 %v2191
        %2625 = vmatprep.subr.bf16.mxu0 %v2208
        %2626 = vmatpush1.bf16.msra.mxu0 %v2207
        %2627 = vmatprep.subr.bf16.mxu0 %v2224
        %2628 = vmatpush1.bf16.msra.mxu0 %v2223
        %2629 = vmatprep.subr.bf16.mxu0 0
        %2630 = vmatpush1.bf16.msra.mxu0 0
        %2631 = vmatprep.subr.bf16.mxu0 0
        %2632 = vmatpush1.bf16.msra.mxu0 0
        %2633 = vmatprep.subr.bf16.mxu0 0
        %2634 = vmatpush1.bf16.msra.mxu0 0
        %2635 = vmatprep.subr.bf16.mxu0 0
        %2636 = vmatpush1.bf16.msra.mxu0 0
        %2637 = vmatprep.subr.bf16.mxu0 0
        %2638 = vmatpush1.bf16.msra.mxu0 0
        %2639 = vmatprep.subr.bf16.mxu0 0
        %2640 = vmatpush1.bf16.msra.mxu0 0
        %2641 = vmatprep.subr.bf16.mxu0 0
        %2642 = vmatpush1.bf16.msra.mxu0 0
        %2643 = vmatprep.subr.bf16.mxu0 0
        %2644 = vmatpush1.bf16.msra.mxu0 0
        %2645 = vmatprep.subr.bf16.mxu0 0
        %2646 = vmatpush1.bf16.msra.mxu0 0
        %2647 = vmatprep.subr.bf16.mxu0 0
        %2648 = vmatpush1.bf16.msra.mxu0 0
        %2649 = vmatprep.subr.bf16.mxu0 0
        %2650 = vmatpush1.bf16.msra.mxu0 0
        %2651 = vmatprep.subr.bf16.mxu0 0
        %2652 = vmatpush1.bf16.msra.mxu0 0
        %2653 = vmatprep.mubr.bf16.mxu0 0
        %2654 = vmatmul.mubr.bf16.gmra.mrb[0].mxu0 %v2576
        %v2655 = vpop.f32.mrb[0].mxu0
        %v2656 = vadd.f32 0.0, %v2655
        %v2657 = vpop.f32.mrb[0].mxu0
        %v2658 = vadd.f32 0.0, %v2657
        %v2659 = vpop.f32.mrb[0].mxu0
        %v2660 = vadd.f32 0.0, %v2659
        %v2661 = vpop.f32.mrb[0].mxu0
        %v2662 = vadd.f32 0.0, %v2661
        %2663 = vdwg.mxu0
        %2664 = vmatprep.subr.bf16.mxu0 %v2178
        %2665 = vmatpush1.bf16.msra.mxu0 %v2177
        %2666 = vmatprep.subr.bf16.mxu0 %v2194
        %2667 = vmatpush1.bf16.msra.mxu0 %v2193
        %2668 = vmatprep.subr.bf16.mxu0 %v2210
        %2669 = vmatpush1.bf16.msra.mxu0 %v2209
        %2670 = vmatprep.subr.bf16.mxu0 %v2226
        %2671 = vmatpush1.bf16.msra.mxu0 %v2225
        %2672 = vmatprep.subr.bf16.mxu0 0
        %2673 = vmatpush1.bf16.msra.mxu0 0
        %2674 = vmatprep.subr.bf16.mxu0 0
        %2675 = vmatpush1.bf16.msra.mxu0 0
        %2676 = vmatprep.subr.bf16.mxu0 0
        %2677 = vmatpush1.bf16.msra.mxu0 0
        %2678 = vmatprep.subr.bf16.mxu0 0
        %2679 = vmatpush1.bf16.msra.mxu0 0
        %2680 = vmatprep.subr.bf16.mxu0 0
        %2681 = vmatpush1.bf16.msra.mxu0 0
        %2682 = vmatprep.subr.bf16.mxu0 0
        %2683 = vmatpush1.bf16.msra.mxu0 0
        %2684 = vmatprep.subr.bf16.mxu0 0
        %2685 = vmatpush1.bf16.msra.mxu0 0
        %2686 = vmatprep.subr.bf16.mxu0 0
        %2687 = vmatpush1.bf16.msra.mxu0 0
        %2688 = vmatprep.subr.bf16.mxu0 0
        %2689 = vmatpush1.bf16.msra.mxu0 0
        %2690 = vmatprep.subr.bf16.mxu0 0
        %2691 = vmatpush1.bf16.msra.mxu0 0
        %2692 = vmatprep.subr.bf16.mxu0 0
        %2693 = vmatpush1.bf16.msra.mxu0 0
        %2694 = vmatprep.subr.bf16.mxu0 0
        %2695 = vmatpush1.bf16.msra.mxu0 0
        %2696 = vmatprep.mubr.bf16.mxu0 0
        %2697 = vmatmul.mubr.bf16.gmra.mrb[0].mxu0 %v2576
        %v2698 = vpop.f32.mrb[0].mxu0
        %v2699 = vadd.f32 0.0, %v2698
        %v2700 = vpop.f32.mrb[0].mxu0
        %v2701 = vadd.f32 0.0, %v2700
        %v2702 = vpop.f32.mrb[0].mxu0
        %v2703 = vadd.f32 0.0, %v2702
        %v2704 = vpop.f32.mrb[0].mxu0
        %v2705 = vadd.f32 0.0, %v2704
        %2706 = vdwg.mxu0
        %2707 = vmatprep.subr.bf16.mxu0 %v2180
        %2708 = vmatpush1.bf16.msra.mxu0 %v2179
        %2709 = vmatprep.subr.bf16.mxu0 %v2196
        %2710 = vmatpush1.bf16.msra.mxu0 %v2195
        %2711 = vmatprep.subr.bf16.mxu0 %v2212
        %2712 = vmatpush1.bf16.msra.mxu0 %v2211
        %2713 = vmatprep.subr.bf16.mxu0 %v2228
        %2714 = vmatpush1.bf16.msra.mxu0 %v2227
        %2715 = vmatprep.subr.bf16.mxu0 0
        %2716 = vmatpush1.bf16.msra.mxu0 0
        %2717 = vmatprep.subr.bf16.mxu0 0
        %2718 = vmatpush1.bf16.msra.mxu0 0
        %2719 = vmatprep.subr.bf16.mxu0 0
        %2720 = vmatpush1.bf16.msra.mxu0 0
        %2721 = vmatprep.subr.bf16.mxu0 0
        %2722 = vmatpush1.bf16.msra.mxu0 0
        %2723 = vmatprep.subr.bf16.mxu0 0
        %2724 = vmatpush1.bf16.msra.mxu0 0
        %2725 = vmatprep.subr.bf16.mxu0 0
        %2726 = vmatpush1.bf16.msra.mxu0 0
        %2727 = vmatprep.subr.bf16.mxu0 0
        %2728 = vmatpush1.bf16.msra.mxu0 0
        %2729 = vmatprep.subr.bf16.mxu0 0
        %2730 = vmatpush1.bf16.msra.mxu0 0
        %2731 = vmatprep.subr.bf16.mxu0 0
        %2732 = vmatpush1.bf16.msra.mxu0 0
        %2733 = vmatprep.subr.bf16.mxu0 0
        %2734 = vmatpush1.bf16.msra.mxu0 0
        %2735 = vmatprep.subr.bf16.mxu0 0
        %2736 = vmatpush1.bf16.msra.mxu0 0
        %2737 = vmatprep.subr.bf16.mxu0 0
        %2738 = vmatpush1.bf16.msra.mxu0 0
        %2739 = vmatprep.mubr.bf16.mxu0 0
        %2740 = vmatmul.mubr.bf16.gmra.mrb[0].mxu0 %v2576
        %v2741 = vpop.f32.mrb[0].mxu0
        %v2742 = vadd.f32 0.0, %v2741
        %v2743 = vpop.f32.mrb[0].mxu0
        %v2744 = vadd.f32 0.0, %v2743
        %v2745 = vpop.f32.mrb[0].mxu0
        %v2746 = vadd.f32 0.0, %v2745
        %v2747 = vpop.f32.mrb[0].mxu0
        %v2748 = vadd.f32 0.0, %v2747
        %2749 = vdwg.mxu0
        %2750 = vmatprep.subr.bf16.mxu0 %v2182
        %2751 = vmatpush1.bf16.msra.mxu0 %v2181
        %2752 = vmatprep.subr.bf16.mxu0 %v2198
        %2753 = vmatpush1.bf16.msra.mxu0 %v2197
        %2754 = vmatprep.subr.bf16.mxu0 %v2214
        %2755 = vmatpush1.bf16.msra.mxu0 %v2213
        %2756 = vmatprep.subr.bf16.mxu0 %v2230
        %2757 = vmatpush1.bf16.msra.mxu0 %v2229
        %2758 = vmatprep.subr.bf16.mxu0 0
        %2759 = vmatpush1.bf16.msra.mxu0 0
        %2760 = vmatprep.subr.bf16.mxu0 0
        %2761 = vmatpush1.bf16.msra.mxu0 0
        %2762 = vmatprep.subr.bf16.mxu0 0
        %2763 = vmatpush1.bf16.msra.mxu0 0
        %2764 = vmatprep.subr.bf16.mxu0 0
        %2765 = vmatpush1.bf16.msra.mxu0 0
        %2766 = vmatprep.subr.bf16.mxu0 0
        %2767 = vmatpush1.bf16.msra.mxu0 0
        %2768 = vmatprep.subr.bf16.mxu0 0
        %2769 = vmatpush1.bf16.msra.mxu0 0
        %2770 = vmatprep.subr.bf16.mxu0 0
        %2771 = vmatpush1.bf16.msra.mxu0 0
        %2772 = vmatprep.subr.bf16.mxu0 0
        %2773 = vmatpush1.bf16.msra.mxu0 0
        %2774 = vmatprep.subr.bf16.mxu0 0
        %2775 = vmatpush1.bf16.msra.mxu0 0
        %2776 = vmatprep.subr.bf16.mxu0 0
        %2777 = vmatpush1.bf16.msra.mxu0 0
        %2778 = vmatprep.subr.bf16.mxu0 0
        %2779 = vmatpush1.bf16.msra.mxu0 0
        %2780 = vmatprep.subr.bf16.mxu0 0
        %2781 = vmatpush1.bf16.msra.mxu0 0
        %2782 = vmatprep.mubr.bf16.mxu0 0
        %2783 = vmatmul.mubr.bf16.gmra.mrb[0].mxu0 %v2576
        %v2784 = vpop.f32.mrb[0].mxu0
        %v2785 = vadd.f32 0.0, %v2784
        %v2786 = vpop.f32.mrb[0].mxu0
        %v2787 = vadd.f32 0.0, %v2786
        %v2788 = vpop.f32.mrb[0].mxu0
        %v2789 = vadd.f32 0.0, %v2788
        %v2790 = vpop.f32.mrb[0].mxu0
        %v2791 = vadd.f32 0.0, %v2790
        %2792 = vdwg.mxu0
        %2793 = vmatprep.subr.bf16.mxu0 %v2184
        %2794 = vmatpush1.bf16.msra.mxu0 %v2183
        %2795 = vmatprep.subr.bf16.mxu0 %v2200
        %2796 = vmatpush1.bf16.msra.mxu0 %v2199
        %2797 = vmatprep.subr.bf16.mxu0 %v2216
        %2798 = vmatpush1.bf16.msra.mxu0 %v2215
        %2799 = vmatprep.subr.bf16.mxu0 %v2232
        %2800 = vmatpush1.bf16.msra.mxu0 %v2231
        %2801 = vmatprep.subr.bf16.mxu0 0
        %2802 = vmatpush1.bf16.msra.mxu0 0
        %2803 = vmatprep.subr.bf16.mxu0 0
        %2804 = vmatpush1.bf16.msra.mxu0 0
        %2805 = vmatprep.subr.bf16.mxu0 0
        %2806 = vmatpush1.bf16.msra.mxu0 0
        %2807 = vmatprep.subr.bf16.mxu0 0
        %2808 = vmatpush1.bf16.msra.mxu0 0
        %2809 = vmatprep.subr.bf16.mxu0 0
        %2810 = vmatpush1.bf16.msra.mxu0 0
        %2811 = vmatprep.subr.bf16.mxu0 0
        %2812 = vmatpush1.bf16.msra.mxu0 0
        %2813 = vmatprep.subr.bf16.mxu0 0
        %2814 = vmatpush1.bf16.msra.mxu0 0
        %2815 = vmatprep.subr.bf16.mxu0 0
        %2816 = vmatpush1.bf16.msra.mxu0 0
        %2817 = vmatprep.subr.bf16.mxu0 0
        %2818 = vmatpush1.bf16.msra.mxu0 0
        %2819 = vmatprep.subr.bf16.mxu0 0
        %2820 = vmatpush1.bf16.msra.mxu0 0
        %2821 = vmatprep.subr.bf16.mxu0 0
        %2822 = vmatpush1.bf16.msra.mxu0 0
        %2823 = vmatprep.subr.bf16.mxu0 0
        %2824 = vmatpush1.bf16.msra.mxu0 0
        %2825 = vmatprep.mubr.bf16.mxu0 0
        %2826 = vmatmul.mubr.bf16.gmra.mrb[0].mxu0 %v2576
        %v2827 = vpop.f32.mrb[0].mxu0
        %v2828 = vadd.f32 0.0, %v2827
        %v2829 = vpop.f32.mrb[0].mxu0
        %v2830 = vadd.f32 0.0, %v2829
        %v2831 = vpop.f32.mrb[0].mxu0
        %v2832 = vadd.f32 0.0, %v2831
        %v2833 = vpop.f32.mrb[0].mxu0
        %v2834 = vadd.f32 0.0, %v2833
        %2835 = vdwg.mxu0
        %2836 = vmatprep.subr.bf16.mxu0 %v2186
        %2837 = vmatpush1.bf16.msra.mxu0 %v2185
        %2838 = vmatprep.subr.bf16.mxu0 %v2202
        %2839 = vmatpush1.bf16.msra.mxu0 %v2201
        %2840 = vmatprep.subr.bf16.mxu0 %v2218
        %2841 = vmatpush1.bf16.msra.mxu0 %v2217
        %2842 = vmatprep.subr.bf16.mxu0 %v2234
        %2843 = vmatpush1.bf16.msra.mxu0 %v2233
        %2844 = vmatprep.subr.bf16.mxu0 0
        %2845 = vmatpush1.bf16.msra.mxu0 0
        %2846 = vmatprep.subr.bf16.mxu0 0
        %2847 = vmatpush1.bf16.msra.mxu0 0
        %2848 = vmatprep.subr.bf16.mxu0 0
        %2849 = vmatpush1.bf16.msra.mxu0 0
        %2850 = vmatprep.subr.bf16.mxu0 0
        %2851 = vmatpush1.bf16.msra.mxu0 0
        %2852 = vmatprep.subr.bf16.mxu0 0
        %2853 = vmatpush1.bf16.msra.mxu0 0
        %2854 = vmatprep.subr.bf16.mxu0 0
        %2855 = vmatpush1.bf16.msra.mxu0 0
        %2856 = vmatprep.subr.bf16.mxu0 0
        %2857 = vmatpush1.bf16.msra.mxu0 0
        %2858 = vmatprep.subr.bf16.mxu0 0
        %2859 = vmatpush1.bf16.msra.mxu0 0
        %2860 = vmatprep.subr.bf16.mxu0 0
        %2861 = vmatpush1.bf16.msra.mxu0 0
        %2862 = vmatprep.subr.bf16.mxu0 0
        %2863 = vmatpush1.bf16.msra.mxu0 0
        %2864 = vmatprep.subr.bf16.mxu0 0
        %2865 = vmatpush1.bf16.msra.mxu0 0
        %2866 = vmatprep.subr.bf16.mxu0 0
        %2867 = vmatpush1.bf16.msra.mxu0 0
        %2868 = vmatprep.mubr.bf16.mxu0 0
        %2869 = vmatmul.mubr.bf16.gmra.mrb[0].mxu0 %v2576
        %v2870 = vpop.f32.mrb[0].mxu0
        %v2871 = vadd.f32 0.0, %v2870
        %v2872 = vpop.f32.mrb[0].mxu0
        %v2873 = vadd.f32 0.0, %v2872
        %v2874 = vpop.f32.mrb[0].mxu0
        %v2875 = vadd.f32 0.0, %v2874
        %v2876 = vpop.f32.mrb[0].mxu0
        %v2877 = vadd.f32 0.0, %v2876
        %2878 = vdwg.mxu0
        %2879 = vmatprep.subr.bf16.mxu0 %v2188
        %2880 = vmatpush1.bf16.msra.mxu0 %v2187
        %2881 = vmatprep.subr.bf16.mxu0 %v2204
        %2882 = vmatpush1.bf16.msra.mxu0 %v2203
        %2883 = vmatprep.subr.bf16.mxu0 %v2220
        %2884 = vmatpush1.bf16.msra.mxu0 %v2219
        %2885 = vmatprep.subr.bf16.mxu0 %v2236
        %2886 = vmatpush1.bf16.msra.mxu0 %v2235
        %2887 = vmatprep.subr.bf16.mxu0 0
        %2888 = vmatpush1.bf16.msra.mxu0 0
        %2889 = vmatprep.subr.bf16.mxu0 0
        %2890 = vmatpush1.bf16.msra.mxu0 0
        %2891 = vmatprep.subr.bf16.mxu0 0
        %2892 = vmatpush1.bf16.msra.mxu0 0
        %2893 = vmatprep.subr.bf16.mxu0 0
        %2894 = vmatpush1.bf16.msra.mxu0 0
        %2895 = vmatprep.subr.bf16.mxu0 0
        %2896 = vmatpush1.bf16.msra.mxu0 0
        %2897 = vmatprep.subr.bf16.mxu0 0
        %2898 = vmatpush1.bf16.msra.mxu0 0
        %2899 = vmatprep.subr.bf16.mxu0 0
        %2900 = vmatpush1.bf16.msra.mxu0 0
        %2901 = vmatprep.subr.bf16.mxu0 0
        %2902 = vmatpush1.bf16.msra.mxu0 0
        %2903 = vmatprep.subr.bf16.mxu0 0
        %2904 = vmatpush1.bf16.msra.mxu0 0
        %2905 = vmatprep.subr.bf16.mxu0 0
        %2906 = vmatpush1.bf16.msra.mxu0 0
        %2907 = vmatprep.subr.bf16.mxu0 0
        %2908 = vmatpush1.bf16.msra.mxu0 0
        %2909 = vmatprep.subr.bf16.mxu0 0
        %2910 = vmatpush1.bf16.msra.mxu0 0
        %2911 = vmatprep.mubr.bf16.mxu0 0
        %2912 = vmatmul.mubr.bf16.gmra.mrb[0].mxu0 %v2576
        %v2913 = vpop.f32.mrb[0].mxu0
        %v2914 = vadd.f32 0.0, %v2913
        %v2915 = vpop.f32.mrb[0].mxu0
        %v2916 = vadd.f32 0.0, %v2915
        %v2917 = vpop.f32.mrb[0].mxu0
        %v2918 = vadd.f32 0.0, %v2917
        %v2919 = vpop.f32.mrb[0].mxu0
        %v2920 = vadd.f32 0.0, %v2919
        %2921 = vdwg.mxu0
        %v2922 = vld [vmem:[%s6] sm:$0xf]
        %v2923 = vld [vmem:[%s6 + $0x4] sm:$0xf]
        %v2924 = vld [vmem:[%s6 + $0x8] sm:$0xf]
        %v2925 = vld [vmem:[%s6 + $0xc] sm:$0xf]
        %v2926 = vld [vmem:[%s6 + $0x10] sm:$0xf]
        %v2927 = vld [vmem:[%s6 + $0x14] sm:$0xf]
        %v2928 = vld [vmem:[%s6 + $0x18] sm:$0xf]
        %v2929 = vld [vmem:[%s6 + $0x1c] sm:$0xf]
        %v2930 = vld [vmem:[%s7] sm:$0xf]
        %v2931 = vld [vmem:[%s7 + $0x4] sm:$0xf]
        %v2932 = vld [vmem:[%s7 + $0x8] sm:$0xf]
        %v2933 = vld [vmem:[%s7 + $0xc] sm:$0xf]
        %v2934 = vld [vmem:[%s7 + $0x10] sm:$0xf]
        %v2935 = vld [vmem:[%s7 + $0x14] sm:$0xf]
        %v2936 = vld [vmem:[%s7 + $0x18] sm:$0xf]
        %v2937 = vld [vmem:[%s7 + $0x1c] sm:$0xf]
        %v2938 = vpack.c.bf16 %v2617, %v2613
        %v2939 = vpack.c.bf16 %v2619, %v2615
        %v2940 = vpack.c.bf16 %v2660, %v2656
        %v2941 = vpack.c.bf16 %v2662, %v2658
        %v2942 = vpack.c.bf16 %v2703, %v2699
        %v2943 = vpack.c.bf16 %v2705, %v2701
        %v2944 = vpack.c.bf16 %v2746, %v2742
        %v2945 = vpack.c.bf16 %v2748, %v2744
        %v2946 = vpack.c.bf16 %v2789, %v2785
        %v2947 = vpack.c.bf16 %v2791, %v2787
        %v2948 = vpack.c.bf16 %v2832, %v2828
        %v2949 = vpack.c.bf16 %v2834, %v2830
        %v2950 = vpack.c.bf16 %v2875, %v2871
        %v2951 = vpack.c.bf16 %v2877, %v2873
        %v2952 = vpack.c.bf16 %v2918, %v2914
        %v2953 = vpack.c.bf16 %v2920, %v2916
        %v2962 = vunpack.c.l.b16 %v2930
        %v2963 = vunpack.c.l.b16 %v2931
        %v2964 = vunpack.c.l.b16 %v2932
        %v2965 = vunpack.c.l.b16 %v2933
        %v2966 = vunpack.c.l.b16 %v2934
        %v2967 = vunpack.c.l.b16 %v2935
        %v2968 = vunpack.c.l.b16 %v2936
        %v2969 = vunpack.c.l.b16 %v2937
        %v2970 = vpack.c.b16 %v2963, %v2962
        %v2971 = vpack.c.b16 %v2965, %v2964
        %v2972 = vpack.c.b16 %v2967, %v2966
        %v2973 = vpack.c.b16 %v2969, %v2968
        %vm2974 = vcmask 121856
        %v2976 = vsel %vm2974, %v2970, 0
        %v2979 = vsel %vm2974, %v2971, 0
        %v2982 = vsel %vm2974, %v2972, 0
        %v2985 = vsel %vm2974, %v2973, 0
        %vm2987 = vcmask 1046528
        %vm2988 = vcmask 1047552
        %v2989 = vsel %vm2987, 4294967295, 65535
        %v2990 = vsel %vm2988, %v2989, 0
        %v2992 = vand.u32 %v2938, %v2990
        %v2995 = vand.u32 %v2939, %v2990
        %v2998 = vand.u32 %v2940, %v2990
        %v3001 = vand.u32 %v2941, %v2990
        %v3004 = vand.u32 %v2942, %v2990
        %v3007 = vand.u32 %v2943, %v2990
        %v3010 = vand.u32 %v2944, %v2990
        %v3013 = vand.u32 %v2945, %v2990
        %v3016 = vand.u32 %v2946, %v2990
        %v3019 = vand.u32 %v2947, %v2990
        %v3022 = vand.u32 %v2948, %v2990
        %v3025 = vand.u32 %v2949, %v2990
        %v3028 = vand.u32 %v2950, %v2990
        %v3031 = vand.u32 %v2951, %v2990
        %v3034 = vand.u32 %v2952, %v2990
        %v3037 = vand.u32 %v2953, %v2990
        %3039 = vmatprep.subr.bf16.mxu0 %v2995
        %3040 = vmatpush1.bf16.msra.mxu0 %v2992
        %3041 = vmatprep.subr.bf16.mxu0 0
        %3042 = vmatpush1.bf16.msra.mxu0 0
        %3043 = vmatprep.subr.bf16.mxu0 0
        %3044 = vmatpush1.bf16.msra.mxu0 0
        %3045 = vmatprep.subr.bf16.mxu0 0
        %3046 = vmatpush1.bf16.msra.mxu0 0
        %3047 = vmatprep.subr.bf16.mxu0 0
        %3048 = vmatpush1.bf16.msra.mxu0 0
        %3049 = vmatprep.subr.bf16.mxu0 0
        %3050 = vmatpush1.bf16.msra.mxu0 0
        %3051 = vmatprep.subr.bf16.mxu0 0
        %3052 = vmatpush1.bf16.msra.mxu0 0
        %3053 = vmatprep.subr.bf16.mxu0 0
        %3054 = vmatpush1.bf16.msra.mxu0 0
        %3055 = vmatprep.subr.bf16.mxu0 0
        %3056 = vmatpush1.bf16.msra.mxu0 0
        %3057 = vmatprep.subr.bf16.mxu0 0
        %3058 = vmatpush1.bf16.msra.mxu0 0
        %3059 = vmatprep.subr.bf16.mxu0 0
        %3060 = vmatpush1.bf16.msra.mxu0 0
        %3061 = vmatprep.subr.bf16.mxu0 0
        %3062 = vmatpush1.bf16.msra.mxu0 0
        %3063 = vmatprep.subr.bf16.mxu0 0
        %3064 = vmatpush1.bf16.msra.mxu0 0
        %3065 = vmatprep.subr.bf16.mxu0 0
        %3066 = vmatpush1.bf16.msra.mxu0 0
        %3067 = vmatprep.subr.bf16.mxu0 0
        %3068 = vmatpush1.bf16.msra.mxu0 0
        %3069 = vmatprep.subr.bf16.mxu0 0
        %3070 = vmatpush1.bf16.msra.mxu0 0
        %3071 = vmatprep.mubr.bf16.mxu0 0
        %3072 = vmatmul.mubr.bf16.gmra.mrb[0].mxu0 %v2976
        %v3073 = vpop.f32.mrb[0].mxu0
        %v3074 = vadd.f32 0.0, %v3073
        %v3075 = vpop.f32.mrb[0].mxu0
        %v3076 = vadd.f32 0.0, %v3075
        %v3077 = vpop.f32.mrb[0].mxu0
        %v3078 = vadd.f32 0.0, %v3077
        %v3079 = vpop.f32.mrb[0].mxu0
        %v3080 = vadd.f32 0.0, %v3079
        %3081 = vmatprep.mubr.bf16.mxu0 0
        %3082 = vmatmul.mubr.bf16.gmra.mrb[0].mxu0 %v2979
        %v3083 = vpop.f32.mrb[0].mxu0
        %v3084 = vadd.f32 0.0, %v3083
        %v3085 = vpop.f32.mrb[0].mxu0
        %v3086 = vadd.f32 0.0, %v3085
        %v3087 = vpop.f32.mrb[0].mxu0
        %v3088 = vadd.f32 0.0, %v3087
        %v3089 = vpop.f32.mrb[0].mxu0
        %v3090 = vadd.f32 0.0, %v3089
        %3091 = vmatprep.mubr.bf16.mxu0 0
        %3092 = vmatmul.mubr.bf16.gmra.mrb[0].mxu0 %v2982
        %v3093 = vpop.f32.mrb[0].mxu0
        %v3094 = vadd.f32 0.0, %v3093
        %v3095 = vpop.f32.mrb[0].mxu0
        %v3096 = vadd.f32 0.0, %v3095
        %v3097 = vpop.f32.mrb[0].mxu0
        %v3098 = vadd.f32 0.0, %v3097
        %v3099 = vpop.f32.mrb[0].mxu0
        %v3100 = vadd.f32 0.0, %v3099
        %3101 = vmatprep.mubr.bf16.mxu0 0
        %3102 = vmatmul.mubr.bf16.gmra.mrb[0].mxu0 %v2985
        %v3103 = vpop.f32.mrb[0].mxu0
        %v3104 = vadd.f32 0.0, %v3103
        %v3105 = vpop.f32.mrb[0].mxu0
        %v3106 = vadd.f32 0.0, %v3105
        %v3107 = vpop.f32.mrb[0].mxu0
        %v3108 = vadd.f32 0.0, %v3107
        %v3109 = vpop.f32.mrb[0].mxu0
        %v3110 = vadd.f32 0.0, %v3109
        %3111 = vdwg.mxu0
        %3112 = vmatprep.subr.bf16.mxu0 %v3001
        %3113 = vmatpush1.bf16.msra.mxu0 %v2998
        %3114 = vmatprep.subr.bf16.mxu0 0
        %3115 = vmatpush1.bf16.msra.mxu0 0
        %3116 = vmatprep.subr.bf16.mxu0 0
        %3117 = vmatpush1.bf16.msra.mxu0 0
        %3118 = vmatprep.subr.bf16.mxu0 0
        %3119 = vmatpush1.bf16.msra.mxu0 0
        %3120 = vmatprep.subr.bf16.mxu0 0
        %3121 = vmatpush1.bf16.msra.mxu0 0
        %3122 = vmatprep.subr.bf16.mxu0 0
        %3123 = vmatpush1.bf16.msra.mxu0 0
        %3124 = vmatprep.subr.bf16.mxu0 0
        %3125 = vmatpush1.bf16.msra.mxu0 0
        %3126 = vmatprep.subr.bf16.mxu0 0
        %3127 = vmatpush1.bf16.msra.mxu0 0
        %3128 = vmatprep.subr.bf16.mxu0 0
        %3129 = vmatpush1.bf16.msra.mxu0 0
        %3130 = vmatprep.subr.bf16.mxu0 0
        %3131 = vmatpush1.bf16.msra.mxu0 0
        %3132 = vmatprep.subr.bf16.mxu0 0
        %3133 = vmatpush1.bf16.msra.mxu0 0
        %3134 = vmatprep.subr.bf16.mxu0 0
        %3135 = vmatpush1.bf16.msra.mxu0 0
        %3136 = vmatprep.subr.bf16.mxu0 0
        %3137 = vmatpush1.bf16.msra.mxu0 0
        %3138 = vmatprep.subr.bf16.mxu0 0
        %3139 = vmatpush1.bf16.msra.mxu0 0
        %3140 = vmatprep.subr.bf16.mxu0 0
        %3141 = vmatpush1.bf16.msra.mxu0 0
        %3142 = vmatprep.subr.bf16.mxu0 0
        %3143 = vmatpush1.bf16.msra.mxu0 0
        %3144 = vmatprep.mubr.bf16.mxu0 0
        %3145 = vmatmul.mubr.bf16.gmra.mrb[0].mxu0 %v2976
        %v3146 = vpop.f32.mrb[0].mxu0
        %v3147 = vadd.f32 0.0, %v3146
        %v3148 = vpop.f32.mrb[0].mxu0
        %v3149 = vadd.f32 0.0, %v3148
        %v3150 = vpop.f32.mrb[0].mxu0
        %v3151 = vadd.f32 0.0, %v3150
        %v3152 = vpop.f32.mrb[0].mxu0
        %v3153 = vadd.f32 0.0, %v3152
        %3154 = vmatprep.mubr.bf16.mxu0 0
        %3155 = vmatmul.mubr.bf16.gmra.mrb[0].mxu0 %v2979
        %v3156 = vpop.f32.mrb[0].mxu0
        %v3157 = vadd.f32 0.0, %v3156
        %v3158 = vpop.f32.mrb[0].mxu0
        %v3159 = vadd.f32 0.0, %v3158
        %v3160 = vpop.f32.mrb[0].mxu0
        %v3161 = vadd.f32 0.0, %v3160
        %v3162 = vpop.f32.mrb[0].mxu0
        %v3163 = vadd.f32 0.0, %v3162
        %3164 = vmatprep.mubr.bf16.mxu0 0
        %3165 = vmatmul.mubr.bf16.gmra.mrb[0].mxu0 %v2982
        %v3166 = vpop.f32.mrb[0].mxu0
        %v3167 = vadd.f32 0.0, %v3166
        %v3168 = vpop.f32.mrb[0].mxu0
        %v3169 = vadd.f32 0.0, %v3168
        %v3170 = vpop.f32.mrb[0].mxu0
        %v3171 = vadd.f32 0.0, %v3170
        %v3172 = vpop.f32.mrb[0].mxu0
        %v3173 = vadd.f32 0.0, %v3172
        %3174 = vmatprep.mubr.bf16.mxu0 0
        %3175 = vmatmul.mubr.bf16.gmra.mrb[0].mxu0 %v2985
        %v3176 = vpop.f32.mrb[0].mxu0
        %v3177 = vadd.f32 0.0, %v3176
        %v3178 = vpop.f32.mrb[0].mxu0
        %v3179 = vadd.f32 0.0, %v3178
        %v3180 = vpop.f32.mrb[0].mxu0
        %v3181 = vadd.f32 0.0, %v3180
        %v3182 = vpop.f32.mrb[0].mxu0
        %v3183 = vadd.f32 0.0, %v3182
        %3184 = vdwg.mxu0
        %3185 = vmatprep.subr.bf16.mxu0 %v3007
        %3186 = vmatpush1.bf16.msra.mxu0 %v3004
        %3187 = vmatprep.subr.bf16.mxu0 0
        %3188 = vmatpush1.bf16.msra.mxu0 0
        %3189 = vmatprep.subr.bf16.mxu0 0
        %3190 = vmatpush1.bf16.msra.mxu0 0
        %3191 = vmatprep.subr.bf16.mxu0 0
        %3192 = vmatpush1.bf16.msra.mxu0 0
        %3193 = vmatprep.subr.bf16.mxu0 0
        %3194 = vmatpush1.bf16.msra.mxu0 0
        %3195 = vmatprep.subr.bf16.mxu0 0
        %3196 = vmatpush1.bf16.msra.mxu0 0
        %3197 = vmatprep.subr.bf16.mxu0 0
        %3198 = vmatpush1.bf16.msra.mxu0 0
        %3199 = vmatprep.subr.bf16.mxu0 0
        %3200 = vmatpush1.bf16.msra.mxu0 0
        %3201 = vmatprep.subr.bf16.mxu0 0
        %3202 = vmatpush1.bf16.msra.mxu0 0
        %3203 = vmatprep.subr.bf16.mxu0 0
        %3204 = vmatpush1.bf16.msra.mxu0 0
        %3205 = vmatprep.subr.bf16.mxu0 0
        %3206 = vmatpush1.bf16.msra.mxu0 0
        %3207 = vmatprep.subr.bf16.mxu0 0
        %3208 = vmatpush1.bf16.msra.mxu0 0
        %3209 = vmatprep.subr.bf16.mxu0 0
        %3210 = vmatpush1.bf16.msra.mxu0 0
        %3211 = vmatprep.subr.bf16.mxu0 0
        %3212 = vmatpush1.bf16.msra.mxu0 0
        %3213 = vmatprep.subr.bf16.mxu0 0
        %3214 = vmatpush1.bf16.msra.mxu0 0
        %3215 = vmatprep.subr.bf16.mxu0 0
        %3216 = vmatpush1.bf16.msra.mxu0 0
        %3217 = vmatprep.mubr.bf16.mxu0 0
        %3218 = vmatmul.mubr.bf16.gmra.mrb[0].mxu0 %v2976
        %v3219 = vpop.f32.mrb[0].mxu0
        %v3220 = vadd.f32 0.0, %v3219
        %v3221 = vpop.f32.mrb[0].mxu0
        %v3222 = vadd.f32 0.0, %v3221
        %v3223 = vpop.f32.mrb[0].mxu0
        %v3224 = vadd.f32 0.0, %v3223
        %v3225 = vpop.f32.mrb[0].mxu0
        %v3226 = vadd.f32 0.0, %v3225
        %3227 = vmatprep.mubr.bf16.mxu0 0
        %3228 = vmatmul.mubr.bf16.gmra.mrb[0].mxu0 %v2979
        %v3229 = vpop.f32.mrb[0].mxu0
        %v3230 = vadd.f32 0.0, %v3229
        %v3231 = vpop.f32.mrb[0].mxu0
        %v3232 = vadd.f32 0.0, %v3231
        %v3233 = vpop.f32.mrb[0].mxu0
        %v3234 = vadd.f32 0.0, %v3233
        %v3235 = vpop.f32.mrb[0].mxu0
        %v3236 = vadd.f32 0.0, %v3235
        %3237 = vmatprep.mubr.bf16.mxu0 0
        %3238 = vmatmul.mubr.bf16.gmra.mrb[0].mxu0 %v2982
        %v3239 = vpop.f32.mrb[0].mxu0
        %v3240 = vadd.f32 0.0, %v3239
        %v3241 = vpop.f32.mrb[0].mxu0
        %v3242 = vadd.f32 0.0, %v3241
        %v3243 = vpop.f32.mrb[0].mxu0
        %v3244 = vadd.f32 0.0, %v3243
        %v3245 = vpop.f32.mrb[0].mxu0
        %v3246 = vadd.f32 0.0, %v3245
        %3247 = vmatprep.mubr.bf16.mxu0 0
        %3248 = vmatmul.mubr.bf16.gmra.mrb[0].mxu0 %v2985
        %v3249 = vpop.f32.mrb[0].mxu0
        %v3250 = vadd.f32 0.0, %v3249
        %v3251 = vpop.f32.mrb[0].mxu0
        %v3252 = vadd.f32 0.0, %v3251
        %v3253 = vpop.f32.mrb[0].mxu0
        %v3254 = vadd.f32 0.0, %v3253
        %v3255 = vpop.f32.mrb[0].mxu0
        %v3256 = vadd.f32 0.0, %v3255
        %3257 = vdwg.mxu0
        %3258 = vmatprep.subr.bf16.mxu0 %v3013
        %3259 = vmatpush1.bf16.msra.mxu0 %v3010
        %3260 = vmatprep.subr.bf16.mxu0 0
        %3261 = vmatpush1.bf16.msra.mxu0 0
        %3262 = vmatprep.subr.bf16.mxu0 0
        %3263 = vmatpush1.bf16.msra.mxu0 0
        %3264 = vmatprep.subr.bf16.mxu0 0
        %3265 = vmatpush1.bf16.msra.mxu0 0
        %3266 = vmatprep.subr.bf16.mxu0 0
        %3267 = vmatpush1.bf16.msra.mxu0 0
        %3268 = vmatprep.subr.bf16.mxu0 0
        %3269 = vmatpush1.bf16.msra.mxu0 0
        %3270 = vmatprep.subr.bf16.mxu0 0
        %3271 = vmatpush1.bf16.msra.mxu0 0
        %3272 = vmatprep.subr.bf16.mxu0 0
        %3273 = vmatpush1.bf16.msra.mxu0 0
        %3274 = vmatprep.subr.bf16.mxu0 0
        %3275 = vmatpush1.bf16.msra.mxu0 0
        %3276 = vmatprep.subr.bf16.mxu0 0
        %3277 = vmatpush1.bf16.msra.mxu0 0
        %3278 = vmatprep.subr.bf16.mxu0 0
        %3279 = vmatpush1.bf16.msra.mxu0 0
        %3280 = vmatprep.subr.bf16.mxu0 0
        %3281 = vmatpush1.bf16.msra.mxu0 0
        %3282 = vmatprep.subr.bf16.mxu0 0
        %3283 = vmatpush1.bf16.msra.mxu0 0
        %3284 = vmatprep.subr.bf16.mxu0 0
        %3285 = vmatpush1.bf16.msra.mxu0 0
        %3286 = vmatprep.subr.bf16.mxu0 0
        %3287 = vmatpush1.bf16.msra.mxu0 0
        %3288 = vmatprep.subr.bf16.mxu0 0
        %3289 = vmatpush1.bf16.msra.mxu0 0
        %3290 = vmatprep.mubr.bf16.mxu0 0
        %3291 = vmatmul.mubr.bf16.gmra.mrb[0].mxu0 %v2976
        %v3292 = vpop.f32.mrb[0].mxu0
        %v3293 = vadd.f32 0.0, %v3292
        %v3294 = vpop.f32.mrb[0].mxu0
        %v3295 = vadd.f32 0.0, %v3294
        %v3296 = vpop.f32.mrb[0].mxu0
        %v3297 = vadd.f32 0.0, %v3296
        %v3298 = vpop.f32.mrb[0].mxu0
        %v3299 = vadd.f32 0.0, %v3298
        %3300 = vmatprep.mubr.bf16.mxu0 0
        %3301 = vmatmul.mubr.bf16.gmra.mrb[0].mxu0 %v2979
        %v3302 = vpop.f32.mrb[0].mxu0
        %v3303 = vadd.f32 0.0, %v3302
        %v3304 = vpop.f32.mrb[0].mxu0
        %v3305 = vadd.f32 0.0, %v3304
        %v3306 = vpop.f32.mrb[0].mxu0
        %v3307 = vadd.f32 0.0, %v3306
        %v3308 = vpop.f32.mrb[0].mxu0
        %v3309 = vadd.f32 0.0, %v3308
        %3310 = vmatprep.mubr.bf16.mxu0 0
        %3311 = vmatmul.mubr.bf16.gmra.mrb[0].mxu0 %v2982
        %v3312 = vpop.f32.mrb[0].mxu0
        %v3313 = vadd.f32 0.0, %v3312
        %v3314 = vpop.f32.mrb[0].mxu0
        %v3315 = vadd.f32 0.0, %v3314
        %v3316 = vpop.f32.mrb[0].mxu0
        %v3317 = vadd.f32 0.0, %v3316
        %v3318 = vpop.f32.mrb[0].mxu0
        %v3319 = vadd.f32 0.0, %v3318
        %3320 = vmatprep.mubr.bf16.mxu0 0
        %3321 = vmatmul.mubr.bf16.gmra.mrb[0].mxu0 %v2985
        %v3322 = vpop.f32.mrb[0].mxu0
        %v3323 = vadd.f32 0.0, %v3322
        %v3324 = vpop.f32.mrb[0].mxu0
        %v3325 = vadd.f32 0.0, %v3324
        %v3326 = vpop.f32.mrb[0].mxu0
        %v3327 = vadd.f32 0.0, %v3326
        %v3328 = vpop.f32.mrb[0].mxu0
        %v3329 = vadd.f32 0.0, %v3328
        %3330 = vdwg.mxu0
        %3331 = vmatprep.subr.bf16.mxu0 %v3019
        %3332 = vmatpush1.bf16.msra.mxu0 %v3016
        %3333 = vmatprep.subr.bf16.mxu0 0
        %3334 = vmatpush1.bf16.msra.mxu0 0
        %3335 = vmatprep.subr.bf16.mxu0 0
        %3336 = vmatpush1.bf16.msra.mxu0 0
        %3337 = vmatprep.subr.bf16.mxu0 0
        %3338 = vmatpush1.bf16.msra.mxu0 0
        %3339 = vmatprep.subr.bf16.mxu0 0
        %3340 = vmatpush1.bf16.msra.mxu0 0
        %3341 = vmatprep.subr.bf16.mxu0 0
        %3342 = vmatpush1.bf16.msra.mxu0 0
        %3343 = vmatprep.subr.bf16.mxu0 0
        %3344 = vmatpush1.bf16.msra.mxu0 0
        %3345 = vmatprep.subr.bf16.mxu0 0
        %3346 = vmatpush1.bf16.msra.mxu0 0
        %3347 = vmatprep.subr.bf16.mxu0 0
        %3348 = vmatpush1.bf16.msra.mxu0 0
        %3349 = vmatprep.subr.bf16.mxu0 0
        %3350 = vmatpush1.bf16.msra.mxu0 0
        %3351 = vmatprep.subr.bf16.mxu0 0
        %3352 = vmatpush1.bf16.msra.mxu0 0
        %3353 = vmatprep.subr.bf16.mxu0 0
        %3354 = vmatpush1.bf16.msra.mxu0 0
        %3355 = vmatprep.subr.bf16.mxu0 0
        %3356 = vmatpush1.bf16.msra.mxu0 0
        %3357 = vmatprep.subr.bf16.mxu0 0
        %3358 = vmatpush1.bf16.msra.mxu0 0
        %3359 = vmatprep.subr.bf16.mxu0 0
        %3360 = vmatpush1.bf16.msra.mxu0 0
        %3361 = vmatprep.subr.bf16.mxu0 0
        %3362 = vmatpush1.bf16.msra.mxu0 0
        %3363 = vmatprep.mubr.bf16.mxu0 0
        %3364 = vmatmul.mubr.bf16.gmra.mrb[0].mxu0 %v2976
        %v3365 = vpop.f32.mrb[0].mxu0
        %v3366 = vadd.f32 0.0, %v3365
        %v3367 = vpop.f32.mrb[0].mxu0
        %v3368 = vadd.f32 0.0, %v3367
        %v3369 = vpop.f32.mrb[0].mxu0
        %v3370 = vadd.f32 0.0, %v3369
        %v3371 = vpop.f32.mrb[0].mxu0
        %v3372 = vadd.f32 0.0, %v3371
        %3373 = vmatprep.mubr.bf16.mxu0 0
        %3374 = vmatmul.mubr.bf16.gmra.mrb[0].mxu0 %v2979
        %v3375 = vpop.f32.mrb[0].mxu0
        %v3376 = vadd.f32 0.0, %v3375
        %v3377 = vpop.f32.mrb[0].mxu0
        %v3378 = vadd.f32 0.0, %v3377
        %v3379 = vpop.f32.mrb[0].mxu0
        %v3380 = vadd.f32 0.0, %v3379
        %v3381 = vpop.f32.mrb[0].mxu0
        %v3382 = vadd.f32 0.0, %v3381
        %3383 = vmatprep.mubr.bf16.mxu0 0
        %3384 = vmatmul.mubr.bf16.gmra.mrb[0].mxu0 %v2982
        %v3385 = vpop.f32.mrb[0].mxu0
        %v3386 = vadd.f32 0.0, %v3385
        %v3387 = vpop.f32.mrb[0].mxu0
        %v3388 = vadd.f32 0.0, %v3387
        %v3389 = vpop.f32.mrb[0].mxu0
        %v3390 = vadd.f32 0.0, %v3389
        %v3391 = vpop.f32.mrb[0].mxu0
        %v3392 = vadd.f32 0.0, %v3391
        %3393 = vmatprep.mubr.bf16.mxu0 0
        %3394 = vmatmul.mubr.bf16.gmra.mrb[0].mxu0 %v2985
        %v3395 = vpop.f32.mrb[0].mxu0
        %v3396 = vadd.f32 0.0, %v3395
        %v3397 = vpop.f32.mrb[0].mxu0
        %v3398 = vadd.f32 0.0, %v3397
        %v3399 = vpop.f32.mrb[0].mxu0
        %v3400 = vadd.f32 0.0, %v3399
        %v3401 = vpop.f32.mrb[0].mxu0
        %v3402 = vadd.f32 0.0, %v3401
        %3403 = vdwg.mxu0
        %3404 = vmatprep.subr.bf16.mxu0 %v3025
        %3405 = vmatpush1.bf16.msra.mxu0 %v3022
        %3406 = vmatprep.subr.bf16.mxu0 0
        %3407 = vmatpush1.bf16.msra.mxu0 0
        %3408 = vmatprep.subr.bf16.mxu0 0
        %3409 = vmatpush1.bf16.msra.mxu0 0
        %3410 = vmatprep.subr.bf16.mxu0 0
        %3411 = vmatpush1.bf16.msra.mxu0 0
        %3412 = vmatprep.subr.bf16.mxu0 0
        %3413 = vmatpush1.bf16.msra.mxu0 0
        %3414 = vmatprep.subr.bf16.mxu0 0
        %3415 = vmatpush1.bf16.msra.mxu0 0
        %3416 = vmatprep.subr.bf16.mxu0 0
        %3417 = vmatpush1.bf16.msra.mxu0 0
        %3418 = vmatprep.subr.bf16.mxu0 0
        %3419 = vmatpush1.bf16.msra.mxu0 0
        %3420 = vmatprep.subr.bf16.mxu0 0
        %3421 = vmatpush1.bf16.msra.mxu0 0
        %3422 = vmatprep.subr.bf16.mxu0 0
        %3423 = vmatpush1.bf16.msra.mxu0 0
        %3424 = vmatprep.subr.bf16.mxu0 0
        %3425 = vmatpush1.bf16.msra.mxu0 0
        %3426 = vmatprep.subr.bf16.mxu0 0
        %3427 = vmatpush1.bf16.msra.mxu0 0
        %3428 = vmatprep.subr.bf16.mxu0 0
        %3429 = vmatpush1.bf16.msra.mxu0 0
        %3430 = vmatprep.subr.bf16.mxu0 0
        %3431 = vmatpush1.bf16.msra.mxu0 0
        %3432 = vmatprep.subr.bf16.mxu0 0
        %3433 = vmatpush1.bf16.msra.mxu0 0
        %3434 = vmatprep.subr.bf16.mxu0 0
        %3435 = vmatpush1.bf16.msra.mxu0 0
        %3436 = vmatprep.mubr.bf16.mxu0 0
        %3437 = vmatmul.mubr.bf16.gmra.mrb[0].mxu0 %v2976
        %v3438 = vpop.f32.mrb[0].mxu0
        %v3439 = vadd.f32 0.0, %v3438
        %v3440 = vpop.f32.mrb[0].mxu0
        %v3441 = vadd.f32 0.0, %v3440
        %v3442 = vpop.f32.mrb[0].mxu0
        %v3443 = vadd.f32 0.0, %v3442
        %v3444 = vpop.f32.mrb[0].mxu0
        %v3445 = vadd.f32 0.0, %v3444
        %3446 = vmatprep.mubr.bf16.mxu0 0
        %3447 = vmatmul.mubr.bf16.gmra.mrb[0].mxu0 %v2979
        %v3448 = vpop.f32.mrb[0].mxu0
        %v3449 = vadd.f32 0.0, %v3448
        %v3450 = vpop.f32.mrb[0].mxu0
        %v3451 = vadd.f32 0.0, %v3450
        %v3452 = vpop.f32.mrb[0].mxu0
        %v3453 = vadd.f32 0.0, %v3452
        %v3454 = vpop.f32.mrb[0].mxu0
        %v3455 = vadd.f32 0.0, %v3454
        %3456 = vmatprep.mubr.bf16.mxu0 0
        %3457 = vmatmul.mubr.bf16.gmra.mrb[0].mxu0 %v2982
        %v3458 = vpop.f32.mrb[0].mxu0
        %v3459 = vadd.f32 0.0, %v3458
        %v3460 = vpop.f32.mrb[0].mxu0
        %v3461 = vadd.f32 0.0, %v3460
        %v3462 = vpop.f32.mrb[0].mxu0
        %v3463 = vadd.f32 0.0, %v3462
        %v3464 = vpop.f32.mrb[0].mxu0
        %v3465 = vadd.f32 0.0, %v3464
        %3466 = vmatprep.mubr.bf16.mxu0 0
        %3467 = vmatmul.mubr.bf16.gmra.mrb[0].mxu0 %v2985
        %v3468 = vpop.f32.mrb[0].mxu0
        %v3469 = vadd.f32 0.0, %v3468
        %v3470 = vpop.f32.mrb[0].mxu0
        %v3471 = vadd.f32 0.0, %v3470
        %v3472 = vpop.f32.mrb[0].mxu0
        %v3473 = vadd.f32 0.0, %v3472
        %v3474 = vpop.f32.mrb[0].mxu0
        %v3475 = vadd.f32 0.0, %v3474
        %3476 = vdwg.mxu0
        %3477 = vmatprep.subr.bf16.mxu0 %v3031
        %3478 = vmatpush1.bf16.msra.mxu0 %v3028
        %3479 = vmatprep.subr.bf16.mxu0 0
        %3480 = vmatpush1.bf16.msra.mxu0 0
        %3481 = vmatprep.subr.bf16.mxu0 0
        %3482 = vmatpush1.bf16.msra.mxu0 0
        %3483 = vmatprep.subr.bf16.mxu0 0
        %3484 = vmatpush1.bf16.msra.mxu0 0
        %3485 = vmatprep.subr.bf16.mxu0 0
        %3486 = vmatpush1.bf16.msra.mxu0 0
        %3487 = vmatprep.subr.bf16.mxu0 0
        %3488 = vmatpush1.bf16.msra.mxu0 0
        %3489 = vmatprep.subr.bf16.mxu0 0
        %3490 = vmatpush1.bf16.msra.mxu0 0
        %3491 = vmatprep.subr.bf16.mxu0 0
        %3492 = vmatpush1.bf16.msra.mxu0 0
        %3493 = vmatprep.subr.bf16.mxu0 0
        %3494 = vmatpush1.bf16.msra.mxu0 0
        %3495 = vmatprep.subr.bf16.mxu0 0
        %3496 = vmatpush1.bf16.msra.mxu0 0
        %3497 = vmatprep.subr.bf16.mxu0 0
        %3498 = vmatpush1.bf16.msra.mxu0 0
        %3499 = vmatprep.subr.bf16.mxu0 0
        %3500 = vmatpush1.bf16.msra.mxu0 0
        %3501 = vmatprep.subr.bf16.mxu0 0
        %3502 = vmatpush1.bf16.msra.mxu0 0
        %3503 = vmatprep.subr.bf16.mxu0 0
        %3504 = vmatpush1.bf16.msra.mxu0 0
        %3505 = vmatprep.subr.bf16.mxu0 0
        %3506 = vmatpush1.bf16.msra.mxu0 0
        %3507 = vmatprep.subr.bf16.mxu0 0
        %3508 = vmatpush1.bf16.msra.mxu0 0
        %3509 = vmatprep.mubr.bf16.mxu0 0
        %3510 = vmatmul.mubr.bf16.gmra.mrb[0].mxu0 %v2976
        %v3511 = vpop.f32.mrb[0].mxu0
        %v3512 = vadd.f32 0.0, %v3511
        %v3513 = vpop.f32.mrb[0].mxu0
        %v3514 = vadd.f32 0.0, %v3513
        %v3515 = vpop.f32.mrb[0].mxu0
        %v3516 = vadd.f32 0.0, %v3515
        %v3517 = vpop.f32.mrb[0].mxu0
        %v3518 = vadd.f32 0.0, %v3517
        %3519 = vmatprep.mubr.bf16.mxu0 0
        %3520 = vmatmul.mubr.bf16.gmra.mrb[0].mxu0 %v2979
        %v3521 = vpop.f32.mrb[0].mxu0
        %v3522 = vadd.f32 0.0, %v3521
        %v3523 = vpop.f32.mrb[0].mxu0
        %v3524 = vadd.f32 0.0, %v3523
        %v3525 = vpop.f32.mrb[0].mxu0
        %v3526 = vadd.f32 0.0, %v3525
        %v3527 = vpop.f32.mrb[0].mxu0
        %v3528 = vadd.f32 0.0, %v3527
        %3529 = vmatprep.mubr.bf16.mxu0 0
        %3530 = vmatmul.mubr.bf16.gmra.mrb[0].mxu0 %v2982
        %v3531 = vpop.f32.mrb[0].mxu0
        %v3532 = vadd.f32 0.0, %v3531
        %v3533 = vpop.f32.mrb[0].mxu0
        %v3534 = vadd.f32 0.0, %v3533
        %v3535 = vpop.f32.mrb[0].mxu0
        %v3536 = vadd.f32 0.0, %v3535
        %v3537 = vpop.f32.mrb[0].mxu0
        %v3538 = vadd.f32 0.0, %v3537
        %3539 = vmatprep.mubr.bf16.mxu0 0
        %3540 = vmatmul.mubr.bf16.gmra.mrb[0].mxu0 %v2985
        %v3541 = vpop.f32.mrb[0].mxu0
        %v3542 = vadd.f32 0.0, %v3541
        %v3543 = vpop.f32.mrb[0].mxu0
        %v3544 = vadd.f32 0.0, %v3543
        %v3545 = vpop.f32.mrb[0].mxu0
        %v3546 = vadd.f32 0.0, %v3545
        %v3547 = vpop.f32.mrb[0].mxu0
        %v3548 = vadd.f32 0.0, %v3547
        %3549 = vdwg.mxu0
        %3550 = vmatprep.subr.bf16.mxu0 %v3037
        %3551 = vmatpush1.bf16.msra.mxu0 %v3034
        %3552 = vmatprep.subr.bf16.mxu0 0
        %3553 = vmatpush1.bf16.msra.mxu0 0
        %3554 = vmatprep.subr.bf16.mxu0 0
        %3555 = vmatpush1.bf16.msra.mxu0 0
        %3556 = vmatprep.subr.bf16.mxu0 0
        %3557 = vmatpush1.bf16.msra.mxu0 0
        %3558 = vmatprep.subr.bf16.mxu0 0
        %3559 = vmatpush1.bf16.msra.mxu0 0
        %3560 = vmatprep.subr.bf16.mxu0 0
        %3561 = vmatpush1.bf16.msra.mxu0 0
        %3562 = vmatprep.subr.bf16.mxu0 0
        %3563 = vmatpush1.bf16.msra.mxu0 0
        %3564 = vmatprep.subr.bf16.mxu0 0
        %3565 = vmatpush1.bf16.msra.mxu0 0
        %3566 = vmatprep.subr.bf16.mxu0 0
        %3567 = vmatpush1.bf16.msra.mxu0 0
        %3568 = vmatprep.subr.bf16.mxu0 0
        %3569 = vmatpush1.bf16.msra.mxu0 0
        %3570 = vmatprep.subr.bf16.mxu0 0
        %3571 = vmatpush1.bf16.msra.mxu0 0
        %3572 = vmatprep.subr.bf16.mxu0 0
        %3573 = vmatpush1.bf16.msra.mxu0 0
        %3574 = vmatprep.subr.bf16.mxu0 0
        %3575 = vmatpush1.bf16.msra.mxu0 0
        %3576 = vmatprep.subr.bf16.mxu0 0
        %3577 = vmatpush1.bf16.msra.mxu0 0
        %3578 = vmatprep.subr.bf16.mxu0 0
        %3579 = vmatpush1.bf16.msra.mxu0 0
        %3580 = vmatprep.subr.bf16.mxu0 0
        %3581 = vmatpush1.bf16.msra.mxu0 0
        %3582 = vmatprep.mubr.bf16.mxu0 0
        %3583 = vmatmul.mubr.bf16.gmra.mrb[0].mxu0 %v2976
        %v3584 = vpop.f32.mrb[0].mxu0
        %v3585 = vadd.f32 0.0, %v3584
        %v3586 = vpop.f32.mrb[0].mxu0
        %v3587 = vadd.f32 0.0, %v3586
        %v3588 = vpop.f32.mrb[0].mxu0
        %v3589 = vadd.f32 0.0, %v3588
        %v3590 = vpop.f32.mrb[0].mxu0
        %v3591 = vadd.f32 0.0, %v3590
        %3592 = vmatprep.mubr.bf16.mxu0 0
        %3593 = vmatmul.mubr.bf16.gmra.mrb[0].mxu0 %v2979
        %v3594 = vpop.f32.mrb[0].mxu0
        %v3595 = vadd.f32 0.0, %v3594
        %v3596 = vpop.f32.mrb[0].mxu0
        %v3597 = vadd.f32 0.0, %v3596
        %v3598 = vpop.f32.mrb[0].mxu0
        %v3599 = vadd.f32 0.0, %v3598
        %v3600 = vpop.f32.mrb[0].mxu0
        %v3601 = vadd.f32 0.0, %v3600
        %3602 = vmatprep.mubr.bf16.mxu0 0
        %3603 = vmatmul.mubr.bf16.gmra.mrb[0].mxu0 %v2982
        %v3604 = vpop.f32.mrb[0].mxu0
        %v3605 = vadd.f32 0.0, %v3604
        %v3606 = vpop.f32.mrb[0].mxu0
        %v3607 = vadd.f32 0.0, %v3606
        %v3608 = vpop.f32.mrb[0].mxu0
        %v3609 = vadd.f32 0.0, %v3608
        %v3610 = vpop.f32.mrb[0].mxu0
        %v3611 = vadd.f32 0.0, %v3610
        %3612 = vmatprep.mubr.bf16.mxu0 0
        %3613 = vmatmul.mubr.bf16.gmra.mrb[0].mxu0 %v2985
        %v3614 = vpop.f32.mrb[0].mxu0
        %v3615 = vadd.f32 0.0, %v3614
        %v3616 = vpop.f32.mrb[0].mxu0
        %v3617 = vadd.f32 0.0, %v3616
        %v3618 = vpop.f32.mrb[0].mxu0
        %v3619 = vadd.f32 0.0, %v3618
        %v3620 = vpop.f32.mrb[0].mxu0
        %v3621 = vadd.f32 0.0, %v3620
        %3622 = vdwg.mxu0
        %v3631 = vunpack.c.l.b16 %v2922
        %v3632 = vunpack.c.l.b16 %v2923
        %v3633 = vunpack.c.l.b16 %v2924
        %v3634 = vunpack.c.l.b16 %v2925
        %v3635 = vunpack.c.l.b16 %v2926
        %v3636 = vunpack.c.l.b16 %v2927
        %v3637 = vunpack.c.l.b16 %v2928
        %v3638 = vunpack.c.l.b16 %v2929
        %v3639 = vpack.c.b16 %v3632, %v3631
        %v3640 = vpack.c.b16 %v3634, %v3633
        %v3641 = vpack.c.b16 %v3636, %v3635
        %v3642 = vpack.c.b16 %v3638, %v3637
        %v3647 = vcombine.high %v474, %v474
        %v3649 = vunpack.c.l.s4 1983009808
        %v3650 = vunpack.c.0.s8 %v3649
        %v3651 = vlaneseq
        %v3652 = vshrl.u32 %v3651, 7
        %v3653 = vsub.s32 %v3650, %v3652
        %v3654 = vrot.slane %v474, %v3653
        %v3656 = vunpack.c.l.s4 1983009808
        %v3657 = vunpack.c.0.s8 %v3656
        %v3658 = vlaneseq
        %v3659 = vshrl.u32 %v3658, 7
        %v3660 = vsub.s32 %v3657, %v3659
        %v3661 = vrot.slane %v3647, %v3660
        %v3662 = vcombine.high %v3654, %v3654
        %v3663 = vcombine.high %v3661, %v3661
        %v3664 = vcombine.high %v475, %v475
        %v3666 = vunpack.c.l.s4 1983009808
        %v3667 = vunpack.c.0.s8 %v3666
        %v3668 = vlaneseq
        %v3669 = vshrl.u32 %v3668, 7
        %v3670 = vsub.s32 %v3667, %v3669
        %v3671 = vrot.slane %v475, %v3670
        %v3673 = vunpack.c.l.s4 1983009808
        %v3674 = vunpack.c.0.s8 %v3673
        %v3675 = vlaneseq
        %v3676 = vshrl.u32 %v3675, 7
        %v3677 = vsub.s32 %v3674, %v3676
        %v3678 = vrot.slane %v3664, %v3677
        %v3679 = vcombine.high %v3671, %v3671
        %v3680 = vcombine.high %v3678, %v3678
        %v3681 = vcombine.high %v476, %v476
        %v3683 = vunpack.c.l.s4 1983009808
        %v3684 = vunpack.c.0.s8 %v3683
        %v3685 = vlaneseq
        %v3686 = vshrl.u32 %v3685, 7
        %v3687 = vsub.s32 %v3684, %v3686
        %v3688 = vrot.slane %v476, %v3687
        %v3690 = vunpack.c.l.s4 1983009808
        %v3691 = vunpack.c.0.s8 %v3690
        %v3692 = vlaneseq
        %v3693 = vshrl.u32 %v3692, 7
        %v3694 = vsub.s32 %v3691, %v3693
        %v3695 = vrot.slane %v3681, %v3694
        %v3696 = vcombine.high %v3688, %v3688
        %v3697 = vcombine.high %v3695, %v3695
        %v3698 = vcombine.high %v477, %v477
        %v3700 = vunpack.c.l.s4 1983009808
        %v3701 = vunpack.c.0.s8 %v3700
        %v3702 = vlaneseq
        %v3703 = vshrl.u32 %v3702, 7
        %v3704 = vsub.s32 %v3701, %v3703
        %v3705 = vrot.slane %v477, %v3704
        %v3707 = vunpack.c.l.s4 1983009808
        %v3708 = vunpack.c.0.s8 %v3707
        %v3709 = vlaneseq
        %v3710 = vshrl.u32 %v3709, 7
        %v3711 = vsub.s32 %v3708, %v3710
        %v3712 = vrot.slane %v3698, %v3711
        %v3713 = vcombine.high %v3705, %v3705
        %v3714 = vcombine.high %v3712, %v3712
        %v3716 = vsel %vm578, %v3639, 0
        %v3719 = vsel %vm578, %v3640, 0
        %v3722 = vsel %vm578, %v3641, 0
        %v3725 = vsel %vm578, %v3642, 0
        %v3728 = vand.u32 %v3654, %v594
        %v3731 = vand.u32 %v3662, %v594
        %v3734 = vand.u32 %v3661, %v594
        %v3737 = vand.u32 %v3663, %v594
        %v3740 = vand.u32 %v3671, %v594
        %v3743 = vand.u32 %v3679, %v594
        %v3746 = vand.u32 %v3678, %v594
        %v3749 = vand.u32 %v3680, %v594
        %v3752 = vand.u32 %v3688, %v594
        %v3755 = vand.u32 %v3696, %v594
        %v3758 = vand.u32 %v3695, %v594
        %v3761 = vand.u32 %v3697, %v594
        %v3764 = vand.u32 %v3705, %v594
        %v3767 = vand.u32 %v3713, %v594
        %v3770 = vand.u32 %v3712, %v594
        %v3773 = vand.u32 %v3714, %v594
        %3775 = vmatprep.subr.bf16.mxu0 %v3731
        %3776 = vmatpush1.bf16.msra.mxu0 %v3728
        %3777 = vmatprep.subr.bf16.mxu0 0
        %3778 = vmatpush1.bf16.msra.mxu0 0
        %3779 = vmatprep.subr.bf16.mxu0 0
        %3780 = vmatpush1.bf16.msra.mxu0 0
        %3781 = vmatprep.subr.bf16.mxu0 0
        %3782 = vmatpush1.bf16.msra.mxu0 0
        %3783 = vmatprep.subr.bf16.mxu0 0
        %3784 = vmatpush1.bf16.msra.mxu0 0
        %3785 = vmatprep.subr.bf16.mxu0 0
        %3786 = vmatpush1.bf16.msra.mxu0 0
        %3787 = vmatprep.subr.bf16.mxu0 0
        %3788 = vmatpush1.bf16.msra.mxu0 0
        %3789 = vmatprep.subr.bf16.mxu0 0
        %3790 = vmatpush1.bf16.msra.mxu0 0
        %3791 = vmatprep.subr.bf16.mxu0 0
        %3792 = vmatpush1.bf16.msra.mxu0 0
        %3793 = vmatprep.subr.bf16.mxu0 0
        %3794 = vmatpush1.bf16.msra.mxu0 0
        %3795 = vmatprep.subr.bf16.mxu0 0
        %3796 = vmatpush1.bf16.msra.mxu0 0
        %3797 = vmatprep.subr.bf16.mxu0 0
        %3798 = vmatpush1.bf16.msra.mxu0 0
        %3799 = vmatprep.subr.bf16.mxu0 0
        %3800 = vmatpush1.bf16.msra.mxu0 0
        %3801 = vmatprep.subr.bf16.mxu0 0
        %3802 = vmatpush1.bf16.msra.mxu0 0
        %3803 = vmatprep.subr.bf16.mxu0 0
        %3804 = vmatpush1.bf16.msra.mxu0 0
        %3805 = vmatprep.subr.bf16.mxu0 0
        %3806 = vmatpush1.bf16.msra.mxu0 0
        %3807 = vmatprep.mubr.bf16.mxu0 0
        %3808 = vmatmul.mubr.bf16.gmra.mrb[0].mxu0 %v3716
        %v3809 = vpop.f32.mrb[0].mxu0
        %v3810 = vadd.f32 %v3074, %v3809
        %v3811 = vpop.f32.mrb[0].mxu0
        %v3812 = vadd.f32 %v3076, %v3811
        %v3813 = vpop.f32.mrb[0].mxu0
        %v3814 = vadd.f32 %v3078, %v3813
        %v3815 = vpop.f32.mrb[0].mxu0
        %v3816 = vadd.f32 %v3080, %v3815
        %3817 = vmatprep.mubr.bf16.mxu0 0
        %3818 = vmatmul.mubr.bf16.gmra.mrb[0].mxu0 %v3719
        %v3819 = vpop.f32.mrb[0].mxu0
        %v3820 = vadd.f32 %v3084, %v3819
        %v3821 = vpop.f32.mrb[0].mxu0
        %v3822 = vadd.f32 %v3086, %v3821
        %v3823 = vpop.f32.mrb[0].mxu0
        %v3824 = vadd.f32 %v3088, %v3823
        %v3825 = vpop.f32.mrb[0].mxu0
        %v3826 = vadd.f32 %v3090, %v3825
        %3827 = vmatprep.mubr.bf16.mxu0 0
        %3828 = vmatmul.mubr.bf16.gmra.mrb[0].mxu0 %v3722
        %v3829 = vpop.f32.mrb[0].mxu0
        %v3830 = vadd.f32 %v3094, %v3829
        %v3831 = vpop.f32.mrb[0].mxu0
        %v3832 = vadd.f32 %v3096, %v3831
        %v3833 = vpop.f32.mrb[0].mxu0
        %v3834 = vadd.f32 %v3098, %v3833
        %v3835 = vpop.f32.mrb[0].mxu0
        %v3836 = vadd.f32 %v3100, %v3835
        %3837 = vmatprep.mubr.bf16.mxu0 0
        %3838 = vmatmul.mubr.bf16.gmra.mrb[0].mxu0 %v3725
        %v3839 = vpop.f32.mrb[0].mxu0
        %v3840 = vadd.f32 %v3104, %v3839
        %v3841 = vpop.f32.mrb[0].mxu0
        %v3842 = vadd.f32 %v3106, %v3841
        %v3843 = vpop.f32.mrb[0].mxu0
        %v3844 = vadd.f32 %v3108, %v3843
        %v3845 = vpop.f32.mrb[0].mxu0
        %v3846 = vadd.f32 %v3110, %v3845
        %3847 = vdwg.mxu0
        %3848 = vmatprep.subr.bf16.mxu0 %v3737
        %3849 = vmatpush1.bf16.msra.mxu0 %v3734
        %3850 = vmatprep.subr.bf16.mxu0 0
        %3851 = vmatpush1.bf16.msra.mxu0 0
        %3852 = vmatprep.subr.bf16.mxu0 0
        %3853 = vmatpush1.bf16.msra.mxu0 0
        %3854 = vmatprep.subr.bf16.mxu0 0
        %3855 = vmatpush1.bf16.msra.mxu0 0
        %3856 = vmatprep.subr.bf16.mxu0 0
        %3857 = vmatpush1.bf16.msra.mxu0 0
        %3858 = vmatprep.subr.bf16.mxu0 0
        %3859 = vmatpush1.bf16.msra.mxu0 0
        %3860 = vmatprep.subr.bf16.mxu0 0
        %3861 = vmatpush1.bf16.msra.mxu0 0
        %3862 = vmatprep.subr.bf16.mxu0 0
        %3863 = vmatpush1.bf16.msra.mxu0 0
        %3864 = vmatprep.subr.bf16.mxu0 0
        %3865 = vmatpush1.bf16.msra.mxu0 0
        %3866 = vmatprep.subr.bf16.mxu0 0
        %3867 = vmatpush1.bf16.msra.mxu0 0
        %3868 = vmatprep.subr.bf16.mxu0 0
        %3869 = vmatpush1.bf16.msra.mxu0 0
        %3870 = vmatprep.subr.bf16.mxu0 0
        %3871 = vmatpush1.bf16.msra.mxu0 0
        %3872 = vmatprep.subr.bf16.mxu0 0
        %3873 = vmatpush1.bf16.msra.mxu0 0
        %3874 = vmatprep.subr.bf16.mxu0 0
        %3875 = vmatpush1.bf16.msra.mxu0 0
        %3876 = vmatprep.subr.bf16.mxu0 0
        %3877 = vmatpush1.bf16.msra.mxu0 0
        %3878 = vmatprep.subr.bf16.mxu0 0
        %3879 = vmatpush1.bf16.msra.mxu0 0
        %3880 = vmatprep.mubr.bf16.mxu0 0
        %3881 = vmatmul.mubr.bf16.gmra.mrb[0].mxu0 %v3716
        %v3882 = vpop.f32.mrb[0].mxu0
        %v3883 = vadd.f32 %v3147, %v3882
        %v3884 = vpop.f32.mrb[0].mxu0
        %v3885 = vadd.f32 %v3149, %v3884
        %v3886 = vpop.f32.mrb[0].mxu0
        %v3887 = vadd.f32 %v3151, %v3886
        %v3888 = vpop.f32.mrb[0].mxu0
        %v3889 = vadd.f32 %v3153, %v3888
        %3890 = vmatprep.mubr.bf16.mxu0 0
        %3891 = vmatmul.mubr.bf16.gmra.mrb[0].mxu0 %v3719
        %v3892 = vpop.f32.mrb[0].mxu0
        %v3893 = vadd.f32 %v3157, %v3892
        %v3894 = vpop.f32.mrb[0].mxu0
        %v3895 = vadd.f32 %v3159, %v3894
        %v3896 = vpop.f32.mrb[0].mxu0
        %v3897 = vadd.f32 %v3161, %v3896
        %v3898 = vpop.f32.mrb[0].mxu0
        %v3899 = vadd.f32 %v3163, %v3898
        %3900 = vmatprep.mubr.bf16.mxu0 0
        %3901 = vmatmul.mubr.bf16.gmra.mrb[0].mxu0 %v3722
        %v3902 = vpop.f32.mrb[0].mxu0
        %v3903 = vadd.f32 %v3167, %v3902
        %v3904 = vpop.f32.mrb[0].mxu0
        %v3905 = vadd.f32 %v3169, %v3904
        %v3906 = vpop.f32.mrb[0].mxu0
        %v3907 = vadd.f32 %v3171, %v3906
        %v3908 = vpop.f32.mrb[0].mxu0
        %v3909 = vadd.f32 %v3173, %v3908
        %3910 = vmatprep.mubr.bf16.mxu0 0
        %3911 = vmatmul.mubr.bf16.gmra.mrb[0].mxu0 %v3725
        %v3912 = vpop.f32.mrb[0].mxu0
        %v3913 = vadd.f32 %v3177, %v3912
        %v3914 = vpop.f32.mrb[0].mxu0
        %v3915 = vadd.f32 %v3179, %v3914
        %v3916 = vpop.f32.mrb[0].mxu0
        %v3917 = vadd.f32 %v3181, %v3916
        %v3918 = vpop.f32.mrb[0].mxu0
        %v3919 = vadd.f32 %v3183, %v3918
        %3920 = vdwg.mxu0
        %3921 = vmatprep.subr.bf16.mxu0 %v3743
        %3922 = vmatpush1.bf16.msra.mxu0 %v3740
        %3923 = vmatprep.subr.bf16.mxu0 0
        %3924 = vmatpush1.bf16.msra.mxu0 0
        %3925 = vmatprep.subr.bf16.mxu0 0
        %3926 = vmatpush1.bf16.msra.mxu0 0
        %3927 = vmatprep.subr.bf16.mxu0 0
        %3928 = vmatpush1.bf16.msra.mxu0 0
        %3929 = vmatprep.subr.bf16.mxu0 0
        %3930 = vmatpush1.bf16.msra.mxu0 0
        %3931 = vmatprep.subr.bf16.mxu0 0
        %3932 = vmatpush1.bf16.msra.mxu0 0
        %3933 = vmatprep.subr.bf16.mxu0 0
        %3934 = vmatpush1.bf16.msra.mxu0 0
        %3935 = vmatprep.subr.bf16.mxu0 0
        %3936 = vmatpush1.bf16.msra.mxu0 0
        %3937 = vmatprep.subr.bf16.mxu0 0
        %3938 = vmatpush1.bf16.msra.mxu0 0
        %3939 = vmatprep.subr.bf16.mxu0 0
        %3940 = vmatpush1.bf16.msra.mxu0 0
        %3941 = vmatprep.subr.bf16.mxu0 0
        %3942 = vmatpush1.bf16.msra.mxu0 0
        %3943 = vmatprep.subr.bf16.mxu0 0
        %3944 = vmatpush1.bf16.msra.mxu0 0
        %3945 = vmatprep.subr.bf16.mxu0 0
        %3946 = vmatpush1.bf16.msra.mxu0 0
        %3947 = vmatprep.subr.bf16.mxu0 0
        %3948 = vmatpush1.bf16.msra.mxu0 0
        %3949 = vmatprep.subr.bf16.mxu0 0
        %3950 = vmatpush1.bf16.msra.mxu0 0
        %3951 = vmatprep.subr.bf16.mxu0 0
        %3952 = vmatpush1.bf16.msra.mxu0 0
        %3953 = vmatprep.mubr.bf16.mxu0 0
        %3954 = vmatmul.mubr.bf16.gmra.mrb[0].mxu0 %v3716
        %v3955 = vpop.f32.mrb[0].mxu0
        %v3956 = vadd.f32 %v3220, %v3955
        %v3957 = vpop.f32.mrb[0].mxu0
        %v3958 = vadd.f32 %v3222, %v3957
        %v3959 = vpop.f32.mrb[0].mxu0
        %v3960 = vadd.f32 %v3224, %v3959
        %v3961 = vpop.f32.mrb[0].mxu0
        %v3962 = vadd.f32 %v3226, %v3961
        %3963 = vmatprep.mubr.bf16.mxu0 0
        %3964 = vmatmul.mubr.bf16.gmra.mrb[0].mxu0 %v3719
        %v3965 = vpop.f32.mrb[0].mxu0
        %v3966 = vadd.f32 %v3230, %v3965
        %v3967 = vpop.f32.mrb[0].mxu0
        %v3968 = vadd.f32 %v3232, %v3967
        %v3969 = vpop.f32.mrb[0].mxu0
        %v3970 = vadd.f32 %v3234, %v3969
        %v3971 = vpop.f32.mrb[0].mxu0
        %v3972 = vadd.f32 %v3236, %v3971
        %3973 = vmatprep.mubr.bf16.mxu0 0
        %3974 = vmatmul.mubr.bf16.gmra.mrb[0].mxu0 %v3722
        %v3975 = vpop.f32.mrb[0].mxu0
        %v3976 = vadd.f32 %v3240, %v3975
        %v3977 = vpop.f32.mrb[0].mxu0
        %v3978 = vadd.f32 %v3242, %v3977
        %v3979 = vpop.f32.mrb[0].mxu0
        %v3980 = vadd.f32 %v3244, %v3979
        %v3981 = vpop.f32.mrb[0].mxu0
        %v3982 = vadd.f32 %v3246, %v3981
        %3983 = vmatprep.mubr.bf16.mxu0 0
        %3984 = vmatmul.mubr.bf16.gmra.mrb[0].mxu0 %v3725
        %v3985 = vpop.f32.mrb[0].mxu0
        %v3986 = vadd.f32 %v3250, %v3985
        %v3987 = vpop.f32.mrb[0].mxu0
        %v3988 = vadd.f32 %v3252, %v3987
        %v3989 = vpop.f32.mrb[0].mxu0
        %v3990 = vadd.f32 %v3254, %v3989
        %v3991 = vpop.f32.mrb[0].mxu0
        %v3992 = vadd.f32 %v3256, %v3991
        %3993 = vdwg.mxu0
        %3994 = vmatprep.subr.bf16.mxu0 %v3749
        %3995 = vmatpush1.bf16.msra.mxu0 %v3746
        %3996 = vmatprep.subr.bf16.mxu0 0
        %3997 = vmatpush1.bf16.msra.mxu0 0
        %3998 = vmatprep.subr.bf16.mxu0 0
        %3999 = vmatpush1.bf16.msra.mxu0 0
        %4000 = vmatprep.subr.bf16.mxu0 0
        %4001 = vmatpush1.bf16.msra.mxu0 0
        %4002 = vmatprep.subr.bf16.mxu0 0
        %4003 = vmatpush1.bf16.msra.mxu0 0
        %4004 = vmatprep.subr.bf16.mxu0 0
        %4005 = vmatpush1.bf16.msra.mxu0 0
        %4006 = vmatprep.subr.bf16.mxu0 0
        %4007 = vmatpush1.bf16.msra.mxu0 0
        %4008 = vmatprep.subr.bf16.mxu0 0
        %4009 = vmatpush1.bf16.msra.mxu0 0
        %4010 = vmatprep.subr.bf16.mxu0 0
        %4011 = vmatpush1.bf16.msra.mxu0 0
        %4012 = vmatprep.subr.bf16.mxu0 0
        %4013 = vmatpush1.bf16.msra.mxu0 0
        %4014 = vmatprep.subr.bf16.mxu0 0
        %4015 = vmatpush1.bf16.msra.mxu0 0
        %4016 = vmatprep.subr.bf16.mxu0 0
        %4017 = vmatpush1.bf16.msra.mxu0 0
        %4018 = vmatprep.subr.bf16.mxu0 0
        %4019 = vmatpush1.bf16.msra.mxu0 0
        %4020 = vmatprep.subr.bf16.mxu0 0
        %4021 = vmatpush1.bf16.msra.mxu0 0
        %4022 = vmatprep.subr.bf16.mxu0 0
        %4023 = vmatpush1.bf16.msra.mxu0 0
        %4024 = vmatprep.subr.bf16.mxu0 0
        %4025 = vmatpush1.bf16.msra.mxu0 0
        %4026 = vmatprep.mubr.bf16.mxu0 0
        %4027 = vmatmul.mubr.bf16.gmra.mrb[0].mxu0 %v3716
        %v4028 = vpop.f32.mrb[0].mxu0
        %v4029 = vadd.f32 %v3293, %v4028
        %v4030 = vpop.f32.mrb[0].mxu0
        %v4031 = vadd.f32 %v3295, %v4030
        %v4032 = vpop.f32.mrb[0].mxu0
        %v4033 = vadd.f32 %v3297, %v4032
        %v4034 = vpop.f32.mrb[0].mxu0
        %v4035 = vadd.f32 %v3299, %v4034
        %4036 = vmatprep.mubr.bf16.mxu0 0
        %4037 = vmatmul.mubr.bf16.gmra.mrb[0].mxu0 %v3719
        %v4038 = vpop.f32.mrb[0].mxu0
        %v4039 = vadd.f32 %v3303, %v4038
        %v4040 = vpop.f32.mrb[0].mxu0
        %v4041 = vadd.f32 %v3305, %v4040
        %v4042 = vpop.f32.mrb[0].mxu0
        %v4043 = vadd.f32 %v3307, %v4042
        %v4044 = vpop.f32.mrb[0].mxu0
        %v4045 = vadd.f32 %v3309, %v4044
        %4046 = vmatprep.mubr.bf16.mxu0 0
        %4047 = vmatmul.mubr.bf16.gmra.mrb[0].mxu0 %v3722
        %v4048 = vpop.f32.mrb[0].mxu0
        %v4049 = vadd.f32 %v3313, %v4048
        %v4050 = vpop.f32.mrb[0].mxu0
        %v4051 = vadd.f32 %v3315, %v4050
        %v4052 = vpop.f32.mrb[0].mxu0
        %v4053 = vadd.f32 %v3317, %v4052
        %v4054 = vpop.f32.mrb[0].mxu0
        %v4055 = vadd.f32 %v3319, %v4054
        %4056 = vmatprep.mubr.bf16.mxu0 0
        %4057 = vmatmul.mubr.bf16.gmra.mrb[0].mxu0 %v3725
        %v4058 = vpop.f32.mrb[0].mxu0
        %v4059 = vadd.f32 %v3323, %v4058
        %v4060 = vpop.f32.mrb[0].mxu0
        %v4061 = vadd.f32 %v3325, %v4060
        %v4062 = vpop.f32.mrb[0].mxu0
        %v4063 = vadd.f32 %v3327, %v4062
        %v4064 = vpop.f32.mrb[0].mxu0
        %v4065 = vadd.f32 %v3329, %v4064
        %4066 = vdwg.mxu0
        %4067 = vmatprep.subr.bf16.mxu0 %v3755
        %4068 = vmatpush1.bf16.msra.mxu0 %v3752
        %4069 = vmatprep.subr.bf16.mxu0 0
        %4070 = vmatpush1.bf16.msra.mxu0 0
        %4071 = vmatprep.subr.bf16.mxu0 0
        %4072 = vmatpush1.bf16.msra.mxu0 0
        %4073 = vmatprep.subr.bf16.mxu0 0
        %4074 = vmatpush1.bf16.msra.mxu0 0
        %4075 = vmatprep.subr.bf16.mxu0 0
        %4076 = vmatpush1.bf16.msra.mxu0 0
        %4077 = vmatprep.subr.bf16.mxu0 0
        %4078 = vmatpush1.bf16.msra.mxu0 0
        %4079 = vmatprep.subr.bf16.mxu0 0
        %4080 = vmatpush1.bf16.msra.mxu0 0
        %4081 = vmatprep.subr.bf16.mxu0 0
        %4082 = vmatpush1.bf16.msra.mxu0 0
        %4083 = vmatprep.subr.bf16.mxu0 0
        %4084 = vmatpush1.bf16.msra.mxu0 0
        %4085 = vmatprep.subr.bf16.mxu0 0
        %4086 = vmatpush1.bf16.msra.mxu0 0
        %4087 = vmatprep.subr.bf16.mxu0 0
        %4088 = vmatpush1.bf16.msra.mxu0 0
        %4089 = vmatprep.subr.bf16.mxu0 0
        %4090 = vmatpush1.bf16.msra.mxu0 0
        %4091 = vmatprep.subr.bf16.mxu0 0
        %4092 = vmatpush1.bf16.msra.mxu0 0
        %4093 = vmatprep.subr.bf16.mxu0 0
        %4094 = vmatpush1.bf16.msra.mxu0 0
        %4095 = vmatprep.subr.bf16.mxu0 0
        %4096 = vmatpush1.bf16.msra.mxu0 0
        %4097 = vmatprep.subr.bf16.mxu0 0
        %4098 = vmatpush1.bf16.msra.mxu0 0
        %4099 = vmatprep.mubr.bf16.mxu0 0
        %4100 = vmatmul.mubr.bf16.gmra.mrb[0].mxu0 %v3716
        %v4101 = vpop.f32.mrb[0].mxu0
        %v4102 = vadd.f32 %v3366, %v4101
        %v4103 = vpop.f32.mrb[0].mxu0
        %v4104 = vadd.f32 %v3368, %v4103
        %v4105 = vpop.f32.mrb[0].mxu0
        %v4106 = vadd.f32 %v3370, %v4105
        %v4107 = vpop.f32.mrb[0].mxu0
        %v4108 = vadd.f32 %v3372, %v4107
        %4109 = vmatprep.mubr.bf16.mxu0 0
        %4110 = vmatmul.mubr.bf16.gmra.mrb[0].mxu0 %v3719
        %v4111 = vpop.f32.mrb[0].mxu0
        %v4112 = vadd.f32 %v3376, %v4111
        %v4113 = vpop.f32.mrb[0].mxu0
        %v4114 = vadd.f32 %v3378, %v4113
        %v4115 = vpop.f32.mrb[0].mxu0
        %v4116 = vadd.f32 %v3380, %v4115
        %v4117 = vpop.f32.mrb[0].mxu0
        %v4118 = vadd.f32 %v3382, %v4117
        %4119 = vmatprep.mubr.bf16.mxu0 0
        %4120 = vmatmul.mubr.bf16.gmra.mrb[0].mxu0 %v3722
        %v4121 = vpop.f32.mrb[0].mxu0
        %v4122 = vadd.f32 %v3386, %v4121
        %v4123 = vpop.f32.mrb[0].mxu0
        %v4124 = vadd.f32 %v3388, %v4123
        %v4125 = vpop.f32.mrb[0].mxu0
        %v4126 = vadd.f32 %v3390, %v4125
        %v4127 = vpop.f32.mrb[0].mxu0
        %v4128 = vadd.f32 %v3392, %v4127
        %4129 = vmatprep.mubr.bf16.mxu0 0
        %4130 = vmatmul.mubr.bf16.gmra.mrb[0].mxu0 %v3725
        %v4131 = vpop.f32.mrb[0].mxu0
        %v4132 = vadd.f32 %v3396, %v4131
        %v4133 = vpop.f32.mrb[0].mxu0
        %v4134 = vadd.f32 %v3398, %v4133
        %v4135 = vpop.f32.mrb[0].mxu0
        %v4136 = vadd.f32 %v3400, %v4135
        %v4137 = vpop.f32.mrb[0].mxu0
        %v4138 = vadd.f32 %v3402, %v4137
        %4139 = vdwg.mxu0
        %4140 = vmatprep.subr.bf16.mxu0 %v3761
        %4141 = vmatpush1.bf16.msra.mxu0 %v3758
        %4142 = vmatprep.subr.bf16.mxu0 0
        %4143 = vmatpush1.bf16.msra.mxu0 0
        %4144 = vmatprep.subr.bf16.mxu0 0
        %4145 = vmatpush1.bf16.msra.mxu0 0
        %4146 = vmatprep.subr.bf16.mxu0 0
        %4147 = vmatpush1.bf16.msra.mxu0 0
        %4148 = vmatprep.subr.bf16.mxu0 0
        %4149 = vmatpush1.bf16.msra.mxu0 0
        %4150 = vmatprep.subr.bf16.mxu0 0
        %4151 = vmatpush1.bf16.msra.mxu0 0
        %4152 = vmatprep.subr.bf16.mxu0 0
        %4153 = vmatpush1.bf16.msra.mxu0 0
        %4154 = vmatprep.subr.bf16.mxu0 0
        %4155 = vmatpush1.bf16.msra.mxu0 0
        %4156 = vmatprep.subr.bf16.mxu0 0
        %4157 = vmatpush1.bf16.msra.mxu0 0
        %4158 = vmatprep.subr.bf16.mxu0 0
        %4159 = vmatpush1.bf16.msra.mxu0 0
        %4160 = vmatprep.subr.bf16.mxu0 0
        %4161 = vmatpush1.bf16.msra.mxu0 0
        %4162 = vmatprep.subr.bf16.mxu0 0
        %4163 = vmatpush1.bf16.msra.mxu0 0
        %4164 = vmatprep.subr.bf16.mxu0 0
        %4165 = vmatpush1.bf16.msra.mxu0 0
        %4166 = vmatprep.subr.bf16.mxu0 0
        %4167 = vmatpush1.bf16.msra.mxu0 0
        %4168 = vmatprep.subr.bf16.mxu0 0
        %4169 = vmatpush1.bf16.msra.mxu0 0
        %4170 = vmatprep.subr.bf16.mxu0 0
        %4171 = vmatpush1.bf16.msra.mxu0 0
        %4172 = vmatprep.mubr.bf16.mxu0 0
        %4173 = vmatmul.mubr.bf16.gmra.mrb[0].mxu0 %v3716
        %v4174 = vpop.f32.mrb[0].mxu0
        %v4175 = vadd.f32 %v3439, %v4174
        %v4176 = vpop.f32.mrb[0].mxu0
        %v4177 = vadd.f32 %v3441, %v4176
        %v4178 = vpop.f32.mrb[0].mxu0
        %v4179 = vadd.f32 %v3443, %v4178
        %v4180 = vpop.f32.mrb[0].mxu0
        %v4181 = vadd.f32 %v3445, %v4180
        %4182 = vmatprep.mubr.bf16.mxu0 0
        %4183 = vmatmul.mubr.bf16.gmra.mrb[0].mxu0 %v3719
        %v4184 = vpop.f32.mrb[0].mxu0
        %v4185 = vadd.f32 %v3449, %v4184
        %v4186 = vpop.f32.mrb[0].mxu0
        %v4187 = vadd.f32 %v3451, %v4186
        %v4188 = vpop.f32.mrb[0].mxu0
        %v4189 = vadd.f32 %v3453, %v4188
        %v4190 = vpop.f32.mrb[0].mxu0
        %v4191 = vadd.f32 %v3455, %v4190
        %4192 = vmatprep.mubr.bf16.mxu0 0
        %4193 = vmatmul.mubr.bf16.gmra.mrb[0].mxu0 %v3722
        %v4194 = vpop.f32.mrb[0].mxu0
        %v4195 = vadd.f32 %v3459, %v4194
        %v4196 = vpop.f32.mrb[0].mxu0
        %v4197 = vadd.f32 %v3461, %v4196
        %v4198 = vpop.f32.mrb[0].mxu0
        %v4199 = vadd.f32 %v3463, %v4198
        %v4200 = vpop.f32.mrb[0].mxu0
        %v4201 = vadd.f32 %v3465, %v4200
        %4202 = vmatprep.mubr.bf16.mxu0 0
        %4203 = vmatmul.mubr.bf16.gmra.mrb[0].mxu0 %v3725
        %v4204 = vpop.f32.mrb[0].mxu0
        %v4205 = vadd.f32 %v3469, %v4204
        %v4206 = vpop.f32.mrb[0].mxu0
        %v4207 = vadd.f32 %v3471, %v4206
        %v4208 = vpop.f32.mrb[0].mxu0
        %v4209 = vadd.f32 %v3473, %v4208
        %v4210 = vpop.f32.mrb[0].mxu0
        %v4211 = vadd.f32 %v3475, %v4210
        %4212 = vdwg.mxu0
        %4213 = vmatprep.subr.bf16.mxu0 %v3767
        %4214 = vmatpush1.bf16.msra.mxu0 %v3764
        %4215 = vmatprep.subr.bf16.mxu0 0
        %4216 = vmatpush1.bf16.msra.mxu0 0
        %4217 = vmatprep.subr.bf16.mxu0 0
        %4218 = vmatpush1.bf16.msra.mxu0 0
        %4219 = vmatprep.subr.bf16.mxu0 0
        %4220 = vmatpush1.bf16.msra.mxu0 0
        %4221 = vmatprep.subr.bf16.mxu0 0
        %4222 = vmatpush1.bf16.msra.mxu0 0
        %4223 = vmatprep.subr.bf16.mxu0 0
        %4224 = vmatpush1.bf16.msra.mxu0 0
        %4225 = vmatprep.subr.bf16.mxu0 0
        %4226 = vmatpush1.bf16.msra.mxu0 0
        %4227 = vmatprep.subr.bf16.mxu0 0
        %4228 = vmatpush1.bf16.msra.mxu0 0
        %4229 = vmatprep.subr.bf16.mxu0 0
        %4230 = vmatpush1.bf16.msra.mxu0 0
        %4231 = vmatprep.subr.bf16.mxu0 0
        %4232 = vmatpush1.bf16.msra.mxu0 0
        %4233 = vmatprep.subr.bf16.mxu0 0
        %4234 = vmatpush1.bf16.msra.mxu0 0
        %4235 = vmatprep.subr.bf16.mxu0 0
        %4236 = vmatpush1.bf16.msra.mxu0 0
        %4237 = vmatprep.subr.bf16.mxu0 0
        %4238 = vmatpush1.bf16.msra.mxu0 0
        %4239 = vmatprep.subr.bf16.mxu0 0
        %4240 = vmatpush1.bf16.msra.mxu0 0
        %4241 = vmatprep.subr.bf16.mxu0 0
        %4242 = vmatpush1.bf16.msra.mxu0 0
        %4243 = vmatprep.subr.bf16.mxu0 0
        %4244 = vmatpush1.bf16.msra.mxu0 0
        %4245 = vmatprep.mubr.bf16.mxu0 0
        %4246 = vmatmul.mubr.bf16.gmra.mrb[0].mxu0 %v3716
        %v4247 = vpop.f32.mrb[0].mxu0
        %v4248 = vadd.f32 %v3512, %v4247
        %v4249 = vpop.f32.mrb[0].mxu0
        %v4250 = vadd.f32 %v3514, %v4249
        %v4251 = vpop.f32.mrb[0].mxu0
        %v4252 = vadd.f32 %v3516, %v4251
        %v4253 = vpop.f32.mrb[0].mxu0
        %v4254 = vadd.f32 %v3518, %v4253
        %4255 = vmatprep.mubr.bf16.mxu0 0
        %4256 = vmatmul.mubr.bf16.gmra.mrb[0].mxu0 %v3719
        %v4257 = vpop.f32.mrb[0].mxu0
        %v4258 = vadd.f32 %v3522, %v4257
        %v4259 = vpop.f32.mrb[0].mxu0
        %v4260 = vadd.f32 %v3524, %v4259
        %v4261 = vpop.f32.mrb[0].mxu0
        %v4262 = vadd.f32 %v3526, %v4261
        %v4263 = vpop.f32.mrb[0].mxu0
        %v4264 = vadd.f32 %v3528, %v4263
        %4265 = vmatprep.mubr.bf16.mxu0 0
        %4266 = vmatmul.mubr.bf16.gmra.mrb[0].mxu0 %v3722
        %v4267 = vpop.f32.mrb[0].mxu0
        %v4268 = vadd.f32 %v3532, %v4267
        %v4269 = vpop.f32.mrb[0].mxu0
        %v4270 = vadd.f32 %v3534, %v4269
        %v4271 = vpop.f32.mrb[0].mxu0
        %v4272 = vadd.f32 %v3536, %v4271
        %v4273 = vpop.f32.mrb[0].mxu0
        %v4274 = vadd.f32 %v3538, %v4273
        %4275 = vmatprep.mubr.bf16.mxu0 0
        %4276 = vmatmul.mubr.bf16.gmra.mrb[0].mxu0 %v3725
        %v4277 = vpop.f32.mrb[0].mxu0
        %v4278 = vadd.f32 %v3542, %v4277
        %v4279 = vpop.f32.mrb[0].mxu0
        %v4280 = vadd.f32 %v3544, %v4279
        %v4281 = vpop.f32.mrb[0].mxu0
        %v4282 = vadd.f32 %v3546, %v4281
        %v4283 = vpop.f32.mrb[0].mxu0
        %v4284 = vadd.f32 %v3548, %v4283
        %4285 = vdwg.mxu0
        %4286 = vmatprep.subr.bf16.mxu0 %v3773
        %4287 = vmatpush1.bf16.msra.mxu0 %v3770
        %4288 = vmatprep.subr.bf16.mxu0 0
        %4289 = vmatpush1.bf16.msra.mxu0 0
        %4290 = vmatprep.subr.bf16.mxu0 0
        %4291 = vmatpush1.bf16.msra.mxu0 0
        %4292 = vmatprep.subr.bf16.mxu0 0
        %4293 = vmatpush1.bf16.msra.mxu0 0
        %4294 = vmatprep.subr.bf16.mxu0 0
        %4295 = vmatpush1.bf16.msra.mxu0 0
        %4296 = vmatprep.subr.bf16.mxu0 0
        %4297 = vmatpush1.bf16.msra.mxu0 0
        %4298 = vmatprep.subr.bf16.mxu0 0
        %4299 = vmatpush1.bf16.msra.mxu0 0
        %4300 = vmatprep.subr.bf16.mxu0 0
        %4301 = vmatpush1.bf16.msra.mxu0 0
        %4302 = vmatprep.subr.bf16.mxu0 0
        %4303 = vmatpush1.bf16.msra.mxu0 0
        %4304 = vmatprep.subr.bf16.mxu0 0
        %4305 = vmatpush1.bf16.msra.mxu0 0
        %4306 = vmatprep.subr.bf16.mxu0 0
        %4307 = vmatpush1.bf16.msra.mxu0 0
        %4308 = vmatprep.subr.bf16.mxu0 0
        %4309 = vmatpush1.bf16.msra.mxu0 0
        %4310 = vmatprep.subr.bf16.mxu0 0
        %4311 = vmatpush1.bf16.msra.mxu0 0
        %4312 = vmatprep.subr.bf16.mxu0 0
        %4313 = vmatpush1.bf16.msra.mxu0 0
        %4314 = vmatprep.subr.bf16.mxu0 0
        %4315 = vmatpush1.bf16.msra.mxu0 0
        %4316 = vmatprep.subr.bf16.mxu0 0
        %4317 = vmatpush1.bf16.msra.mxu0 0
        %4318 = vmatprep.mubr.bf16.mxu0 0
        %4319 = vmatmul.mubr.bf16.gmra.mrb[0].mxu0 %v3716
        %v4320 = vpop.f32.mrb[0].mxu0
        %v4321 = vadd.f32 %v3585, %v4320
        %v4322 = vpop.f32.mrb[0].mxu0
        %v4323 = vadd.f32 %v3587, %v4322
        %v4324 = vpop.f32.mrb[0].mxu0
        %v4325 = vadd.f32 %v3589, %v4324
        %v4326 = vpop.f32.mrb[0].mxu0
        %v4327 = vadd.f32 %v3591, %v4326
        %4328 = vmatprep.mubr.bf16.mxu0 0
        %4329 = vmatmul.mubr.bf16.gmra.mrb[0].mxu0 %v3719
        %v4330 = vpop.f32.mrb[0].mxu0
        %v4331 = vadd.f32 %v3595, %v4330
        %v4332 = vpop.f32.mrb[0].mxu0
        %v4333 = vadd.f32 %v3597, %v4332
        %v4334 = vpop.f32.mrb[0].mxu0
        %v4335 = vadd.f32 %v3599, %v4334
        %v4336 = vpop.f32.mrb[0].mxu0
        %v4337 = vadd.f32 %v3601, %v4336
        %4338 = vmatprep.mubr.bf16.mxu0 0
        %4339 = vmatmul.mubr.bf16.gmra.mrb[0].mxu0 %v3722
        %v4340 = vpop.f32.mrb[0].mxu0
        %v4341 = vadd.f32 %v3605, %v4340
        %v4342 = vpop.f32.mrb[0].mxu0
        %v4343 = vadd.f32 %v3607, %v4342
        %v4344 = vpop.f32.mrb[0].mxu0
        %v4345 = vadd.f32 %v3609, %v4344
        %v4346 = vpop.f32.mrb[0].mxu0
        %v4347 = vadd.f32 %v3611, %v4346
        %4348 = vmatprep.mubr.bf16.mxu0 0
        %4349 = vmatmul.mubr.bf16.gmra.mrb[0].mxu0 %v3725
        %v4350 = vpop.f32.mrb[0].mxu0
        %v4351 = vadd.f32 %v3615, %v4350
        %v4352 = vpop.f32.mrb[0].mxu0
        %v4353 = vadd.f32 %v3617, %v4352
        %v4354 = vpop.f32.mrb[0].mxu0
        %v4355 = vadd.f32 %v3619, %v4354
        %v4356 = vpop.f32.mrb[0].mxu0
        %v4357 = vadd.f32 %v3621, %v4356
        %4358 = vdwg.mxu0
        %v4359 = vmax.f32 %v3810, 0.0
        %v4360 = vmax.f32 %v3812, 0.0
        %v4361 = vmax.f32 %v3883, 0.0
        %v4362 = vmax.f32 %v3885, 0.0
        %v4363 = vmax.f32 %v3956, 0.0
        %v4364 = vmax.f32 %v3958, 0.0
        %v4365 = vmax.f32 %v4029, 0.0
        %v4366 = vmax.f32 %v4031, 0.0
        %v4367 = vmax.f32 %v4102, 0.0
        %v4368 = vmax.f32 %v4104, 0.0
        %v4369 = vmax.f32 %v4175, 0.0
        %v4370 = vmax.f32 %v4177, 0.0
        %v4371 = vmax.f32 %v4248, 0.0
        %v4372 = vmax.f32 %v4250, 0.0
        %v4373 = vmax.f32 %v4321, 0.0
        %v4374 = vmax.f32 %v4323, 0.0
        %v4375 = vmax.f32 %v3814, 0.0
        %v4376 = vmax.f32 %v3816, 0.0
        %v4377 = vmax.f32 %v3887, 0.0
        %v4378 = vmax.f32 %v3889, 0.0
        %v4379 = vmax.f32 %v3960, 0.0
        %v4380 = vmax.f32 %v3962, 0.0
        %v4381 = vmax.f32 %v4033, 0.0
        %v4382 = vmax.f32 %v4035, 0.0
        %v4383 = vmax.f32 %v4106, 0.0
        %v4384 = vmax.f32 %v4108, 0.0
        %v4385 = vmax.f32 %v4179, 0.0
        %v4386 = vmax.f32 %v4181, 0.0
        %v4387 = vmax.f32 %v4252, 0.0
        %v4388 = vmax.f32 %v4254, 0.0
        %v4389 = vmax.f32 %v4325, 0.0
        %v4390 = vmax.f32 %v4327, 0.0
        %v4391 = vmax.f32 %v3820, 0.0
        %v4392 = vmax.f32 %v3822, 0.0
        %v4393 = vmax.f32 %v3893, 0.0
        %v4394 = vmax.f32 %v3895, 0.0
        %v4395 = vmax.f32 %v3966, 0.0
        %v4396 = vmax.f32 %v3968, 0.0
        %v4397 = vmax.f32 %v4039, 0.0
        %v4398 = vmax.f32 %v4041, 0.0
        %v4399 = vmax.f32 %v4112, 0.0
        %v4400 = vmax.f32 %v4114, 0.0
        %v4401 = vmax.f32 %v4185, 0.0
        %v4402 = vmax.f32 %v4187, 0.0
        %v4403 = vmax.f32 %v4258, 0.0
        %v4404 = vmax.f32 %v4260, 0.0
        %v4405 = vmax.f32 %v4331, 0.0
        %v4406 = vmax.f32 %v4333, 0.0
        %v4407 = vmax.f32 %v3824, 0.0
        %v4408 = vmax.f32 %v3826, 0.0
        %v4409 = vmax.f32 %v3897, 0.0
        %v4410 = vmax.f32 %v3899, 0.0
        %v4411 = vmax.f32 %v3970, 0.0
        %v4412 = vmax.f32 %v3972, 0.0
        %v4413 = vmax.f32 %v4043, 0.0
        %v4414 = vmax.f32 %v4045, 0.0
        %v4415 = vmax.f32 %v4116, 0.0
        %v4416 = vmax.f32 %v4118, 0.0
        %v4417 = vmax.f32 %v4189, 0.0
        %v4418 = vmax.f32 %v4191, 0.0
        %v4419 = vmax.f32 %v4262, 0.0
        %v4420 = vmax.f32 %v4264, 0.0
        %v4421 = vmax.f32 %v4335, 0.0
        %v4422 = vmax.f32 %v4337, 0.0
        %v4423 = vmax.f32 %v3830, 0.0
        %v4424 = vmax.f32 %v3832, 0.0
        %v4425 = vmax.f32 %v3903, 0.0
        %v4426 = vmax.f32 %v3905, 0.0
        %v4427 = vmax.f32 %v3976, 0.0
        %v4428 = vmax.f32 %v3978, 0.0
        %v4429 = vmax.f32 %v4049, 0.0
        %v4430 = vmax.f32 %v4051, 0.0
        %v4431 = vmax.f32 %v4122, 0.0
        %v4432 = vmax.f32 %v4124, 0.0
        %v4433 = vmax.f32 %v4195, 0.0
        %v4434 = vmax.f32 %v4197, 0.0
        %v4435 = vmax.f32 %v4268, 0.0
        %v4436 = vmax.f32 %v4270, 0.0
        %v4437 = vmax.f32 %v4341, 0.0
        %v4438 = vmax.f32 %v4343, 0.0
        %v4439 = vmax.f32 %v3834, 0.0
        %v4440 = vmax.f32 %v3836, 0.0
        %v4441 = vmax.f32 %v3907, 0.0
        %v4442 = vmax.f32 %v3909, 0.0
        %v4443 = vmax.f32 %v3980, 0.0
        %v4444 = vmax.f32 %v3982, 0.0
        %v4445 = vmax.f32 %v4053, 0.0
        %v4446 = vmax.f32 %v4055, 0.0
        %v4447 = vmax.f32 %v4126, 0.0
        %v4448 = vmax.f32 %v4128, 0.0
        %v4449 = vmax.f32 %v4199, 0.0
        %v4450 = vmax.f32 %v4201, 0.0
        %v4451 = vmax.f32 %v4272, 0.0
        %v4452 = vmax.f32 %v4274, 0.0
        %v4453 = vmax.f32 %v4345, 0.0
        %v4454 = vmax.f32 %v4347, 0.0
        %v4455 = vmax.f32 %v3840, 0.0
        %v4456 = vmax.f32 %v3842, 0.0
        %v4457 = vmax.f32 %v3913, 0.0
        %v4458 = vmax.f32 %v3915, 0.0
        %v4459 = vmax.f32 %v3986, 0.0
        %v4460 = vmax.f32 %v3988, 0.0
        %v4461 = vmax.f32 %v4059, 0.0
        %v4462 = vmax.f32 %v4061, 0.0
        %v4463 = vmax.f32 %v4132, 0.0
        %v4464 = vmax.f32 %v4134, 0.0
        %v4465 = vmax.f32 %v4205, 0.0
        %v4466 = vmax.f32 %v4207, 0.0
        %v4467 = vmax.f32 %v4278, 0.0
        %v4468 = vmax.f32 %v4280, 0.0
        %v4469 = vmax.f32 %v4351, 0.0
        %v4470 = vmax.f32 %v4353, 0.0
        %v4471 = vmax.f32 %v3844, 0.0
        %v4472 = vmax.f32 %v3846, 0.0
        %v4473 = vmax.f32 %v3917, 0.0
        %v4474 = vmax.f32 %v3919, 0.0
        %v4475 = vmax.f32 %v3990, 0.0
        %v4476 = vmax.f32 %v3992, 0.0
        %v4477 = vmax.f32 %v4063, 0.0
        %v4478 = vmax.f32 %v4065, 0.0
        %v4479 = vmax.f32 %v4136, 0.0
        %v4480 = vmax.f32 %v4138, 0.0
        %v4481 = vmax.f32 %v4209, 0.0
        %v4482 = vmax.f32 %v4211, 0.0
        %v4483 = vmax.f32 %v4282, 0.0
        %v4484 = vmax.f32 %v4284, 0.0
        %v4485 = vmax.f32 %v4355, 0.0
        %v4486 = vmax.f32 %v4357, 0.0
        %v4487 = vld [vmem:[#allocation8] sm:$0xf]
        %v4488 = vld [vmem:[#allocation8 + $0x4] sm:$0xf]
        %v4489 = vld [vmem:[#allocation8 + $0x8] sm:$0xf]
        %v4490 = vld [vmem:[#allocation8 + $0xc] sm:$0xf]
        %v4491 = vld [vmem:[#allocation8 + $0x10] sm:$0xf]
        %v4492 = vld [vmem:[#allocation8 + $0x14] sm:$0xf]
        %v4493 = vld [vmem:[#allocation8 + $0x18] sm:$0xf]
        %v4494 = vld [vmem:[#allocation8 + $0x1c] sm:$0xf]
        %v4495 = vpack.c.bf16 %v4375, %v4359
        %v4496 = vpack.c.bf16 %v4376, %v4360
        %v4497 = vpack.c.bf16 %v4377, %v4361
        %v4498 = vpack.c.bf16 %v4378, %v4362
        %v4499 = vpack.c.bf16 %v4379, %v4363
        %v4500 = vpack.c.bf16 %v4380, %v4364
        %v4501 = vpack.c.bf16 %v4381, %v4365
        %v4502 = vpack.c.bf16 %v4382, %v4366
        %v4503 = vpack.c.bf16 %v4383, %v4367
        %v4504 = vpack.c.bf16 %v4384, %v4368
        %v4505 = vpack.c.bf16 %v4385, %v4369
        %v4506 = vpack.c.bf16 %v4386, %v4370
        %v4507 = vpack.c.bf16 %v4387, %v4371
        %v4508 = vpack.c.bf16 %v4388, %v4372
        %v4509 = vpack.c.bf16 %v4389, %v4373
        %v4510 = vpack.c.bf16 %v4390, %v4374
        %v4511 = vpack.c.bf16 %v4407, %v4391
        %v4512 = vpack.c.bf16 %v4408, %v4392
        %v4513 = vpack.c.bf16 %v4409, %v4393
        %v4514 = vpack.c.bf16 %v4410, %v4394
        %v4515 = vpack.c.bf16 %v4411, %v4395
        %v4516 = vpack.c.bf16 %v4412, %v4396
        %v4517 = vpack.c.bf16 %v4413, %v4397
        %v4518 = vpack.c.bf16 %v4414, %v4398
        %v4519 = vpack.c.bf16 %v4415, %v4399
        %v4520 = vpack.c.bf16 %v4416, %v4400
        %v4521 = vpack.c.bf16 %v4417, %v4401
        %v4522 = vpack.c.bf16 %v4418, %v4402
        %v4523 = vpack.c.bf16 %v4419, %v4403
        %v4524 = vpack.c.bf16 %v4420, %v4404
        %v4525 = vpack.c.bf16 %v4421, %v4405
        %v4526 = vpack.c.bf16 %v4422, %v4406
        %v4527 = vpack.c.bf16 %v4439, %v4423
        %v4528 = vpack.c.bf16 %v4440, %v4424
        %v4529 = vpack.c.bf16 %v4441, %v4425
        %v4530 = vpack.c.bf16 %v4442, %v4426
        %v4531 = vpack.c.bf16 %v4443, %v4427
        %v4532 = vpack.c.bf16 %v4444, %v4428
        %v4533 = vpack.c.bf16 %v4445, %v4429
        %v4534 = vpack.c.bf16 %v4446, %v4430
        %v4535 = vpack.c.bf16 %v4447, %v4431
        %v4536 = vpack.c.bf16 %v4448, %v4432
        %v4537 = vpack.c.bf16 %v4449, %v4433
        %v4538 = vpack.c.bf16 %v4450, %v4434
        %v4539 = vpack.c.bf16 %v4451, %v4435
        %v4540 = vpack.c.bf16 %v4452, %v4436
        %v4541 = vpack.c.bf16 %v4453, %v4437
        %v4542 = vpack.c.bf16 %v4454, %v4438
        %v4543 = vpack.c.bf16 %v4471, %v4455
        %v4544 = vpack.c.bf16 %v4472, %v4456
        %v4545 = vpack.c.bf16 %v4473, %v4457
        %v4546 = vpack.c.bf16 %v4474, %v4458
        %v4547 = vpack.c.bf16 %v4475, %v4459
        %v4548 = vpack.c.bf16 %v4476, %v4460
        %v4549 = vpack.c.bf16 %v4477, %v4461
        %v4550 = vpack.c.bf16 %v4478, %v4462
        %v4551 = vpack.c.bf16 %v4479, %v4463
        %v4552 = vpack.c.bf16 %v4480, %v4464
        %v4553 = vpack.c.bf16 %v4481, %v4465
        %v4554 = vpack.c.bf16 %v4482, %v4466
        %v4555 = vpack.c.bf16 %v4483, %v4467
        %v4556 = vpack.c.bf16 %v4484, %v4468
        %v4557 = vpack.c.bf16 %v4485, %v4469
        %v4558 = vpack.c.bf16 %v4486, %v4470
        %v4567 = vunpack.c.l.b16 %v4487
        %v4568 = vunpack.c.l.b16 %v4488
        %v4569 = vunpack.c.l.b16 %v4489
        %v4570 = vunpack.c.l.b16 %v4490
        %v4571 = vunpack.c.l.b16 %v4491
        %v4572 = vunpack.c.l.b16 %v4492
        %v4573 = vunpack.c.l.b16 %v4493
        %v4574 = vunpack.c.l.b16 %v4494
        %v4575 = vpack.c.b16 %v4568, %v4567
        %v4576 = vpack.c.b16 %v4570, %v4569
        %v4577 = vpack.c.b16 %v4572, %v4571
        %v4578 = vpack.c.b16 %v4574, %v4573
        %v4580 = vsel %vm1447, %v4575, 0
        %v4583 = vsel %vm1447, %v4576, 0
        %v4586 = vsel %vm1447, %v4577, 0
        %v4589 = vsel %vm1447, %v4578, 0
        %4591 = vmatprep.subr.bf16.mxu0 %v4496
        %4592 = vmatpush1.bf16.msra.mxu0 %v4495
        %4593 = vmatprep.subr.bf16.mxu0 %v4512
        %4594 = vmatpush1.bf16.msra.mxu0 %v4511
        %4595 = vmatprep.subr.bf16.mxu0 %v4528
        %4596 = vmatpush1.bf16.msra.mxu0 %v4527
        %4597 = vmatprep.subr.bf16.mxu0 %v4544
        %4598 = vmatpush1.bf16.msra.mxu0 %v4543
        %4599 = vmatprep.subr.bf16.mxu0 0
        %4600 = vmatpush1.bf16.msra.mxu0 0
        %4601 = vmatprep.subr.bf16.mxu0 0
        %4602 = vmatpush1.bf16.msra.mxu0 0
        %4603 = vmatprep.subr.bf16.mxu0 0
        %4604 = vmatpush1.bf16.msra.mxu0 0
        %4605 = vmatprep.subr.bf16.mxu0 0
        %4606 = vmatpush1.bf16.msra.mxu0 0
        %4607 = vmatprep.subr.bf16.mxu0 0
        %4608 = vmatpush1.bf16.msra.mxu0 0
        %4609 = vmatprep.subr.bf16.mxu0 0
        %4610 = vmatpush1.bf16.msra.mxu0 0
        %4611 = vmatprep.subr.bf16.mxu0 0
        %4612 = vmatpush1.bf16.msra.mxu0 0
        %4613 = vmatprep.subr.bf16.mxu0 0
        %4614 = vmatpush1.bf16.msra.mxu0 0
        %4615 = vmatprep.subr.bf16.mxu0 0
        %4616 = vmatpush1.bf16.msra.mxu0 0
        %4617 = vmatprep.subr.bf16.mxu0 0
        %4618 = vmatpush1.bf16.msra.mxu0 0
        %4619 = vmatprep.subr.bf16.mxu0 0
        %4620 = vmatpush1.bf16.msra.mxu0 0
        %4621 = vmatprep.subr.bf16.mxu0 0
        %4622 = vmatpush1.bf16.msra.mxu0 0
        %4623 = vmatprep.mubr.bf16.mxu0 0
        %4624 = vmatmul.mubr.bf16.gmra.mrb[0].mxu0 %v4580
        %v4625 = vpop.f32.mrb[0].mxu0
        %v4626 = vadd.f32 0.0, %v4625
        %v4627 = vpop.f32.mrb[0].mxu0
        %v4628 = vadd.f32 0.0, %v4627
        %v4629 = vpop.f32.mrb[0].mxu0
        %v4630 = vadd.f32 0.0, %v4629
        %v4631 = vpop.f32.mrb[0].mxu0
        %v4632 = vadd.f32 0.0, %v4631
        %4633 = vmatprep.mubr.bf16.mxu0 0
        %4634 = vmatmul.mubr.bf16.gmra.mrb[0].mxu0 %v4583
        %v4635 = vpop.f32.mrb[0].mxu0
        %v4636 = vadd.f32 0.0, %v4635
        %v4637 = vpop.f32.mrb[0].mxu0
        %v4638 = vadd.f32 0.0, %v4637
        %v4639 = vpop.f32.mrb[0].mxu0
        %v4640 = vadd.f32 0.0, %v4639
        %v4641 = vpop.f32.mrb[0].mxu0
        %v4642 = vadd.f32 0.0, %v4641
        %4643 = vmatprep.mubr.bf16.mxu0 0
        %4644 = vmatmul.mubr.bf16.gmra.mrb[0].mxu0 %v4586
        %v4645 = vpop.f32.mrb[0].mxu0
        %v4646 = vadd.f32 0.0, %v4645
        %v4647 = vpop.f32.mrb[0].mxu0
        %v4648 = vadd.f32 0.0, %v4647
        %v4649 = vpop.f32.mrb[0].mxu0
        %v4650 = vadd.f32 0.0, %v4649
        %v4651 = vpop.f32.mrb[0].mxu0
        %v4652 = vadd.f32 0.0, %v4651
        %4653 = vmatprep.mubr.bf16.mxu0 0
        %4654 = vmatmul.mubr.bf16.gmra.mrb[0].mxu0 %v4589
        %v4655 = vpop.f32.mrb[0].mxu0
        %v4656 = vadd.f32 0.0, %v4655
        %v4657 = vpop.f32.mrb[0].mxu0
        %v4658 = vadd.f32 0.0, %v4657
        %v4659 = vpop.f32.mrb[0].mxu0
        %v4660 = vadd.f32 0.0, %v4659
        %v4661 = vpop.f32.mrb[0].mxu0
        %v4662 = vadd.f32 0.0, %v4661
        %4663 = vdwg.mxu0
        %4664 = vmatprep.subr.bf16.mxu0 %v4498
        %4665 = vmatpush1.bf16.msra.mxu0 %v4497
        %4666 = vmatprep.subr.bf16.mxu0 %v4514
        %4667 = vmatpush1.bf16.msra.mxu0 %v4513
        %4668 = vmatprep.subr.bf16.mxu0 %v4530
        %4669 = vmatpush1.bf16.msra.mxu0 %v4529
        %4670 = vmatprep.subr.bf16.mxu0 %v4546
        %4671 = vmatpush1.bf16.msra.mxu0 %v4545
        %4672 = vmatprep.subr.bf16.mxu0 0
        %4673 = vmatpush1.bf16.msra.mxu0 0
        %4674 = vmatprep.subr.bf16.mxu0 0
        %4675 = vmatpush1.bf16.msra.mxu0 0
        %4676 = vmatprep.subr.bf16.mxu0 0
        %4677 = vmatpush1.bf16.msra.mxu0 0
        %4678 = vmatprep.subr.bf16.mxu0 0
        %4679 = vmatpush1.bf16.msra.mxu0 0
        %4680 = vmatprep.subr.bf16.mxu0 0
        %4681 = vmatpush1.bf16.msra.mxu0 0
        %4682 = vmatprep.subr.bf16.mxu0 0
        %4683 = vmatpush1.bf16.msra.mxu0 0
        %4684 = vmatprep.subr.bf16.mxu0 0
        %4685 = vmatpush1.bf16.msra.mxu0 0
        %4686 = vmatprep.subr.bf16.mxu0 0
        %4687 = vmatpush1.bf16.msra.mxu0 0
        %4688 = vmatprep.subr.bf16.mxu0 0
        %4689 = vmatpush1.bf16.msra.mxu0 0
        %4690 = vmatprep.subr.bf16.mxu0 0
        %4691 = vmatpush1.bf16.msra.mxu0 0
        %4692 = vmatprep.subr.bf16.mxu0 0
        %4693 = vmatpush1.bf16.msra.mxu0 0
        %4694 = vmatprep.subr.bf16.mxu0 0
        %4695 = vmatpush1.bf16.msra.mxu0 0
        %4696 = vmatprep.mubr.bf16.mxu0 0
        %4697 = vmatmul.mubr.bf16.gmra.mrb[0].mxu0 %v4580
        %v4698 = vpop.f32.mrb[0].mxu0
        %v4699 = vadd.f32 0.0, %v4698
        %v4700 = vpop.f32.mrb[0].mxu0
        %v4701 = vadd.f32 0.0, %v4700
        %v4702 = vpop.f32.mrb[0].mxu0
        %v4703 = vadd.f32 0.0, %v4702
        %v4704 = vpop.f32.mrb[0].mxu0
        %v4705 = vadd.f32 0.0, %v4704
        %4706 = vmatprep.mubr.bf16.mxu0 0
        %4707 = vmatmul.mubr.bf16.gmra.mrb[0].mxu0 %v4583
        %v4708 = vpop.f32.mrb[0].mxu0
        %v4709 = vadd.f32 0.0, %v4708
        %v4710 = vpop.f32.mrb[0].mxu0
        %v4711 = vadd.f32 0.0, %v4710
        %v4712 = vpop.f32.mrb[0].mxu0
        %v4713 = vadd.f32 0.0, %v4712
        %v4714 = vpop.f32.mrb[0].mxu0
        %v4715 = vadd.f32 0.0, %v4714
        %4716 = vmatprep.mubr.bf16.mxu0 0
        %4717 = vmatmul.mubr.bf16.gmra.mrb[0].mxu0 %v4586
        %v4718 = vpop.f32.mrb[0].mxu0
        %v4719 = vadd.f32 0.0, %v4718
        %v4720 = vpop.f32.mrb[0].mxu0
        %v4721 = vadd.f32 0.0, %v4720
        %v4722 = vpop.f32.mrb[0].mxu0
        %v4723 = vadd.f32 0.0, %v4722
        %v4724 = vpop.f32.mrb[0].mxu0
        %v4725 = vadd.f32 0.0, %v4724
        %4726 = vmatprep.mubr.bf16.mxu0 0
        %4727 = vmatmul.mubr.bf16.gmra.mrb[0].mxu0 %v4589
        %v4728 = vpop.f32.mrb[0].mxu0
        %v4729 = vadd.f32 0.0, %v4728
        %v4730 = vpop.f32.mrb[0].mxu0
        %v4731 = vadd.f32 0.0, %v4730
        %v4732 = vpop.f32.mrb[0].mxu0
        %v4733 = vadd.f32 0.0, %v4732
        %v4734 = vpop.f32.mrb[0].mxu0
        %v4735 = vadd.f32 0.0, %v4734
        %4736 = vdwg.mxu0
        %4737 = vmatprep.subr.bf16.mxu0 %v4500
        %4738 = vmatpush1.bf16.msra.mxu0 %v4499
        %4739 = vmatprep.subr.bf16.mxu0 %v4516
        %4740 = vmatpush1.bf16.msra.mxu0 %v4515
        %4741 = vmatprep.subr.bf16.mxu0 %v4532
        %4742 = vmatpush1.bf16.msra.mxu0 %v4531
        %4743 = vmatprep.subr.bf16.mxu0 %v4548
        %4744 = vmatpush1.bf16.msra.mxu0 %v4547
        %4745 = vmatprep.subr.bf16.mxu0 0
        %4746 = vmatpush1.bf16.msra.mxu0 0
        %4747 = vmatprep.subr.bf16.mxu0 0
        %4748 = vmatpush1.bf16.msra.mxu0 0
        %4749 = vmatprep.subr.bf16.mxu0 0
        %4750 = vmatpush1.bf16.msra.mxu0 0
        %4751 = vmatprep.subr.bf16.mxu0 0
        %4752 = vmatpush1.bf16.msra.mxu0 0
        %4753 = vmatprep.subr.bf16.mxu0 0
        %4754 = vmatpush1.bf16.msra.mxu0 0
        %4755 = vmatprep.subr.bf16.mxu0 0
        %4756 = vmatpush1.bf16.msra.mxu0 0
        %4757 = vmatprep.subr.bf16.mxu0 0
        %4758 = vmatpush1.bf16.msra.mxu0 0
        %4759 = vmatprep.subr.bf16.mxu0 0
        %4760 = vmatpush1.bf16.msra.mxu0 0
        %4761 = vmatprep.subr.bf16.mxu0 0
        %4762 = vmatpush1.bf16.msra.mxu0 0
        %4763 = vmatprep.subr.bf16.mxu0 0
        %4764 = vmatpush1.bf16.msra.mxu0 0
        %4765 = vmatprep.subr.bf16.mxu0 0
        %4766 = vmatpush1.bf16.msra.mxu0 0
        %4767 = vmatprep.subr.bf16.mxu0 0
        %4768 = vmatpush1.bf16.msra.mxu0 0
        %4769 = vmatprep.mubr.bf16.mxu0 0
        %4770 = vmatmul.mubr.bf16.gmra.mrb[0].mxu0 %v4580
        %v4771 = vpop.f32.mrb[0].mxu0
        %v4772 = vadd.f32 0.0, %v4771
        %v4773 = vpop.f32.mrb[0].mxu0
        %v4774 = vadd.f32 0.0, %v4773
        %v4775 = vpop.f32.mrb[0].mxu0
        %v4776 = vadd.f32 0.0, %v4775
        %v4777 = vpop.f32.mrb[0].mxu0
        %v4778 = vadd.f32 0.0, %v4777
        %4779 = vmatprep.mubr.bf16.mxu0 0
        %4780 = vmatmul.mubr.bf16.gmra.mrb[0].mxu0 %v4583
        %v4781 = vpop.f32.mrb[0].mxu0
        %v4782 = vadd.f32 0.0, %v4781
        %v4783 = vpop.f32.mrb[0].mxu0
        %v4784 = vadd.f32 0.0, %v4783
        %v4785 = vpop.f32.mrb[0].mxu0
        %v4786 = vadd.f32 0.0, %v4785
        %v4787 = vpop.f32.mrb[0].mxu0
        %v4788 = vadd.f32 0.0, %v4787
        %4789 = vmatprep.mubr.bf16.mxu0 0
        %4790 = vmatmul.mubr.bf16.gmra.mrb[0].mxu0 %v4586
        %v4791 = vpop.f32.mrb[0].mxu0
        %v4792 = vadd.f32 0.0, %v4791
        %v4793 = vpop.f32.mrb[0].mxu0
        %v4794 = vadd.f32 0.0, %v4793
        %v4795 = vpop.f32.mrb[0].mxu0
        %v4796 = vadd.f32 0.0, %v4795
        %v4797 = vpop.f32.mrb[0].mxu0
        %v4798 = vadd.f32 0.0, %v4797
        %4799 = vmatprep.mubr.bf16.mxu0 0
        %4800 = vmatmul.mubr.bf16.gmra.mrb[0].mxu0 %v4589
        %v4801 = vpop.f32.mrb[0].mxu0
        %v4802 = vadd.f32 0.0, %v4801
        %v4803 = vpop.f32.mrb[0].mxu0
        %v4804 = vadd.f32 0.0, %v4803
        %v4805 = vpop.f32.mrb[0].mxu0
        %v4806 = vadd.f32 0.0, %v4805
        %v4807 = vpop.f32.mrb[0].mxu0
        %v4808 = vadd.f32 0.0, %v4807
        %4809 = vdwg.mxu0
        %4810 = vmatprep.subr.bf16.mxu0 %v4502
        %4811 = vmatpush1.bf16.msra.mxu0 %v4501
        %4812 = vmatprep.subr.bf16.mxu0 %v4518
        %4813 = vmatpush1.bf16.msra.mxu0 %v4517
        %4814 = vmatprep.subr.bf16.mxu0 %v4534
        %4815 = vmatpush1.bf16.msra.mxu0 %v4533
        %4816 = vmatprep.subr.bf16.mxu0 %v4550
        %4817 = vmatpush1.bf16.msra.mxu0 %v4549
        %4818 = vmatprep.subr.bf16.mxu0 0
        %4819 = vmatpush1.bf16.msra.mxu0 0
        %4820 = vmatprep.subr.bf16.mxu0 0
        %4821 = vmatpush1.bf16.msra.mxu0 0
        %4822 = vmatprep.subr.bf16.mxu0 0
        %4823 = vmatpush1.bf16.msra.mxu0 0
        %4824 = vmatprep.subr.bf16.mxu0 0
        %4825 = vmatpush1.bf16.msra.mxu0 0
        %4826 = vmatprep.subr.bf16.mxu0 0
        %4827 = vmatpush1.bf16.msra.mxu0 0
        %4828 = vmatprep.subr.bf16.mxu0 0
        %4829 = vmatpush1.bf16.msra.mxu0 0
        %4830 = vmatprep.subr.bf16.mxu0 0
        %4831 = vmatpush1.bf16.msra.mxu0 0
        %4832 = vmatprep.subr.bf16.mxu0 0
        %4833 = vmatpush1.bf16.msra.mxu0 0
        %4834 = vmatprep.subr.bf16.mxu0 0
        %4835 = vmatpush1.bf16.msra.mxu0 0
        %4836 = vmatprep.subr.bf16.mxu0 0
        %4837 = vmatpush1.bf16.msra.mxu0 0
        %4838 = vmatprep.subr.bf16.mxu0 0
        %4839 = vmatpush1.bf16.msra.mxu0 0
        %4840 = vmatprep.subr.bf16.mxu0 0
        %4841 = vmatpush1.bf16.msra.mxu0 0
        %4842 = vmatprep.mubr.bf16.mxu0 0
        %4843 = vmatmul.mubr.bf16.gmra.mrb[0].mxu0 %v4580
        %v4844 = vpop.f32.mrb[0].mxu0
        %v4845 = vadd.f32 0.0, %v4844
        %v4846 = vpop.f32.mrb[0].mxu0
        %v4847 = vadd.f32 0.0, %v4846
        %v4848 = vpop.f32.mrb[0].mxu0
        %v4849 = vadd.f32 0.0, %v4848
        %v4850 = vpop.f32.mrb[0].mxu0
        %v4851 = vadd.f32 0.0, %v4850
        %4852 = vmatprep.mubr.bf16.mxu0 0
        %4853 = vmatmul.mubr.bf16.gmra.mrb[0].mxu0 %v4583
        %v4854 = vpop.f32.mrb[0].mxu0
        %v4855 = vadd.f32 0.0, %v4854
        %v4856 = vpop.f32.mrb[0].mxu0
        %v4857 = vadd.f32 0.0, %v4856
        %v4858 = vpop.f32.mrb[0].mxu0
        %v4859 = vadd.f32 0.0, %v4858
        %v4860 = vpop.f32.mrb[0].mxu0
        %v4861 = vadd.f32 0.0, %v4860
        %4862 = vmatprep.mubr.bf16.mxu0 0
        %4863 = vmatmul.mubr.bf16.gmra.mrb[0].mxu0 %v4586
        %v4864 = vpop.f32.mrb[0].mxu0
        %v4865 = vadd.f32 0.0, %v4864
        %v4866 = vpop.f32.mrb[0].mxu0
        %v4867 = vadd.f32 0.0, %v4866
        %v4868 = vpop.f32.mrb[0].mxu0
        %v4869 = vadd.f32 0.0, %v4868
        %v4870 = vpop.f32.mrb[0].mxu0
        %v4871 = vadd.f32 0.0, %v4870
        %4872 = vmatprep.mubr.bf16.mxu0 0
        %4873 = vmatmul.mubr.bf16.gmra.mrb[0].mxu0 %v4589
        %v4874 = vpop.f32.mrb[0].mxu0
        %v4875 = vadd.f32 0.0, %v4874
        %v4876 = vpop.f32.mrb[0].mxu0
        %v4877 = vadd.f32 0.0, %v4876
        %v4878 = vpop.f32.mrb[0].mxu0
        %v4879 = vadd.f32 0.0, %v4878
        %v4880 = vpop.f32.mrb[0].mxu0
        %v4881 = vadd.f32 0.0, %v4880
        %4882 = vdwg.mxu0
        %4883 = vmatprep.subr.bf16.mxu0 %v4504
        %4884 = vmatpush1.bf16.msra.mxu0 %v4503
        %4885 = vmatprep.subr.bf16.mxu0 %v4520
        %4886 = vmatpush1.bf16.msra.mxu0 %v4519
        %4887 = vmatprep.subr.bf16.mxu0 %v4536
        %4888 = vmatpush1.bf16.msra.mxu0 %v4535
        %4889 = vmatprep.subr.bf16.mxu0 %v4552
        %4890 = vmatpush1.bf16.msra.mxu0 %v4551
        %4891 = vmatprep.subr.bf16.mxu0 0
        %4892 = vmatpush1.bf16.msra.mxu0 0
        %4893 = vmatprep.subr.bf16.mxu0 0
        %4894 = vmatpush1.bf16.msra.mxu0 0
        %4895 = vmatprep.subr.bf16.mxu0 0
        %4896 = vmatpush1.bf16.msra.mxu0 0
        %4897 = vmatprep.subr.bf16.mxu0 0
        %4898 = vmatpush1.bf16.msra.mxu0 0
        %4899 = vmatprep.subr.bf16.mxu0 0
        %4900 = vmatpush1.bf16.msra.mxu0 0
        %4901 = vmatprep.subr.bf16.mxu0 0
        %4902 = vmatpush1.bf16.msra.mxu0 0
        %4903 = vmatprep.subr.bf16.mxu0 0
        %4904 = vmatpush1.bf16.msra.mxu0 0
        %4905 = vmatprep.subr.bf16.mxu0 0
        %4906 = vmatpush1.bf16.msra.mxu0 0
        %4907 = vmatprep.subr.bf16.mxu0 0
        %4908 = vmatpush1.bf16.msra.mxu0 0
        %4909 = vmatprep.subr.bf16.mxu0 0
        %4910 = vmatpush1.bf16.msra.mxu0 0
        %4911 = vmatprep.subr.bf16.mxu0 0
        %4912 = vmatpush1.bf16.msra.mxu0 0
        %4913 = vmatprep.subr.bf16.mxu0 0
        %4914 = vmatpush1.bf16.msra.mxu0 0
        %4915 = vmatprep.mubr.bf16.mxu0 0
        %4916 = vmatmul.mubr.bf16.gmra.mrb[0].mxu0 %v4580
        %v4917 = vpop.f32.mrb[0].mxu0
        %v4918 = vadd.f32 0.0, %v4917
        %v4919 = vpop.f32.mrb[0].mxu0
        %v4920 = vadd.f32 0.0, %v4919
        %v4921 = vpop.f32.mrb[0].mxu0
        %v4922 = vadd.f32 0.0, %v4921
        %v4923 = vpop.f32.mrb[0].mxu0
        %v4924 = vadd.f32 0.0, %v4923
        %4925 = vmatprep.mubr.bf16.mxu0 0
        %4926 = vmatmul.mubr.bf16.gmra.mrb[0].mxu0 %v4583
        %v4927 = vpop.f32.mrb[0].mxu0
        %v4928 = vadd.f32 0.0, %v4927
        %v4929 = vpop.f32.mrb[0].mxu0
        %v4930 = vadd.f32 0.0, %v4929
        %v4931 = vpop.f32.mrb[0].mxu0
        %v4932 = vadd.f32 0.0, %v4931
        %v4933 = vpop.f32.mrb[0].mxu0
        %v4934 = vadd.f32 0.0, %v4933
        %4935 = vmatprep.mubr.bf16.mxu0 0
        %4936 = vmatmul.mubr.bf16.gmra.mrb[0].mxu0 %v4586
        %v4937 = vpop.f32.mrb[0].mxu0
        %v4938 = vadd.f32 0.0, %v4937
        %v4939 = vpop.f32.mrb[0].mxu0
        %v4940 = vadd.f32 0.0, %v4939
        %v4941 = vpop.f32.mrb[0].mxu0
        %v4942 = vadd.f32 0.0, %v4941
        %v4943 = vpop.f32.mrb[0].mxu0
        %v4944 = vadd.f32 0.0, %v4943
        %4945 = vmatprep.mubr.bf16.mxu0 0
        %4946 = vmatmul.mubr.bf16.gmra.mrb[0].mxu0 %v4589
        %v4947 = vpop.f32.mrb[0].mxu0
        %v4948 = vadd.f32 0.0, %v4947
        %v4949 = vpop.f32.mrb[0].mxu0
        %v4950 = vadd.f32 0.0, %v4949
        %v4951 = vpop.f32.mrb[0].mxu0
        %v4952 = vadd.f32 0.0, %v4951
        %v4953 = vpop.f32.mrb[0].mxu0
        %v4954 = vadd.f32 0.0, %v4953
        %4955 = vdwg.mxu0
        %4956 = vmatprep.subr.bf16.mxu0 %v4506
        %4957 = vmatpush1.bf16.msra.mxu0 %v4505
        %4958 = vmatprep.subr.bf16.mxu0 %v4522
        %4959 = vmatpush1.bf16.msra.mxu0 %v4521
        %4960 = vmatprep.subr.bf16.mxu0 %v4538
        %4961 = vmatpush1.bf16.msra.mxu0 %v4537
        %4962 = vmatprep.subr.bf16.mxu0 %v4554
        %4963 = vmatpush1.bf16.msra.mxu0 %v4553
        %4964 = vmatprep.subr.bf16.mxu0 0
        %4965 = vmatpush1.bf16.msra.mxu0 0
        %4966 = vmatprep.subr.bf16.mxu0 0
        %4967 = vmatpush1.bf16.msra.mxu0 0
        %4968 = vmatprep.subr.bf16.mxu0 0
        %4969 = vmatpush1.bf16.msra.mxu0 0
        %4970 = vmatprep.subr.bf16.mxu0 0
        %4971 = vmatpush1.bf16.msra.mxu0 0
        %4972 = vmatprep.subr.bf16.mxu0 0
        %4973 = vmatpush1.bf16.msra.mxu0 0
        %4974 = vmatprep.subr.bf16.mxu0 0
        %4975 = vmatpush1.bf16.msra.mxu0 0
        %4976 = vmatprep.subr.bf16.mxu0 0
        %4977 = vmatpush1.bf16.msra.mxu0 0
        %4978 = vmatprep.subr.bf16.mxu0 0
        %4979 = vmatpush1.bf16.msra.mxu0 0
        %4980 = vmatprep.subr.bf16.mxu0 0
        %4981 = vmatpush1.bf16.msra.mxu0 0
        %4982 = vmatprep.subr.bf16.mxu0 0
        %4983 = vmatpush1.bf16.msra.mxu0 0
        %4984 = vmatprep.subr.bf16.mxu0 0
        %4985 = vmatpush1.bf16.msra.mxu0 0
        %4986 = vmatprep.subr.bf16.mxu0 0
        %4987 = vmatpush1.bf16.msra.mxu0 0
        %4988 = vmatprep.mubr.bf16.mxu0 0
        %4989 = vmatmul.mubr.bf16.gmra.mrb[0].mxu0 %v4580
        %v4990 = vpop.f32.mrb[0].mxu0
        %v4991 = vadd.f32 0.0, %v4990
        %v4992 = vpop.f32.mrb[0].mxu0
        %v4993 = vadd.f32 0.0, %v4992
        %v4994 = vpop.f32.mrb[0].mxu0
        %v4995 = vadd.f32 0.0, %v4994
        %v4996 = vpop.f32.mrb[0].mxu0
        %v4997 = vadd.f32 0.0, %v4996
        %4998 = vmatprep.mubr.bf16.mxu0 0
        %4999 = vmatmul.mubr.bf16.gmra.mrb[0].mxu0 %v4583
        %v5000 = vpop.f32.mrb[0].mxu0
        %v5001 = vadd.f32 0.0, %v5000
        %v5002 = vpop.f32.mrb[0].mxu0
        %v5003 = vadd.f32 0.0, %v5002
        %v5004 = vpop.f32.mrb[0].mxu0
        %v5005 = vadd.f32 0.0, %v5004
        %v5006 = vpop.f32.mrb[0].mxu0
        %v5007 = vadd.f32 0.0, %v5006
        %5008 = vmatprep.mubr.bf16.mxu0 0
        %5009 = vmatmul.mubr.bf16.gmra.mrb[0].mxu0 %v4586
        %v5010 = vpop.f32.mrb[0].mxu0
        %v5011 = vadd.f32 0.0, %v5010
        %v5012 = vpop.f32.mrb[0].mxu0
        %v5013 = vadd.f32 0.0, %v5012
        %v5014 = vpop.f32.mrb[0].mxu0
        %v5015 = vadd.f32 0.0, %v5014
        %v5016 = vpop.f32.mrb[0].mxu0
        %v5017 = vadd.f32 0.0, %v5016
        %5018 = vmatprep.mubr.bf16.mxu0 0
        %5019 = vmatmul.mubr.bf16.gmra.mrb[0].mxu0 %v4589
        %v5020 = vpop.f32.mrb[0].mxu0
        %v5021 = vadd.f32 0.0, %v5020
        %v5022 = vpop.f32.mrb[0].mxu0
        %v5023 = vadd.f32 0.0, %v5022
        %v5024 = vpop.f32.mrb[0].mxu0
        %v5025 = vadd.f32 0.0, %v5024
        %v5026 = vpop.f32.mrb[0].mxu0
        %v5027 = vadd.f32 0.0, %v5026
        %5028 = vdwg.mxu0
        %5029 = vmatprep.subr.bf16.mxu0 %v4508
        %5030 = vmatpush1.bf16.msra.mxu0 %v4507
        %5031 = vmatprep.subr.bf16.mxu0 %v4524
        %5032 = vmatpush1.bf16.msra.mxu0 %v4523
        %5033 = vmatprep.subr.bf16.mxu0 %v4540
        %5034 = vmatpush1.bf16.msra.mxu0 %v4539
        %5035 = vmatprep.subr.bf16.mxu0 %v4556
        %5036 = vmatpush1.bf16.msra.mxu0 %v4555
        %5037 = vmatprep.subr.bf16.mxu0 0
        %5038 = vmatpush1.bf16.msra.mxu0 0
        %5039 = vmatprep.subr.bf16.mxu0 0
        %5040 = vmatpush1.bf16.msra.mxu0 0
        %5041 = vmatprep.subr.bf16.mxu0 0
        %5042 = vmatpush1.bf16.msra.mxu0 0
        %5043 = vmatprep.subr.bf16.mxu0 0
        %5044 = vmatpush1.bf16.msra.mxu0 0
        %5045 = vmatprep.subr.bf16.mxu0 0
        %5046 = vmatpush1.bf16.msra.mxu0 0
        %5047 = vmatprep.subr.bf16.mxu0 0
        %5048 = vmatpush1.bf16.msra.mxu0 0
        %5049 = vmatprep.subr.bf16.mxu0 0
        %5050 = vmatpush1.bf16.msra.mxu0 0
        %5051 = vmatprep.subr.bf16.mxu0 0
        %5052 = vmatpush1.bf16.msra.mxu0 0
        %5053 = vmatprep.subr.bf16.mxu0 0
        %5054 = vmatpush1.bf16.msra.mxu0 0
        %5055 = vmatprep.subr.bf16.mxu0 0
        %5056 = vmatpush1.bf16.msra.mxu0 0
        %5057 = vmatprep.subr.bf16.mxu0 0
        %5058 = vmatpush1.bf16.msra.mxu0 0
        %5059 = vmatprep.subr.bf16.mxu0 0
        %5060 = vmatpush1.bf16.msra.mxu0 0
        %5061 = vmatprep.mubr.bf16.mxu0 0
        %5062 = vmatmul.mubr.bf16.gmra.mrb[0].mxu0 %v4580
        %v5063 = vpop.f32.mrb[0].mxu0
        %v5064 = vadd.f32 0.0, %v5063
        %v5065 = vpop.f32.mrb[0].mxu0
        %v5066 = vadd.f32 0.0, %v5065
        %v5067 = vpop.f32.mrb[0].mxu0
        %v5068 = vadd.f32 0.0, %v5067
        %v5069 = vpop.f32.mrb[0].mxu0
        %v5070 = vadd.f32 0.0, %v5069
        %5071 = vmatprep.mubr.bf16.mxu0 0
        %5072 = vmatmul.mubr.bf16.gmra.mrb[0].mxu0 %v4583
        %v5073 = vpop.f32.mrb[0].mxu0
        %v5074 = vadd.f32 0.0, %v5073
        %v5075 = vpop.f32.mrb[0].mxu0
        %v5076 = vadd.f32 0.0, %v5075
        %v5077 = vpop.f32.mrb[0].mxu0
        %v5078 = vadd.f32 0.0, %v5077
        %v5079 = vpop.f32.mrb[0].mxu0
        %v5080 = vadd.f32 0.0, %v5079
        %5081 = vmatprep.mubr.bf16.mxu0 0
        %5082 = vmatmul.mubr.bf16.gmra.mrb[0].mxu0 %v4586
        %v5083 = vpop.f32.mrb[0].mxu0
        %v5084 = vadd.f32 0.0, %v5083
        %v5085 = vpop.f32.mrb[0].mxu0
        %v5086 = vadd.f32 0.0, %v5085
        %v5087 = vpop.f32.mrb[0].mxu0
        %v5088 = vadd.f32 0.0, %v5087
        %v5089 = vpop.f32.mrb[0].mxu0
        %v5090 = vadd.f32 0.0, %v5089
        %5091 = vmatprep.mubr.bf16.mxu0 0
        %5092 = vmatmul.mubr.bf16.gmra.mrb[0].mxu0 %v4589
        %v5093 = vpop.f32.mrb[0].mxu0
        %v5094 = vadd.f32 0.0, %v5093
        %v5095 = vpop.f32.mrb[0].mxu0
        %v5096 = vadd.f32 0.0, %v5095
        %v5097 = vpop.f32.mrb[0].mxu0
        %v5098 = vadd.f32 0.0, %v5097
        %v5099 = vpop.f32.mrb[0].mxu0
        %v5100 = vadd.f32 0.0, %v5099
        %5101 = vdwg.mxu0
        %5102 = vmatprep.subr.bf16.mxu0 %v4510
        %5103 = vmatpush1.bf16.msra.mxu0 %v4509
        %5104 = vmatprep.subr.bf16.mxu0 %v4526
        %5105 = vmatpush1.bf16.msra.mxu0 %v4525
        %5106 = vmatprep.subr.bf16.mxu0 %v4542
        %5107 = vmatpush1.bf16.msra.mxu0 %v4541
        %5108 = vmatprep.subr.bf16.mxu0 %v4558
        %5109 = vmatpush1.bf16.msra.mxu0 %v4557
        %5110 = vmatprep.subr.bf16.mxu0 0
        %5111 = vmatpush1.bf16.msra.mxu0 0
        %5112 = vmatprep.subr.bf16.mxu0 0
        %5113 = vmatpush1.bf16.msra.mxu0 0
        %5114 = vmatprep.subr.bf16.mxu0 0
        %5115 = vmatpush1.bf16.msra.mxu0 0
        %5116 = vmatprep.subr.bf16.mxu0 0
        %5117 = vmatpush1.bf16.msra.mxu0 0
        %5118 = vmatprep.subr.bf16.mxu0 0
        %5119 = vmatpush1.bf16.msra.mxu0 0
        %5120 = vmatprep.subr.bf16.mxu0 0
        %5121 = vmatpush1.bf16.msra.mxu0 0
        %5122 = vmatprep.subr.bf16.mxu0 0
        %5123 = vmatpush1.bf16.msra.mxu0 0
        %5124 = vmatprep.subr.bf16.mxu0 0
        %5125 = vmatpush1.bf16.msra.mxu0 0
        %5126 = vmatprep.subr.bf16.mxu0 0
        %5127 = vmatpush1.bf16.msra.mxu0 0
        %5128 = vmatprep.subr.bf16.mxu0 0
        %5129 = vmatpush1.bf16.msra.mxu0 0
        %5130 = vmatprep.subr.bf16.mxu0 0
        %5131 = vmatpush1.bf16.msra.mxu0 0
        %5132 = vmatprep.subr.bf16.mxu0 0
        %5133 = vmatpush1.bf16.msra.mxu0 0
        %5134 = vmatprep.mubr.bf16.mxu0 0
        %5135 = vmatmul.mubr.bf16.gmra.mrb[0].mxu0 %v4580
        %v5136 = vpop.f32.mrb[0].mxu0
        %v5137 = vadd.f32 0.0, %v5136
        %v5138 = vpop.f32.mrb[0].mxu0
        %v5139 = vadd.f32 0.0, %v5138
        %v5140 = vpop.f32.mrb[0].mxu0
        %v5141 = vadd.f32 0.0, %v5140
        %v5142 = vpop.f32.mrb[0].mxu0
        %v5143 = vadd.f32 0.0, %v5142
        %5144 = vmatprep.mubr.bf16.mxu0 0
        %5145 = vmatmul.mubr.bf16.gmra.mrb[0].mxu0 %v4583
        %v5146 = vpop.f32.mrb[0].mxu0
        %v5147 = vadd.f32 0.0, %v5146
        %v5148 = vpop.f32.mrb[0].mxu0
        %v5149 = vadd.f32 0.0, %v5148
        %v5150 = vpop.f32.mrb[0].mxu0
        %v5151 = vadd.f32 0.0, %v5150
        %v5152 = vpop.f32.mrb[0].mxu0
        %v5153 = vadd.f32 0.0, %v5152
        %5154 = vmatprep.mubr.bf16.mxu0 0
        %5155 = vmatmul.mubr.bf16.gmra.mrb[0].mxu0 %v4586
        %v5156 = vpop.f32.mrb[0].mxu0
        %v5157 = vadd.f32 0.0, %v5156
        %v5158 = vpop.f32.mrb[0].mxu0
        %v5159 = vadd.f32 0.0, %v5158
        %v5160 = vpop.f32.mrb[0].mxu0
        %v5161 = vadd.f32 0.0, %v5160
        %v5162 = vpop.f32.mrb[0].mxu0
        %v5163 = vadd.f32 0.0, %v5162
        %5164 = vmatprep.mubr.bf16.mxu0 0
        %5165 = vmatmul.mubr.bf16.gmra.mrb[0].mxu0 %v4589
        %v5166 = vpop.f32.mrb[0].mxu0
        %v5167 = vadd.f32 0.0, %v5166
        %v5168 = vpop.f32.mrb[0].mxu0
        %v5169 = vadd.f32 0.0, %v5168
        %v5170 = vpop.f32.mrb[0].mxu0
        %v5171 = vadd.f32 0.0, %v5170
        %v5172 = vpop.f32.mrb[0].mxu0
        %v5173 = vadd.f32 0.0, %v5172
        %5174 = vdwg.mxu0
        %v5175 = vmax.f32 %v4626, 0.0
        %v5176 = vmax.f32 %v4628, 0.0
        %v5177 = vmax.f32 %v4699, 0.0
        %v5178 = vmax.f32 %v4701, 0.0
        %v5179 = vmax.f32 %v4772, 0.0
        %v5180 = vmax.f32 %v4774, 0.0
        %v5181 = vmax.f32 %v4845, 0.0
        %v5182 = vmax.f32 %v4847, 0.0
        %v5183 = vmax.f32 %v4918, 0.0
        %v5184 = vmax.f32 %v4920, 0.0
        %v5185 = vmax.f32 %v4991, 0.0
        %v5186 = vmax.f32 %v4993, 0.0
        %v5187 = vmax.f32 %v5064, 0.0
        %v5188 = vmax.f32 %v5066, 0.0
        %v5189 = vmax.f32 %v5137, 0.0
        %v5190 = vmax.f32 %v5139, 0.0
        %v5191 = vmax.f32 %v4630, 0.0
        %v5192 = vmax.f32 %v4632, 0.0
        %v5193 = vmax.f32 %v4703, 0.0
        %v5194 = vmax.f32 %v4705, 0.0
        %v5195 = vmax.f32 %v4776, 0.0
        %v5196 = vmax.f32 %v4778, 0.0
        %v5197 = vmax.f32 %v4849, 0.0
        %v5198 = vmax.f32 %v4851, 0.0
        %v5199 = vmax.f32 %v4922, 0.0
        %v5200 = vmax.f32 %v4924, 0.0
        %v5201 = vmax.f32 %v4995, 0.0
        %v5202 = vmax.f32 %v4997, 0.0
        %v5203 = vmax.f32 %v5068, 0.0
        %v5204 = vmax.f32 %v5070, 0.0
        %v5205 = vmax.f32 %v5141, 0.0
        %v5206 = vmax.f32 %v5143, 0.0
        %v5207 = vmax.f32 %v4636, 0.0
        %v5208 = vmax.f32 %v4638, 0.0
        %v5209 = vmax.f32 %v4709, 0.0
        %v5210 = vmax.f32 %v4711, 0.0
        %v5211 = vmax.f32 %v4782, 0.0
        %v5212 = vmax.f32 %v4784, 0.0
        %v5213 = vmax.f32 %v4855, 0.0
        %v5214 = vmax.f32 %v4857, 0.0
        %v5215 = vmax.f32 %v4928, 0.0
        %v5216 = vmax.f32 %v4930, 0.0
        %v5217 = vmax.f32 %v5001, 0.0
        %v5218 = vmax.f32 %v5003, 0.0
        %v5219 = vmax.f32 %v5074, 0.0
        %v5220 = vmax.f32 %v5076, 0.0
        %v5221 = vmax.f32 %v5147, 0.0
        %v5222 = vmax.f32 %v5149, 0.0
        %v5223 = vmax.f32 %v4640, 0.0
        %v5224 = vmax.f32 %v4642, 0.0
        %v5225 = vmax.f32 %v4713, 0.0
        %v5226 = vmax.f32 %v4715, 0.0
        %v5227 = vmax.f32 %v4786, 0.0
        %v5228 = vmax.f32 %v4788, 0.0
        %v5229 = vmax.f32 %v4859, 0.0
        %v5230 = vmax.f32 %v4861, 0.0
        %v5231 = vmax.f32 %v4932, 0.0
        %v5232 = vmax.f32 %v4934, 0.0
        %v5233 = vmax.f32 %v5005, 0.0
        %v5234 = vmax.f32 %v5007, 0.0
        %v5235 = vmax.f32 %v5078, 0.0
        %v5236 = vmax.f32 %v5080, 0.0
        %v5237 = vmax.f32 %v5151, 0.0
        %v5238 = vmax.f32 %v5153, 0.0
        %v5239 = vmax.f32 %v4646, 0.0
        %v5240 = vmax.f32 %v4648, 0.0
        %v5241 = vmax.f32 %v4719, 0.0
        %v5242 = vmax.f32 %v4721, 0.0
        %v5243 = vmax.f32 %v4792, 0.0
        %v5244 = vmax.f32 %v4794, 0.0
        %v5245 = vmax.f32 %v4865, 0.0
        %v5246 = vmax.f32 %v4867, 0.0
        %v5247 = vmax.f32 %v4938, 0.0
        %v5248 = vmax.f32 %v4940, 0.0
        %v5249 = vmax.f32 %v5011, 0.0
        %v5250 = vmax.f32 %v5013, 0.0
        %v5251 = vmax.f32 %v5084, 0.0
        %v5252 = vmax.f32 %v5086, 0.0
        %v5253 = vmax.f32 %v5157, 0.0
        %v5254 = vmax.f32 %v5159, 0.0
        %v5255 = vmax.f32 %v4650, 0.0
        %v5256 = vmax.f32 %v4652, 0.0
        %v5257 = vmax.f32 %v4723, 0.0
        %v5258 = vmax.f32 %v4725, 0.0
        %v5259 = vmax.f32 %v4796, 0.0
        %v5260 = vmax.f32 %v4798, 0.0
        %v5261 = vmax.f32 %v4869, 0.0
        %v5262 = vmax.f32 %v4871, 0.0
        %v5263 = vmax.f32 %v4942, 0.0
        %v5264 = vmax.f32 %v4944, 0.0
        %v5265 = vmax.f32 %v5015, 0.0
        %v5266 = vmax.f32 %v5017, 0.0
        %v5267 = vmax.f32 %v5088, 0.0
        %v5268 = vmax.f32 %v5090, 0.0
        %v5269 = vmax.f32 %v5161, 0.0
        %v5270 = vmax.f32 %v5163, 0.0
        %v5271 = vmax.f32 %v4656, 0.0
        %v5272 = vmax.f32 %v4658, 0.0
        %v5273 = vmax.f32 %v4729, 0.0
        %v5274 = vmax.f32 %v4731, 0.0
        %v5275 = vmax.f32 %v4802, 0.0
        %v5276 = vmax.f32 %v4804, 0.0
        %v5277 = vmax.f32 %v4875, 0.0
        %v5278 = vmax.f32 %v4877, 0.0
        %v5279 = vmax.f32 %v4948, 0.0
        %v5280 = vmax.f32 %v4950, 0.0
        %v5281 = vmax.f32 %v5021, 0.0
        %v5282 = vmax.f32 %v5023, 0.0
        %v5283 = vmax.f32 %v5094, 0.0
        %v5284 = vmax.f32 %v5096, 0.0
        %v5285 = vmax.f32 %v5167, 0.0
        %v5286 = vmax.f32 %v5169, 0.0
        %v5287 = vmax.f32 %v4660, 0.0
        %v5288 = vmax.f32 %v4662, 0.0
        %v5289 = vmax.f32 %v4733, 0.0
        %v5290 = vmax.f32 %v4735, 0.0
        %v5291 = vmax.f32 %v4806, 0.0
        %v5292 = vmax.f32 %v4808, 0.0
        %v5293 = vmax.f32 %v4879, 0.0
        %v5294 = vmax.f32 %v4881, 0.0
        %v5295 = vmax.f32 %v4952, 0.0
        %v5296 = vmax.f32 %v4954, 0.0
        %v5297 = vmax.f32 %v5025, 0.0
        %v5298 = vmax.f32 %v5027, 0.0
        %v5299 = vmax.f32 %v5098, 0.0
        %v5300 = vmax.f32 %v5100, 0.0
        %v5301 = vmax.f32 %v5171, 0.0
        %v5302 = vmax.f32 %v5173, 0.0
        %v5303 = vld [vmem:[%s9] sm:$0xf]
        %v5304 = vld [vmem:[%s9 + $0x4] sm:$0xf]
        %v5305 = vld [vmem:[%s9 + $0x8] sm:$0xf]
        %v5306 = vld [vmem:[%s9 + $0xc] sm:$0xf]
        %v5307 = vld [vmem:[%s9 + $0x10] sm:$0xf]
        %v5308 = vld [vmem:[%s9 + $0x14] sm:$0xf]
        %v5309 = vld [vmem:[%s9 + $0x18] sm:$0xf]
        %v5310 = vld [vmem:[%s9 + $0x1c] sm:$0xf]
        %v5311 = vpack.c.bf16 %v5191, %v5175
        %v5312 = vpack.c.bf16 %v5192, %v5176
        %v5313 = vpack.c.bf16 %v5193, %v5177
        %v5314 = vpack.c.bf16 %v5194, %v5178
        %v5315 = vpack.c.bf16 %v5195, %v5179
        %v5316 = vpack.c.bf16 %v5196, %v5180
        %v5317 = vpack.c.bf16 %v5197, %v5181
        %v5318 = vpack.c.bf16 %v5198, %v5182
        %v5319 = vpack.c.bf16 %v5199, %v5183
        %v5320 = vpack.c.bf16 %v5200, %v5184
        %v5321 = vpack.c.bf16 %v5201, %v5185
        %v5322 = vpack.c.bf16 %v5202, %v5186
        %v5323 = vpack.c.bf16 %v5203, %v5187
        %v5324 = vpack.c.bf16 %v5204, %v5188
        %v5325 = vpack.c.bf16 %v5205, %v5189
        %v5326 = vpack.c.bf16 %v5206, %v5190
        %v5327 = vpack.c.bf16 %v5223, %v5207
        %v5328 = vpack.c.bf16 %v5224, %v5208
        %v5329 = vpack.c.bf16 %v5225, %v5209
        %v5330 = vpack.c.bf16 %v5226, %v5210
        %v5331 = vpack.c.bf16 %v5227, %v5211
        %v5332 = vpack.c.bf16 %v5228, %v5212
        %v5333 = vpack.c.bf16 %v5229, %v5213
        %v5334 = vpack.c.bf16 %v5230, %v5214
        %v5335 = vpack.c.bf16 %v5231, %v5215
        %v5336 = vpack.c.bf16 %v5232, %v5216
        %v5337 = vpack.c.bf16 %v5233, %v5217
        %v5338 = vpack.c.bf16 %v5234, %v5218
        %v5339 = vpack.c.bf16 %v5235, %v5219
        %v5340 = vpack.c.bf16 %v5236, %v5220
        %v5341 = vpack.c.bf16 %v5237, %v5221
        %v5342 = vpack.c.bf16 %v5238, %v5222
        %v5343 = vpack.c.bf16 %v5255, %v5239
        %v5344 = vpack.c.bf16 %v5256, %v5240
        %v5345 = vpack.c.bf16 %v5257, %v5241
        %v5346 = vpack.c.bf16 %v5258, %v5242
        %v5347 = vpack.c.bf16 %v5259, %v5243
        %v5348 = vpack.c.bf16 %v5260, %v5244
        %v5349 = vpack.c.bf16 %v5261, %v5245
        %v5350 = vpack.c.bf16 %v5262, %v5246
        %v5351 = vpack.c.bf16 %v5263, %v5247
        %v5352 = vpack.c.bf16 %v5264, %v5248
        %v5353 = vpack.c.bf16 %v5265, %v5249
        %v5354 = vpack.c.bf16 %v5266, %v5250
        %v5355 = vpack.c.bf16 %v5267, %v5251
        %v5356 = vpack.c.bf16 %v5268, %v5252
        %v5357 = vpack.c.bf16 %v5269, %v5253
        %v5358 = vpack.c.bf16 %v5270, %v5254
        %v5359 = vpack.c.bf16 %v5287, %v5271
        %v5360 = vpack.c.bf16 %v5288, %v5272
        %v5361 = vpack.c.bf16 %v5289, %v5273
        %v5362 = vpack.c.bf16 %v5290, %v5274
        %v5363 = vpack.c.bf16 %v5291, %v5275
        %v5364 = vpack.c.bf16 %v5292, %v5276
        %v5365 = vpack.c.bf16 %v5293, %v5277
        %v5366 = vpack.c.bf16 %v5294, %v5278
        %v5367 = vpack.c.bf16 %v5295, %v5279
        %v5368 = vpack.c.bf16 %v5296, %v5280
        %v5369 = vpack.c.bf16 %v5297, %v5281
        %v5370 = vpack.c.bf16 %v5298, %v5282
        %v5371 = vpack.c.bf16 %v5299, %v5283
        %v5372 = vpack.c.bf16 %v5300, %v5284
        %v5373 = vpack.c.bf16 %v5301, %v5285
        %v5374 = vpack.c.bf16 %v5302, %v5286
        %v5383 = vunpack.c.l.b16 %v5303
        %v5384 = vunpack.c.l.b16 %v5304
        %v5385 = vunpack.c.l.b16 %v5305
        %v5386 = vunpack.c.l.b16 %v5306
        %v5387 = vunpack.c.l.b16 %v5307
        %v5388 = vunpack.c.l.b16 %v5308
        %v5389 = vunpack.c.l.b16 %v5309
        %v5390 = vunpack.c.l.b16 %v5310
        %v5391 = vpack.c.b16 %v5384, %v5383
        %v5392 = vpack.c.b16 %v5386, %v5385
        %v5393 = vpack.c.b16 %v5388, %v5387
        %v5394 = vpack.c.b16 %v5390, %v5389
        %v5396 = vsel %vm1447, %v5391, 0
        %v5399 = vsel %vm1447, %v5392, 0
        %v5402 = vsel %vm1447, %v5393, 0
        %v5405 = vsel %vm1447, %v5394, 0
        %5407 = vmatprep.subr.bf16.mxu0 %v5312
        %5408 = vmatpush1.bf16.msra.mxu0 %v5311
        %5409 = vmatprep.subr.bf16.mxu0 %v5328
        %5410 = vmatpush1.bf16.msra.mxu0 %v5327
        %5411 = vmatprep.subr.bf16.mxu0 %v5344
        %5412 = vmatpush1.bf16.msra.mxu0 %v5343
        %5413 = vmatprep.subr.bf16.mxu0 %v5360
        %5414 = vmatpush1.bf16.msra.mxu0 %v5359
        %5415 = vmatprep.subr.bf16.mxu0 0
        %5416 = vmatpush1.bf16.msra.mxu0 0
        %5417 = vmatprep.subr.bf16.mxu0 0
        %5418 = vmatpush1.bf16.msra.mxu0 0
        %5419 = vmatprep.subr.bf16.mxu0 0
        %5420 = vmatpush1.bf16.msra.mxu0 0
        %5421 = vmatprep.subr.bf16.mxu0 0
        %5422 = vmatpush1.bf16.msra.mxu0 0
        %5423 = vmatprep.subr.bf16.mxu0 0
        %5424 = vmatpush1.bf16.msra.mxu0 0
        %5425 = vmatprep.subr.bf16.mxu0 0
        %5426 = vmatpush1.bf16.msra.mxu0 0
        %5427 = vmatprep.subr.bf16.mxu0 0
        %5428 = vmatpush1.bf16.msra.mxu0 0
        %5429 = vmatprep.subr.bf16.mxu0 0
        %5430 = vmatpush1.bf16.msra.mxu0 0
        %5431 = vmatprep.subr.bf16.mxu0 0
        %5432 = vmatpush1.bf16.msra.mxu0 0
        %5433 = vmatprep.subr.bf16.mxu0 0
        %5434 = vmatpush1.bf16.msra.mxu0 0
        %5435 = vmatprep.subr.bf16.mxu0 0
        %5436 = vmatpush1.bf16.msra.mxu0 0
        %5437 = vmatprep.subr.bf16.mxu0 0
        %5438 = vmatpush1.bf16.msra.mxu0 0
        %5439 = vmatprep.mubr.bf16.mxu0 0
        %5440 = vmatmul.mubr.bf16.gmra.mrb[0].mxu0 %v5396
        %v5441 = vpop.f32.mrb[0].mxu0
        %v5442 = vadd.f32 0.0, %v5441
        %v5443 = vpop.f32.mrb[0].mxu0
        %v5444 = vadd.f32 0.0, %v5443
        %v5445 = vpop.f32.mrb[0].mxu0
        %v5446 = vadd.f32 0.0, %v5445
        %v5447 = vpop.f32.mrb[0].mxu0
        %v5448 = vadd.f32 0.0, %v5447
        %5449 = vmatprep.mubr.bf16.mxu0 0
        %5450 = vmatmul.mubr.bf16.gmra.mrb[0].mxu0 %v5399
        %v5451 = vpop.f32.mrb[0].mxu0
        %v5452 = vadd.f32 0.0, %v5451
        %v5453 = vpop.f32.mrb[0].mxu0
        %v5454 = vadd.f32 0.0, %v5453
        %v5455 = vpop.f32.mrb[0].mxu0
        %v5456 = vadd.f32 0.0, %v5455
        %v5457 = vpop.f32.mrb[0].mxu0
        %v5458 = vadd.f32 0.0, %v5457
        %5459 = vmatprep.mubr.bf16.mxu0 0
        %5460 = vmatmul.mubr.bf16.gmra.mrb[0].mxu0 %v5402
        %v5461 = vpop.f32.mrb[0].mxu0
        %v5462 = vadd.f32 0.0, %v5461
        %v5463 = vpop.f32.mrb[0].mxu0
        %v5464 = vadd.f32 0.0, %v5463
        %v5465 = vpop.f32.mrb[0].mxu0
        %v5466 = vadd.f32 0.0, %v5465
        %v5467 = vpop.f32.mrb[0].mxu0
        %v5468 = vadd.f32 0.0, %v5467
        %5469 = vmatprep.mubr.bf16.mxu0 0
        %5470 = vmatmul.mubr.bf16.gmra.mrb[0].mxu0 %v5405
        %v5471 = vpop.f32.mrb[0].mxu0
        %v5472 = vadd.f32 0.0, %v5471
        %v5473 = vpop.f32.mrb[0].mxu0
        %v5474 = vadd.f32 0.0, %v5473
        %v5475 = vpop.f32.mrb[0].mxu0
        %v5476 = vadd.f32 0.0, %v5475
        %v5477 = vpop.f32.mrb[0].mxu0
        %v5478 = vadd.f32 0.0, %v5477
        %5479 = vdwg.mxu0
        %5480 = vmatprep.subr.bf16.mxu0 %v5314
        %5481 = vmatpush1.bf16.msra.mxu0 %v5313
        %5482 = vmatprep.subr.bf16.mxu0 %v5330
        %5483 = vmatpush1.bf16.msra.mxu0 %v5329
        %5484 = vmatprep.subr.bf16.mxu0 %v5346
        %5485 = vmatpush1.bf16.msra.mxu0 %v5345
        %5486 = vmatprep.subr.bf16.mxu0 %v5362
        %5487 = vmatpush1.bf16.msra.mxu0 %v5361
        %5488 = vmatprep.subr.bf16.mxu0 0
        %5489 = vmatpush1.bf16.msra.mxu0 0
        %5490 = vmatprep.subr.bf16.mxu0 0
        %5491 = vmatpush1.bf16.msra.mxu0 0
        %5492 = vmatprep.subr.bf16.mxu0 0
        %5493 = vmatpush1.bf16.msra.mxu0 0
        %5494 = vmatprep.subr.bf16.mxu0 0
        %5495 = vmatpush1.bf16.msra.mxu0 0
        %5496 = vmatprep.subr.bf16.mxu0 0
        %5497 = vmatpush1.bf16.msra.mxu0 0
        %5498 = vmatprep.subr.bf16.mxu0 0
        %5499 = vmatpush1.bf16.msra.mxu0 0
        %5500 = vmatprep.subr.bf16.mxu0 0
        %5501 = vmatpush1.bf16.msra.mxu0 0
        %5502 = vmatprep.subr.bf16.mxu0 0
        %5503 = vmatpush1.bf16.msra.mxu0 0
        %5504 = vmatprep.subr.bf16.mxu0 0
        %5505 = vmatpush1.bf16.msra.mxu0 0
        %5506 = vmatprep.subr.bf16.mxu0 0
        %5507 = vmatpush1.bf16.msra.mxu0 0
        %5508 = vmatprep.subr.bf16.mxu0 0
        %5509 = vmatpush1.bf16.msra.mxu0 0
        %5510 = vmatprep.subr.bf16.mxu0 0
        %5511 = vmatpush1.bf16.msra.mxu0 0
        %5512 = vmatprep.mubr.bf16.mxu0 0
        %5513 = vmatmul.mubr.bf16.gmra.mrb[0].mxu0 %v5396
        %v5514 = vpop.f32.mrb[0].mxu0
        %v5515 = vadd.f32 0.0, %v5514
        %v5516 = vpop.f32.mrb[0].mxu0
        %v5517 = vadd.f32 0.0, %v5516
        %v5518 = vpop.f32.mrb[0].mxu0
        %v5519 = vadd.f32 0.0, %v5518
        %v5520 = vpop.f32.mrb[0].mxu0
        %v5521 = vadd.f32 0.0, %v5520
        %5522 = vmatprep.mubr.bf16.mxu0 0
        %5523 = vmatmul.mubr.bf16.gmra.mrb[0].mxu0 %v5399
        %v5524 = vpop.f32.mrb[0].mxu0
        %v5525 = vadd.f32 0.0, %v5524
        %v5526 = vpop.f32.mrb[0].mxu0
        %v5527 = vadd.f32 0.0, %v5526
        %v5528 = vpop.f32.mrb[0].mxu0
        %v5529 = vadd.f32 0.0, %v5528
        %v5530 = vpop.f32.mrb[0].mxu0
        %v5531 = vadd.f32 0.0, %v5530
        %5532 = vmatprep.mubr.bf16.mxu0 0
        %5533 = vmatmul.mubr.bf16.gmra.mrb[0].mxu0 %v5402
        %v5534 = vpop.f32.mrb[0].mxu0
        %v5535 = vadd.f32 0.0, %v5534
        %v5536 = vpop.f32.mrb[0].mxu0
        %v5537 = vadd.f32 0.0, %v5536
        %v5538 = vpop.f32.mrb[0].mxu0
        %v5539 = vadd.f32 0.0, %v5538
        %v5540 = vpop.f32.mrb[0].mxu0
        %v5541 = vadd.f32 0.0, %v5540
        %5542 = vmatprep.mubr.bf16.mxu0 0
        %5543 = vmatmul.mubr.bf16.gmra.mrb[0].mxu0 %v5405
        %v5544 = vpop.f32.mrb[0].mxu0
        %v5545 = vadd.f32 0.0, %v5544
        %v5546 = vpop.f32.mrb[0].mxu0
        %v5547 = vadd.f32 0.0, %v5546
        %v5548 = vpop.f32.mrb[0].mxu0
        %v5549 = vadd.f32 0.0, %v5548
        %v5550 = vpop.f32.mrb[0].mxu0
        %v5551 = vadd.f32 0.0, %v5550
        %5552 = vdwg.mxu0
        %5553 = vmatprep.subr.bf16.mxu0 %v5316
        %5554 = vmatpush1.bf16.msra.mxu0 %v5315
        %5555 = vmatprep.subr.bf16.mxu0 %v5332
        %5556 = vmatpush1.bf16.msra.mxu0 %v5331
        %5557 = vmatprep.subr.bf16.mxu0 %v5348
        %5558 = vmatpush1.bf16.msra.mxu0 %v5347
        %5559 = vmatprep.subr.bf16.mxu0 %v5364
        %5560 = vmatpush1.bf16.msra.mxu0 %v5363
        %5561 = vmatprep.subr.bf16.mxu0 0
        %5562 = vmatpush1.bf16.msra.mxu0 0
        %5563 = vmatprep.subr.bf16.mxu0 0
        %5564 = vmatpush1.bf16.msra.mxu0 0
        %5565 = vmatprep.subr.bf16.mxu0 0
        %5566 = vmatpush1.bf16.msra.mxu0 0
        %5567 = vmatprep.subr.bf16.mxu0 0
        %5568 = vmatpush1.bf16.msra.mxu0 0
        %5569 = vmatprep.subr.bf16.mxu0 0
        %5570 = vmatpush1.bf16.msra.mxu0 0
        %5571 = vmatprep.subr.bf16.mxu0 0
        %5572 = vmatpush1.bf16.msra.mxu0 0
        %5573 = vmatprep.subr.bf16.mxu0 0
        %5574 = vmatpush1.bf16.msra.mxu0 0
        %5575 = vmatprep.subr.bf16.mxu0 0
        %5576 = vmatpush1.bf16.msra.mxu0 0
        %5577 = vmatprep.subr.bf16.mxu0 0
        %5578 = vmatpush1.bf16.msra.mxu0 0
        %5579 = vmatprep.subr.bf16.mxu0 0
        %5580 = vmatpush1.bf16.msra.mxu0 0
        %5581 = vmatprep.subr.bf16.mxu0 0
        %5582 = vmatpush1.bf16.msra.mxu0 0
        %5583 = vmatprep.subr.bf16.mxu0 0
        %5584 = vmatpush1.bf16.msra.mxu0 0
        %5585 = vmatprep.mubr.bf16.mxu0 0
        %5586 = vmatmul.mubr.bf16.gmra.mrb[0].mxu0 %v5396
        %v5587 = vpop.f32.mrb[0].mxu0
        %v5588 = vadd.f32 0.0, %v5587
        %v5589 = vpop.f32.mrb[0].mxu0
        %v5590 = vadd.f32 0.0, %v5589
        %v5591 = vpop.f32.mrb[0].mxu0
        %v5592 = vadd.f32 0.0, %v5591
        %v5593 = vpop.f32.mrb[0].mxu0
        %v5594 = vadd.f32 0.0, %v5593
        %5595 = vmatprep.mubr.bf16.mxu0 0
        %5596 = vmatmul.mubr.bf16.gmra.mrb[0].mxu0 %v5399
        %v5597 = vpop.f32.mrb[0].mxu0
        %v5598 = vadd.f32 0.0, %v5597
        %v5599 = vpop.f32.mrb[0].mxu0
        %v5600 = vadd.f32 0.0, %v5599
        %v5601 = vpop.f32.mrb[0].mxu0
        %v5602 = vadd.f32 0.0, %v5601
        %v5603 = vpop.f32.mrb[0].mxu0
        %v5604 = vadd.f32 0.0, %v5603
        %5605 = vmatprep.mubr.bf16.mxu0 0
        %5606 = vmatmul.mubr.bf16.gmra.mrb[0].mxu0 %v5402
        %v5607 = vpop.f32.mrb[0].mxu0
        %v5608 = vadd.f32 0.0, %v5607
        %v5609 = vpop.f32.mrb[0].mxu0
        %v5610 = vadd.f32 0.0, %v5609
        %v5611 = vpop.f32.mrb[0].mxu0
        %v5612 = vadd.f32 0.0, %v5611
        %v5613 = vpop.f32.mrb[0].mxu0
        %v5614 = vadd.f32 0.0, %v5613
        %5615 = vmatprep.mubr.bf16.mxu0 0
        %5616 = vmatmul.mubr.bf16.gmra.mrb[0].mxu0 %v5405
        %v5617 = vpop.f32.mrb[0].mxu0
        %v5618 = vadd.f32 0.0, %v5617
        %v5619 = vpop.f32.mrb[0].mxu0
        %v5620 = vadd.f32 0.0, %v5619
        %v5621 = vpop.f32.mrb[0].mxu0
        %v5622 = vadd.f32 0.0, %v5621
        %v5623 = vpop.f32.mrb[0].mxu0
        %v5624 = vadd.f32 0.0, %v5623
        %5625 = vdwg.mxu0
        %5626 = vmatprep.subr.bf16.mxu0 %v5318
        %5627 = vmatpush1.bf16.msra.mxu0 %v5317
        %5628 = vmatprep.subr.bf16.mxu0 %v5334
        %5629 = vmatpush1.bf16.msra.mxu0 %v5333
        %5630 = vmatprep.subr.bf16.mxu0 %v5350
        %5631 = vmatpush1.bf16.msra.mxu0 %v5349
        %5632 = vmatprep.subr.bf16.mxu0 %v5366
        %5633 = vmatpush1.bf16.msra.mxu0 %v5365
        %5634 = vmatprep.subr.bf16.mxu0 0
        %5635 = vmatpush1.bf16.msra.mxu0 0
        %5636 = vmatprep.subr.bf16.mxu0 0
        %5637 = vmatpush1.bf16.msra.mxu0 0
        %5638 = vmatprep.subr.bf16.mxu0 0
        %5639 = vmatpush1.bf16.msra.mxu0 0
        %5640 = vmatprep.subr.bf16.mxu0 0
        %5641 = vmatpush1.bf16.msra.mxu0 0
        %5642 = vmatprep.subr.bf16.mxu0 0
        %5643 = vmatpush1.bf16.msra.mxu0 0
        %5644 = vmatprep.subr.bf16.mxu0 0
        %5645 = vmatpush1.bf16.msra.mxu0 0
        %5646 = vmatprep.subr.bf16.mxu0 0
        %5647 = vmatpush1.bf16.msra.mxu0 0
        %5648 = vmatprep.subr.bf16.mxu0 0
        %5649 = vmatpush1.bf16.msra.mxu0 0
        %5650 = vmatprep.subr.bf16.mxu0 0
        %5651 = vmatpush1.bf16.msra.mxu0 0
        %5652 = vmatprep.subr.bf16.mxu0 0
        %5653 = vmatpush1.bf16.msra.mxu0 0
        %5654 = vmatprep.subr.bf16.mxu0 0
        %5655 = vmatpush1.bf16.msra.mxu0 0
        %5656 = vmatprep.subr.bf16.mxu0 0
        %5657 = vmatpush1.bf16.msra.mxu0 0
        %5658 = vmatprep.mubr.bf16.mxu0 0
        %5659 = vmatmul.mubr.bf16.gmra.mrb[0].mxu0 %v5396
        %v5660 = vpop.f32.mrb[0].mxu0
        %v5661 = vadd.f32 0.0, %v5660
        %v5662 = vpop.f32.mrb[0].mxu0
        %v5663 = vadd.f32 0.0, %v5662
        %v5664 = vpop.f32.mrb[0].mxu0
        %v5665 = vadd.f32 0.0, %v5664
        %v5666 = vpop.f32.mrb[0].mxu0
        %v5667 = vadd.f32 0.0, %v5666
        %5668 = vmatprep.mubr.bf16.mxu0 0
        %5669 = vmatmul.mubr.bf16.gmra.mrb[0].mxu0 %v5399
        %v5670 = vpop.f32.mrb[0].mxu0
        %v5671 = vadd.f32 0.0, %v5670
        %v5672 = vpop.f32.mrb[0].mxu0
        %v5673 = vadd.f32 0.0, %v5672
        %v5674 = vpop.f32.mrb[0].mxu0
        %v5675 = vadd.f32 0.0, %v5674
        %v5676 = vpop.f32.mrb[0].mxu0
        %v5677 = vadd.f32 0.0, %v5676
        %5678 = vmatprep.mubr.bf16.mxu0 0
        %5679 = vmatmul.mubr.bf16.gmra.mrb[0].mxu0 %v5402
        %v5680 = vpop.f32.mrb[0].mxu0
        %v5681 = vadd.f32 0.0, %v5680
        %v5682 = vpop.f32.mrb[0].mxu0
        %v5683 = vadd.f32 0.0, %v5682
        %v5684 = vpop.f32.mrb[0].mxu0
        %v5685 = vadd.f32 0.0, %v5684
        %v5686 = vpop.f32.mrb[0].mxu0
        %v5687 = vadd.f32 0.0, %v5686
        %5688 = vmatprep.mubr.bf16.mxu0 0
        %5689 = vmatmul.mubr.bf16.gmra.mrb[0].mxu0 %v5405
        %v5690 = vpop.f32.mrb[0].mxu0
        %v5691 = vadd.f32 0.0, %v5690
        %v5692 = vpop.f32.mrb[0].mxu0
        %v5693 = vadd.f32 0.0, %v5692
        %v5694 = vpop.f32.mrb[0].mxu0
        %v5695 = vadd.f32 0.0, %v5694
        %v5696 = vpop.f32.mrb[0].mxu0
        %v5697 = vadd.f32 0.0, %v5696
        %5698 = vdwg.mxu0
        %5699 = vmatprep.subr.bf16.mxu0 %v5320
        %5700 = vmatpush1.bf16.msra.mxu0 %v5319
        %5701 = vmatprep.subr.bf16.mxu0 %v5336
        %5702 = vmatpush1.bf16.msra.mxu0 %v5335
        %5703 = vmatprep.subr.bf16.mxu0 %v5352
        %5704 = vmatpush1.bf16.msra.mxu0 %v5351
        %5705 = vmatprep.subr.bf16.mxu0 %v5368
        %5706 = vmatpush1.bf16.msra.mxu0 %v5367
        %5707 = vmatprep.subr.bf16.mxu0 0
        %5708 = vmatpush1.bf16.msra.mxu0 0
        %5709 = vmatprep.subr.bf16.mxu0 0
        %5710 = vmatpush1.bf16.msra.mxu0 0
        %5711 = vmatprep.subr.bf16.mxu0 0
        %5712 = vmatpush1.bf16.msra.mxu0 0
        %5713 = vmatprep.subr.bf16.mxu0 0
        %5714 = vmatpush1.bf16.msra.mxu0 0
        %5715 = vmatprep.subr.bf16.mxu0 0
        %5716 = vmatpush1.bf16.msra.mxu0 0
        %5717 = vmatprep.subr.bf16.mxu0 0
        %5718 = vmatpush1.bf16.msra.mxu0 0
        %5719 = vmatprep.subr.bf16.mxu0 0
        %5720 = vmatpush1.bf16.msra.mxu0 0
        %5721 = vmatprep.subr.bf16.mxu0 0
        %5722 = vmatpush1.bf16.msra.mxu0 0
        %5723 = vmatprep.subr.bf16.mxu0 0
        %5724 = vmatpush1.bf16.msra.mxu0 0
        %5725 = vmatprep.subr.bf16.mxu0 0
        %5726 = vmatpush1.bf16.msra.mxu0 0
        %5727 = vmatprep.subr.bf16.mxu0 0
        %5728 = vmatpush1.bf16.msra.mxu0 0
        %5729 = vmatprep.subr.bf16.mxu0 0
        %5730 = vmatpush1.bf16.msra.mxu0 0
        %5731 = vmatprep.mubr.bf16.mxu0 0
        %5732 = vmatmul.mubr.bf16.gmra.mrb[0].mxu0 %v5396
        %v5733 = vpop.f32.mrb[0].mxu0
        %v5734 = vadd.f32 0.0, %v5733
        %v5735 = vpop.f32.mrb[0].mxu0
        %v5736 = vadd.f32 0.0, %v5735
        %v5737 = vpop.f32.mrb[0].mxu0
        %v5738 = vadd.f32 0.0, %v5737
        %v5739 = vpop.f32.mrb[0].mxu0
        %v5740 = vadd.f32 0.0, %v5739
        %5741 = vmatprep.mubr.bf16.mxu0 0
        %5742 = vmatmul.mubr.bf16.gmra.mrb[0].mxu0 %v5399
        %v5743 = vpop.f32.mrb[0].mxu0
        %v5744 = vadd.f32 0.0, %v5743
        %v5745 = vpop.f32.mrb[0].mxu0
        %v5746 = vadd.f32 0.0, %v5745
        %v5747 = vpop.f32.mrb[0].mxu0
        %v5748 = vadd.f32 0.0, %v5747
        %v5749 = vpop.f32.mrb[0].mxu0
        %v5750 = vadd.f32 0.0, %v5749
        %5751 = vmatprep.mubr.bf16.mxu0 0
        %5752 = vmatmul.mubr.bf16.gmra.mrb[0].mxu0 %v5402
        %v5753 = vpop.f32.mrb[0].mxu0
        %v5754 = vadd.f32 0.0, %v5753
        %v5755 = vpop.f32.mrb[0].mxu0
        %v5756 = vadd.f32 0.0, %v5755
        %v5757 = vpop.f32.mrb[0].mxu0
        %v5758 = vadd.f32 0.0, %v5757
        %v5759 = vpop.f32.mrb[0].mxu0
        %v5760 = vadd.f32 0.0, %v5759
        %5761 = vmatprep.mubr.bf16.mxu0 0
        %5762 = vmatmul.mubr.bf16.gmra.mrb[0].mxu0 %v5405
        %v5763 = vpop.f32.mrb[0].mxu0
        %v5764 = vadd.f32 0.0, %v5763
        %v5765 = vpop.f32.mrb[0].mxu0
        %v5766 = vadd.f32 0.0, %v5765
        %v5767 = vpop.f32.mrb[0].mxu0
        %v5768 = vadd.f32 0.0, %v5767
        %v5769 = vpop.f32.mrb[0].mxu0
        %v5770 = vadd.f32 0.0, %v5769
        %5771 = vdwg.mxu0
        %5772 = vmatprep.subr.bf16.mxu0 %v5322
        %5773 = vmatpush1.bf16.msra.mxu0 %v5321
        %5774 = vmatprep.subr.bf16.mxu0 %v5338
        %5775 = vmatpush1.bf16.msra.mxu0 %v5337
        %5776 = vmatprep.subr.bf16.mxu0 %v5354
        %5777 = vmatpush1.bf16.msra.mxu0 %v5353
        %5778 = vmatprep.subr.bf16.mxu0 %v5370
        %5779 = vmatpush1.bf16.msra.mxu0 %v5369
        %5780 = vmatprep.subr.bf16.mxu0 0
        %5781 = vmatpush1.bf16.msra.mxu0 0
        %5782 = vmatprep.subr.bf16.mxu0 0
        %5783 = vmatpush1.bf16.msra.mxu0 0
        %5784 = vmatprep.subr.bf16.mxu0 0
        %5785 = vmatpush1.bf16.msra.mxu0 0
        %5786 = vmatprep.subr.bf16.mxu0 0
        %5787 = vmatpush1.bf16.msra.mxu0 0
        %5788 = vmatprep.subr.bf16.mxu0 0
        %5789 = vmatpush1.bf16.msra.mxu0 0
        %5790 = vmatprep.subr.bf16.mxu0 0
        %5791 = vmatpush1.bf16.msra.mxu0 0
        %5792 = vmatprep.subr.bf16.mxu0 0
        %5793 = vmatpush1.bf16.msra.mxu0 0
        %5794 = vmatprep.subr.bf16.mxu0 0
        %5795 = vmatpush1.bf16.msra.mxu0 0
        %5796 = vmatprep.subr.bf16.mxu0 0
        %5797 = vmatpush1.bf16.msra.mxu0 0
        %5798 = vmatprep.subr.bf16.mxu0 0
        %5799 = vmatpush1.bf16.msra.mxu0 0
        %5800 = vmatprep.subr.bf16.mxu0 0
        %5801 = vmatpush1.bf16.msra.mxu0 0
        %5802 = vmatprep.subr.bf16.mxu0 0
        %5803 = vmatpush1.bf16.msra.mxu0 0
        %5804 = vmatprep.mubr.bf16.mxu0 0
        %5805 = vmatmul.mubr.bf16.gmra.mrb[0].mxu0 %v5396
        %v5806 = vpop.f32.mrb[0].mxu0
        %v5807 = vadd.f32 0.0, %v5806
        %v5808 = vpop.f32.mrb[0].mxu0
        %v5809 = vadd.f32 0.0, %v5808
        %v5810 = vpop.f32.mrb[0].mxu0
        %v5811 = vadd.f32 0.0, %v5810
        %v5812 = vpop.f32.mrb[0].mxu0
        %v5813 = vadd.f32 0.0, %v5812
        %5814 = vmatprep.mubr.bf16.mxu0 0
        %5815 = vmatmul.mubr.bf16.gmra.mrb[0].mxu0 %v5399
        %v5816 = vpop.f32.mrb[0].mxu0
        %v5817 = vadd.f32 0.0, %v5816
        %v5818 = vpop.f32.mrb[0].mxu0
        %v5819 = vadd.f32 0.0, %v5818
        %v5820 = vpop.f32.mrb[0].mxu0
        %v5821 = vadd.f32 0.0, %v5820
        %v5822 = vpop.f32.mrb[0].mxu0
        %v5823 = vadd.f32 0.0, %v5822
        %5824 = vmatprep.mubr.bf16.mxu0 0
        %5825 = vmatmul.mubr.bf16.gmra.mrb[0].mxu0 %v5402
        %v5826 = vpop.f32.mrb[0].mxu0
        %v5827 = vadd.f32 0.0, %v5826
        %v5828 = vpop.f32.mrb[0].mxu0
        %v5829 = vadd.f32 0.0, %v5828
        %v5830 = vpop.f32.mrb[0].mxu0
        %v5831 = vadd.f32 0.0, %v5830
        %v5832 = vpop.f32.mrb[0].mxu0
        %v5833 = vadd.f32 0.0, %v5832
        %5834 = vmatprep.mubr.bf16.mxu0 0
        %5835 = vmatmul.mubr.bf16.gmra.mrb[0].mxu0 %v5405
        %v5836 = vpop.f32.mrb[0].mxu0
        %v5837 = vadd.f32 0.0, %v5836
        %v5838 = vpop.f32.mrb[0].mxu0
        %v5839 = vadd.f32 0.0, %v5838
        %v5840 = vpop.f32.mrb[0].mxu0
        %v5841 = vadd.f32 0.0, %v5840
        %v5842 = vpop.f32.mrb[0].mxu0
        %v5843 = vadd.f32 0.0, %v5842
        %5844 = vdwg.mxu0
        %5845 = vmatprep.subr.bf16.mxu0 %v5324
        %5846 = vmatpush1.bf16.msra.mxu0 %v5323
        %5847 = vmatprep.subr.bf16.mxu0 %v5340
        %5848 = vmatpush1.bf16.msra.mxu0 %v5339
        %5849 = vmatprep.subr.bf16.mxu0 %v5356
        %5850 = vmatpush1.bf16.msra.mxu0 %v5355
        %5851 = vmatprep.subr.bf16.mxu0 %v5372
        %5852 = vmatpush1.bf16.msra.mxu0 %v5371
        %5853 = vmatprep.subr.bf16.mxu0 0
        %5854 = vmatpush1.bf16.msra.mxu0 0
        %5855 = vmatprep.subr.bf16.mxu0 0
        %5856 = vmatpush1.bf16.msra.mxu0 0
        %5857 = vmatprep.subr.bf16.mxu0 0
        %5858 = vmatpush1.bf16.msra.mxu0 0
        %5859 = vmatprep.subr.bf16.mxu0 0
        %5860 = vmatpush1.bf16.msra.mxu0 0
        %5861 = vmatprep.subr.bf16.mxu0 0
        %5862 = vmatpush1.bf16.msra.mxu0 0
        %5863 = vmatprep.subr.bf16.mxu0 0
        %5864 = vmatpush1.bf16.msra.mxu0 0
        %5865 = vmatprep.subr.bf16.mxu0 0
        %5866 = vmatpush1.bf16.msra.mxu0 0
        %5867 = vmatprep.subr.bf16.mxu0 0
        %5868 = vmatpush1.bf16.msra.mxu0 0
        %5869 = vmatprep.subr.bf16.mxu0 0
        %5870 = vmatpush1.bf16.msra.mxu0 0
        %5871 = vmatprep.subr.bf16.mxu0 0
        %5872 = vmatpush1.bf16.msra.mxu0 0
        %5873 = vmatprep.subr.bf16.mxu0 0
        %5874 = vmatpush1.bf16.msra.mxu0 0
        %5875 = vmatprep.subr.bf16.mxu0 0
        %5876 = vmatpush1.bf16.msra.mxu0 0
        %5877 = vmatprep.mubr.bf16.mxu0 0
        %5878 = vmatmul.mubr.bf16.gmra.mrb[0].mxu0 %v5396
        %v5879 = vpop.f32.mrb[0].mxu0
        %v5880 = vadd.f32 0.0, %v5879
        %v5881 = vpop.f32.mrb[0].mxu0
        %v5882 = vadd.f32 0.0, %v5881
        %v5883 = vpop.f32.mrb[0].mxu0
        %v5884 = vadd.f32 0.0, %v5883
        %v5885 = vpop.f32.mrb[0].mxu0
        %v5886 = vadd.f32 0.0, %v5885
        %5887 = vmatprep.mubr.bf16.mxu0 0
        %5888 = vmatmul.mubr.bf16.gmra.mrb[0].mxu0 %v5399
        %v5889 = vpop.f32.mrb[0].mxu0
        %v5890 = vadd.f32 0.0, %v5889
        %v5891 = vpop.f32.mrb[0].mxu0
        %v5892 = vadd.f32 0.0, %v5891
        %v5893 = vpop.f32.mrb[0].mxu0
        %v5894 = vadd.f32 0.0, %v5893
        %v5895 = vpop.f32.mrb[0].mxu0
        %v5896 = vadd.f32 0.0, %v5895
        %5897 = vmatprep.mubr.bf16.mxu0 0
        %5898 = vmatmul.mubr.bf16.gmra.mrb[0].mxu0 %v5402
        %v5899 = vpop.f32.mrb[0].mxu0
        %v5900 = vadd.f32 0.0, %v5899
        %v5901 = vpop.f32.mrb[0].mxu0
        %v5902 = vadd.f32 0.0, %v5901
        %v5903 = vpop.f32.mrb[0].mxu0
        %v5904 = vadd.f32 0.0, %v5903
        %v5905 = vpop.f32.mrb[0].mxu0
        %v5906 = vadd.f32 0.0, %v5905
        %5907 = vmatprep.mubr.bf16.mxu0 0
        %5908 = vmatmul.mubr.bf16.gmra.mrb[0].mxu0 %v5405
        %v5909 = vpop.f32.mrb[0].mxu0
        %v5910 = vadd.f32 0.0, %v5909
        %v5911 = vpop.f32.mrb[0].mxu0
        %v5912 = vadd.f32 0.0, %v5911
        %v5913 = vpop.f32.mrb[0].mxu0
        %v5914 = vadd.f32 0.0, %v5913
        %v5915 = vpop.f32.mrb[0].mxu0
        %v5916 = vadd.f32 0.0, %v5915
        %5917 = vdwg.mxu0
        %5918 = vmatprep.subr.bf16.mxu0 %v5326
        %5919 = vmatpush1.bf16.msra.mxu0 %v5325
        %5920 = vmatprep.subr.bf16.mxu0 %v5342
        %5921 = vmatpush1.bf16.msra.mxu0 %v5341
        %5922 = vmatprep.subr.bf16.mxu0 %v5358
        %5923 = vmatpush1.bf16.msra.mxu0 %v5357
        %5924 = vmatprep.subr.bf16.mxu0 %v5374
        %5925 = vmatpush1.bf16.msra.mxu0 %v5373
        %5926 = vmatprep.subr.bf16.mxu0 0
        %5927 = vmatpush1.bf16.msra.mxu0 0
        %5928 = vmatprep.subr.bf16.mxu0 0
        %5929 = vmatpush1.bf16.msra.mxu0 0
        %5930 = vmatprep.subr.bf16.mxu0 0
        %5931 = vmatpush1.bf16.msra.mxu0 0
        %5932 = vmatprep.subr.bf16.mxu0 0
        %5933 = vmatpush1.bf16.msra.mxu0 0
        %5934 = vmatprep.subr.bf16.mxu0 0
        %5935 = vmatpush1.bf16.msra.mxu0 0
        %5936 = vmatprep.subr.bf16.mxu0 0
        %5937 = vmatpush1.bf16.msra.mxu0 0
        %5938 = vmatprep.subr.bf16.mxu0 0
        %5939 = vmatpush1.bf16.msra.mxu0 0
        %5940 = vmatprep.subr.bf16.mxu0 0
        %5941 = vmatpush1.bf16.msra.mxu0 0
        %5942 = vmatprep.subr.bf16.mxu0 0
        %5943 = vmatpush1.bf16.msra.mxu0 0
        %5944 = vmatprep.subr.bf16.mxu0 0
        %5945 = vmatpush1.bf16.msra.mxu0 0
        %5946 = vmatprep.subr.bf16.mxu0 0
        %5947 = vmatpush1.bf16.msra.mxu0 0
        %5948 = vmatprep.subr.bf16.mxu0 0
        %5949 = vmatpush1.bf16.msra.mxu0 0
        %5950 = vmatprep.mubr.bf16.mxu0 0
        %5951 = vmatmul.mubr.bf16.gmra.mrb[0].mxu0 %v5396
        %v5952 = vpop.f32.mrb[0].mxu0
        %v5953 = vadd.f32 0.0, %v5952
        %v5954 = vpop.f32.mrb[0].mxu0
        %v5955 = vadd.f32 0.0, %v5954
        %v5956 = vpop.f32.mrb[0].mxu0
        %v5957 = vadd.f32 0.0, %v5956
        %v5958 = vpop.f32.mrb[0].mxu0
        %v5959 = vadd.f32 0.0, %v5958
        %5960 = vmatprep.mubr.bf16.mxu0 0
        %5961 = vmatmul.mubr.bf16.gmra.mrb[0].mxu0 %v5399
        %v5962 = vpop.f32.mrb[0].mxu0
        %v5963 = vadd.f32 0.0, %v5962
        %v5964 = vpop.f32.mrb[0].mxu0
        %v5965 = vadd.f32 0.0, %v5964
        %v5966 = vpop.f32.mrb[0].mxu0
        %v5967 = vadd.f32 0.0, %v5966
        %v5968 = vpop.f32.mrb[0].mxu0
        %v5969 = vadd.f32 0.0, %v5968
        %5970 = vmatprep.mubr.bf16.mxu0 0
        %5971 = vmatmul.mubr.bf16.gmra.mrb[0].mxu0 %v5402
        %v5972 = vpop.f32.mrb[0].mxu0
        %v5973 = vadd.f32 0.0, %v5972
        %v5974 = vpop.f32.mrb[0].mxu0
        %v5975 = vadd.f32 0.0, %v5974
        %v5976 = vpop.f32.mrb[0].mxu0
        %v5977 = vadd.f32 0.0, %v5976
        %v5978 = vpop.f32.mrb[0].mxu0
        %v5979 = vadd.f32 0.0, %v5978
        %5980 = vmatprep.mubr.bf16.mxu0 0
        %5981 = vmatmul.mubr.bf16.gmra.mrb[0].mxu0 %v5405
        %v5982 = vpop.f32.mrb[0].mxu0
        %v5983 = vadd.f32 0.0, %v5982
        %v5984 = vpop.f32.mrb[0].mxu0
        %v5985 = vadd.f32 0.0, %v5984
        %v5986 = vpop.f32.mrb[0].mxu0
        %v5987 = vadd.f32 0.0, %v5986
        %v5988 = vpop.f32.mrb[0].mxu0
        %v5989 = vadd.f32 0.0, %v5988
        %5990 = vdwg.mxu0
        %v5991 = vmax.f32 %v5442, 0.0
        %v5992 = vmax.f32 %v5444, 0.0
        %v5993 = vmax.f32 %v5515, 0.0
        %v5994 = vmax.f32 %v5517, 0.0
        %v5995 = vmax.f32 %v5588, 0.0
        %v5996 = vmax.f32 %v5590, 0.0
        %v5997 = vmax.f32 %v5661, 0.0
        %v5998 = vmax.f32 %v5663, 0.0
        %v5999 = vmax.f32 %v5734, 0.0
        %v6000 = vmax.f32 %v5736, 0.0
        %v6001 = vmax.f32 %v5807, 0.0
        %v6002 = vmax.f32 %v5809, 0.0
        %v6003 = vmax.f32 %v5880, 0.0
        %v6004 = vmax.f32 %v5882, 0.0
        %v6005 = vmax.f32 %v5953, 0.0
        %v6006 = vmax.f32 %v5955, 0.0
        %v6007 = vmax.f32 %v5446, 0.0
        %v6008 = vmax.f32 %v5448, 0.0
        %v6009 = vmax.f32 %v5519, 0.0
        %v6010 = vmax.f32 %v5521, 0.0
        %v6011 = vmax.f32 %v5592, 0.0
        %v6012 = vmax.f32 %v5594, 0.0
        %v6013 = vmax.f32 %v5665, 0.0
        %v6014 = vmax.f32 %v5667, 0.0
        %v6015 = vmax.f32 %v5738, 0.0
        %v6016 = vmax.f32 %v5740, 0.0
        %v6017 = vmax.f32 %v5811, 0.0
        %v6018 = vmax.f32 %v5813, 0.0
        %v6019 = vmax.f32 %v5884, 0.0
        %v6020 = vmax.f32 %v5886, 0.0
        %v6021 = vmax.f32 %v5957, 0.0
        %v6022 = vmax.f32 %v5959, 0.0
        %v6023 = vmax.f32 %v5452, 0.0
        %v6024 = vmax.f32 %v5454, 0.0
        %v6025 = vmax.f32 %v5525, 0.0
        %v6026 = vmax.f32 %v5527, 0.0
        %v6027 = vmax.f32 %v5598, 0.0
        %v6028 = vmax.f32 %v5600, 0.0
        %v6029 = vmax.f32 %v5671, 0.0
        %v6030 = vmax.f32 %v5673, 0.0
        %v6031 = vmax.f32 %v5744, 0.0
        %v6032 = vmax.f32 %v5746, 0.0
        %v6033 = vmax.f32 %v5817, 0.0
        %v6034 = vmax.f32 %v5819, 0.0
        %v6035 = vmax.f32 %v5890, 0.0
        %v6036 = vmax.f32 %v5892, 0.0
        %v6037 = vmax.f32 %v5963, 0.0
        %v6038 = vmax.f32 %v5965, 0.0
        %v6039 = vmax.f32 %v5456, 0.0
        %v6040 = vmax.f32 %v5458, 0.0
        %v6041 = vmax.f32 %v5529, 0.0
        %v6042 = vmax.f32 %v5531, 0.0
        %v6043 = vmax.f32 %v5602, 0.0
        %v6044 = vmax.f32 %v5604, 0.0
        %v6045 = vmax.f32 %v5675, 0.0
        %v6046 = vmax.f32 %v5677, 0.0
        %v6047 = vmax.f32 %v5748, 0.0
        %v6048 = vmax.f32 %v5750, 0.0
        %v6049 = vmax.f32 %v5821, 0.0
        %v6050 = vmax.f32 %v5823, 0.0
        %v6051 = vmax.f32 %v5894, 0.0
        %v6052 = vmax.f32 %v5896, 0.0
        %v6053 = vmax.f32 %v5967, 0.0
        %v6054 = vmax.f32 %v5969, 0.0
        %v6055 = vmax.f32 %v5462, 0.0
        %v6056 = vmax.f32 %v5464, 0.0
        %v6057 = vmax.f32 %v5535, 0.0
        %v6058 = vmax.f32 %v5537, 0.0
        %v6059 = vmax.f32 %v5608, 0.0
        %v6060 = vmax.f32 %v5610, 0.0
        %v6061 = vmax.f32 %v5681, 0.0
        %v6062 = vmax.f32 %v5683, 0.0
        %v6063 = vmax.f32 %v5754, 0.0
        %v6064 = vmax.f32 %v5756, 0.0
        %v6065 = vmax.f32 %v5827, 0.0
        %v6066 = vmax.f32 %v5829, 0.0
        %v6067 = vmax.f32 %v5900, 0.0
        %v6068 = vmax.f32 %v5902, 0.0
        %v6069 = vmax.f32 %v5973, 0.0
        %v6070 = vmax.f32 %v5975, 0.0
        %v6071 = vmax.f32 %v5466, 0.0
        %v6072 = vmax.f32 %v5468, 0.0
        %v6073 = vmax.f32 %v5539, 0.0
        %v6074 = vmax.f32 %v5541, 0.0
        %v6075 = vmax.f32 %v5612, 0.0
        %v6076 = vmax.f32 %v5614, 0.0
        %v6077 = vmax.f32 %v5685, 0.0
        %v6078 = vmax.f32 %v5687, 0.0
        %v6079 = vmax.f32 %v5758, 0.0
        %v6080 = vmax.f32 %v5760, 0.0
        %v6081 = vmax.f32 %v5831, 0.0
        %v6082 = vmax.f32 %v5833, 0.0
        %v6083 = vmax.f32 %v5904, 0.0
        %v6084 = vmax.f32 %v5906, 0.0
        %v6085 = vmax.f32 %v5977, 0.0
        %v6086 = vmax.f32 %v5979, 0.0
        %v6087 = vmax.f32 %v5472, 0.0
        %v6088 = vmax.f32 %v5474, 0.0
        %v6089 = vmax.f32 %v5545, 0.0
        %v6090 = vmax.f32 %v5547, 0.0
        %v6091 = vmax.f32 %v5618, 0.0
        %v6092 = vmax.f32 %v5620, 0.0
        %v6093 = vmax.f32 %v5691, 0.0
        %v6094 = vmax.f32 %v5693, 0.0
        %v6095 = vmax.f32 %v5764, 0.0
        %v6096 = vmax.f32 %v5766, 0.0
        %v6097 = vmax.f32 %v5837, 0.0
        %v6098 = vmax.f32 %v5839, 0.0
        %v6099 = vmax.f32 %v5910, 0.0
        %v6100 = vmax.f32 %v5912, 0.0
        %v6101 = vmax.f32 %v5983, 0.0
        %v6102 = vmax.f32 %v5985, 0.0
        %v6103 = vmax.f32 %v5476, 0.0
        %v6104 = vmax.f32 %v5478, 0.0
        %v6105 = vmax.f32 %v5549, 0.0
        %v6106 = vmax.f32 %v5551, 0.0
        %v6107 = vmax.f32 %v5622, 0.0
        %v6108 = vmax.f32 %v5624, 0.0
        %v6109 = vmax.f32 %v5695, 0.0
        %v6110 = vmax.f32 %v5697, 0.0
        %v6111 = vmax.f32 %v5768, 0.0
        %v6112 = vmax.f32 %v5770, 0.0
        %v6113 = vmax.f32 %v5841, 0.0
        %v6114 = vmax.f32 %v5843, 0.0
        %v6115 = vmax.f32 %v5914, 0.0
        %v6116 = vmax.f32 %v5916, 0.0
        %v6117 = vmax.f32 %v5987, 0.0
        %v6118 = vmax.f32 %v5989, 0.0
        %v6119 = vld [vmem:[%s10] sm:$0x3]
        %v6120 = vpack.c.bf16 %v6007, %v5991
        %v6121 = vpack.c.bf16 %v6008, %v5992
        %v6122 = vpack.c.bf16 %v6009, %v5993
        %v6123 = vpack.c.bf16 %v6010, %v5994
        %v6124 = vpack.c.bf16 %v6011, %v5995
        %v6125 = vpack.c.bf16 %v6012, %v5996
        %v6126 = vpack.c.bf16 %v6013, %v5997
        %v6127 = vpack.c.bf16 %v6014, %v5998
        %v6128 = vpack.c.bf16 %v6015, %v5999
        %v6129 = vpack.c.bf16 %v6016, %v6000
        %v6130 = vpack.c.bf16 %v6017, %v6001
        %v6131 = vpack.c.bf16 %v6018, %v6002
        %v6132 = vpack.c.bf16 %v6019, %v6003
        %v6133 = vpack.c.bf16 %v6020, %v6004
        %v6134 = vpack.c.bf16 %v6021, %v6005
        %v6135 = vpack.c.bf16 %v6022, %v6006
        %v6136 = vpack.c.bf16 %v6039, %v6023
        %v6137 = vpack.c.bf16 %v6040, %v6024
        %v6138 = vpack.c.bf16 %v6041, %v6025
        %v6139 = vpack.c.bf16 %v6042, %v6026
        %v6140 = vpack.c.bf16 %v6043, %v6027
        %v6141 = vpack.c.bf16 %v6044, %v6028
        %v6142 = vpack.c.bf16 %v6045, %v6029
        %v6143 = vpack.c.bf16 %v6046, %v6030
        %v6144 = vpack.c.bf16 %v6047, %v6031
        %v6145 = vpack.c.bf16 %v6048, %v6032
        %v6146 = vpack.c.bf16 %v6049, %v6033
        %v6147 = vpack.c.bf16 %v6050, %v6034
        %v6148 = vpack.c.bf16 %v6051, %v6035
        %v6149 = vpack.c.bf16 %v6052, %v6036
        %v6150 = vpack.c.bf16 %v6053, %v6037
        %v6151 = vpack.c.bf16 %v6054, %v6038
        %v6152 = vpack.c.bf16 %v6071, %v6055
        %v6153 = vpack.c.bf16 %v6072, %v6056
        %v6154 = vpack.c.bf16 %v6073, %v6057
        %v6155 = vpack.c.bf16 %v6074, %v6058
        %v6156 = vpack.c.bf16 %v6075, %v6059
        %v6157 = vpack.c.bf16 %v6076, %v6060
        %v6158 = vpack.c.bf16 %v6077, %v6061
        %v6159 = vpack.c.bf16 %v6078, %v6062
        %v6160 = vpack.c.bf16 %v6079, %v6063
        %v6161 = vpack.c.bf16 %v6080, %v6064
        %v6162 = vpack.c.bf16 %v6081, %v6065
        %v6163 = vpack.c.bf16 %v6082, %v6066
        %v6164 = vpack.c.bf16 %v6083, %v6067
        %v6165 = vpack.c.bf16 %v6084, %v6068
        %v6166 = vpack.c.bf16 %v6085, %v6069
        %v6167 = vpack.c.bf16 %v6086, %v6070
        %v6168 = vpack.c.bf16 %v6103, %v6087
        %v6169 = vpack.c.bf16 %v6104, %v6088
        %v6170 = vpack.c.bf16 %v6105, %v6089
        %v6171 = vpack.c.bf16 %v6106, %v6090
        %v6172 = vpack.c.bf16 %v6107, %v6091
        %v6173 = vpack.c.bf16 %v6108, %v6092
        %v6174 = vpack.c.bf16 %v6109, %v6093
        %v6175 = vpack.c.bf16 %v6110, %v6094
        %v6176 = vpack.c.bf16 %v6111, %v6095
        %v6177 = vpack.c.bf16 %v6112, %v6096
        %v6178 = vpack.c.bf16 %v6113, %v6097
        %v6179 = vpack.c.bf16 %v6114, %v6098
        %v6180 = vpack.c.bf16 %v6115, %v6099
        %v6181 = vpack.c.bf16 %v6116, %v6100
        %v6182 = vpack.c.bf16 %v6117, %v6101
        %v6183 = vpack.c.bf16 %v6118, %v6102
        %v6185 = vsel %vm1447, %v6119, 0
        %6187 = vmatprep.subr.bf16.mxu0 %v6121
        %6188 = vmatpush1.bf16.msra.mxu0 %v6120
        %6189 = vmatprep.subr.bf16.mxu0 %v6137
        %6190 = vmatpush1.bf16.msra.mxu0 %v6136
        %6191 = vmatprep.subr.bf16.mxu0 %v6153
        %6192 = vmatpush1.bf16.msra.mxu0 %v6152
        %6193 = vmatprep.subr.bf16.mxu0 %v6169
        %6194 = vmatpush1.bf16.msra.mxu0 %v6168
        %6195 = vmatprep.subr.bf16.mxu0 0
        %6196 = vmatpush1.bf16.msra.mxu0 0
        %6197 = vmatprep.subr.bf16.mxu0 0
        %6198 = vmatpush1.bf16.msra.mxu0 0
        %6199 = vmatprep.subr.bf16.mxu0 0
        %6200 = vmatpush1.bf16.msra.mxu0 0
        %6201 = vmatprep.subr.bf16.mxu0 0
        %6202 = vmatpush1.bf16.msra.mxu0 0
        %6203 = vmatprep.subr.bf16.mxu0 0
        %6204 = vmatpush1.bf16.msra.mxu0 0
        %6205 = vmatprep.subr.bf16.mxu0 0
        %6206 = vmatpush1.bf16.msra.mxu0 0
        %6207 = vmatprep.subr.bf16.mxu0 0
        %6208 = vmatpush1.bf16.msra.mxu0 0
        %6209 = vmatprep.subr.bf16.mxu0 0
        %6210 = vmatpush1.bf16.msra.mxu0 0
        %6211 = vmatprep.subr.bf16.mxu0 0
        %6212 = vmatpush1.bf16.msra.mxu0 0
        %6213 = vmatprep.subr.bf16.mxu0 0
        %6214 = vmatpush1.bf16.msra.mxu0 0
        %6215 = vmatprep.subr.bf16.mxu0 0
        %6216 = vmatpush1.bf16.msra.mxu0 0
        %6217 = vmatprep.subr.bf16.mxu0 0
        %6218 = vmatpush1.bf16.msra.mxu0 0
        %6219 = vmatprep.mubr.bf16.mxu0 0
        %6220 = vmatmul.mubr.bf16.gmra.mrb[0].mxu0 %v6185
        %v6221 = vpop.f32.mrb[0].mxu0
        %v6222 = vadd.f32 0.0, %v6221
        %v6223 = vpop.f32.mrb[0].mxu0
        %v6224 = vadd.f32 0.0, %v6223
        %v6225 = vpop.f32.mrb[0].mxu0
        %v6226 = vpop.f32.mrb[0].mxu0
        %6227 = vdwg.mxu0
        %6228 = vmatprep.subr.bf16.mxu0 %v6123
        %6229 = vmatpush1.bf16.msra.mxu0 %v6122
        %6230 = vmatprep.subr.bf16.mxu0 %v6139
        %6231 = vmatpush1.bf16.msra.mxu0 %v6138
        %6232 = vmatprep.subr.bf16.mxu0 %v6155
        %6233 = vmatpush1.bf16.msra.mxu0 %v6154
        %6234 = vmatprep.subr.bf16.mxu0 %v6171
        %6235 = vmatpush1.bf16.msra.mxu0 %v6170
        %6236 = vmatprep.subr.bf16.mxu0 0
        %6237 = vmatpush1.bf16.msra.mxu0 0
        %6238 = vmatprep.subr.bf16.mxu0 0
        %6239 = vmatpush1.bf16.msra.mxu0 0
        %6240 = vmatprep.subr.bf16.mxu0 0
        %6241 = vmatpush1.bf16.msra.mxu0 0
        %6242 = vmatprep.subr.bf16.mxu0 0
        %6243 = vmatpush1.bf16.msra.mxu0 0
        %6244 = vmatprep.subr.bf16.mxu0 0
        %6245 = vmatpush1.bf16.msra.mxu0 0
        %6246 = vmatprep.subr.bf16.mxu0 0
        %6247 = vmatpush1.bf16.msra.mxu0 0
        %6248 = vmatprep.subr.bf16.mxu0 0
        %6249 = vmatpush1.bf16.msra.mxu0 0
        %6250 = vmatprep.subr.bf16.mxu0 0
        %6251 = vmatpush1.bf16.msra.mxu0 0
        %6252 = vmatprep.subr.bf16.mxu0 0
        %6253 = vmatpush1.bf16.msra.mxu0 0
        %6254 = vmatprep.subr.bf16.mxu0 0
        %6255 = vmatpush1.bf16.msra.mxu0 0
        %6256 = vmatprep.subr.bf16.mxu0 0
        %6257 = vmatpush1.bf16.msra.mxu0 0
        %6258 = vmatprep.subr.bf16.mxu0 0
        %6259 = vmatpush1.bf16.msra.mxu0 0
        %6260 = vmatprep.mubr.bf16.mxu0 0
        %6261 = vmatmul.mubr.bf16.gmra.mrb[0].mxu0 %v6185
        %v6262 = vpop.f32.mrb[0].mxu0
        %v6263 = vadd.f32 0.0, %v6262
        %v6264 = vpop.f32.mrb[0].mxu0
        %v6265 = vadd.f32 0.0, %v6264
        %v6266 = vpop.f32.mrb[0].mxu0
        %v6267 = vpop.f32.mrb[0].mxu0
        %6268 = vdwg.mxu0
        %6269 = vmatprep.subr.bf16.mxu0 %v6125
        %6270 = vmatpush1.bf16.msra.mxu0 %v6124
        %6271 = vmatprep.subr.bf16.mxu0 %v6141
        %6272 = vmatpush1.bf16.msra.mxu0 %v6140
        %6273 = vmatprep.subr.bf16.mxu0 %v6157
        %6274 = vmatpush1.bf16.msra.mxu0 %v6156
        %6275 = vmatprep.subr.bf16.mxu0 %v6173
        %6276 = vmatpush1.bf16.msra.mxu0 %v6172
        %6277 = vmatprep.subr.bf16.mxu0 0
        %6278 = vmatpush1.bf16.msra.mxu0 0
        %6279 = vmatprep.subr.bf16.mxu0 0
        %6280 = vmatpush1.bf16.msra.mxu0 0
        %6281 = vmatprep.subr.bf16.mxu0 0
        %6282 = vmatpush1.bf16.msra.mxu0 0
        %6283 = vmatprep.subr.bf16.mxu0 0
        %6284 = vmatpush1.bf16.msra.mxu0 0
        %6285 = vmatprep.subr.bf16.mxu0 0
        %6286 = vmatpush1.bf16.msra.mxu0 0
        %6287 = vmatprep.subr.bf16.mxu0 0
        %6288 = vmatpush1.bf16.msra.mxu0 0
        %6289 = vmatprep.subr.bf16.mxu0 0
        %6290 = vmatpush1.bf16.msra.mxu0 0
        %6291 = vmatprep.subr.bf16.mxu0 0
        %6292 = vmatpush1.bf16.msra.mxu0 0
        %6293 = vmatprep.subr.bf16.mxu0 0
        %6294 = vmatpush1.bf16.msra.mxu0 0
        %6295 = vmatprep.subr.bf16.mxu0 0
        %6296 = vmatpush1.bf16.msra.mxu0 0
        %6297 = vmatprep.subr.bf16.mxu0 0
        %6298 = vmatpush1.bf16.msra.mxu0 0
        %6299 = vmatprep.subr.bf16.mxu0 0
        %6300 = vmatpush1.bf16.msra.mxu0 0
        %6301 = vmatprep.mubr.bf16.mxu0 0
        %6302 = vmatmul.mubr.bf16.gmra.mrb[0].mxu0 %v6185
        %v6303 = vpop.f32.mrb[0].mxu0
        %v6304 = vadd.f32 0.0, %v6303
        %v6305 = vpop.f32.mrb[0].mxu0
        %v6306 = vadd.f32 0.0, %v6305
        %v6307 = vpop.f32.mrb[0].mxu0
        %v6308 = vpop.f32.mrb[0].mxu0
        %6309 = vdwg.mxu0
        %6310 = vmatprep.subr.bf16.mxu0 %v6127
        %6311 = vmatpush1.bf16.msra.mxu0 %v6126
        %6312 = vmatprep.subr.bf16.mxu0 %v6143
        %6313 = vmatpush1.bf16.msra.mxu0 %v6142
        %6314 = vmatprep.subr.bf16.mxu0 %v6159
        %6315 = vmatpush1.bf16.msra.mxu0 %v6158
        %6316 = vmatprep.subr.bf16.mxu0 %v6175
        %6317 = vmatpush1.bf16.msra.mxu0 %v6174
        %6318 = vmatprep.subr.bf16.mxu0 0
        %6319 = vmatpush1.bf16.msra.mxu0 0
        %6320 = vmatprep.subr.bf16.mxu0 0
        %6321 = vmatpush1.bf16.msra.mxu0 0
        %6322 = vmatprep.subr.bf16.mxu0 0
        %6323 = vmatpush1.bf16.msra.mxu0 0
        %6324 = vmatprep.subr.bf16.mxu0 0
        %6325 = vmatpush1.bf16.msra.mxu0 0
        %6326 = vmatprep.subr.bf16.mxu0 0
        %6327 = vmatpush1.bf16.msra.mxu0 0
        %6328 = vmatprep.subr.bf16.mxu0 0
        %6329 = vmatpush1.bf16.msra.mxu0 0
        %6330 = vmatprep.subr.bf16.mxu0 0
        %6331 = vmatpush1.bf16.msra.mxu0 0
        %6332 = vmatprep.subr.bf16.mxu0 0
        %6333 = vmatpush1.bf16.msra.mxu0 0
        %6334 = vmatprep.subr.bf16.mxu0 0
        %6335 = vmatpush1.bf16.msra.mxu0 0
        %6336 = vmatprep.subr.bf16.mxu0 0
        %6337 = vmatpush1.bf16.msra.mxu0 0
        %6338 = vmatprep.subr.bf16.mxu0 0
        %6339 = vmatpush1.bf16.msra.mxu0 0
        %6340 = vmatprep.subr.bf16.mxu0 0
        %6341 = vmatpush1.bf16.msra.mxu0 0
        %6342 = vmatprep.mubr.bf16.mxu0 0
        %6343 = vmatmul.mubr.bf16.gmra.mrb[0].mxu0 %v6185
        %v6344 = vpop.f32.mrb[0].mxu0
        %v6345 = vadd.f32 0.0, %v6344
        %v6346 = vpop.f32.mrb[0].mxu0
        %v6347 = vadd.f32 0.0, %v6346
        %v6348 = vpop.f32.mrb[0].mxu0
        %v6349 = vpop.f32.mrb[0].mxu0
        %6350 = vdwg.mxu0
        %6351 = vmatprep.subr.bf16.mxu0 %v6129
        %6352 = vmatpush1.bf16.msra.mxu0 %v6128
        %6353 = vmatprep.subr.bf16.mxu0 %v6145
        %6354 = vmatpush1.bf16.msra.mxu0 %v6144
        %6355 = vmatprep.subr.bf16.mxu0 %v6161
        %6356 = vmatpush1.bf16.msra.mxu0 %v6160
        %6357 = vmatprep.subr.bf16.mxu0 %v6177
        %6358 = vmatpush1.bf16.msra.mxu0 %v6176
        %6359 = vmatprep.subr.bf16.mxu0 0
        %6360 = vmatpush1.bf16.msra.mxu0 0
        %6361 = vmatprep.subr.bf16.mxu0 0
        %6362 = vmatpush1.bf16.msra.mxu0 0
        %6363 = vmatprep.subr.bf16.mxu0 0
        %6364 = vmatpush1.bf16.msra.mxu0 0
        %6365 = vmatprep.subr.bf16.mxu0 0
        %6366 = vmatpush1.bf16.msra.mxu0 0
        %6367 = vmatprep.subr.bf16.mxu0 0
        %6368 = vmatpush1.bf16.msra.mxu0 0
        %6369 = vmatprep.subr.bf16.mxu0 0
        %6370 = vmatpush1.bf16.msra.mxu0 0
        %6371 = vmatprep.subr.bf16.mxu0 0
        %6372 = vmatpush1.bf16.msra.mxu0 0
        %6373 = vmatprep.subr.bf16.mxu0 0
        %6374 = vmatpush1.bf16.msra.mxu0 0
        %6375 = vmatprep.subr.bf16.mxu0 0
        %6376 = vmatpush1.bf16.msra.mxu0 0
        %6377 = vmatprep.subr.bf16.mxu0 0
        %6378 = vmatpush1.bf16.msra.mxu0 0
        %6379 = vmatprep.subr.bf16.mxu0 0
        %6380 = vmatpush1.bf16.msra.mxu0 0
        %6381 = vmatprep.subr.bf16.mxu0 0
        %6382 = vmatpush1.bf16.msra.mxu0 0
        %6383 = vmatprep.mubr.bf16.mxu0 0
        %6384 = vmatmul.mubr.bf16.gmra.mrb[0].mxu0 %v6185
        %v6385 = vpop.f32.mrb[0].mxu0
        %v6386 = vadd.f32 0.0, %v6385
        %v6387 = vpop.f32.mrb[0].mxu0
        %v6388 = vadd.f32 0.0, %v6387
        %v6389 = vpop.f32.mrb[0].mxu0
        %v6390 = vpop.f32.mrb[0].mxu0
        %6391 = vdwg.mxu0
        %6392 = vmatprep.subr.bf16.mxu0 %v6131
        %6393 = vmatpush1.bf16.msra.mxu0 %v6130
        %6394 = vmatprep.subr.bf16.mxu0 %v6147
        %6395 = vmatpush1.bf16.msra.mxu0 %v6146
        %6396 = vmatprep.subr.bf16.mxu0 %v6163
        %6397 = vmatpush1.bf16.msra.mxu0 %v6162
        %6398 = vmatprep.subr.bf16.mxu0 %v6179
        %6399 = vmatpush1.bf16.msra.mxu0 %v6178
        %6400 = vmatprep.subr.bf16.mxu0 0
        %6401 = vmatpush1.bf16.msra.mxu0 0
        %6402 = vmatprep.subr.bf16.mxu0 0
        %6403 = vmatpush1.bf16.msra.mxu0 0
        %6404 = vmatprep.subr.bf16.mxu0 0
        %6405 = vmatpush1.bf16.msra.mxu0 0
        %6406 = vmatprep.subr.bf16.mxu0 0
        %6407 = vmatpush1.bf16.msra.mxu0 0
        %6408 = vmatprep.subr.bf16.mxu0 0
        %6409 = vmatpush1.bf16.msra.mxu0 0
        %6410 = vmatprep.subr.bf16.mxu0 0
        %6411 = vmatpush1.bf16.msra.mxu0 0
        %6412 = vmatprep.subr.bf16.mxu0 0
        %6413 = vmatpush1.bf16.msra.mxu0 0
        %6414 = vmatprep.subr.bf16.mxu0 0
        %6415 = vmatpush1.bf16.msra.mxu0 0
        %6416 = vmatprep.subr.bf16.mxu0 0
        %6417 = vmatpush1.bf16.msra.mxu0 0
        %6418 = vmatprep.subr.bf16.mxu0 0
        %6419 = vmatpush1.bf16.msra.mxu0 0
        %6420 = vmatprep.subr.bf16.mxu0 0
        %6421 = vmatpush1.bf16.msra.mxu0 0
        %6422 = vmatprep.subr.bf16.mxu0 0
        %6423 = vmatpush1.bf16.msra.mxu0 0
        %6424 = vmatprep.mubr.bf16.mxu0 0
        %6425 = vmatmul.mubr.bf16.gmra.mrb[0].mxu0 %v6185
        %v6426 = vpop.f32.mrb[0].mxu0
        %v6427 = vadd.f32 0.0, %v6426
        %v6428 = vpop.f32.mrb[0].mxu0
        %v6429 = vadd.f32 0.0, %v6428
        %v6430 = vpop.f32.mrb[0].mxu0
        %v6431 = vpop.f32.mrb[0].mxu0
        %6432 = vdwg.mxu0
        %6433 = vmatprep.subr.bf16.mxu0 %v6133
        %6434 = vmatpush1.bf16.msra.mxu0 %v6132
        %6435 = vmatprep.subr.bf16.mxu0 %v6149
        %6436 = vmatpush1.bf16.msra.mxu0 %v6148
        %6437 = vmatprep.subr.bf16.mxu0 %v6165
        %6438 = vmatpush1.bf16.msra.mxu0 %v6164
        %6439 = vmatprep.subr.bf16.mxu0 %v6181
        %6440 = vmatpush1.bf16.msra.mxu0 %v6180
        %6441 = vmatprep.subr.bf16.mxu0 0
        %6442 = vmatpush1.bf16.msra.mxu0 0
        %6443 = vmatprep.subr.bf16.mxu0 0
        %6444 = vmatpush1.bf16.msra.mxu0 0
        %6445 = vmatprep.subr.bf16.mxu0 0
        %6446 = vmatpush1.bf16.msra.mxu0 0
        %6447 = vmatprep.subr.bf16.mxu0 0
        %6448 = vmatpush1.bf16.msra.mxu0 0
        %6449 = vmatprep.subr.bf16.mxu0 0
        %6450 = vmatpush1.bf16.msra.mxu0 0
        %6451 = vmatprep.subr.bf16.mxu0 0
        %6452 = vmatpush1.bf16.msra.mxu0 0
        %6453 = vmatprep.subr.bf16.mxu0 0
        %6454 = vmatpush1.bf16.msra.mxu0 0
        %6455 = vmatprep.subr.bf16.mxu0 0
        %6456 = vmatpush1.bf16.msra.mxu0 0
        %6457 = vmatprep.subr.bf16.mxu0 0
        %6458 = vmatpush1.bf16.msra.mxu0 0
        %6459 = vmatprep.subr.bf16.mxu0 0
        %6460 = vmatpush1.bf16.msra.mxu0 0
        %6461 = vmatprep.subr.bf16.mxu0 0
        %6462 = vmatpush1.bf16.msra.mxu0 0
        %6463 = vmatprep.subr.bf16.mxu0 0
        %6464 = vmatpush1.bf16.msra.mxu0 0
        %6465 = vmatprep.mubr.bf16.mxu0 0
        %6466 = vmatmul.mubr.bf16.gmra.mrb[0].mxu0 %v6185
        %v6467 = vpop.f32.mrb[0].mxu0
        %v6468 = vadd.f32 0.0, %v6467
        %v6469 = vpop.f32.mrb[0].mxu0
        %v6470 = vadd.f32 0.0, %v6469
        %v6471 = vpop.f32.mrb[0].mxu0
        %v6472 = vpop.f32.mrb[0].mxu0
        %6473 = vdwg.mxu0
        %6474 = vmatprep.subr.bf16.mxu0 %v6135
        %6475 = vmatpush1.bf16.msra.mxu0 %v6134
        %6476 = vmatprep.subr.bf16.mxu0 %v6151
        %6477 = vmatpush1.bf16.msra.mxu0 %v6150
        %6478 = vmatprep.subr.bf16.mxu0 %v6167
        %6479 = vmatpush1.bf16.msra.mxu0 %v6166
        %6480 = vmatprep.subr.bf16.mxu0 %v6183
        %6481 = vmatpush1.bf16.msra.mxu0 %v6182
        %6482 = vmatprep.subr.bf16.mxu0 0
        %6483 = vmatpush1.bf16.msra.mxu0 0
        %6484 = vmatprep.subr.bf16.mxu0 0
        %6485 = vmatpush1.bf16.msra.mxu0 0
        %6486 = vmatprep.subr.bf16.mxu0 0
        %6487 = vmatpush1.bf16.msra.mxu0 0
        %6488 = vmatprep.subr.bf16.mxu0 0
        %6489 = vmatpush1.bf16.msra.mxu0 0
        %6490 = vmatprep.subr.bf16.mxu0 0
        %6491 = vmatpush1.bf16.msra.mxu0 0
        %6492 = vmatprep.subr.bf16.mxu0 0
        %6493 = vmatpush1.bf16.msra.mxu0 0
        %6494 = vmatprep.subr.bf16.mxu0 0
        %6495 = vmatpush1.bf16.msra.mxu0 0
        %6496 = vmatprep.subr.bf16.mxu0 0
        %6497 = vmatpush1.bf16.msra.mxu0 0
        %6498 = vmatprep.subr.bf16.mxu0 0
        %6499 = vmatpush1.bf16.msra.mxu0 0
        %6500 = vmatprep.subr.bf16.mxu0 0
        %6501 = vmatpush1.bf16.msra.mxu0 0
        %6502 = vmatprep.subr.bf16.mxu0 0
        %6503 = vmatpush1.bf16.msra.mxu0 0
        %6504 = vmatprep.subr.bf16.mxu0 0
        %6505 = vmatpush1.bf16.msra.mxu0 0
        %6506 = vmatprep.mubr.bf16.mxu0 0
        %6507 = vmatmul.mubr.bf16.gmra.mrb[0].mxu0 %v6185
        %v6508 = vpop.f32.mrb[0].mxu0
        %v6509 = vadd.f32 0.0, %v6508
        %v6510 = vpop.f32.mrb[0].mxu0
        %v6511 = vadd.f32 0.0, %v6510
        %v6512 = vpop.f32.mrb[0].mxu0
        %v6513 = vpop.f32.mrb[0].mxu0
        %6514 = vdwg.mxu0
        %v6531 = vrot.slane %v2275, 5
        %v6532 = vrot.slane %v2277, 5
        %v6533 = vrot.slane %v2316, 5
        %v6534 = vrot.slane %v2318, 5
        %v6535 = vrot.slane %v2357, 5
        %v6536 = vrot.slane %v2359, 5
        %v6537 = vrot.slane %v2398, 5
        %v6538 = vrot.slane %v2400, 5
        %v6539 = vrot.slane %v2439, 5
        %v6540 = vrot.slane %v2441, 5
        %v6541 = vrot.slane %v2480, 5
        %v6542 = vrot.slane %v2482, 5
        %v6543 = vrot.slane %v2521, 5
        %v6544 = vrot.slane %v2523, 5
        %v6545 = vrot.slane %v2562, 5
        %v6546 = vrot.slane %v2564, 5
        %vm6563 = vcmask 1042432
        %v6564 = vsel %vm6563, %v6222, %v6531
        %v6565 = vsel %vm6563, %v6224, %v6532
        %v6566 = vsel %vm6563, %v6263, %v6533
        %v6567 = vsel %vm6563, %v6265, %v6534
        %v6568 = vsel %vm6563, %v6304, %v6535
        %v6569 = vsel %vm6563, %v6306, %v6536
        %v6570 = vsel %vm6563, %v6345, %v6537
        %v6571 = vsel %vm6563, %v6347, %v6538
        %v6572 = vsel %vm6563, %v6386, %v6539
        %v6573 = vsel %vm6563, %v6388, %v6540
        %v6574 = vsel %vm6563, %v6427, %v6541
        %v6575 = vsel %vm6563, %v6429, %v6542
        %v6576 = vsel %vm6563, %v6468, %v6543
        %v6577 = vsel %vm6563, %v6470, %v6544
        %v6578 = vsel %vm6563, %v6509, %v6545
        %v6579 = vsel %vm6563, %v6511, %v6546
        %v6596 = vcombine.low %v6564, %v6565
        %v6597 = vcombine.low %v6566, %v6567
        %v6598 = vcombine.low %v6568, %v6569
        %v6599 = vcombine.low %v6570, %v6571
        %v6600 = vcombine.low %v6572, %v6573
        %v6601 = vcombine.low %v6574, %v6575
        %v6602 = vcombine.low %v6576, %v6577
        %v6603 = vcombine.low %v6578, %v6579
        %6612 = vst [vmem:[%s460] sm:$0xff] %v6596
        %6613 = vst [vmem:[%s460 + $0x8] sm:$0xff] %v6597
        %6614 = vst [vmem:[%s460 + $0x10] sm:$0xff] %v6598
        %6615 = vst [vmem:[%s460 + $0x18] sm:$0xff] %v6599
        %6616 = vst [vmem:[%s460 + $0x20] sm:$0xff] %v6600
        %6617 = vst [vmem:[%s460 + $0x28] sm:$0xff] %v6601
        %6618 = vst [vmem:[%s460 + $0x30] sm:$0xff] %v6602
        %6619 = vst [vmem:[%s460 + $0x38] sm:$0xff] %v6603
        %s6620 = sand.u32 %s279, 1
        %s6621 = scalar_lea.sflag [#allocation4], %s6620
        %s6622 = sand.u32 %s279, 1
        %s6623 = smul.addr %s6622, 64
        %s6624 = scalar_lea.vmem [#allocation10], %s6623
        // Predicated region
        $region81: #{tpu_custom_call.1} parent=63 // pred_check
          %p6625 = pneg %p289
        $region82: #{tpu_custom_call.1} parent=63 // pred_check_branch
          %6627 = sbr.rel (%p6625) target = $region84
        $region83: #{tpu_custom_call.1} parent=63 // pred_region
          %s6628 = smul.u32 16, %s30
          %s6630 = ssub.s32 1024, 1024
          %6631 = vsyncadd %s6621, %s6630
          %s6632 = smul.addr %s6628, 64
          %s6633 = scalar_lea.hbm %s11, %s6632
          %s6635 = sshll.u32 %s6624, 4
          %s6636 = int_to_ptr.vmem [resolvable:$true] %s6635
          %6638 = dma.vmem_to_hbm [thread:$0]  %s6636, 1024, %s6633, %s6621
        $region84: #{tpu_custom_call.1} parent=63 // pred_fallthru
          _
      $region64: #{tpu_custom_call.1} parent=5 // pred_fallthru
        _
      %p6639 = scmp.le.s32.totalorder 2, %s25
      // Predicated region
      $region85: #{tpu_custom_call.1} parent=5 // pred_check
        %p6640 = pneg %p6639
      $region86: #{tpu_custom_call.1} parent=5 // pred_check_branch
        %6642 = sbr.rel (%p6640) target = $region88
      $region87: #{tpu_custom_call.1} parent=5 // pred_region
        %s6643 = ssub.s32 %s25, 2
        // Predicated region
        $region89: #{tpu_custom_call.1} parent=87 // pred_check
          %p6644 = pneg %p295
        $region90: #{tpu_custom_call.1} parent=87 // pred_check_branch
          %6646 = sbr.rel (%p6644) target = $region92
        $region91: #{tpu_custom_call.1} parent=87 // pred_region
          %s6647 = sand.u32 %s280, 1
          %s6648 = scalar_lea.sflag [#allocation4], %s6647
          %s6649 = sand.u32 %s280, 1
          %s6650 = smul.addr %s6649, 64
          %s6651 = scalar_lea.vmem [#allocation10], %s6650
          %6652 = dma.done %s6648, 1024
        $region92: #{tpu_custom_call.1} parent=87 // pred_fallthru
          _
      $region88: #{tpu_custom_call.1} parent=5 // pred_fallthru
        _
    $region6: #{tpu_custom_call.1} parent=1 // loop_footer
      %s29 = sadd.s32 1, %s25
    $region7: #{tpu_custom_call.1} parent=1 // loop_footer_branch
      %24 = sbr.rel target = $region3
    $region8: #{tpu_custom_call.1} parent=1 // loop_exit
      _
    %6653 = vsyncpa [#allocation3], 1
    %s6654 = scalar_lea.sflag [#allocation3], 1
    %6655 = vsyncpa %s6654, 1
    %6656 = vsyncpa [#allocation6], 1
    %6657 = vsyncpa [#allocation9], 1
    %6658 = vsyncpa [#allocation4], 1
    %s6659 = scalar_lea.sflag [#allocation4], 1
    %6660 = vsyncpa %s6659, 1

</llo_original>
